<compile_context>
chip_gen: v5e
topology: v5e:2x2
jax: 0.10.0
libtpu: 0.0.40
codegen_flags: <defaults>
</compile_context>

<pallas_src>
import functools

import numpy as np

import jax
import jax.numpy as jnp
from jax import lax
from jax.experimental import pallas as pl
from jax.experimental.pallas import tpu as pltpu


# ----------------------------------------------------------------------------
# Kernel
# ----------------------------------------------------------------------------
def _flow_attention_kernel(x_ref, wqkv_ref, bqkv_ref, wout_ref, bout_ref,
                           mask_eh_ref, mask_he_ref, o_ref, *,
                           num_heads, head_dim, use_roll, fast_math, precision):
    """One batch block: (Bt, S, E) -> (Bt, S, E)."""
    Bt, S, E = x_ref.shape
    H, Dh = num_heads, head_dim
    rows = Bt * S

    dot = functools.partial(jnp.dot, preferred_element_type=jnp.float32,
                            precision=precision)

    # Fold batch into the matmul M dimension (fills the MXU).
    x2 = x_ref[...].reshape(rows, E)

    # ---- QKV projection: ONE full-width MXU matmul, bias added once.
    qkv = dot(x2.astype(wqkv_ref.dtype), wqkv_ref[...]) + bqkv_ref[...]

    # E-aligned slabs (weight columns pre-permuted host-side to [Q|K|V] with
    # heads contiguous, so these slices are lane-dense for E % 128 == 0).
    q = jax.nn.sigmoid(qkv[:, :E])            # (rows, E)
    k = jax.nn.sigmoid(qkv[:, E:2 * E])       # (rows, E)
    v = qkv[:, 2 * E:]                        # (rows, E)

    mask_eh = mask_eh_ref[...]                # (E, H) one-hot head mask
    mask_he = mask_he_ref[...]                # (H, E)
    rdt = mask_eh.dtype                       # bf16 on the fast path (mask exact)

    def red_h(a2):
        # Per-head sum over the Dh lanes of each head -> compact (rows, H);
        # MXU mask matmul instead of H XLU reductions.
        return dot(a2.astype(rdt), mask_eh)

    def exp_h(b2):
        # Broadcast compact per-head scalars back to all Dh lanes of the head.
        return dot(b2.astype(rdt), mask_he)

    def recip(a):
        if fast_math:
            return pl.reciprocal(a, approx=True)   # EUP slot, nearly free
        return 1.0 / a                              # exact (matches reference)

    q3 = q.reshape(Bt, S, E)
    k3 = k.reshape(Bt, S, E)

    # Sequence reductions stay compact -- broadcast happens implicitly in the
    # elementwise products (no materialized broadcast_to buffers).
    ksum = jnp.sum(k3, axis=1, keepdims=True)       # (Bt, 1, E)
    qsum = jnp.sum(q3, axis=1, keepdims=True)       # (Bt, 1, E)

    # Per-head flow normalizers, compact (rows, H).  q,k are sigmoid outputs so
    # every divisor is strictly positive (same as the PyTorch reference).
    i_c = red_h((q3 * ksum).reshape(rows, E))                         # "i"
    o_c = red_h((k3 * qsum).reshape(rows, E))                         # "o"
    inv_i = recip(i_c)
    inv_o = recip(o_c)

    k_over_o = (k * exp_h(inv_o)).reshape(Bt, S, E)                   # k / o
    i_hat_c = red_h(
        (q3 * jnp.sum(k_over_o, axis=1, keepdims=True)).reshape(rows, E))

    qi = q * exp_h(inv_i)                                             # q / i (reused)
    qi3 = qi.reshape(Bt, S, E)
    o_hat_c = red_h(
        (k3 * jnp.sum(qi3, axis=1, keepdims=True)).reshape(rows, E))

    # Softmax of o_hat over the sequence axis, per (batch element, head),
    # entirely on the compact (Bt, S, H) array (no Dh-redundant EUP work).
    o_hat3 = o_hat_c.reshape(Bt, S, H)
    e3 = jnp.exp(o_hat3 - jnp.max(o_hat3, axis=1, keepdims=True))
    sm = (e3 * recip(jnp.sum(e3, axis=1, keepdims=True))).reshape(rows, H)

    vs = v * exp_h(sm)                                                # v * softmax(o_hat)

    # ---- r[s] = (q/i)[s] @ (k[s]^T @ (v*sm)[s])  (contraction over heads per
    # sequence position), decomposed over head offsets delta.  Both operands
    # are rotated by the SAME Dh each step, so the pairing covers every head
    # pair exactly once regardless of rotation direction.
    # TODO(synk): for H > ~8 the delta decomposition costs ~H^2/2x the
    # algorithmic FLOPs; switch to a compact Gram formulation there.
    def rot_heads(a):
        if use_roll:
            return pltpu.roll(a, shift=E - Dh, axis=1)    # one XLU op
        return jnp.concatenate([a[:, Dh:], a[:, :Dh]], axis=1)

    def delta_step(_, carry):
        r_acc, k_rot, vs_rot = carry
        k_rot = rot_heads(k_rot)
        vs_rot = rot_heads(vs_rot)
        r_acc = r_acc + exp_h(red_h(qi * k_rot)) * vs_rot
        return r_acc, k_rot, vs_rot

    r0 = exp_h(red_h(qi * k)) * vs                        # delta = 0 term
    r, _, _ = lax.fori_loop(1, H, delta_step, (r0, k, vs), unroll=(H <= 8))
    r = r * exp_h(jax.nn.sigmoid(i_hat_c))

    # ---- output projection: ONE (rows, E) @ (E, E) matmul, bias in epilogue.
    out = dot(r.astype(wout_ref.dtype), wout_ref[...]) + bout_ref[...]
    o_ref[...] = out.reshape(Bt, S, E).astype(o_ref.dtype)


# ----------------------------------------------------------------------------
# Host-side one-time parameter preparation
# ----------------------------------------------------------------------------
def _head_permutation(embed_dim, num_heads):
    """Column permutation: per-head-interleaved [q|k|v]*H -> [Q | K | V]."""
    dh = embed_dim // num_heads
    return np.arange(3 * embed_dim).reshape(num_heads, 3, dh).transpose(1, 0, 2).reshape(-1)


def prepare_flow_attention_params(w_qkv, b_qkv, w_out, b_out, num_heads,
                                  mxu_dtype=jnp.float32):
    """Permute QKV columns, pre-transpose weights (once), build the (E,H)/(H,E)
    one-hot head masks, and optionally cast the MXU operands to bf16 (halves
    weight DMA bytes and keeps the mask matmuls single-pass on the MXU)."""
    E = np.shape(w_qkv)[1]
    assert E % num_heads == 0
    dh = E // num_heads
    perm = _head_permutation(E, num_heads)
    w_qkv_t = jnp.asarray(w_qkv).T[:, perm].astype(mxu_dtype)          # (E, 3E)
    b_qkv_p = jnp.asarray(b_qkv)[perm].reshape(1, 3 * E).astype(jnp.float32)
    w_out_t = jnp.asarray(w_out).T.astype(mxu_dtype)                   # (E, E)
    b_out_2 = jnp.asarray(b_out).reshape(1, E).astype(jnp.float32)
    head_id = np.arange(E) // dh
    one_hot = (head_id[:, None] == np.arange(num_heads)[None, :]).astype(np.float32)
    mask_eh = jnp.asarray(one_hot).astype(mxu_dtype)                   # (E, H)
    mask_he = jnp.asarray(one_hot.T).astype(mxu_dtype)                 # (H, E)
    return dict(w_qkv_t=w_qkv_t, b_qkv=b_qkv_p, w_out_t=w_out_t,
                b_out=b_out_2, mask_eh=mask_eh, mask_he=mask_he)


# ----------------------------------------------------------------------------
# Generation-aware tile / VMEM sizing
# ----------------------------------------------------------------------------
def _vmem_limit_bytes():
    """~75% of the chip's VMEM: ~96 MiB on v5e/v6e (128 MiB), ~48 MiB on v7x (64 MiB)."""
    try:
        cap = int(pltpu.get_tpu_info().vmem_capacity_bytes)
    except Exception:
        cap = 64 * 1024 * 1024        # conservative default (v7x-sized)
    return min(int(cap * 3 // 4), 112 * 1024 * 1024)


def _pick_batch_block(batch, seq_len, embed_dim, *, vmem_budget, weight_bytes,
                      target_rows=512, min_grid_steps=4):
    """Pick how many batch elements to fold into one kernel step so the MXU M
    dimension reaches ~512 rows (256-wide MXU on v6e/v7x; ~256 suffices on
    v5e) without exceeding the VMEM budget, while keeping >= ~min_grid_steps
    grid steps for megacore sharding and DMA pipelining."""
    # TODO(synk): very long sequences need the S-tiled two-pass variant (esp.
    # on v7x's 64 MiB); this version keeps the (Bt*S, E) working set resident.
    if seq_len % 8 != 0:              # keep the (S, E) flatten a pure view
        return 1
    per_row_bytes = 20 * embed_dim * 4    # ~live f32 intermediates + pipelined I/O
    max_rows = max(seq_len, (vmem_budget - weight_bytes) // per_row_bytes)
    grid_cap = max(1, batch // min_grid_steps)
    divisors = [d for d in range(1, batch + 1) if batch % d == 0]
    fitting = [d for d in divisors if d * seq_len <= max_rows and d <= grid_cap] or [1]
    reaching = [d for d in fitting if d * seq_len >= target_rows]
    return min(reaching) if reaching else max(fitting)


# ----------------------------------------------------------------------------
# pallas_call wrapper
# ----------------------------------------------------------------------------
def _flow_attention_call(x, params, num_heads, Bt, vmem_limit_bytes,
                         weight_buffer_count):
    B, S, E = x.shape
    H = num_heads
    Dh = E // H
    use_roll = (E % 128 == 0)                     # lane-aligned rotation path
    fast_math = params["w_qkv_t"].dtype != jnp.float32
    precision = None if fast_math else lax.Precision.HIGHEST

    kernel = functools.partial(_flow_attention_kernel,
                               num_heads=H, head_dim=Dh, use_roll=use_roll,
                               fast_math=fast_math, precision=precision)

    pmode = pl.Buffered(weight_buffer_count) if weight_buffer_count else None

    def const_spec(shape):
        # Grid-invariant operands (weights / biases / masks): fetched once.
        if pmode is None:
            return pl.BlockSpec(shape, lambda b: (0,) * len(shape))
        return pl.BlockSpec(shape, lambda b: (0,) * len(shape), pipeline_mode=pmode)

    return pl.pallas_call(
        kernel,
        out_shape=jax.ShapeDtypeStruct((B, S, E), x.dtype),
        grid=(B // Bt,),
        in_specs=[
            pl.BlockSpec((Bt, S, E), lambda b: (b, 0, 0)),
            const_spec((E, 3 * E)),
            const_spec((1, 3 * E)),
            const_spec((E, E)),
            const_spec((1, E)),
            const_spec((E, H)),
            const_spec((H, E)),
        ],
        out_specs=pl.BlockSpec((Bt, S, E), lambda b: (b, 0, 0)),
        compiler_params=pltpu.CompilerParams(
            dimension_semantics=("parallel",),     # shards across TCs on v7x
            vmem_limit_bytes=int(vmem_limit_bytes),
        ),
    )(x, params["w_qkv_t"], params["b_qkv"], params["w_out_t"],
      params["b_out"], params["mask_eh"], params["mask_he"])


def flow_attention_pallas(x, params, num_heads, batch_block=None):
    """x: (B, S, E); params from prepare_flow_attention_params."""
    B, S, E = x.shape
    assert E % num_heads == 0
    vmem_budget = _vmem_limit_bytes()
    weight_bytes = sum(int(np.prod(p.shape)) * p.dtype.itemsize
                       for p in params.values())
    Bt = batch_block or _pick_batch_block(B, S, E, vmem_budget=vmem_budget,
                                          weight_bytes=weight_bytes)
    assert B % Bt == 0
    try:
        # Single-buffer the constant weight/bias/mask blocks (VMEM headroom,
        # especially on v7x's 64 MiB).
        return _flow_attention_call(x, params, num_heads, Bt, vmem_budget,
                                    weight_buffer_count=1)
    except Exception:
        # Fallback: this JAX build rejects single-buffered constant blocks;
        # use the default (double-buffered) specs instead.
        return _flow_attention_call(x, params, num_heads, Bt, vmem_budget,
                                    weight_buffer_count=None)


# ----------------------------------------------------------------------------
# Pure-JAX reference (mirror of the PyTorch FlowAttention.forward)
# ----------------------------------------------------------------------------
def flow_attention_ref(x, w_qkv, b_qkv, w_out, b_out, num_heads):
    B, S, E = x.shape
    Dh = E // num_heads
    qkv = x @ w_qkv.T + b_qkv
    qkv = qkv.reshape(B, S, num_heads, 3 * Dh)
    q, k, v = qkv[..., :Dh], qkv[..., Dh:2 * Dh], qkv[..., 2 * Dh:]
    q = jax.nn.sigmoid(q)
    k = jax.nn.sigmoid(k)
    i = jnp.sum(q * jnp.sum(k, axis=1, keepdims=True), axis=3, keepdims=True)
    o = jnp.sum(k * jnp.sum(q, axis=1, keepdims=True), axis=3, keepdims=True)
    i_hat = jnp.sum(q * jnp.sum(k / o, axis=1, keepdims=True), axis=3, keepdims=True)
    o_hat = jnp.sum(k * jnp.sum(q / i, axis=1, keepdims=True), axis=3, keepdims=True)
    sm = jax.nn.softmax(o_hat, axis=1)
    kv = jnp.einsum('bshd,bshe->bsde', k, v * sm)
    r = jnp.einsum('bshd,bsde->bshe', q / i, kv) * jax.nn.sigmoid(i_hat)
    values = r.reshape(B, S, E)
    return values @ w_out.T + b_out


# ----------------------------------------------------------------------------
# Module wrapper
# ----------------------------------------------------------------------------
class Attention:
    """JAX/Pallas port of ptls Attention (parameters initialized in-script)."""

    def __init__(self, embed_dim, num_heads, self_attn, key,
                 mxu_dtype=jnp.float32):
        self.self_attn = self_attn
        self.embed_dim = embed_dim
        self.num_heads = num_heads
        if self_attn == 'linear-flow':
            k1, k2 = jax.random.split(key)
            # xavier_uniform bounds for (fan_out, fan_in) linear weights
            b_qkv_bound = (6.0 / (embed_dim + 3 * embed_dim)) ** 0.5
            b_out_bound = (6.0 / (embed_dim + embed_dim)) ** 0.5
            self.w_qkv = jax.random.uniform(
                k1, (3 * embed_dim, embed_dim), jnp.float32,
                -b_qkv_bound, b_qkv_bound)
            self.b_qkv = jnp.zeros((3 * embed_dim,), jnp.float32)
            self.w_out = jax.random.uniform(
                k2, (embed_dim, embed_dim), jnp.float32,
                -b_out_bound, b_out_bound)
            self.b_out = jnp.zeros((embed_dim,), jnp.float32)
            self._params = prepare_flow_attention_params(
                self.w_qkv, self.b_qkv, self.w_out, self.b_out, num_heads,
                mxu_dtype=mxu_dtype)
        elif self_attn == 'quadratic':
            # TODO(synk): torch.nn.MultiheadAttention ('quadratic') path not ported.
            pass
        elif self_attn == 'linear-cross':
            pass  # identity pass-through, matches the PyTorch forward

    def __call__(self, x):
        if self.self_attn == 'linear-flow':
            return flow_attention_pallas(x, self._params, self.num_heads)
        return x  # 'linear-cross' (and unported 'quadratic') leave X unchanged


if __name__ == "__main__":
    # Global flag only so the XLA *reference* uses full-precision matmuls; the
    # kernel's f32 path passes precision=HIGHEST explicitly on its own.
    jax.config.update("jax_default_matmul_precision", "highest")

    B, S, E, H = 2, 8, 32, 4
    key = jax.random.PRNGKey(0)
    k_x, k_params = jax.random.split(key)
    x = jax.random.normal(k_x, (B, S, E), dtype=jnp.float32)

    # f32 MXU-operand path
    attn = Attention(embed_dim=E, num_heads=H, self_attn='linear-flow', key=k_params)
    out = jax.block_until_ready(attn(x))
    ref = flow_attention_ref(x, attn.w_qkv, attn.b_qkv, attn.w_out, attn.b_out, H)
    assert out.shape == (B, S, E)
    assert jnp.allclose(out, ref, atol=1e-5, rtol=1e-4), "f32 kernel mismatch vs reference"

    # Batch-folded tile (Bt=2 -> 16 MXU rows) exercises the (Bt*S, E) flatten path.
    out_bt2 = jax.block_until_ready(
        flow_attention_pallas(x, attn._params, H, batch_block=2))
    assert jnp.allclose(out_bt2, ref, atol=1e-5, rtol=1e-4), "Bt>1 kernel mismatch"

    # bf16 MXU-operand fast path (v5e/v6e/v7x): f32 accumulation, f32/EUP
    # elementwise math, approx reciprocals -> only small rounding drift.
    attn_bf16 = Attention(embed_dim=E, num_heads=H, self_attn='linear-flow',
                          key=k_params, mxu_dtype=jnp.bfloat16)
    out_bf16 = jax.block_until_ready(attn_bf16(x))
    assert bool(jnp.all(jnp.isfinite(out_bf16)))
    assert float(jnp.max(jnp.abs(out_bf16 - ref))) < 5e-2, "bf16 kernel drift too large"

    # 'linear-cross' is an identity pass-through (as in the PyTorch module)
    ident = Attention(embed_dim=E, num_heads=H, self_attn='linear-cross', key=k_params)
    assert ident(x) is x

    print("KERNEL_OK")
</pallas_src>

<mosaic_0001>
module attributes {stable_mosaic.version = 11 : i64} {
  func.func @_flow_attention_kernel(%arg0: i32, %arg1: memref<1x8x32xf32, #tpu.memory_space<vmem>>, %arg2: memref<32x96xf32, #tpu.memory_space<vmem>>, %arg3: memref<1x96xf32, #tpu.memory_space<vmem>>, %arg4: memref<32x32xf32, #tpu.memory_space<vmem>>, %arg5: memref<1x32xf32, #tpu.memory_space<vmem>>, %arg6: memref<32x4xf32, #tpu.memory_space<vmem>>, %arg7: memref<4x32xf32, #tpu.memory_space<vmem>>, %arg8: memref<1x8x32xf32, #tpu.memory_space<vmem>>) attributes {dimension_semantics = [#tpu.dimension_semantics<parallel>], iteration_bounds = array<i64: 2>, scalar_prefetch = 0 : i64, scratch_operands = 0 : i64, tpu.core_type = #tpu.core_type<tc>, window_params = [{transform_indices = @transform_0, window_bounds = array<i64: 1, 8, 32>}, {pipeline_mode = #tpu.pipeline_mode<synchronous>, transform_indices = @transform_1, window_bounds = array<i64: 32, 96>}, {pipeline_mode = #tpu.pipeline_mode<synchronous>, transform_indices = @transform_2, window_bounds = array<i64: 1, 96>}, {pipeline_mode = #tpu.pipeline_mode<synchronous>, transform_indices = @transform_3, window_bounds = array<i64: 32, 32>}, {pipeline_mode = #tpu.pipeline_mode<synchronous>, transform_indices = @transform_4, window_bounds = array<i64: 1, 32>}, {pipeline_mode = #tpu.pipeline_mode<synchronous>, transform_indices = @transform_5, window_bounds = array<i64: 32, 4>}, {pipeline_mode = #tpu.pipeline_mode<synchronous>, transform_indices = @transform_6, window_bounds = array<i64: 4, 32>}, {transform_indices = @transform_7, window_bounds = array<i64: 1, 8, 32>}]} {
    %c0 = arith.constant 0 : index
    %c0_0 = arith.constant 0 : index
    %c0_1 = arith.constant 0 : index
    %0 = vector.load %arg1[%c0, %c0_0, %c0_1] : memref<1x8x32xf32, #tpu.memory_space<vmem>>, vector<1x8x32xf32>
    %1 = vector.shape_cast %0 : vector<1x8x32xf32> to vector<8x32xf32>
    %c0_2 = arith.constant 0 : index
    %c0_3 = arith.constant 0 : index
    %2 = vector.load %arg2[%c0_2, %c0_3] : memref<32x96xf32, #tpu.memory_space<vmem>>, vector<32x96xf32>
    %cst = arith.constant dense<0.000000e+00> : vector<8x96xf32>
    %3 = tpu.matmul %1, %2, %cst {dimension_numbers = #tpu.dot_dimension_numbers<[1], [0], [0], [1], [0, 0, 1, 1], [], []>, precision = #tpu.contract_precision<fp32>} : vector<8x32xf32>, vector<32x96xf32>, vector<8x96xf32> -> vector<8x96xf32>
    %c0_4 = arith.constant 0 : index
    %c0_5 = arith.constant 0 : index
    %4 = vector.load %arg3[%c0_4, %c0_5] : memref<1x96xf32, #tpu.memory_space<vmem>>, vector<1x96xf32>
    %5 = vector.broadcast %4 : vector<1x96xf32> to vector<8x96xf32>
    %6 = arith.addf %3, %5 : vector<8x96xf32>
    %7 = vector.extract_strided_slice %6 {offsets = [0, 0], sizes = [8, 32], strides = [1, 1]} : vector<8x96xf32> to vector<8x32xf32>
    %8 = arith.negf %7 : vector<8x32xf32>
    %9 = math.exp %8 : vector<8x32xf32>
    %cst_6 = arith.constant 1.000000e+00 : f32
    %10 = vector.broadcast %cst_6 : f32 to vector<8x32xf32>
    %11 = arith.addf %10, %9 : vector<8x32xf32>
    %12 = arith.divf %10, %11 : vector<8x32xf32>
    %13 = vector.extract_strided_slice %6 {offsets = [0, 32], sizes = [8, 32], strides = [1, 1]} : vector<8x96xf32> to vector<8x32xf32>
    %14 = arith.negf %13 : vector<8x32xf32>
    %15 = math.exp %14 : vector<8x32xf32>
    %cst_7 = arith.constant 1.000000e+00 : f32
    %16 = vector.broadcast %cst_7 : f32 to vector<8x32xf32>
    %17 = arith.addf %16, %15 : vector<8x32xf32>
    %18 = arith.divf %16, %17 : vector<8x32xf32>
    %19 = vector.extract_strided_slice %6 {offsets = [0, 64], sizes = [8, 32], strides = [1, 1]} : vector<8x96xf32> to vector<8x32xf32>
    %c0_8 = arith.constant 0 : index
    %c0_9 = arith.constant 0 : index
    %20 = vector.load %arg6[%c0_8, %c0_9] : memref<32x4xf32, #tpu.memory_space<vmem>>, vector<32x4xf32>
    %c0_10 = arith.constant 0 : index
    %c0_11 = arith.constant 0 : index
    %21 = vector.load %arg7[%c0_10, %c0_11] : memref<4x32xf32, #tpu.memory_space<vmem>>, vector<4x32xf32>
    %22 = vector.shape_cast %12 : vector<8x32xf32> to vector<1x8x32xf32>
    %23 = vector.shape_cast %18 : vector<8x32xf32> to vector<1x8x32xf32>
    %cst_12 = arith.constant dense<0.000000e+00> : vector<1x32xf32>
    %24 = vector.multi_reduction <add>, %23, %cst_12 [1] : vector<1x8x32xf32> to vector<1x32xf32>
    %25 = vector.shape_cast %24 : vector<1x32xf32> to vector<1x1x32xf32>
    %cst_13 = arith.constant dense<0.000000e+00> : vector<1x32xf32>
    %26 = vector.multi_reduction <add>, %22, %cst_13 [1] : vector<1x8x32xf32> to vector<1x32xf32>
    %27 = vector.shape_cast %26 : vector<1x32xf32> to vector<1x1x32xf32>
    %28 = vector.broadcast %25 : vector<1x1x32xf32> to vector<1x8x32xf32>
    %29 = arith.mulf %22, %28 : vector<1x8x32xf32>
    %30 = vector.shape_cast %29 : vector<1x8x32xf32> to vector<8x32xf32>
    %cst_14 = arith.constant dense<0.000000e+00> : vector<8x4xf32>
    %31 = tpu.matmul %30, %20, %cst_14 {dimension_numbers = #tpu.dot_dimension_numbers<[1], [0], [0], [1], [0, 0, 1, 1], [], []>, precision = #tpu.contract_precision<fp32>} : vector<8x32xf32>, vector<32x4xf32>, vector<8x4xf32> -> vector<8x4xf32>
    %32 = vector.broadcast %27 : vector<1x1x32xf32> to vector<1x8x32xf32>
    %33 = arith.mulf %23, %32 : vector<1x8x32xf32>
    %34 = vector.shape_cast %33 : vector<1x8x32xf32> to vector<8x32xf32>
    %cst_15 = arith.constant dense<0.000000e+00> : vector<8x4xf32>
    %35 = tpu.matmul %34, %20, %cst_15 {dimension_numbers = #tpu.dot_dimension_numbers<[1], [0], [0], [1], [0, 0, 1, 1], [], []>, precision = #tpu.contract_precision<fp32>} : vector<8x32xf32>, vector<32x4xf32>, vector<8x4xf32> -> vector<8x4xf32>
    %cst_16 = arith.constant 1.000000e+00 : f32
    %36 = vector.broadcast %cst_16 : f32 to vector<8x4xf32>
    %37 = arith.divf %36, %31 : vector<8x4xf32>
    %cst_17 = arith.constant 1.000000e+00 : f32
    %38 = vector.broadcast %cst_17 : f32 to vector<8x4xf32>
    %39 = arith.divf %38, %35 : vector<8x4xf32>
    %cst_18 = arith.constant dense<0.000000e+00> : vector<8x32xf32>
    %40 = tpu.matmul %39, %21, %cst_18 {dimension_numbers = #tpu.dot_dimension_numbers<[1], [0], [0], [1], [0, 0, 1, 1], [], []>, precision = #tpu.contract_precision<fp32>} : vector<8x4xf32>, vector<4x32xf32>, vector<8x32xf32> -> vector<8x32xf32>
    %41 = arith.mulf %18, %40 : vector<8x32xf32>
    %42 = vector.shape_cast %41 : vector<8x32xf32> to vector<1x8x32xf32>
    %cst_19 = arith.constant dense<0.000000e+00> : vector<1x32xf32>
    %43 = vector.multi_reduction <add>, %42, %cst_19 [1] : vector<1x8x32xf32> to vector<1x32xf32>
    %44 = vector.shape_cast %43 : vector<1x32xf32> to vector<1x1x32xf32>
    %45 = vector.broadcast %44 : vector<1x1x32xf32> to vector<1x8x32xf32>
    %46 = arith.mulf %22, %45 : vector<1x8x32xf32>
    %47 = vector.shape_cast %46 : vector<1x8x32xf32> to vector<8x32xf32>
    %cst_20 = arith.constant dense<0.000000e+00> : vector<8x4xf32>
    %48 = tpu.matmul %47, %20, %cst_20 {dimension_numbers = #tpu.dot_dimension_numbers<[1], [0], [0], [1], [0, 0, 1, 1], [], []>, precision = #tpu.contract_precision<fp32>} : vector<8x32xf32>, vector<32x4xf32>, vector<8x4xf32> -> vector<8x4xf32>
    %cst_21 = arith.constant dense<0.000000e+00> : vector<8x32xf32>
    %49 = tpu.matmul %37, %21, %cst_21 {dimension_numbers = #tpu.dot_dimension_numbers<[1], [0], [0], [1], [0, 0, 1, 1], [], []>, precision = #tpu.contract_precision<fp32>} : vector<8x4xf32>, vector<4x32xf32>, vector<8x32xf32> -> vector<8x32xf32>
    %50 = arith.mulf %12, %49 : vector<8x32xf32>
    %51 = vector.shape_cast %50 : vector<8x32xf32> to vector<1x8x32xf32>
    %cst_22 = arith.constant dense<0.000000e+00> : vector<1x32xf32>
    %52 = vector.multi_reduction <add>, %51, %cst_22 [1] : vector<1x8x32xf32> to vector<1x32xf32>
    %53 = vector.shape_cast %52 : vector<1x32xf32> to vector<1x1x32xf32>
    %54 = vector.broadcast %53 : vector<1x1x32xf32> to vector<1x8x32xf32>
    %55 = arith.mulf %23, %54 : vector<1x8x32xf32>
    %56 = vector.shape_cast %55 : vector<1x8x32xf32> to vector<8x32xf32>
    %cst_23 = arith.constant dense<0.000000e+00> : vector<8x4xf32>
    %57 = tpu.matmul %56, %20, %cst_23 {dimension_numbers = #tpu.dot_dimension_numbers<[1], [0], [0], [1], [0, 0, 1, 1], [], []>, precision = #tpu.contract_precision<fp32>} : vector<8x32xf32>, vector<32x4xf32>, vector<8x4xf32> -> vector<8x4xf32>
    %58 = vector.shape_cast %57 : vector<8x4xf32> to vector<1x8x4xf32>
    %cst_24 = arith.constant dense<0xFF800000> : vector<1x4xf32>
    %59 = vector.multi_reduction <maximumf>, %58, %cst_24 [1] : vector<1x8x4xf32> to vector<1x4xf32>
    %60 = vector.shape_cast %59 : vector<1x4xf32> to vector<1x1x4xf32>
    %61 = vector.broadcast %60 : vector<1x1x4xf32> to vector<1x8x4xf32>
    %62 = arith.subf %58, %61 : vector<1x8x4xf32>
    %63 = math.exp %62 : vector<1x8x4xf32>
    %cst_25 = arith.constant dense<0.000000e+00> : vector<1x4xf32>
    %64 = vector.multi_reduction <add>, %63, %cst_25 [1] : vector<1x8x4xf32> to vector<1x4xf32>
    %65 = vector.shape_cast %64 : vector<1x4xf32> to vector<1x1x4xf32>
    %cst_26 = arith.constant 1.000000e+00 : f32
    %66 = vector.broadcast %cst_26 : f32 to vector<1x1x4xf32>
    %67 = arith.divf %66, %65 : vector<1x1x4xf32>
    %68 = vector.broadcast %67 : vector<1x1x4xf32> to vector<1x8x4xf32>
    %69 = arith.mulf %63, %68 : vector<1x8x4xf32>
    %70 = vector.shape_cast %69 : vector<1x8x4xf32> to vector<8x4xf32>
    %cst_27 = arith.constant dense<0.000000e+00> : vector<8x32xf32>
    %71 = tpu.matmul %70, %21, %cst_27 {dimension_numbers = #tpu.dot_dimension_numbers<[1], [0], [0], [1], [0, 0, 1, 1], [], []>, precision = #tpu.contract_precision<fp32>} : vector<8x4xf32>, vector<4x32xf32>, vector<8x32xf32> -> vector<8x32xf32>
    %72 = arith.mulf %19, %71 : vector<8x32xf32>
    %73 = arith.mulf %50, %18 : vector<8x32xf32>
    %cst_28 = arith.constant dense<0.000000e+00> : vector<8x4xf32>
    %74 = tpu.matmul %73, %20, %cst_28 {dimension_numbers = #tpu.dot_dimension_numbers<[1], [0], [0], [1], [0, 0, 1, 1], [], []>, precision = #tpu.contract_precision<fp32>} : vector<8x32xf32>, vector<32x4xf32>, vector<8x4xf32> -> vector<8x4xf32>
    %cst_29 = arith.constant dense<0.000000e+00> : vector<8x32xf32>
    %75 = tpu.matmul %74, %21, %cst_29 {dimension_numbers = #tpu.dot_dimension_numbers<[1], [0], [0], [1], [0, 0, 1, 1], [], []>, precision = #tpu.contract_precision<fp32>} : vector<8x4xf32>, vector<4x32xf32>, vector<8x32xf32> -> vector<8x32xf32>
    %76 = arith.mulf %75, %72 : vector<8x32xf32>
    %c0_i32 = arith.constant 0 : i32
    %77 = vector.extract_strided_slice %18 {offsets = [0, 8], sizes = [8, 24], strides = [1, 1]} : vector<8x32xf32> to vector<8x24xf32>
    %78 = vector.extract_strided_slice %18 {offsets = [0, 0], sizes = [8, 8], strides = [1, 1]} : vector<8x32xf32> to vector<8x8xf32>
    %79 = tpu.concatenate %77, %78 in 1 : vector<8x24xf32>, vector<8x8xf32> -> vector<8x32xf32>
    %80 = vector.extract_strided_slice %72 {offsets = [0, 8], sizes = [8, 24], strides = [1, 1]} : vector<8x32xf32> to vector<8x24xf32>
    %81 = vector.extract_strided_slice %72 {offsets = [0, 0], sizes = [8, 8], strides = [1, 1]} : vector<8x32xf32> to vector<8x8xf32>
    %82 = tpu.concatenate %80, %81 in 1 : vector<8x24xf32>, vector<8x8xf32> -> vector<8x32xf32>
    %83 = arith.mulf %50, %79 : vector<8x32xf32>
    %cst_30 = arith.constant dense<0.000000e+00> : vector<8x4xf32>
    %84 = tpu.matmul %83, %20, %cst_30 {dimension_numbers = #tpu.dot_dimension_numbers<[1], [0], [0], [1], [0, 0, 1, 1], [], []>, precision = #tpu.contract_precision<fp32>} : vector<8x32xf32>, vector<32x4xf32>, vector<8x4xf32> -> vector<8x4xf32>
    %cst_31 = arith.constant dense<0.000000e+00> : vector<8x32xf32>
    %85 = tpu.matmul %84, %21, %cst_31 {dimension_numbers = #tpu.dot_dimension_numbers<[1], [0], [0], [1], [0, 0, 1, 1], [], []>, precision = #tpu.contract_precision<fp32>} : vector<8x4xf32>, vector<4x32xf32>, vector<8x32xf32> -> vector<8x32xf32>
    %86 = arith.mulf %85, %82 : vector<8x32xf32>
    %87 = arith.addf %76, %86 : vector<8x32xf32>
    %c1_i32 = arith.constant 1 : i32
    %88 = vector.extract_strided_slice %79 {offsets = [0, 8], sizes = [8, 24], strides = [1, 1]} : vector<8x32xf32> to vector<8x24xf32>
    %89 = vector.extract_strided_slice %79 {offsets = [0, 0], sizes = [8, 8], strides = [1, 1]} : vector<8x32xf32> to vector<8x8xf32>
    %90 = tpu.concatenate %88, %89 in 1 : vector<8x24xf32>, vector<8x8xf32> -> vector<8x32xf32>
    %91 = vector.extract_strided_slice %82 {offsets = [0, 8], sizes = [8, 24], strides = [1, 1]} : vector<8x32xf32> to vector<8x24xf32>
    %92 = vector.extract_strided_slice %82 {offsets = [0, 0], sizes = [8, 8], strides = [1, 1]} : vector<8x32xf32> to vector<8x8xf32>
    %93 = tpu.concatenate %91, %92 in 1 : vector<8x24xf32>, vector<8x8xf32> -> vector<8x32xf32>
    %94 = arith.mulf %50, %90 : vector<8x32xf32>
    %cst_32 = arith.constant dense<0.000000e+00> : vector<8x4xf32>
    %95 = tpu.matmul %94, %20, %cst_32 {dimension_numbers = #tpu.dot_dimension_numbers<[1], [0], [0], [1], [0, 0, 1, 1], [], []>, precision = #tpu.contract_precision<fp32>} : vector<8x32xf32>, vector<32x4xf32>, vector<8x4xf32> -> vector<8x4xf32>
    %cst_33 = arith.constant dense<0.000000e+00> : vector<8x32xf32>
    %96 = tpu.matmul %95, %21, %cst_33 {dimension_numbers = #tpu.dot_dimension_numbers<[1], [0], [0], [1], [0, 0, 1, 1], [], []>, precision = #tpu.contract_precision<fp32>} : vector<8x4xf32>, vector<4x32xf32>, vector<8x32xf32> -> vector<8x32xf32>
    %97 = arith.mulf %96, %93 : vector<8x32xf32>
    %98 = arith.addf %87, %97 : vector<8x32xf32>
    %c2_i32 = arith.constant 2 : i32
    %99 = vector.extract_strided_slice %90 {offsets = [0, 8], sizes = [8, 24], strides = [1, 1]} : vector<8x32xf32> to vector<8x24xf32>
    %100 = vector.extract_strided_slice %90 {offsets = [0, 0], sizes = [8, 8], strides = [1, 1]} : vector<8x32xf32> to vector<8x8xf32>
    %101 = tpu.concatenate %99, %100 in 1 : vector<8x24xf32>, vector<8x8xf32> -> vector<8x32xf32>
    %102 = vector.extract_strided_slice %93 {offsets = [0, 8], sizes = [8, 24], strides = [1, 1]} : vector<8x32xf32> to vector<8x24xf32>
    %103 = vector.extract_strided_slice %93 {offsets = [0, 0], sizes = [8, 8], strides = [1, 1]} : vector<8x32xf32> to vector<8x8xf32>
    %104 = tpu.concatenate %102, %103 in 1 : vector<8x24xf32>, vector<8x8xf32> -> vector<8x32xf32>
    %105 = arith.mulf %50, %101 : vector<8x32xf32>
    %cst_34 = arith.constant dense<0.000000e+00> : vector<8x4xf32>
    %106 = tpu.matmul %105, %20, %cst_34 {dimension_numbers = #tpu.dot_dimension_numbers<[1], [0], [0], [1], [0, 0, 1, 1], [], []>, precision = #tpu.contract_precision<fp32>} : vector<8x32xf32>, vector<32x4xf32>, vector<8x4xf32> -> vector<8x4xf32>
    %cst_35 = arith.constant dense<0.000000e+00> : vector<8x32xf32>
    %107 = tpu.matmul %106, %21, %cst_35 {dimension_numbers = #tpu.dot_dimension_numbers<[1], [0], [0], [1], [0, 0, 1, 1], [], []>, precision = #tpu.contract_precision<fp32>} : vector<8x4xf32>, vector<4x32xf32>, vector<8x32xf32> -> vector<8x32xf32>
    %108 = arith.mulf %107, %104 : vector<8x32xf32>
    %109 = arith.addf %98, %108 : vector<8x32xf32>
    %110 = arith.negf %48 : vector<8x4xf32>
    %111 = math.exp %110 : vector<8x4xf32>
    %cst_36 = arith.constant 1.000000e+00 : f32
    %112 = vector.broadcast %cst_36 : f32 to vector<8x4xf32>
    %113 = arith.addf %112, %111 : vector<8x4xf32>
    %114 = arith.divf %112, %113 : vector<8x4xf32>
    %cst_37 = arith.constant dense<0.000000e+00> : vector<8x32xf32>
    %115 = tpu.matmul %114, %21, %cst_37 {dimension_numbers = #tpu.dot_dimension_numbers<[1], [0], [0], [1], [0, 0, 1, 1], [], []>, precision = #tpu.contract_precision<fp32>} : vector<8x4xf32>, vector<4x32xf32>, vector<8x32xf32> -> vector<8x32xf32>
    %116 = arith.mulf %109, %115 : vector<8x32xf32>
    %c0_38 = arith.constant 0 : index
    %c0_39 = arith.constant 0 : index
    %117 = vector.load %arg4[%c0_38, %c0_39] : memref<32x32xf32, #tpu.memory_space<vmem>>, vector<32x32xf32>
    %cst_40 = arith.constant dense<0.000000e+00> : vector<8x32xf32>
    %118 = tpu.matmul %116, %117, %cst_40 {dimension_numbers = #tpu.dot_dimension_numbers<[1], [0], [0], [1], [0, 0, 1, 1], [], []>, precision = #tpu.contract_precision<fp32>} : vector<8x32xf32>, vector<32x32xf32>, vector<8x32xf32> -> vector<8x32xf32>
    %c0_41 = arith.constant 0 : index
    %c0_42 = arith.constant 0 : index
    %119 = vector.load %arg5[%c0_41, %c0_42] : memref<1x32xf32, #tpu.memory_space<vmem>>, vector<1x32xf32>
    %120 = vector.broadcast %119 : vector<1x32xf32> to vector<8x32xf32>
    %121 = arith.addf %118, %120 : vector<8x32xf32>
    %122 = vector.shape_cast %121 : vector<8x32xf32> to vector<1x8x32xf32>
    %c0_43 = arith.constant 0 : index
    %c0_44 = arith.constant 0 : index
    %c0_45 = arith.constant 0 : index
    %123 = vector.load %arg8[%c0_43, %c0_44, %c0_45] : memref<1x8x32xf32, #tpu.memory_space<vmem>>, vector<1x8x32xf32>
    tpu.vector_store %arg8[%c0_43, %c0_44, %c0_45], %122 {strides = array<i32>} : memref<1x8x32xf32, #tpu.memory_space<vmem>>, vector<1x8x32xf32>,
    return
  }
  func.func @transform_0(%arg0: i32) -> (i32, i32, i32) {
    %c0_i32 = arith.constant 0 : i32
    %c0_i32_0 = arith.constant 0 : i32
    %c0_i32_1 = arith.constant 0 : i32
    return %arg0, %c0_i32, %c0_i32_0 : i32, i32, i32
  }
  func.func @transform_1(%arg0: i32) -> (i32, i32) {
    %c0_i32 = arith.constant 0 : i32
    %c0_i32_0 = arith.constant 0 : i32
    %c0_i32_1 = arith.constant 0 : i32
    return %c0_i32, %c0_i32_0 : i32, i32
  }
  func.func @transform_2(%arg0: i32) -> (i32, i32) {
    %c0_i32 = arith.constant 0 : i32
    %c0_i32_0 = arith.constant 0 : i32
    %c0_i32_1 = arith.constant 0 : i32
    return %c0_i32, %c0_i32_0 : i32, i32
  }
  func.func @transform_3(%arg0: i32) -> (i32, i32) {
    %c0_i32 = arith.constant 0 : i32
    %c0_i32_0 = arith.constant 0 : i32
    %c0_i32_1 = arith.constant 0 : i32
    return %c0_i32, %c0_i32_0 : i32, i32
  }
  func.func @transform_4(%arg0: i32) -> (i32, i32) {
    %c0_i32 = arith.constant 0 : i32
    %c0_i32_0 = arith.constant 0 : i32
    %c0_i32_1 = arith.constant 0 : i32
    return %c0_i32, %c0_i32_0 : i32, i32
  }
  func.func @transform_5(%arg0: i32) -> (i32, i32) {
    %c0_i32 = arith.constant 0 : i32
    %c0_i32_0 = arith.constant 0 : i32
    %c0_i32_1 = arith.constant 0 : i32
    return %c0_i32, %c0_i32_0 : i32, i32
  }
  func.func @transform_6(%arg0: i32) -> (i32, i32) {
    %c0_i32 = arith.constant 0 : i32
    %c0_i32_0 = arith.constant 0 : i32
    %c0_i32_1 = arith.constant 0 : i32
    return %c0_i32, %c0_i32_0 : i32, i32
  }
  func.func @transform_7(%arg0: i32) -> (i32, i32, i32) {
    %c0_i32 = arith.constant 0 : i32
    %c0_i32_0 = arith.constant 0 : i32
    %c0_i32_1 = arith.constant 0 : i32
    return %arg0, %c0_i32, %c0_i32_0 : i32, i32, i32
  }
}

module attributes {stable_mosaic.version = 11 : i64} {
  func.func @_flow_attention_kernel(%arg0: i32, %arg1: memref<1x8x32xf32, #tpu.memory_space<vmem>>, %arg2: memref<32x96xf32, #tpu.memory_space<vmem>>, %arg3: memref<1x96xf32, #tpu.memory_space<vmem>>, %arg4: memref<32x32xf32, #tpu.memory_space<vmem>>, %arg5: memref<1x32xf32, #tpu.memory_space<vmem>>, %arg6: memref<32x4xf32, #tpu.memory_space<vmem>>, %arg7: memref<4x32xf32, #tpu.memory_space<vmem>>, %arg8: memref<1x8x32xf32, #tpu.memory_space<vmem>>) attributes {dimension_semantics = [#tpu.dimension_semantics<parallel>], iteration_bounds = array<i64: 2>, scalar_prefetch = 0 : i64, scratch_operands = 0 : i64, tpu.core_type = #tpu.core_type<tc>, window_params = [{transform_indices = @transform_0, window_bounds = array<i64: 1, 8, 32>}, {pipeline_mode = #tpu.pipeline_mode<synchronous>, transform_indices = @transform_1, window_bounds = array<i64: 32, 96>}, {pipeline_mode = #tpu.pipeline_mode<synchronous>, transform_indices = @transform_2, window_bounds = array<i64: 1, 96>}, {pipeline_mode = #tpu.pipeline_mode<synchronous>, transform_indices = @transform_3, window_bounds = array<i64: 32, 32>}, {pipeline_mode = #tpu.pipeline_mode<synchronous>, transform_indices = @transform_4, window_bounds = array<i64: 1, 32>}, {pipeline_mode = #tpu.pipeline_mode<synchronous>, transform_indices = @transform_5, window_bounds = array<i64: 32, 4>}, {pipeline_mode = #tpu.pipeline_mode<synchronous>, transform_indices = @transform_6, window_bounds = array<i64: 4, 32>}, {transform_indices = @transform_7, window_bounds = array<i64: 1, 8, 32>}]} {
    %c0 = arith.constant 0 : index
    %c0_0 = arith.constant 0 : index
    %c0_1 = arith.constant 0 : index
    %0 = vector.load %arg1[%c0, %c0_0, %c0_1] : memref<1x8x32xf32, #tpu.memory_space<vmem>>, vector<1x8x32xf32>
    %1 = vector.shape_cast %0 : vector<1x8x32xf32> to vector<8x32xf32>
    %c0_2 = arith.constant 0 : index
    %c0_3 = arith.constant 0 : index
    %2 = vector.load %arg2[%c0_2, %c0_3] : memref<32x96xf32, #tpu.memory_space<vmem>>, vector<32x96xf32>
    %cst = arith.constant dense<0.000000e+00> : vector<8x96xf32>
    %3 = tpu.matmul %1, %2, %cst {dimension_numbers = #tpu.dot_dimension_numbers<[1], [0], [0], [1], [0, 0, 1, 1], [], []>, precision = #tpu.contract_precision<fp32>} : vector<8x32xf32>, vector<32x96xf32>, vector<8x96xf32> -> vector<8x96xf32>
    %c0_4 = arith.constant 0 : index
    %c0_5 = arith.constant 0 : index
    %4 = vector.load %arg3[%c0_4, %c0_5] : memref<1x96xf32, #tpu.memory_space<vmem>>, vector<1x96xf32>
    %5 = vector.broadcast %4 : vector<1x96xf32> to vector<8x96xf32>
    %6 = arith.addf %3, %5 : vector<8x96xf32>
    %7 = vector.extract_strided_slice %6 {offsets = [0, 0], sizes = [8, 32], strides = [1, 1]} : vector<8x96xf32> to vector<8x32xf32>
    %8 = arith.negf %7 : vector<8x32xf32>
    %9 = math.exp %8 : vector<8x32xf32>
    %cst_6 = arith.constant 1.000000e+00 : f32
    %10 = vector.broadcast %cst_6 : f32 to vector<8x32xf32>
    %11 = arith.addf %10, %9 : vector<8x32xf32>
    %12 = arith.divf %10, %11 : vector<8x32xf32>
    %13 = vector.extract_strided_slice %6 {offsets = [0, 32], sizes = [8, 32], strides = [1, 1]} : vector<8x96xf32> to vector<8x32xf32>
    %14 = arith.negf %13 : vector<8x32xf32>
    %15 = math.exp %14 : vector<8x32xf32>
    %cst_7 = arith.constant 1.000000e+00 : f32
    %16 = vector.broadcast %cst_7 : f32 to vector<8x32xf32>
    %17 = arith.addf %16, %15 : vector<8x32xf32>
    %18 = arith.divf %16, %17 : vector<8x32xf32>
    %19 = vector.extract_strided_slice %6 {offsets = [0, 64], sizes = [8, 32], strides = [1, 1]} : vector<8x96xf32> to vector<8x32xf32>
    %c0_8 = arith.constant 0 : index
    %c0_9 = arith.constant 0 : index
    %20 = vector.load %arg6[%c0_8, %c0_9] : memref<32x4xf32, #tpu.memory_space<vmem>>, vector<32x4xf32>
    %c0_10 = arith.constant 0 : index
    %c0_11 = arith.constant 0 : index
    %21 = vector.load %arg7[%c0_10, %c0_11] : memref<4x32xf32, #tpu.memory_space<vmem>>, vector<4x32xf32>
    %22 = vector.shape_cast %12 : vector<8x32xf32> to vector<1x8x32xf32>
    %23 = vector.shape_cast %18 : vector<8x32xf32> to vector<1x8x32xf32>
    %cst_12 = arith.constant dense<0.000000e+00> : vector<1x32xf32>
    %24 = vector.multi_reduction <add>, %23, %cst_12 [1] : vector<1x8x32xf32> to vector<1x32xf32>
    %25 = vector.shape_cast %24 : vector<1x32xf32> to vector<1x1x32xf32>
    %cst_13 = arith.constant dense<0.000000e+00> : vector<1x32xf32>
    %26 = vector.multi_reduction <add>, %22, %cst_13 [1] : vector<1x8x32xf32> to vector<1x32xf32>
    %27 = vector.shape_cast %26 : vector<1x32xf32> to vector<1x1x32xf32>
    %28 = vector.broadcast %25 : vector<1x1x32xf32> to vector<1x8x32xf32>
    %29 = arith.mulf %22, %28 : vector<1x8x32xf32>
    %30 = vector.shape_cast %29 : vector<1x8x32xf32> to vector<8x32xf32>
    %cst_14 = arith.constant dense<0.000000e+00> : vector<8x4xf32>
    %31 = tpu.matmul %30, %20, %cst_14 {dimension_numbers = #tpu.dot_dimension_numbers<[1], [0], [0], [1], [0, 0, 1, 1], [], []>, precision = #tpu.contract_precision<fp32>} : vector<8x32xf32>, vector<32x4xf32>, vector<8x4xf32> -> vector<8x4xf32>
    %32 = vector.broadcast %27 : vector<1x1x32xf32> to vector<1x8x32xf32>
    %33 = arith.mulf %23, %32 : vector<1x8x32xf32>
    %34 = vector.shape_cast %33 : vector<1x8x32xf32> to vector<8x32xf32>
    %cst_15 = arith.constant dense<0.000000e+00> : vector<8x4xf32>
    %35 = tpu.matmul %34, %20, %cst_15 {dimension_numbers = #tpu.dot_dimension_numbers<[1], [0], [0], [1], [0, 0, 1, 1], [], []>, precision = #tpu.contract_precision<fp32>} : vector<8x32xf32>, vector<32x4xf32>, vector<8x4xf32> -> vector<8x4xf32>
    %cst_16 = arith.constant 1.000000e+00 : f32
    %36 = vector.broadcast %cst_16 : f32 to vector<8x4xf32>
    %37 = arith.divf %36, %31 : vector<8x4xf32>
    %cst_17 = arith.constant 1.000000e+00 : f32
    %38 = vector.broadcast %cst_17 : f32 to vector<8x4xf32>
    %39 = arith.divf %38, %35 : vector<8x4xf32>
    %cst_18 = arith.constant dense<0.000000e+00> : vector<8x32xf32>
    %40 = tpu.matmul %39, %21, %cst_18 {dimension_numbers = #tpu.dot_dimension_numbers<[1], [0], [0], [1], [0, 0, 1, 1], [], []>, precision = #tpu.contract_precision<fp32>} : vector<8x4xf32>, vector<4x32xf32>, vector<8x32xf32> -> vector<8x32xf32>
    %41 = arith.mulf %18, %40 : vector<8x32xf32>
    %42 = vector.shape_cast %41 : vector<8x32xf32> to vector<1x8x32xf32>
    %cst_19 = arith.constant dense<0.000000e+00> : vector<1x32xf32>
    %43 = vector.multi_reduction <add>, %42, %cst_19 [1] : vector<1x8x32xf32> to vector<1x32xf32>
    %44 = vector.shape_cast %43 : vector<1x32xf32> to vector<1x1x32xf32>
    %45 = vector.broadcast %44 : vector<1x1x32xf32> to vector<1x8x32xf32>
    %46 = arith.mulf %22, %45 : vector<1x8x32xf32>
    %47 = vector.shape_cast %46 : vector<1x8x32xf32> to vector<8x32xf32>
    %cst_20 = arith.constant dense<0.000000e+00> : vector<8x4xf32>
    %48 = tpu.matmul %47, %20, %cst_20 {dimension_numbers = #tpu.dot_dimension_numbers<[1], [0], [0], [1], [0, 0, 1, 1], [], []>, precision = #tpu.contract_precision<fp32>} : vector<8x32xf32>, vector<32x4xf32>, vector<8x4xf32> -> vector<8x4xf32>
    %cst_21 = arith.constant dense<0.000000e+00> : vector<8x32xf32>
    %49 = tpu.matmul %37, %21, %cst_21 {dimension_numbers = #tpu.dot_dimension_numbers<[1], [0], [0], [1], [0, 0, 1, 1], [], []>, precision = #tpu.contract_precision<fp32>} : vector<8x4xf32>, vector<4x32xf32>, vector<8x32xf32> -> vector<8x32xf32>
    %50 = arith.mulf %12, %49 : vector<8x32xf32>
    %51 = vector.shape_cast %50 : vector<8x32xf32> to vector<1x8x32xf32>
    %cst_22 = arith.constant dense<0.000000e+00> : vector<1x32xf32>
    %52 = vector.multi_reduction <add>, %51, %cst_22 [1] : vector<1x8x32xf32> to vector<1x32xf32>
    %53 = vector.shape_cast %52 : vector<1x32xf32> to vector<1x1x32xf32>
    %54 = vector.broadcast %53 : vector<1x1x32xf32> to vector<1x8x32xf32>
    %55 = arith.mulf %23, %54 : vector<1x8x32xf32>
    %56 = vector.shape_cast %55 : vector<1x8x32xf32> to vector<8x32xf32>
    %cst_23 = arith.constant dense<0.000000e+00> : vector<8x4xf32>
    %57 = tpu.matmul %56, %20, %cst_23 {dimension_numbers = #tpu.dot_dimension_numbers<[1], [0], [0], [1], [0, 0, 1, 1], [], []>, precision = #tpu.contract_precision<fp32>} : vector<8x32xf32>, vector<32x4xf32>, vector<8x4xf32> -> vector<8x4xf32>
    %58 = vector.shape_cast %57 : vector<8x4xf32> to vector<1x8x4xf32>
    %cst_24 = arith.constant dense<0xFF800000> : vector<1x4xf32>
    %59 = vector.multi_reduction <maximumf>, %58, %cst_24 [1] : vector<1x8x4xf32> to vector<1x4xf32>
    %60 = vector.shape_cast %59 : vector<1x4xf32> to vector<1x1x4xf32>
    %61 = vector.broadcast %60 : vector<1x1x4xf32> to vector<1x8x4xf32>
    %62 = arith.subf %58, %61 : vector<1x8x4xf32>
    %63 = math.exp %62 : vector<1x8x4xf32>
    %cst_25 = arith.constant dense<0.000000e+00> : vector<1x4xf32>
    %64 = vector.multi_reduction <add>, %63, %cst_25 [1] : vector<1x8x4xf32> to vector<1x4xf32>
    %65 = vector.shape_cast %64 : vector<1x4xf32> to vector<1x1x4xf32>
    %cst_26 = arith.constant 1.000000e+00 : f32
    %66 = vector.broadcast %cst_26 : f32 to vector<1x1x4xf32>
    %67 = arith.divf %66, %65 : vector<1x1x4xf32>
    %68 = vector.broadcast %67 : vector<1x1x4xf32> to vector<1x8x4xf32>
    %69 = arith.mulf %63, %68 : vector<1x8x4xf32>
    %70 = vector.shape_cast %69 : vector<1x8x4xf32> to vector<8x4xf32>
    %cst_27 = arith.constant dense<0.000000e+00> : vector<8x32xf32>
    %71 = tpu.matmul %70, %21, %cst_27 {dimension_numbers = #tpu.dot_dimension_numbers<[1], [0], [0], [1], [0, 0, 1, 1], [], []>, precision = #tpu.contract_precision<fp32>} : vector<8x4xf32>, vector<4x32xf32>, vector<8x32xf32> -> vector<8x32xf32>
    %72 = arith.mulf %19, %71 : vector<8x32xf32>
    %73 = arith.mulf %50, %18 : vector<8x32xf32>
    %cst_28 = arith.constant dense<0.000000e+00> : vector<8x4xf32>
    %74 = tpu.matmul %73, %20, %cst_28 {dimension_numbers = #tpu.dot_dimension_numbers<[1], [0], [0], [1], [0, 0, 1, 1], [], []>, precision = #tpu.contract_precision<fp32>} : vector<8x32xf32>, vector<32x4xf32>, vector<8x4xf32> -> vector<8x4xf32>
    %cst_29 = arith.constant dense<0.000000e+00> : vector<8x32xf32>
    %75 = tpu.matmul %74, %21, %cst_29 {dimension_numbers = #tpu.dot_dimension_numbers<[1], [0], [0], [1], [0, 0, 1, 1], [], []>, precision = #tpu.contract_precision<fp32>} : vector<8x4xf32>, vector<4x32xf32>, vector<8x32xf32> -> vector<8x32xf32>
    %76 = arith.mulf %75, %72 : vector<8x32xf32>
    %c0_i32 = arith.constant 0 : i32
    %77 = vector.extract_strided_slice %18 {offsets = [0, 8], sizes = [8, 24], strides = [1, 1]} : vector<8x32xf32> to vector<8x24xf32>
    %78 = vector.extract_strided_slice %18 {offsets = [0, 0], sizes = [8, 8], strides = [1, 1]} : vector<8x32xf32> to vector<8x8xf32>
    %79 = tpu.concatenate %77, %78 in 1 : vector<8x24xf32>, vector<8x8xf32> -> vector<8x32xf32>
    %80 = vector.extract_strided_slice %72 {offsets = [0, 8], sizes = [8, 24], strides = [1, 1]} : vector<8x32xf32> to vector<8x24xf32>
    %81 = vector.extract_strided_slice %72 {offsets = [0, 0], sizes = [8, 8], strides = [1, 1]} : vector<8x32xf32> to vector<8x8xf32>
    %82 = tpu.concatenate %80, %81 in 1 : vector<8x24xf32>, vector<8x8xf32> -> vector<8x32xf32>
    %83 = arith.mulf %50, %79 : vector<8x32xf32>
    %cst_30 = arith.constant dense<0.000000e+00> : vector<8x4xf32>
    %84 = tpu.matmul %83, %20, %cst_30 {dimension_numbers = #tpu.dot_dimension_numbers<[1], [0], [0], [1], [0, 0, 1, 1], [], []>, precision = #tpu.contract_precision<fp32>} : vector<8x32xf32>, vector<32x4xf32>, vector<8x4xf32> -> vector<8x4xf32>
    %cst_31 = arith.constant dense<0.000000e+00> : vector<8x32xf32>
    %85 = tpu.matmul %84, %21, %cst_31 {dimension_numbers = #tpu.dot_dimension_numbers<[1], [0], [0], [1], [0, 0, 1, 1], [], []>, precision = #tpu.contract_precision<fp32>} : vector<8x4xf32>, vector<4x32xf32>, vector<8x32xf32> -> vector<8x32xf32>
    %86 = arith.mulf %85, %82 : vector<8x32xf32>
    %87 = arith.addf %76, %86 : vector<8x32xf32>
    %c1_i32 = arith.constant 1 : i32
    %88 = vector.extract_strided_slice %79 {offsets = [0, 8], sizes = [8, 24], strides = [1, 1]} : vector<8x32xf32> to vector<8x24xf32>
    %89 = vector.extract_strided_slice %79 {offsets = [0, 0], sizes = [8, 8], strides = [1, 1]} : vector<8x32xf32> to vector<8x8xf32>
    %90 = tpu.concatenate %88, %89 in 1 : vector<8x24xf32>, vector<8x8xf32> -> vector<8x32xf32>
    %91 = vector.extract_strided_slice %82 {offsets = [0, 8], sizes = [8, 24], strides = [1, 1]} : vector<8x32xf32> to vector<8x24xf32>
    %92 = vector.extract_strided_slice %82 {offsets = [0, 0], sizes = [8, 8], strides = [1, 1]} : vector<8x32xf32> to vector<8x8xf32>
    %93 = tpu.concatenate %91, %92 in 1 : vector<8x24xf32>, vector<8x8xf32> -> vector<8x32xf32>
    %94 = arith.mulf %50, %90 : vector<8x32xf32>
    %cst_32 = arith.constant dense<0.000000e+00> : vector<8x4xf32>
    %95 = tpu.matmul %94, %20, %cst_32 {dimension_numbers = #tpu.dot_dimension_numbers<[1], [0], [0], [1], [0, 0, 1, 1], [], []>, precision = #tpu.contract_precision<fp32>} : vector<8x32xf32>, vector<32x4xf32>, vector<8x4xf32> -> vector<8x4xf32>
    %cst_33 = arith.constant dense<0.000000e+00> : vector<8x32xf32>
    %96 = tpu.matmul %95, %21, %cst_33 {dimension_numbers = #tpu.dot_dimension_numbers<[1], [0], [0], [1], [0, 0, 1, 1], [], []>, precision = #tpu.contract_precision<fp32>} : vector<8x4xf32>, vector<4x32xf32>, vector<8x32xf32> -> vector<8x32xf32>
    %97 = arith.mulf %96, %93 : vector<8x32xf32>
    %98 = arith.addf %87, %97 : vector<8x32xf32>
    %c2_i32 = arith.constant 2 : i32
    %99 = vector.extract_strided_slice %90 {offsets = [0, 8], sizes = [8, 24], strides = [1, 1]} : vector<8x32xf32> to vector<8x24xf32>
    %100 = vector.extract_strided_slice %90 {offsets = [0, 0], sizes = [8, 8], strides = [1, 1]} : vector<8x32xf32> to vector<8x8xf32>
    %101 = tpu.concatenate %99, %100 in 1 : vector<8x24xf32>, vector<8x8xf32> -> vector<8x32xf32>
    %102 = vector.extract_strided_slice %93 {offsets = [0, 8], sizes = [8, 24], strides = [1, 1]} : vector<8x32xf32> to vector<8x24xf32>
    %103 = vector.extract_strided_slice %93 {offsets = [0, 0], sizes = [8, 8], strides = [1, 1]} : vector<8x32xf32> to vector<8x8xf32>
    %104 = tpu.concatenate %102, %103 in 1 : vector<8x24xf32>, vector<8x8xf32> -> vector<8x32xf32>
    %105 = arith.mulf %50, %101 : vector<8x32xf32>
    %cst_34 = arith.constant dense<0.000000e+00> : vector<8x4xf32>
    %106 = tpu.matmul %105, %20, %cst_34 {dimension_numbers = #tpu.dot_dimension_numbers<[1], [0], [0], [1], [0, 0, 1, 1], [], []>, precision = #tpu.contract_precision<fp32>} : vector<8x32xf32>, vector<32x4xf32>, vector<8x4xf32> -> vector<8x4xf32>
    %cst_35 = arith.constant dense<0.000000e+00> : vector<8x32xf32>
    %107 = tpu.matmul %106, %21, %cst_35 {dimension_numbers = #tpu.dot_dimension_numbers<[1], [0], [0], [1], [0, 0, 1, 1], [], []>, precision = #tpu.contract_precision<fp32>} : vector<8x4xf32>, vector<4x32xf32>, vector<8x32xf32> -> vector<8x32xf32>
    %108 = arith.mulf %107, %104 : vector<8x32xf32>
    %109 = arith.addf %98, %108 : vector<8x32xf32>
    %110 = arith.negf %48 : vector<8x4xf32>
    %111 = math.exp %110 : vector<8x4xf32>
    %cst_36 = arith.constant 1.000000e+00 : f32
    %112 = vector.broadcast %cst_36 : f32 to vector<8x4xf32>
    %113 = arith.addf %112, %111 : vector<8x4xf32>
    %114 = arith.divf %112, %113 : vector<8x4xf32>
    %cst_37 = arith.constant dense<0.000000e+00> : vector<8x32xf32>
    %115 = tpu.matmul %114, %21, %cst_37 {dimension_numbers = #tpu.dot_dimension_numbers<[1], [0], [0], [1], [0, 0, 1, 1], [], []>, precision = #tpu.contract_precision<fp32>} : vector<8x4xf32>, vector<4x32xf32>, vector<8x32xf32> -> vector<8x32xf32>
    %116 = arith.mulf %109, %115 : vector<8x32xf32>
    %c0_38 = arith.constant 0 : index
    %c0_39 = arith.constant 0 : index
    %117 = vector.load %arg4[%c0_38, %c0_39] : memref<32x32xf32, #tpu.memory_space<vmem>>, vector<32x32xf32>
    %cst_40 = arith.constant dense<0.000000e+00> : vector<8x32xf32>
    %118 = tpu.matmul %116, %117, %cst_40 {dimension_numbers = #tpu.dot_dimension_numbers<[1], [0], [0], [1], [0, 0, 1, 1], [], []>, precision = #tpu.contract_precision<fp32>} : vector<8x32xf32>, vector<32x32xf32>, vector<8x32xf32> -> vector<8x32xf32>
    %c0_41 = arith.constant 0 : index
    %c0_42 = arith.constant 0 : index
    %119 = vector.load %arg5[%c0_41, %c0_42] : memref<1x32xf32, #tpu.memory_space<vmem>>, vector<1x32xf32>
    %120 = vector.broadcast %119 : vector<1x32xf32> to vector<8x32xf32>
    %121 = arith.addf %118, %120 : vector<8x32xf32>
    %122 = vector.shape_cast %121 : vector<8x32xf32> to vector<1x8x32xf32>
    %c0_43 = arith.constant 0 : index
    %c0_44 = arith.constant 0 : index
    %c0_45 = arith.constant 0 : index
    %123 = vector.load %arg8[%c0_43, %c0_44, %c0_45] : memref<1x8x32xf32, #tpu.memory_space<vmem>>, vector<1x8x32xf32>
    tpu.vector_store %arg8[%c0_43, %c0_44, %c0_45], %122 {strides = array<i32>} : memref<1x8x32xf32, #tpu.memory_space<vmem>>, vector<1x8x32xf32>,
    return
  }
  func.func @transform_0(%arg0: i32) -> (i32, i32, i32) {
    %c0_i32 = arith.constant 0 : i32
    %c0_i32_0 = arith.constant 0 : i32
    %c0_i32_1 = arith.constant 0 : i32
    return %arg0, %c0_i32, %c0_i32_0 : i32, i32, i32
  }
  func.func @transform_1(%arg0: i32) -> (i32, i32) {
    %c0_i32 = arith.constant 0 : i32
    %c0_i32_0 = arith.constant 0 : i32
    %c0_i32_1 = arith.constant 0 : i32
    return %c0_i32, %c0_i32_0 : i32, i32
  }
  func.func @transform_2(%arg0: i32) -> (i32, i32) {
    %c0_i32 = arith.constant 0 : i32
    %c0_i32_0 = arith.constant 0 : i32
    %c0_i32_1 = arith.constant 0 : i32
    return %c0_i32, %c0_i32_0 : i32, i32
  }
  func.func @transform_3(%arg0: i32) -> (i32, i32) {
    %c0_i32 = arith.constant 0 : i32
    %c0_i32_0 = arith.constant 0 : i32
    %c0_i32_1 = arith.constant 0 : i32
    return %c0_i32, %c0_i32_0 : i32, i32
  }
  func.func @transform_4(%arg0: i32) -> (i32, i32) {
    %c0_i32 = arith.constant 0 : i32
    %c0_i32_0 = arith.constant 0 : i32
    %c0_i32_1 = arith.constant 0 : i32
    return %c0_i32, %c0_i32_0 : i32, i32
  }
  func.func @transform_5(%arg0: i32) -> (i32, i32) {
    %c0_i32 = arith.constant 0 : i32
    %c0_i32_0 = arith.constant 0 : i32
    %c0_i32_1 = arith.constant 0 : i32
    return %c0_i32, %c0_i32_0 : i32, i32
  }
  func.func @transform_6(%arg0: i32) -> (i32, i32) {
    %c0_i32 = arith.constant 0 : i32
    %c0_i32_0 = arith.constant 0 : i32
    %c0_i32_1 = arith.constant 0 : i32
    return %c0_i32, %c0_i32_0 : i32, i32
  }
  func.func @transform_7(%arg0: i32) -> (i32, i32, i32) {
    %c0_i32 = arith.constant 0 : i32
    %c0_i32_0 = arith.constant 0 : i32
    %c0_i32_1 = arith.constant 0 : i32
    return %arg0, %c0_i32, %c0_i32_0 : i32, i32, i32
  }
}

</mosaic_0001>

<llo_original>
// kernel: tpu_custom_call.1
$region0: #{tpu_custom_call.1}
  #allocation0 [shape = 'u32[]', space=smem, size = 0x4, offset = 0x4, fixed_abs, tag = 'smem constant byte address 0x4 - core index']
  #allocation1 [shape = 'u32[72,128]{1,0:T(1,128)}', space=vmem, size = 0x9000, scoped, tag = 'internal scratch']
  %s0 = inlined_call_operand.hbm [shape: f32[2,8,32], index: 0, kind: input, shape index: {}]
  %s1 = inlined_call_operand.vmem [shape: f32[32,96], index: 1, kind: input, shape index: {}]
  %s2 = inlined_call_operand.hbm [shape: f32[1,96], index: 2, kind: input, shape index: {}]
  %s3 = inlined_call_operand.hbm [shape: f32[32,32], index: 3, kind: input, shape index: {}]
  %s4 = inlined_call_operand.hbm [shape: f32[1,32], index: 4, kind: input, shape index: {}]
  %s5 = inlined_call_operand.vmem [shape: f32[32,4], index: 5, kind: input, shape index: {}]
  %s6 = inlined_call_operand.vmem [shape: f32[4,32], index: 6, kind: input, shape index: {}]
  %s7 = inlined_call_operand.hbm [shape: f32[2,8,32], index: 7, kind: output, shape index: {}]
  %s8 = sld [smem:[#allocation0]]
  $region77: #{tpu_custom_call.1} parent=0
    _
  %s10 = ssub.s32 1, %s8
  %s11 = scalar_select 0, %s10, %s8
  $region1: #{tpu_custom_call.1} parent=0
    #allocation2 [shape = 'u8[8192]{0}', space=vmem, size = 0x2000, scoped, tag = 'input window, operand 0']
    #allocation3 [shape = 's32[2]{0}', space=sflag, size = 0x8, scoped, tag = 'scoped memory for tpu_custom_call.1']
    #allocation4 [shape = 's32[2]{0}', space=sflag, size = 0x8, scoped, tag = 'scoped memory for tpu_custom_call.1']
    #allocation5 [shape = 'u8[512]{0}', space=vmem, size = 0x400, scoped, tag = 'input window, operand 2, single buffered']
    #allocation6 [shape = 's32[1]{0}', space=sflag, size = 0x4, scoped, tag = 'scoped memory for tpu_custom_call.1']
    #allocation7 [shape = 'u8[16384]{0}', space=vmem, size = 0x4000, scoped, tag = 'input window, operand 3, single buffered']
    #allocation8 [shape = 'u8[512]{0}', space=vmem, size = 0x400, scoped, tag = 'input window, operand 4, single buffered']
    #allocation9 [shape = 's32[1]{0}', space=sflag, size = 0x4, scoped, tag = 'scoped memory for tpu_custom_call.1']
    #allocation10 [shape = 'u8[8192]{0}', space=vmem, size = 0x2000, scoped, tag = 'output window, operand 0']
    %12 = vsyncpa [#allocation3], 0
    %s13 = scalar_lea.sflag [#allocation3], 1
    %14 = vsyncpa %s13, 0
    %15 = vsyncpa [#allocation6], 0
    %16 = vsyncpa [#allocation9], 0
    %17 = vsyncpa [#allocation4], 0
    %s18 = scalar_lea.sflag [#allocation4], 1
    %19 = vsyncpa %s18, 0
    loop: start=0, step=1, limit=4
    $region2: #{tpu_custom_call.1} parent=1 // loop_pre_header
      _
    $region3: #{tpu_custom_call.1} parent=1 // loop_header
      %s21 = sphi 0, %s25
      %p22 = scmp.ge.s32.totalorder %s21, 4
      %s31 = sphi 0, %s33
      %s34 = sphi 0, %s31
      %s35 = sphi 0, %s34
      %s51 = sphi 0, %s35
      %s55 = sphi 0, %s55
      %s57 = sphi 0, %s55
      %s58 = sphi 0, %s57
      %s72 = sphi 0, %s58
      %s76 = sphi 0, %s76
      %s78 = sphi 0, %s76
      %s79 = sphi 0, %s78
      %s93 = sphi 0, %s79
      %s97 = sphi 0, %s97
      %s99 = sphi 0, %s97
      %s100 = sphi 0, %s99
      %s114 = sphi 0, %s100
      %s118 = sphi 0, %s118
      %s120 = sphi 0, %s118
      %s121 = sphi 0, %s120
      %s135 = sphi 0, %s121
      %s139 = sphi 0, %s139
      %s141 = sphi 0, %s139
      %s142 = sphi 0, %s141
      %s156 = sphi 0, %s142
      %s160 = sphi 0, %s160
      %s162 = sphi 0, %s160
      %s163 = sphi 0, %s162
      %s177 = sphi 0, %s163
      %s183 = sphi 0, %s185
      %s186 = sphi 0, %s183
      %s187 = sphi 0, %s186
      %s203 = sphi 0, %s187
    $region4: #{tpu_custom_call.1} parent=1 // loop_header_branch
      %24 = sbr.rel (%p22) target = $region8
    $region5: #{tpu_custom_call.1} parent=1 // loop_body
      %s26 = ssub.s32 %s21, 1
      %s27 = ssub.s32 %s21, 2
      %s28 = sadd.s32 %s21, 1
      %s29 = ssub.s32 %s21, %s28
      %p30 = scmp.eq.s32.totalorder %s29, 0
      %s32 = sadd.s32 %s31, 1
      %s33 = scalar_select %p30, %s31, %s32
      %p36 = pneg %p30
      %p37 = scmp.eq.s32.totalorder %s21, 1
      %p38 = por %p36, %p37
      %p39 = scmp.ne.s32.totalorder %s31, %s34
      %p40 = scmp.eq.s32.totalorder %s21, 0
      %p41 = por %p39, %p40
      %p42 = scmp.ne.s32.totalorder %s31, %s34
      %p43 = scmp.eq.s32.totalorder %s26, 1
      %p44 = por %p42, %p43
      %p45 = scmp.ne.s32.totalorder %s34, %s35
      %p46 = scmp.eq.s32.totalorder %s26, 0
      %p47 = por %p45, %p46
      %p48 = scmp.ne.s32.totalorder %s34, %s35
      %p49 = scmp.eq.s32.totalorder %s27, 1
      %p50 = por %p48, %p49
      %p52 = scmp.ne.s32.totalorder %s35, %s51
      %p53 = scmp.eq.s32.totalorder %s27, 0
      %p54 = por %p52, %p53
      %s56 = sadd.s32 %s55, 1
      %p59 = scmp.eq.s32.totalorder %s21, 1
      %p60 = scmp.ne.s32.totalorder %s55, %s57
      %p61 = scmp.eq.s32.totalorder %s21, 0
      %p62 = por %p60, %p61
      %p63 = scmp.ne.s32.totalorder %s55, %s57
      %p64 = scmp.eq.s32.totalorder %s26, 1
      %p65 = por %p63, %p64
      %p66 = scmp.ne.s32.totalorder %s57, %s58
      %p67 = scmp.eq.s32.totalorder %s26, 0
      %p68 = por %p66, %p67
      %p69 = scmp.ne.s32.totalorder %s57, %s58
      %p70 = scmp.eq.s32.totalorder %s27, 1
      %p71 = por %p69, %p70
      %p73 = scmp.ne.s32.totalorder %s58, %s72
      %p74 = scmp.eq.s32.totalorder %s27, 0
      %p75 = por %p73, %p74
      %s77 = sadd.s32 %s76, 1
      %p80 = scmp.eq.s32.totalorder %s21, 1
      %p81 = scmp.ne.s32.totalorder %s76, %s78
      %p82 = scmp.eq.s32.totalorder %s21, 0
      %p83 = por %p81, %p82
      %p84 = scmp.ne.s32.totalorder %s76, %s78
      %p85 = scmp.eq.s32.totalorder %s26, 1
      %p86 = por %p84, %p85
      %p87 = scmp.ne.s32.totalorder %s78, %s79
      %p88 = scmp.eq.s32.totalorder %s26, 0
      %p89 = por %p87, %p88
      %p90 = scmp.ne.s32.totalorder %s78, %s79
      %p91 = scmp.eq.s32.totalorder %s27, 1
      %p92 = por %p90, %p91
      %p94 = scmp.ne.s32.totalorder %s79, %s93
      %p95 = scmp.eq.s32.totalorder %s27, 0
      %p96 = por %p94, %p95
      %s98 = sadd.s32 %s97, 1
      %p101 = scmp.eq.s32.totalorder %s21, 1
      %p102 = scmp.ne.s32.totalorder %s97, %s99
      %p103 = scmp.eq.s32.totalorder %s21, 0
      %p104 = por %p102, %p103
      %p105 = scmp.ne.s32.totalorder %s97, %s99
      %p106 = scmp.eq.s32.totalorder %s26, 1
      %p107 = por %p105, %p106
      %p108 = scmp.ne.s32.totalorder %s99, %s100
      %p109 = scmp.eq.s32.totalorder %s26, 0
      %p110 = por %p108, %p109
      %p111 = scmp.ne.s32.totalorder %s99, %s100
      %p112 = scmp.eq.s32.totalorder %s27, 1
      %p113 = por %p111, %p112
      %p115 = scmp.ne.s32.totalorder %s100, %s114
      %p116 = scmp.eq.s32.totalorder %s27, 0
      %p117 = por %p115, %p116
      %s119 = sadd.s32 %s118, 1
      %p122 = scmp.eq.s32.totalorder %s21, 1
      %p123 = scmp.ne.s32.totalorder %s118, %s120
      %p124 = scmp.eq.s32.totalorder %s21, 0
      %p125 = por %p123, %p124
      %p126 = scmp.ne.s32.totalorder %s118, %s120
      %p127 = scmp.eq.s32.totalorder %s26, 1
      %p128 = por %p126, %p127
      %p129 = scmp.ne.s32.totalorder %s120, %s121
      %p130 = scmp.eq.s32.totalorder %s26, 0
      %p131 = por %p129, %p130
      %p132 = scmp.ne.s32.totalorder %s120, %s121
      %p133 = scmp.eq.s32.totalorder %s27, 1
      %p134 = por %p132, %p133
      %p136 = scmp.ne.s32.totalorder %s121, %s135
      %p137 = scmp.eq.s32.totalorder %s27, 0
      %p138 = por %p136, %p137
      %s140 = sadd.s32 %s139, 1
      %p143 = scmp.eq.s32.totalorder %s21, 1
      %p144 = scmp.ne.s32.totalorder %s139, %s141
      %p145 = scmp.eq.s32.totalorder %s21, 0
      %p146 = por %p144, %p145
      %p147 = scmp.ne.s32.totalorder %s139, %s141
      %p148 = scmp.eq.s32.totalorder %s26, 1
      %p149 = por %p147, %p148
      %p150 = scmp.ne.s32.totalorder %s141, %s142
      %p151 = scmp.eq.s32.totalorder %s26, 0
      %p152 = por %p150, %p151
      %p153 = scmp.ne.s32.totalorder %s141, %s142
      %p154 = scmp.eq.s32.totalorder %s27, 1
      %p155 = por %p153, %p154
      %p157 = scmp.ne.s32.totalorder %s142, %s156
      %p158 = scmp.eq.s32.totalorder %s27, 0
      %p159 = por %p157, %p158
      %s161 = sadd.s32 %s160, 1
      %p164 = scmp.eq.s32.totalorder %s21, 1
      %p165 = scmp.ne.s32.totalorder %s160, %s162
      %p166 = scmp.eq.s32.totalorder %s21, 0
      %p167 = por %p165, %p166
      %p168 = scmp.ne.s32.totalorder %s160, %s162
      %p169 = scmp.eq.s32.totalorder %s26, 1
      %p170 = por %p168, %p169
      %p171 = scmp.ne.s32.totalorder %s162, %s163
      %p172 = scmp.eq.s32.totalorder %s26, 0
      %p173 = por %p171, %p172
      %p174 = scmp.ne.s32.totalorder %s162, %s163
      %p175 = scmp.eq.s32.totalorder %s27, 1
      %p176 = por %p174, %p175
      %p178 = scmp.ne.s32.totalorder %s163, %s177
      %p179 = scmp.eq.s32.totalorder %s27, 0
      %p180 = por %p178, %p179
      %s181 = ssub.s32 %s21, %s28
      %p182 = scmp.eq.s32.totalorder %s181, 0
      %s184 = sadd.s32 %s183, 1
      %s185 = scalar_select %p182, %s183, %s184
      %p188 = pneg %p182
      %p189 = scmp.eq.s32.totalorder %s21, 1
      %p190 = por %p188, %p189
      %p191 = scmp.ne.s32.totalorder %s183, %s186
      %p192 = scmp.eq.s32.totalorder %s21, 0
      %p193 = por %p191, %p192
      %p194 = scmp.ne.s32.totalorder %s183, %s186
      %p195 = scmp.eq.s32.totalorder %s26, 1
      %p196 = por %p194, %p195
      %p197 = scmp.ne.s32.totalorder %s186, %s187
      %p198 = scmp.eq.s32.totalorder %s26, 0
      %p199 = por %p197, %p198
      %p200 = scmp.ne.s32.totalorder %s186, %s187
      %p201 = scmp.eq.s32.totalorder %s27, 1
      %p202 = por %p200, %p201
      %p204 = scmp.ne.s32.totalorder %s187, %s203
      %p205 = scmp.eq.s32.totalorder %s27, 0
      %p206 = por %p204, %p205
      %p207 = scmp.le.s32.totalorder 1, %s21
      %p208 = scmp.lt.s32.totalorder %s21, 3
      %p209 = pnand %p207, %p208
      %p210 = pneg %p209
      // Predicated region
      $region9: #{tpu_custom_call.1} parent=5 // pred_check
        _
      $region10: #{tpu_custom_call.1} parent=5 // pred_check_branch
        %212 = sbr.rel (%p209) target = $region12
      $region11: #{tpu_custom_call.1} parent=5 // pred_region
        %s213 = ssub.s32 %s21, 1
        // Predicated region
        $region13: #{tpu_custom_call.1} parent=11 // pred_check
          %p214 = pneg %p68
        $region14: #{tpu_custom_call.1} parent=11 // pred_check_branch
          %216 = sbr.rel (%p214) target = $region16
        $region15: #{tpu_custom_call.1} parent=11 // pred_region
          _
        $region16: #{tpu_custom_call.1} parent=11 // pred_fallthru
          _
        // Predicated region
        $region17: #{tpu_custom_call.1} parent=11 // pred_check
          %p217 = pneg %p89
        $region18: #{tpu_custom_call.1} parent=11 // pred_check_branch
          %219 = sbr.rel (%p217) target = $region20
        $region19: #{tpu_custom_call.1} parent=11 // pred_region
          %221 = vsyncadd [#allocation6], 0
          %s223 = sshll.u32 %s2, 4
          %s224 = int_to_ptr.hbm [resolvable:$true] %s223
          %s225 = sshll.u32 [#allocation5], 4
          %s226 = int_to_ptr.vmem [resolvable:$true] %s225
          %228 = dma.hbm_to_vmem [thread:$0]  %s224, 16, %s226, [#allocation6]
        $region20: #{tpu_custom_call.1} parent=11 // pred_fallthru
          _
        // Predicated region
        $region21: #{tpu_custom_call.1} parent=11 // pred_check
          %p229 = pneg %p110
        $region22: #{tpu_custom_call.1} parent=11 // pred_check_branch
          %231 = sbr.rel (%p229) target = $region24
        $region23: #{tpu_custom_call.1} parent=11 // pred_region
          %233 = vsyncadd [#allocation6], 0
          %s234 = sshll.u32 %s3, 4
          %s235 = int_to_ptr.hbm [resolvable:$true] %s234
          %s236 = sshll.u32 [#allocation7], 4
          %s237 = int_to_ptr.vmem [resolvable:$true] %s236
          %242 = dma.hbm_to_vmem [thread:$0]  %s235, 512, %s237, [#allocation6], 128, 128, 8
        $region24: #{tpu_custom_call.1} parent=11 // pred_fallthru
          _
        // Predicated region
        $region25: #{tpu_custom_call.1} parent=11 // pred_check
          %p243 = pneg %p131
        $region26: #{tpu_custom_call.1} parent=11 // pred_check_branch
          %245 = sbr.rel (%p243) target = $region28
        $region27: #{tpu_custom_call.1} parent=11 // pred_region
          %247 = vsyncadd [#allocation9], 0
          %s249 = sshll.u32 %s4, 4
          %s250 = int_to_ptr.hbm [resolvable:$true] %s249
          %s251 = sshll.u32 [#allocation8], 4
          %s252 = int_to_ptr.vmem [resolvable:$true] %s251
          %254 = dma.hbm_to_vmem [thread:$0]  %s250, 16, %s252, [#allocation9]
        $region28: #{tpu_custom_call.1} parent=11 // pred_fallthru
          _
        // Predicated region
        $region29: #{tpu_custom_call.1} parent=11 // pred_check
          %p255 = pneg %p152
        $region30: #{tpu_custom_call.1} parent=11 // pred_check_branch
          %257 = sbr.rel (%p255) target = $region32
        $region31: #{tpu_custom_call.1} parent=11 // pred_region
          _
        $region32: #{tpu_custom_call.1} parent=11 // pred_fallthru
          _
        // Predicated region
        $region33: #{tpu_custom_call.1} parent=11 // pred_check
          %p258 = pneg %p173
        $region34: #{tpu_custom_call.1} parent=11 // pred_check_branch
          %260 = sbr.rel (%p258) target = $region36
        $region35: #{tpu_custom_call.1} parent=11 // pred_region
          _
        $region36: #{tpu_custom_call.1} parent=11 // pred_fallthru
          _
      $region12: #{tpu_custom_call.1} parent=5 // pred_fallthru
        _
      %p261 = scmp.lt.s32.totalorder %s21, 2
      // Predicated region
      $region37: #{tpu_custom_call.1} parent=5 // pred_check
        %p262 = pneg %p261
      $region38: #{tpu_custom_call.1} parent=5 // pred_check_branch
        %264 = sbr.rel (%p262) target = $region40
      $region39: #{tpu_custom_call.1} parent=5 // pred_region
        // Predicated region
        $region41: #{tpu_custom_call.1} parent=39 // pred_check
          %p265 = pneg %p41
        $region42: #{tpu_custom_call.1} parent=39 // pred_check_branch
          %267 = sbr.rel (%p265) target = $region44
        $region43: #{tpu_custom_call.1} parent=39 // pred_region
          %s268 = sand.u32 %s31, 1
          %s269 = scalar_lea.sflag [#allocation3], %s268
          %s270 = sand.u32 %s31, 1
          %s271 = smul.addr %s270, 8
          %s272 = scalar_lea.vmem [#allocation2], %s271
          %274 = vsyncadd %s269, 0
          %s275 = smul.addr %s21, 8
          %s276 = scalar_lea.hbm %s0, %s275
          %s278 = sshll.u32 %s276, 4
          %s279 = int_to_ptr.hbm [resolvable:$true] %s278
          %s280 = sshll.u32 %s272, 4
          %s281 = int_to_ptr.vmem [resolvable:$true] %s280
          %283 = dma.hbm_to_vmem [thread:$0]  %s279, 128, %s281, %s269
        $region44: #{tpu_custom_call.1} parent=39 // pred_fallthru
          _
      $region40: #{tpu_custom_call.1} parent=5 // pred_fallthru
        _
      %p284 = scmp.le.s32.totalorder 1, %s21
      %p285 = scmp.lt.s32.totalorder %s21, 3
      %p286 = pnand %p284, %p285
      %p287 = pneg %p286
      // Predicated region
      $region45: #{tpu_custom_call.1} parent=5 // pred_check
        _
      $region46: #{tpu_custom_call.1} parent=5 // pred_check_branch
        %289 = sbr.rel (%p286) target = $region48
      $region47: #{tpu_custom_call.1} parent=5 // pred_region
        %s290 = ssub.s32 %s21, 1
        %s291 = sand.u32 %s34, 1
        %s292 = scalar_lea.sflag [#allocation3], %s291
        %s293 = sand.u32 %s34, 1
        %s294 = smul.addr %s293, 8
        %s295 = scalar_lea.vmem [#allocation2], %s294
        // Predicated region
        $region49: #{tpu_custom_call.1} parent=47 // pred_check
          %p296 = pneg %p47
        $region50: #{tpu_custom_call.1} parent=47 // pred_check_branch
          %298 = sbr.rel (%p296) target = $region52
        $region51: #{tpu_custom_call.1} parent=47 // pred_region
          %300 = dma.done %s292, 128
        $region52: #{tpu_custom_call.1} parent=47 // pred_fallthru
          _
        // Predicated region
        $region53: #{tpu_custom_call.1} parent=47 // pred_check
          %p301 = pneg %p89
        $region54: #{tpu_custom_call.1} parent=47 // pred_check_branch
          %303 = sbr.rel (%p301) target = $region56
        $region55: #{tpu_custom_call.1} parent=47 // pred_region
          %305 = dma.done [#allocation6], 16
        $region56: #{tpu_custom_call.1} parent=47 // pred_fallthru
          _
        // Predicated region
        $region57: #{tpu_custom_call.1} parent=47 // pred_check
          %p306 = pneg %p110
        $region58: #{tpu_custom_call.1} parent=47 // pred_check_branch
          %308 = sbr.rel (%p306) target = $region60
        $region59: #{tpu_custom_call.1} parent=47 // pred_region
          %310 = dma.done [#allocation6], 512
        $region60: #{tpu_custom_call.1} parent=47 // pred_fallthru
          _
        // Predicated region
        $region61: #{tpu_custom_call.1} parent=47 // pred_check
          %p311 = pneg %p131
        $region62: #{tpu_custom_call.1} parent=47 // pred_check_branch
          %313 = sbr.rel (%p311) target = $region64
        $region63: #{tpu_custom_call.1} parent=47 // pred_region
          %315 = dma.done [#allocation9], 16
        $region64: #{tpu_custom_call.1} parent=47 // pred_fallthru
          _
        %s316 = sand.u32 %s34, 1
        %s317 = scalar_lea.sflag [#allocation3], %s316
        %s318 = sand.u32 %s34, 1
        %s319 = smul.addr %s318, 8
        %s320 = scalar_lea.vmem [#allocation2], %s319
        %p321 = pneg %p47
        %p322 = pneg %p44
        %p323 = pneg %p68
        %p324 = pneg %p65
        %p325 = pneg %p89
        %p326 = pneg %p86
        %p327 = pneg %p110
        %p328 = pneg %p107
        %p329 = pneg %p131
        %p330 = pneg %p128
        %p331 = pneg %p152
        %p332 = pneg %p149
        %p333 = pneg %p173
        %p334 = pneg %p170
        %p335 = pneg %p199
        %p336 = pneg %p196
        %s337 = sand.u32 %s186, 1
        %s338 = scalar_lea.sflag [#allocation4], %s337
        %s339 = sand.u32 %s186, 1
        %s340 = smul.addr %s339, 8
        %s341 = scalar_lea.vmem [#allocation10], %s340
        %v342 = vld [vmem:[%s295] sm:$0xff]
        %v343 = vld [vmem:[%s1] sm:$0xff]
        %v344 = vld [vmem:[%s1 + $0x8] sm:$0xff]
        %v345 = vld [vmem:[%s1 + $0x10] sm:$0xff]
        %v346 = vld [vmem:[%s1 + $0x18] sm:$0xff]
        %v347 = vld [vmem:[#allocation5] sm:$0x1]
        %v349 = vperm.slane %v347, 0
        %vm351 = vcmask 261120
        %v353 = vsel %vm351, %v342, 0
        %355 = vmatpush.msra.mxu0 0.0
        %356 = vmatpush.msra.mxu0 0.0
        %357 = vmatpush.msra.mxu0 0.0
        %358 = vmatpush.msra.mxu0 0.0
        %359 = vmatpush.msra.mxu0 0.0
        %360 = vmatpush.msra.mxu0 0.0
        %361 = vmatpush.msra.mxu0 0.0
        %362 = vmatpush.msra.mxu0 0.0
        %363 = vmatpush.msra.mxu0 0.0
        %364 = vmatpush.msra.mxu0 0.0
        %365 = vmatpush.msra.mxu0 0.0
        %366 = vmatpush.msra.mxu0 0.0
        %v367 = vand.u32 %v346, 4294901760
        %368 = vmatpush.msra.mxu0 %v367
        %v369 = vand.u32 %v345, 4294901760
        %370 = vmatpush.msra.mxu0 %v369
        %v371 = vand.u32 %v344, 4294901760
        %372 = vmatpush.msra.mxu0 %v371
        %v373 = vand.u32 %v343, 4294901760
        %374 = vmatpush.msra.mxu0 %v373
        %v375 = vand.u32 %v353, 4294901760
        %v376 = vsub.f32 %v353, %v375
        %v377 = vand.u32 %v376, 4294901760
        %v378 = vsub.f32 %v376, %v377
        %v379 = vand.u32 %v378, 4294901760
        %380 = vmatmul.f32.gmra.mxu0 %v379
        %v381 = vpop.f32.mrf.mxu0
        %v382 = vadd.f32 %v349, %v381
        %383 = vdwg.mxu0
        %384 = vmatpush.msra.mxu0 0.0
        %385 = vmatpush.msra.mxu0 0.0
        %386 = vmatpush.msra.mxu0 0.0
        %387 = vmatpush.msra.mxu0 0.0
        %388 = vmatpush.msra.mxu0 0.0
        %389 = vmatpush.msra.mxu0 0.0
        %390 = vmatpush.msra.mxu0 0.0
        %391 = vmatpush.msra.mxu0 0.0
        %392 = vmatpush.msra.mxu0 0.0
        %393 = vmatpush.msra.mxu0 0.0
        %394 = vmatpush.msra.mxu0 0.0
        %395 = vmatpush.msra.mxu0 0.0
        %v396 = vand.u32 %v346, 4294901760
        %v397 = vsub.f32 %v346, %v396
        %v398 = vand.u32 %v397, 4294901760
        %v399 = vsub.f32 %v397, %v398
        %v400 = vand.u32 %v399, 4294901760
        %401 = vmatpush.msra.mxu0 %v400
        %v402 = vand.u32 %v345, 4294901760
        %v403 = vsub.f32 %v345, %v402
        %v404 = vand.u32 %v403, 4294901760
        %v405 = vsub.f32 %v403, %v404
        %v406 = vand.u32 %v405, 4294901760
        %407 = vmatpush.msra.mxu0 %v406
        %v408 = vand.u32 %v344, 4294901760
        %v409 = vsub.f32 %v344, %v408
        %v410 = vand.u32 %v409, 4294901760
        %v411 = vsub.f32 %v409, %v410
        %v412 = vand.u32 %v411, 4294901760
        %413 = vmatpush.msra.mxu0 %v412
        %v414 = vand.u32 %v343, 4294901760
        %v415 = vsub.f32 %v343, %v414
        %v416 = vand.u32 %v415, 4294901760
        %v417 = vsub.f32 %v415, %v416
        %v418 = vand.u32 %v417, 4294901760
        %419 = vmatpush.msra.mxu0 %v418
        %v420 = vand.u32 %v353, 4294901760
        %421 = vmatmul.f32.gmra.mxu0 %v420
        %v422 = vpop.f32.mrf.mxu0
        %v423 = vadd.f32 %v382, %v422
        %424 = vdwg.mxu0
        %425 = vmatpush.msra.mxu0 0.0
        %426 = vmatpush.msra.mxu0 0.0
        %427 = vmatpush.msra.mxu0 0.0
        %428 = vmatpush.msra.mxu0 0.0
        %429 = vmatpush.msra.mxu0 0.0
        %430 = vmatpush.msra.mxu0 0.0
        %431 = vmatpush.msra.mxu0 0.0
        %432 = vmatpush.msra.mxu0 0.0
        %433 = vmatpush.msra.mxu0 0.0
        %434 = vmatpush.msra.mxu0 0.0
        %435 = vmatpush.msra.mxu0 0.0
        %436 = vmatpush.msra.mxu0 0.0
        %v437 = vand.u32 %v346, 4294901760
        %v438 = vsub.f32 %v346, %v437
        %439 = vmatpush.msra.mxu0 %v438
        %v440 = vand.u32 %v345, 4294901760
        %v441 = vsub.f32 %v345, %v440
        %442 = vmatpush.msra.mxu0 %v441
        %v443 = vand.u32 %v344, 4294901760
        %v444 = vsub.f32 %v344, %v443
        %445 = vmatpush.msra.mxu0 %v444
        %v446 = vand.u32 %v343, 4294901760
        %v447 = vsub.f32 %v343, %v446
        %448 = vmatpush.msra.mxu0 %v447
        %v449 = vand.u32 %v353, 4294901760
        %v450 = vsub.f32 %v353, %v449
        %451 = vmatmul.f32.gmra.mxu0 %v450
        %v452 = vpop.f32.mrf.mxu0
        %v453 = vadd.f32 %v423, %v452
        %454 = vdwg.mxu0
        %455 = vmatpush.msra.mxu0 0.0
        %456 = vmatpush.msra.mxu0 0.0
        %457 = vmatpush.msra.mxu0 0.0
        %458 = vmatpush.msra.mxu0 0.0
        %459 = vmatpush.msra.mxu0 0.0
        %460 = vmatpush.msra.mxu0 0.0
        %461 = vmatpush.msra.mxu0 0.0
        %462 = vmatpush.msra.mxu0 0.0
        %463 = vmatpush.msra.mxu0 0.0
        %464 = vmatpush.msra.mxu0 0.0
        %465 = vmatpush.msra.mxu0 0.0
        %466 = vmatpush.msra.mxu0 0.0
        %v467 = vand.u32 %v346, 4294901760
        %468 = vmatpush.msra.mxu0 %v467
        %v469 = vand.u32 %v345, 4294901760
        %470 = vmatpush.msra.mxu0 %v469
        %v471 = vand.u32 %v344, 4294901760
        %472 = vmatpush.msra.mxu0 %v471
        %v473 = vand.u32 %v343, 4294901760
        %474 = vmatpush.msra.mxu0 %v473
        %v475 = vand.u32 %v353, 4294901760
        %v476 = vsub.f32 %v353, %v475
        %v477 = vand.u32 %v476, 4294901760
        %478 = vmatmul.f32.gmra.mxu0 %v477
        %v479 = vpop.f32.mrf.mxu0
        %v480 = vadd.f32 %v453, %v479
        %481 = vdwg.mxu0
        %482 = vmatpush.msra.mxu0 0.0
        %483 = vmatpush.msra.mxu0 0.0
        %484 = vmatpush.msra.mxu0 0.0
        %485 = vmatpush.msra.mxu0 0.0
        %486 = vmatpush.msra.mxu0 0.0
        %487 = vmatpush.msra.mxu0 0.0
        %488 = vmatpush.msra.mxu0 0.0
        %489 = vmatpush.msra.mxu0 0.0
        %490 = vmatpush.msra.mxu0 0.0
        %491 = vmatpush.msra.mxu0 0.0
        %492 = vmatpush.msra.mxu0 0.0
        %493 = vmatpush.msra.mxu0 0.0
        %v494 = vand.u32 %v346, 4294901760
        %v495 = vsub.f32 %v346, %v494
        %v496 = vand.u32 %v495, 4294901760
        %497 = vmatpush.msra.mxu0 %v496
        %v498 = vand.u32 %v345, 4294901760
        %v499 = vsub.f32 %v345, %v498
        %v500 = vand.u32 %v499, 4294901760
        %501 = vmatpush.msra.mxu0 %v500
        %v502 = vand.u32 %v344, 4294901760
        %v503 = vsub.f32 %v344, %v502
        %v504 = vand.u32 %v503, 4294901760
        %505 = vmatpush.msra.mxu0 %v504
        %v506 = vand.u32 %v343, 4294901760
        %v507 = vsub.f32 %v343, %v506
        %v508 = vand.u32 %v507, 4294901760
        %509 = vmatpush.msra.mxu0 %v508
        %v510 = vand.u32 %v353, 4294901760
        %511 = vmatmul.f32.gmra.mxu0 %v510
        %v512 = vpop.f32.mrf.mxu0
        %v513 = vadd.f32 %v480, %v512
        %514 = vdwg.mxu0
        %515 = vmatpush.msra.mxu0 0.0
        %516 = vmatpush.msra.mxu0 0.0
        %517 = vmatpush.msra.mxu0 0.0
        %518 = vmatpush.msra.mxu0 0.0
        %519 = vmatpush.msra.mxu0 0.0
        %520 = vmatpush.msra.mxu0 0.0
        %521 = vmatpush.msra.mxu0 0.0
        %522 = vmatpush.msra.mxu0 0.0
        %523 = vmatpush.msra.mxu0 0.0
        %524 = vmatpush.msra.mxu0 0.0
        %525 = vmatpush.msra.mxu0 0.0
        %526 = vmatpush.msra.mxu0 0.0
        %v527 = vand.u32 %v346, 4294901760
        %528 = vmatpush.msra.mxu0 %v527
        %v529 = vand.u32 %v345, 4294901760
        %530 = vmatpush.msra.mxu0 %v529
        %v531 = vand.u32 %v344, 4294901760
        %532 = vmatpush.msra.mxu0 %v531
        %v533 = vand.u32 %v343, 4294901760
        %534 = vmatpush.msra.mxu0 %v533
        %v535 = vand.u32 %v353, 4294901760
        %536 = vmatmul.f32.gmra.mxu0 %v535
        %v537 = vpop.f32.mrf.mxu0
        %v538 = vadd.f32 %v513, %v537
        %539 = vdwg.mxu0
        %v540 = vxor.u32 %v538, 2147483648
        %v541 = vmul.f32 %v540, 1.442695
        %v542 = vpow.pop %v541
        %v543 = vadd.f32 %v542, 1.0
        %v544 = vrcp.pop %v543
        %v545 = vmul.f32 %v543, %v544
        %v546 = vsub.f32 1.0, %v545
        %v547 = vmul.f32 %v544, %v546
        %v548 = vadd.f32 %v544, %v547
        %vm549 = vweird.f32 %v543
        %vm550 = vweird.f32 %v544
        %vm551 = vmor %vm549, %vm550
        %v552 = vsel %vm551, %v544, %v548
        %v553 = vand.u32 2147483647, %v543
        %vm554 = vcmp.eq.f32.partialorder %v553, 8.507059e+37
        %v555 = vand.u32 %v543, 2147483648
        %v556 = vor.u32 1.1754944e-38, %v555
        %v557 = vsel %vm554, %v556, %v552
        %v558 = vmul.f32 1.0, %v557
        %v559 = vld [vmem:[%s5] sm:$0xff]
        %v560 = vld [vmem:[%s5 + $0x8] sm:$0xff]
        %v561 = vld [vmem:[%s5 + $0x10] sm:$0xff]
        %v562 = vld [vmem:[%s5 + $0x18] sm:$0xff]
        %v563 = vld [vmem:[%s6] sm:$0xf]
        %vm564 = vcmask 523520
        %v565 = vsel %vm564, %v558, 0.0
        %v566 = vrot.slane %v565, 4
        %v567 = vadd.f32 %v565, %v566
        %v568 = vrot.slane %v567, 2
        %v569 = vadd.f32 %v567, %v568
        %v570 = vrot.slane %v569, 1
        %v571 = vadd.f32 %v569, %v570
        %v572 = vsel %vm351, %v558, 0.0
        %v573 = vrot.slane %v572, 4
        %v574 = vadd.f32 %v572, %v573
        %v575 = vrot.slane %v574, 2
        %v576 = vadd.f32 %v574, %v575
        %v577 = vrot.slane %v576, 1
        %v578 = vadd.f32 %v576, %v577
        %580 = vrot.lane.b32.xlu0 %v571, 96
        %v581 = vpop.permute.xlu0 %580
        %v583 = vmul.f32 %v558, %v581
        %v585 = vsel %vm351, %v583, 0
        %587 = vmatpush.msra.mxu0 0.0
        %588 = vmatpush.msra.mxu0 0.0
        %589 = vmatpush.msra.mxu0 0.0
        %590 = vmatpush.msra.mxu0 0.0
        %591 = vmatpush.msra.mxu0 0.0
        %592 = vmatpush.msra.mxu0 0.0
        %593 = vmatpush.msra.mxu0 0.0
        %594 = vmatpush.msra.mxu0 0.0
        %595 = vmatpush.msra.mxu0 0.0
        %596 = vmatpush.msra.mxu0 0.0
        %597 = vmatpush.msra.mxu0 0.0
        %598 = vmatpush.msra.mxu0 0.0
        %v599 = vand.u32 %v562, 4294901760
        %600 = vmatpush.msra.mxu0 %v599
        %v601 = vand.u32 %v561, 4294901760
        %602 = vmatpush.msra.mxu0 %v601
        %v603 = vand.u32 %v560, 4294901760
        %604 = vmatpush.msra.mxu0 %v603
        %v605 = vand.u32 %v559, 4294901760
        %606 = vmatpush.msra.mxu0 %v605
        %v607 = vand.u32 %v585, 4294901760
        %v608 = vsub.f32 %v585, %v607
        %v609 = vand.u32 %v608, 4294901760
        %v610 = vsub.f32 %v608, %v609
        %v611 = vand.u32 %v610, 4294901760
        %612 = vmatmul.f32.gmra.mxu0 %v611
        %v613 = vpop.f32.mrf.mxu0
        %v614 = vadd.f32 0.0, %v613
        %615 = vdwg.mxu0
        %616 = vmatpush.msra.mxu0 0.0
        %617 = vmatpush.msra.mxu0 0.0
        %618 = vmatpush.msra.mxu0 0.0
        %619 = vmatpush.msra.mxu0 0.0
        %620 = vmatpush.msra.mxu0 0.0
        %621 = vmatpush.msra.mxu0 0.0
        %622 = vmatpush.msra.mxu0 0.0
        %623 = vmatpush.msra.mxu0 0.0
        %624 = vmatpush.msra.mxu0 0.0
        %625 = vmatpush.msra.mxu0 0.0
        %626 = vmatpush.msra.mxu0 0.0
        %627 = vmatpush.msra.mxu0 0.0
        %v628 = vand.u32 %v562, 4294901760
        %v629 = vsub.f32 %v562, %v628
        %v630 = vand.u32 %v629, 4294901760
        %v631 = vsub.f32 %v629, %v630
        %v632 = vand.u32 %v631, 4294901760
        %633 = vmatpush.msra.mxu0 %v632
        %v634 = vand.u32 %v561, 4294901760
        %v635 = vsub.f32 %v561, %v634
        %v636 = vand.u32 %v635, 4294901760
        %v637 = vsub.f32 %v635, %v636
        %v638 = vand.u32 %v637, 4294901760
        %639 = vmatpush.msra.mxu0 %v638
        %v640 = vand.u32 %v560, 4294901760
        %v641 = vsub.f32 %v560, %v640
        %v642 = vand.u32 %v641, 4294901760
        %v643 = vsub.f32 %v641, %v642
        %v644 = vand.u32 %v643, 4294901760
        %645 = vmatpush.msra.mxu0 %v644
        %v646 = vand.u32 %v559, 4294901760
        %v647 = vsub.f32 %v559, %v646
        %v648 = vand.u32 %v647, 4294901760
        %v649 = vsub.f32 %v647, %v648
        %v650 = vand.u32 %v649, 4294901760
        %651 = vmatpush.msra.mxu0 %v650
        %v652 = vand.u32 %v585, 4294901760
        %653 = vmatmul.f32.gmra.mxu0 %v652
        %v654 = vpop.f32.mrf.mxu0
        %v655 = vadd.f32 %v614, %v654
        %656 = vdwg.mxu0
        %657 = vmatpush.msra.mxu0 0.0
        %658 = vmatpush.msra.mxu0 0.0
        %659 = vmatpush.msra.mxu0 0.0
        %660 = vmatpush.msra.mxu0 0.0
        %661 = vmatpush.msra.mxu0 0.0
        %662 = vmatpush.msra.mxu0 0.0
        %663 = vmatpush.msra.mxu0 0.0
        %664 = vmatpush.msra.mxu0 0.0
        %665 = vmatpush.msra.mxu0 0.0
        %666 = vmatpush.msra.mxu0 0.0
        %667 = vmatpush.msra.mxu0 0.0
        %668 = vmatpush.msra.mxu0 0.0
        %v669 = vand.u32 %v562, 4294901760
        %v670 = vsub.f32 %v562, %v669
        %671 = vmatpush.msra.mxu0 %v670
        %v672 = vand.u32 %v561, 4294901760
        %v673 = vsub.f32 %v561, %v672
        %674 = vmatpush.msra.mxu0 %v673
        %v675 = vand.u32 %v560, 4294901760
        %v676 = vsub.f32 %v560, %v675
        %677 = vmatpush.msra.mxu0 %v676
        %v678 = vand.u32 %v559, 4294901760
        %v679 = vsub.f32 %v559, %v678
        %680 = vmatpush.msra.mxu0 %v679
        %v681 = vand.u32 %v585, 4294901760
        %v682 = vsub.f32 %v585, %v681
        %683 = vmatmul.f32.gmra.mxu0 %v682
        %v684 = vpop.f32.mrf.mxu0
        %v685 = vadd.f32 %v655, %v684
        %686 = vdwg.mxu0
        %687 = vmatpush.msra.mxu0 0.0
        %688 = vmatpush.msra.mxu0 0.0
        %689 = vmatpush.msra.mxu0 0.0
        %690 = vmatpush.msra.mxu0 0.0
        %691 = vmatpush.msra.mxu0 0.0
        %692 = vmatpush.msra.mxu0 0.0
        %693 = vmatpush.msra.mxu0 0.0
        %694 = vmatpush.msra.mxu0 0.0
        %695 = vmatpush.msra.mxu0 0.0
        %696 = vmatpush.msra.mxu0 0.0
        %697 = vmatpush.msra.mxu0 0.0
        %698 = vmatpush.msra.mxu0 0.0
        %v699 = vand.u32 %v562, 4294901760
        %700 = vmatpush.msra.mxu0 %v699
        %v701 = vand.u32 %v561, 4294901760
        %702 = vmatpush.msra.mxu0 %v701
        %v703 = vand.u32 %v560, 4294901760
        %704 = vmatpush.msra.mxu0 %v703
        %v705 = vand.u32 %v559, 4294901760
        %706 = vmatpush.msra.mxu0 %v705
        %v707 = vand.u32 %v585, 4294901760
        %v708 = vsub.f32 %v585, %v707
        %v709 = vand.u32 %v708, 4294901760
        %710 = vmatmul.f32.gmra.mxu0 %v709
        %v711 = vpop.f32.mrf.mxu0
        %v712 = vadd.f32 %v685, %v711
        %713 = vdwg.mxu0
        %714 = vmatpush.msra.mxu0 0.0
        %715 = vmatpush.msra.mxu0 0.0
        %716 = vmatpush.msra.mxu0 0.0
        %717 = vmatpush.msra.mxu0 0.0
        %718 = vmatpush.msra.mxu0 0.0
        %719 = vmatpush.msra.mxu0 0.0
        %720 = vmatpush.msra.mxu0 0.0
        %721 = vmatpush.msra.mxu0 0.0
        %722 = vmatpush.msra.mxu0 0.0
        %723 = vmatpush.msra.mxu0 0.0
        %724 = vmatpush.msra.mxu0 0.0
        %725 = vmatpush.msra.mxu0 0.0
        %v726 = vand.u32 %v562, 4294901760
        %v727 = vsub.f32 %v562, %v726
        %v728 = vand.u32 %v727, 4294901760
        %729 = vmatpush.msra.mxu0 %v728
        %v730 = vand.u32 %v561, 4294901760
        %v731 = vsub.f32 %v561, %v730
        %v732 = vand.u32 %v731, 4294901760
        %733 = vmatpush.msra.mxu0 %v732
        %v734 = vand.u32 %v560, 4294901760
        %v735 = vsub.f32 %v560, %v734
        %v736 = vand.u32 %v735, 4294901760
        %737 = vmatpush.msra.mxu0 %v736
        %v738 = vand.u32 %v559, 4294901760
        %v739 = vsub.f32 %v559, %v738
        %v740 = vand.u32 %v739, 4294901760
        %741 = vmatpush.msra.mxu0 %v740
        %v742 = vand.u32 %v585, 4294901760
        %743 = vmatmul.f32.gmra.mxu0 %v742
        %v744 = vpop.f32.mrf.mxu0
        %v745 = vadd.f32 %v712, %v744
        %746 = vdwg.mxu0
        %747 = vmatpush.msra.mxu0 0.0
        %748 = vmatpush.msra.mxu0 0.0
        %749 = vmatpush.msra.mxu0 0.0
        %750 = vmatpush.msra.mxu0 0.0
        %751 = vmatpush.msra.mxu0 0.0
        %752 = vmatpush.msra.mxu0 0.0
        %753 = vmatpush.msra.mxu0 0.0
        %754 = vmatpush.msra.mxu0 0.0
        %755 = vmatpush.msra.mxu0 0.0
        %756 = vmatpush.msra.mxu0 0.0
        %757 = vmatpush.msra.mxu0 0.0
        %758 = vmatpush.msra.mxu0 0.0
        %v759 = vand.u32 %v562, 4294901760
        %760 = vmatpush.msra.mxu0 %v759
        %v761 = vand.u32 %v561, 4294901760
        %762 = vmatpush.msra.mxu0 %v761
        %v763 = vand.u32 %v560, 4294901760
        %764 = vmatpush.msra.mxu0 %v763
        %v765 = vand.u32 %v559, 4294901760
        %766 = vmatpush.msra.mxu0 %v765
        %v767 = vand.u32 %v585, 4294901760
        %768 = vmatmul.f32.gmra.mxu0 %v767
        %v769 = vpop.f32.mrf.mxu0
        %v770 = vadd.f32 %v745, %v769
        %771 = vdwg.mxu0
        %773 = vrot.lane.b32.xlu0 %v578, 32
        %v774 = vpop.permute.xlu0 %773
        %v776 = vmul.f32 %v558, %v774
        %778 = vrot.lane.b32.xlu0 %v776, 96
        %v779 = vpop.permute.xlu0 %778
        %v780 = vsel %vm351, %v779, 0
        %782 = vmatpush.msra.mxu0 0.0
        %783 = vmatpush.msra.mxu0 0.0
        %784 = vmatpush.msra.mxu0 0.0
        %785 = vmatpush.msra.mxu0 0.0
        %786 = vmatpush.msra.mxu0 0.0
        %787 = vmatpush.msra.mxu0 0.0
        %788 = vmatpush.msra.mxu0 0.0
        %789 = vmatpush.msra.mxu0 0.0
        %790 = vmatpush.msra.mxu0 0.0
        %791 = vmatpush.msra.mxu0 0.0
        %792 = vmatpush.msra.mxu0 0.0
        %793 = vmatpush.msra.mxu0 0.0
        %v794 = vand.u32 %v562, 4294901760
        %795 = vmatpush.msra.mxu0 %v794
        %v796 = vand.u32 %v561, 4294901760
        %797 = vmatpush.msra.mxu0 %v796
        %v798 = vand.u32 %v560, 4294901760
        %799 = vmatpush.msra.mxu0 %v798
        %v800 = vand.u32 %v559, 4294901760
        %801 = vmatpush.msra.mxu0 %v800
        %v802 = vand.u32 %v780, 4294901760
        %v803 = vsub.f32 %v780, %v802
        %v804 = vand.u32 %v803, 4294901760
        %v805 = vsub.f32 %v803, %v804
        %v806 = vand.u32 %v805, 4294901760
        %807 = vmatmul.f32.gmra.mxu0 %v806
        %v808 = vpop.f32.mrf.mxu0
        %v809 = vadd.f32 0.0, %v808
        %810 = vdwg.mxu0
        %811 = vmatpush.msra.mxu0 0.0
        %812 = vmatpush.msra.mxu0 0.0
        %813 = vmatpush.msra.mxu0 0.0
        %814 = vmatpush.msra.mxu0 0.0
        %815 = vmatpush.msra.mxu0 0.0
        %816 = vmatpush.msra.mxu0 0.0
        %817 = vmatpush.msra.mxu0 0.0
        %818 = vmatpush.msra.mxu0 0.0
        %819 = vmatpush.msra.mxu0 0.0
        %820 = vmatpush.msra.mxu0 0.0
        %821 = vmatpush.msra.mxu0 0.0
        %822 = vmatpush.msra.mxu0 0.0
        %v823 = vand.u32 %v562, 4294901760
        %v824 = vsub.f32 %v562, %v823
        %v825 = vand.u32 %v824, 4294901760
        %v826 = vsub.f32 %v824, %v825
        %v827 = vand.u32 %v826, 4294901760
        %828 = vmatpush.msra.mxu0 %v827
        %v829 = vand.u32 %v561, 4294901760
        %v830 = vsub.f32 %v561, %v829
        %v831 = vand.u32 %v830, 4294901760
        %v832 = vsub.f32 %v830, %v831
        %v833 = vand.u32 %v832, 4294901760
        %834 = vmatpush.msra.mxu0 %v833
        %v835 = vand.u32 %v560, 4294901760
        %v836 = vsub.f32 %v560, %v835
        %v837 = vand.u32 %v836, 4294901760
        %v838 = vsub.f32 %v836, %v837
        %v839 = vand.u32 %v838, 4294901760
        %840 = vmatpush.msra.mxu0 %v839
        %v841 = vand.u32 %v559, 4294901760
        %v842 = vsub.f32 %v559, %v841
        %v843 = vand.u32 %v842, 4294901760
        %v844 = vsub.f32 %v842, %v843
        %v845 = vand.u32 %v844, 4294901760
        %846 = vmatpush.msra.mxu0 %v845
        %v847 = vand.u32 %v780, 4294901760
        %848 = vmatmul.f32.gmra.mxu0 %v847
        %v849 = vpop.f32.mrf.mxu0
        %v850 = vadd.f32 %v809, %v849
        %851 = vdwg.mxu0
        %852 = vmatpush.msra.mxu0 0.0
        %853 = vmatpush.msra.mxu0 0.0
        %854 = vmatpush.msra.mxu0 0.0
        %855 = vmatpush.msra.mxu0 0.0
        %856 = vmatpush.msra.mxu0 0.0
        %857 = vmatpush.msra.mxu0 0.0
        %858 = vmatpush.msra.mxu0 0.0
        %859 = vmatpush.msra.mxu0 0.0
        %860 = vmatpush.msra.mxu0 0.0
        %861 = vmatpush.msra.mxu0 0.0
        %862 = vmatpush.msra.mxu0 0.0
        %863 = vmatpush.msra.mxu0 0.0
        %v864 = vand.u32 %v562, 4294901760
        %v865 = vsub.f32 %v562, %v864
        %866 = vmatpush.msra.mxu0 %v865
        %v867 = vand.u32 %v561, 4294901760
        %v868 = vsub.f32 %v561, %v867
        %869 = vmatpush.msra.mxu0 %v868
        %v870 = vand.u32 %v560, 4294901760
        %v871 = vsub.f32 %v560, %v870
        %872 = vmatpush.msra.mxu0 %v871
        %v873 = vand.u32 %v559, 4294901760
        %v874 = vsub.f32 %v559, %v873
        %875 = vmatpush.msra.mxu0 %v874
        %v876 = vand.u32 %v780, 4294901760
        %v877 = vsub.f32 %v780, %v876
        %878 = vmatmul.f32.gmra.mxu0 %v877
        %v879 = vpop.f32.mrf.mxu0
        %v880 = vadd.f32 %v850, %v879
        %881 = vdwg.mxu0
        %882 = vmatpush.msra.mxu0 0.0
        %883 = vmatpush.msra.mxu0 0.0
        %884 = vmatpush.msra.mxu0 0.0
        %885 = vmatpush.msra.mxu0 0.0
        %886 = vmatpush.msra.mxu0 0.0
        %887 = vmatpush.msra.mxu0 0.0
        %888 = vmatpush.msra.mxu0 0.0
        %889 = vmatpush.msra.mxu0 0.0
        %890 = vmatpush.msra.mxu0 0.0
        %891 = vmatpush.msra.mxu0 0.0
        %892 = vmatpush.msra.mxu0 0.0
        %893 = vmatpush.msra.mxu0 0.0
        %v894 = vand.u32 %v562, 4294901760
        %895 = vmatpush.msra.mxu0 %v894
        %v896 = vand.u32 %v561, 4294901760
        %897 = vmatpush.msra.mxu0 %v896
        %v898 = vand.u32 %v560, 4294901760
        %899 = vmatpush.msra.mxu0 %v898
        %v900 = vand.u32 %v559, 4294901760
        %901 = vmatpush.msra.mxu0 %v900
        %v902 = vand.u32 %v780, 4294901760
        %v903 = vsub.f32 %v780, %v902
        %v904 = vand.u32 %v903, 4294901760
        %905 = vmatmul.f32.gmra.mxu0 %v904
        %v906 = vpop.f32.mrf.mxu0
        %v907 = vadd.f32 %v880, %v906
        %908 = vdwg.mxu0
        %909 = vmatpush.msra.mxu0 0.0
        %910 = vmatpush.msra.mxu0 0.0
        %911 = vmatpush.msra.mxu0 0.0
        %912 = vmatpush.msra.mxu0 0.0
        %913 = vmatpush.msra.mxu0 0.0
        %914 = vmatpush.msra.mxu0 0.0
        %915 = vmatpush.msra.mxu0 0.0
        %916 = vmatpush.msra.mxu0 0.0
        %917 = vmatpush.msra.mxu0 0.0
        %918 = vmatpush.msra.mxu0 0.0
        %919 = vmatpush.msra.mxu0 0.0
        %920 = vmatpush.msra.mxu0 0.0
        %v921 = vand.u32 %v562, 4294901760
        %v922 = vsub.f32 %v562, %v921
        %v923 = vand.u32 %v922, 4294901760
        %924 = vmatpush.msra.mxu0 %v923
        %v925 = vand.u32 %v561, 4294901760
        %v926 = vsub.f32 %v561, %v925
        %v927 = vand.u32 %v926, 4294901760
        %928 = vmatpush.msra.mxu0 %v927
        %v929 = vand.u32 %v560, 4294901760
        %v930 = vsub.f32 %v560, %v929
        %v931 = vand.u32 %v930, 4294901760
        %932 = vmatpush.msra.mxu0 %v931
        %v933 = vand.u32 %v559, 4294901760
        %v934 = vsub.f32 %v559, %v933
        %v935 = vand.u32 %v934, 4294901760
        %936 = vmatpush.msra.mxu0 %v935
        %v937 = vand.u32 %v780, 4294901760
        %938 = vmatmul.f32.gmra.mxu0 %v937
        %v939 = vpop.f32.mrf.mxu0
        %v940 = vadd.f32 %v907, %v939
        %941 = vdwg.mxu0
        %942 = vmatpush.msra.mxu0 0.0
        %943 = vmatpush.msra.mxu0 0.0
        %944 = vmatpush.msra.mxu0 0.0
        %945 = vmatpush.msra.mxu0 0.0
        %946 = vmatpush.msra.mxu0 0.0
        %947 = vmatpush.msra.mxu0 0.0
        %948 = vmatpush.msra.mxu0 0.0
        %949 = vmatpush.msra.mxu0 0.0
        %950 = vmatpush.msra.mxu0 0.0
        %951 = vmatpush.msra.mxu0 0.0
        %952 = vmatpush.msra.mxu0 0.0
        %953 = vmatpush.msra.mxu0 0.0
        %v954 = vand.u32 %v562, 4294901760
        %955 = vmatpush.msra.mxu0 %v954
        %v956 = vand.u32 %v561, 4294901760
        %957 = vmatpush.msra.mxu0 %v956
        %v958 = vand.u32 %v560, 4294901760
        %959 = vmatpush.msra.mxu0 %v958
        %v960 = vand.u32 %v559, 4294901760
        %961 = vmatpush.msra.mxu0 %v960
        %v962 = vand.u32 %v780, 4294901760
        %963 = vmatmul.f32.gmra.mxu0 %v962
        %v964 = vpop.f32.mrf.mxu0
        %v965 = vadd.f32 %v940, %v964
        %966 = vdwg.mxu0
        %v967 = vrcp.pop %v770
        %v968 = vmul.f32 %v770, %v967
        %v969 = vsub.f32 1.0, %v968
        %v970 = vmul.f32 %v967, %v969
        %v971 = vadd.f32 %v967, %v970
        %vm972 = vweird.f32 %v770
        %vm973 = vweird.f32 %v967
        %vm974 = vmor %vm972, %vm973
        %v975 = vsel %vm974, %v967, %v971
        %v976 = vand.u32 2147483647, %v770
        %vm977 = vcmp.eq.f32.partialorder %v976, 8.507059e+37
        %v978 = vand.u32 %v770, 2147483648
        %v979 = vor.u32 1.1754944e-38, %v978
        %v980 = vsel %vm977, %v979, %v975
        %v981 = vmul.f32 1.0, %v980
        %v982 = vrcp.pop %v965
        %v983 = vmul.f32 %v965, %v982
        %v984 = vsub.f32 1.0, %v983
        %v985 = vmul.f32 %v982, %v984
        %v986 = vadd.f32 %v982, %v985
        %vm987 = vweird.f32 %v965
        %vm988 = vweird.f32 %v982
        %vm989 = vmor %vm987, %vm988
        %v990 = vsel %vm989, %v982, %v986
        %v991 = vand.u32 2147483647, %v965
        %vm992 = vcmp.eq.f32.partialorder %v991, 8.507059e+37
        %v993 = vand.u32 %v965, 2147483648
        %v994 = vor.u32 1.1754944e-38, %v993
        %v995 = vsel %vm992, %v994, %v990
        %v996 = vmul.f32 1.0, %v995
        %vm997 = vcmask 31744
        %v999 = vsel %vm997, %v996, 0
        %vm1001 = vcmask 1043456
        %v1003 = vsel %vm1001, %v563, 0
        %1005 = vmatpush.msra.mxu0 0.0
        %1006 = vmatpush.msra.mxu0 0.0
        %1007 = vmatpush.msra.mxu0 0.0
        %1008 = vmatpush.msra.mxu0 0.0
        %1009 = vmatpush.msra.mxu0 0.0
        %1010 = vmatpush.msra.mxu0 0.0
        %1011 = vmatpush.msra.mxu0 0.0
        %1012 = vmatpush.msra.mxu0 0.0
        %1013 = vmatpush.msra.mxu0 0.0
        %1014 = vmatpush.msra.mxu0 0.0
        %1015 = vmatpush.msra.mxu0 0.0
        %1016 = vmatpush.msra.mxu0 0.0
        %1017 = vmatpush.msra.mxu0 0.0
        %1018 = vmatpush.msra.mxu0 0.0
        %1019 = vmatpush.msra.mxu0 0.0
        %v1020 = vand.u32 %v1003, 4294901760
        %1021 = vmatpush.msra.mxu0 %v1020
        %v1022 = vand.u32 %v999, 4294901760
        %v1023 = vsub.f32 %v999, %v1022
        %v1024 = vand.u32 %v1023, 4294901760
        %v1025 = vsub.f32 %v1023, %v1024
        %v1026 = vand.u32 %v1025, 4294901760
        %1027 = vmatmul.f32.gmra.mxu0 %v1026
        %v1028 = vpop.f32.mrf.mxu0
        %v1029 = vadd.f32 0.0, %v1028
        %1030 = vdwg.mxu0
        %1031 = vmatpush.msra.mxu0 0.0
        %1032 = vmatpush.msra.mxu0 0.0
        %1033 = vmatpush.msra.mxu0 0.0
        %1034 = vmatpush.msra.mxu0 0.0
        %1035 = vmatpush.msra.mxu0 0.0
        %1036 = vmatpush.msra.mxu0 0.0
        %1037 = vmatpush.msra.mxu0 0.0
        %1038 = vmatpush.msra.mxu0 0.0
        %1039 = vmatpush.msra.mxu0 0.0
        %1040 = vmatpush.msra.mxu0 0.0
        %1041 = vmatpush.msra.mxu0 0.0
        %1042 = vmatpush.msra.mxu0 0.0
        %1043 = vmatpush.msra.mxu0 0.0
        %1044 = vmatpush.msra.mxu0 0.0
        %1045 = vmatpush.msra.mxu0 0.0
        %v1046 = vand.u32 %v1003, 4294901760
        %v1047 = vsub.f32 %v1003, %v1046
        %v1048 = vand.u32 %v1047, 4294901760
        %v1049 = vsub.f32 %v1047, %v1048
        %v1050 = vand.u32 %v1049, 4294901760
        %1051 = vmatpush.msra.mxu0 %v1050
        %v1052 = vand.u32 %v999, 4294901760
        %1053 = vmatmul.f32.gmra.mxu0 %v1052
        %v1054 = vpop.f32.mrf.mxu0
        %v1055 = vadd.f32 %v1029, %v1054
        %1056 = vdwg.mxu0
        %1057 = vmatpush.msra.mxu0 0.0
        %1058 = vmatpush.msra.mxu0 0.0
        %1059 = vmatpush.msra.mxu0 0.0
        %1060 = vmatpush.msra.mxu0 0.0
        %1061 = vmatpush.msra.mxu0 0.0
        %1062 = vmatpush.msra.mxu0 0.0
        %1063 = vmatpush.msra.mxu0 0.0
        %1064 = vmatpush.msra.mxu0 0.0
        %1065 = vmatpush.msra.mxu0 0.0
        %1066 = vmatpush.msra.mxu0 0.0
        %1067 = vmatpush.msra.mxu0 0.0
        %1068 = vmatpush.msra.mxu0 0.0
        %1069 = vmatpush.msra.mxu0 0.0
        %1070 = vmatpush.msra.mxu0 0.0
        %1071 = vmatpush.msra.mxu0 0.0
        %v1072 = vand.u32 %v1003, 4294901760
        %v1073 = vsub.f32 %v1003, %v1072
        %1074 = vmatpush.msra.mxu0 %v1073
        %v1075 = vand.u32 %v999, 4294901760
        %v1076 = vsub.f32 %v999, %v1075
        %1077 = vmatmul.f32.gmra.mxu0 %v1076
        %v1078 = vpop.f32.mrf.mxu0
        %v1079 = vadd.f32 %v1055, %v1078
        %1080 = vdwg.mxu0
        %1081 = vmatpush.msra.mxu0 0.0
        %1082 = vmatpush.msra.mxu0 0.0
        %1083 = vmatpush.msra.mxu0 0.0
        %1084 = vmatpush.msra.mxu0 0.0
        %1085 = vmatpush.msra.mxu0 0.0
        %1086 = vmatpush.msra.mxu0 0.0
        %1087 = vmatpush.msra.mxu0 0.0
        %1088 = vmatpush.msra.mxu0 0.0
        %1089 = vmatpush.msra.mxu0 0.0
        %1090 = vmatpush.msra.mxu0 0.0
        %1091 = vmatpush.msra.mxu0 0.0
        %1092 = vmatpush.msra.mxu0 0.0
        %1093 = vmatpush.msra.mxu0 0.0
        %1094 = vmatpush.msra.mxu0 0.0
        %1095 = vmatpush.msra.mxu0 0.0
        %v1096 = vand.u32 %v1003, 4294901760
        %1097 = vmatpush.msra.mxu0 %v1096
        %v1098 = vand.u32 %v999, 4294901760
        %v1099 = vsub.f32 %v999, %v1098
        %v1100 = vand.u32 %v1099, 4294901760
        %1101 = vmatmul.f32.gmra.mxu0 %v1100
        %v1102 = vpop.f32.mrf.mxu0
        %v1103 = vadd.f32 %v1079, %v1102
        %1104 = vdwg.mxu0
        %1105 = vmatpush.msra.mxu0 0.0
        %1106 = vmatpush.msra.mxu0 0.0
        %1107 = vmatpush.msra.mxu0 0.0
        %1108 = vmatpush.msra.mxu0 0.0
        %1109 = vmatpush.msra.mxu0 0.0
        %1110 = vmatpush.msra.mxu0 0.0
        %1111 = vmatpush.msra.mxu0 0.0
        %1112 = vmatpush.msra.mxu0 0.0
        %1113 = vmatpush.msra.mxu0 0.0
        %1114 = vmatpush.msra.mxu0 0.0
        %1115 = vmatpush.msra.mxu0 0.0
        %1116 = vmatpush.msra.mxu0 0.0
        %1117 = vmatpush.msra.mxu0 0.0
        %1118 = vmatpush.msra.mxu0 0.0
        %1119 = vmatpush.msra.mxu0 0.0
        %v1120 = vand.u32 %v1003, 4294901760
        %v1121 = vsub.f32 %v1003, %v1120
        %v1122 = vand.u32 %v1121, 4294901760
        %1123 = vmatpush.msra.mxu0 %v1122
        %v1124 = vand.u32 %v999, 4294901760
        %1125 = vmatmul.f32.gmra.mxu0 %v1124
        %v1126 = vpop.f32.mrf.mxu0
        %v1127 = vadd.f32 %v1103, %v1126
        %1128 = vdwg.mxu0
        %1129 = vmatpush.msra.mxu0 0.0
        %1130 = vmatpush.msra.mxu0 0.0
        %1131 = vmatpush.msra.mxu0 0.0
        %1132 = vmatpush.msra.mxu0 0.0
        %1133 = vmatpush.msra.mxu0 0.0
        %1134 = vmatpush.msra.mxu0 0.0
        %1135 = vmatpush.msra.mxu0 0.0
        %1136 = vmatpush.msra.mxu0 0.0
        %1137 = vmatpush.msra.mxu0 0.0
        %1138 = vmatpush.msra.mxu0 0.0
        %1139 = vmatpush.msra.mxu0 0.0
        %1140 = vmatpush.msra.mxu0 0.0
        %1141 = vmatpush.msra.mxu0 0.0
        %1142 = vmatpush.msra.mxu0 0.0
        %1143 = vmatpush.msra.mxu0 0.0
        %v1144 = vand.u32 %v1003, 4294901760
        %1145 = vmatpush.msra.mxu0 %v1144
        %v1146 = vand.u32 %v999, 4294901760
        %1147 = vmatmul.f32.gmra.mxu0 %v1146
        %v1148 = vpop.f32.mrf.mxu0
        %v1149 = vadd.f32 %v1127, %v1148
        %1150 = vdwg.mxu0
        %1152 = vrot.lane.b32.xlu0 %v1149, 32
        %v1153 = vpop.permute.xlu0 %1152
        %v1155 = vmul.f32 %v558, %v1153
        %v1156 = vsel %vm564, %v1155, 0.0
        %v1157 = vrot.slane %v1156, 4
        %v1158 = vadd.f32 %v1156, %v1157
        %v1159 = vrot.slane %v1158, 2
        %v1160 = vadd.f32 %v1158, %v1159
        %v1161 = vrot.slane %v1160, 1
        %v1162 = vadd.f32 %v1160, %v1161
        %1164 = vrot.lane.b32.xlu0 %v1162, 96
        %v1165 = vpop.permute.xlu0 %1164
        %v1167 = vmul.f32 %v558, %v1165
        %v1169 = vsel %vm351, %v1167, 0
        %1171 = vmatpush.msra.mxu0 0.0
        %1172 = vmatpush.msra.mxu0 0.0
        %1173 = vmatpush.msra.mxu0 0.0
        %1174 = vmatpush.msra.mxu0 0.0
        %1175 = vmatpush.msra.mxu0 0.0
        %1176 = vmatpush.msra.mxu0 0.0
        %1177 = vmatpush.msra.mxu0 0.0
        %1178 = vmatpush.msra.mxu0 0.0
        %1179 = vmatpush.msra.mxu0 0.0
        %1180 = vmatpush.msra.mxu0 0.0
        %1181 = vmatpush.msra.mxu0 0.0
        %1182 = vmatpush.msra.mxu0 0.0
        %v1183 = vand.u32 %v562, 4294901760
        %1184 = vmatpush.msra.mxu0 %v1183
        %v1185 = vand.u32 %v561, 4294901760
        %1186 = vmatpush.msra.mxu0 %v1185
        %v1187 = vand.u32 %v560, 4294901760
        %1188 = vmatpush.msra.mxu0 %v1187
        %v1189 = vand.u32 %v559, 4294901760
        %1190 = vmatpush.msra.mxu0 %v1189
        %v1191 = vand.u32 %v1169, 4294901760
        %v1192 = vsub.f32 %v1169, %v1191
        %v1193 = vand.u32 %v1192, 4294901760
        %v1194 = vsub.f32 %v1192, %v1193
        %v1195 = vand.u32 %v1194, 4294901760
        %1196 = vmatmul.f32.gmra.mxu0 %v1195
        %v1197 = vpop.f32.mrf.mxu0
        %v1198 = vadd.f32 0.0, %v1197
        %1199 = vdwg.mxu0
        %1200 = vmatpush.msra.mxu0 0.0
        %1201 = vmatpush.msra.mxu0 0.0
        %1202 = vmatpush.msra.mxu0 0.0
        %1203 = vmatpush.msra.mxu0 0.0
        %1204 = vmatpush.msra.mxu0 0.0
        %1205 = vmatpush.msra.mxu0 0.0
        %1206 = vmatpush.msra.mxu0 0.0
        %1207 = vmatpush.msra.mxu0 0.0
        %1208 = vmatpush.msra.mxu0 0.0
        %1209 = vmatpush.msra.mxu0 0.0
        %1210 = vmatpush.msra.mxu0 0.0
        %1211 = vmatpush.msra.mxu0 0.0
        %v1212 = vand.u32 %v562, 4294901760
        %v1213 = vsub.f32 %v562, %v1212
        %v1214 = vand.u32 %v1213, 4294901760
        %v1215 = vsub.f32 %v1213, %v1214
        %v1216 = vand.u32 %v1215, 4294901760
        %1217 = vmatpush.msra.mxu0 %v1216
        %v1218 = vand.u32 %v561, 4294901760
        %v1219 = vsub.f32 %v561, %v1218
        %v1220 = vand.u32 %v1219, 4294901760
        %v1221 = vsub.f32 %v1219, %v1220
        %v1222 = vand.u32 %v1221, 4294901760
        %1223 = vmatpush.msra.mxu0 %v1222
        %v1224 = vand.u32 %v560, 4294901760
        %v1225 = vsub.f32 %v560, %v1224
        %v1226 = vand.u32 %v1225, 4294901760
        %v1227 = vsub.f32 %v1225, %v1226
        %v1228 = vand.u32 %v1227, 4294901760
        %1229 = vmatpush.msra.mxu0 %v1228
        %v1230 = vand.u32 %v559, 4294901760
        %v1231 = vsub.f32 %v559, %v1230
        %v1232 = vand.u32 %v1231, 4294901760
        %v1233 = vsub.f32 %v1231, %v1232
        %v1234 = vand.u32 %v1233, 4294901760
        %1235 = vmatpush.msra.mxu0 %v1234
        %v1236 = vand.u32 %v1169, 4294901760
        %1237 = vmatmul.f32.gmra.mxu0 %v1236
        %v1238 = vpop.f32.mrf.mxu0
        %v1239 = vadd.f32 %v1198, %v1238
        %1240 = vdwg.mxu0
        %1241 = vmatpush.msra.mxu0 0.0
        %1242 = vmatpush.msra.mxu0 0.0
        %1243 = vmatpush.msra.mxu0 0.0
        %1244 = vmatpush.msra.mxu0 0.0
        %1245 = vmatpush.msra.mxu0 0.0
        %1246 = vmatpush.msra.mxu0 0.0
        %1247 = vmatpush.msra.mxu0 0.0
        %1248 = vmatpush.msra.mxu0 0.0
        %1249 = vmatpush.msra.mxu0 0.0
        %1250 = vmatpush.msra.mxu0 0.0
        %1251 = vmatpush.msra.mxu0 0.0
        %1252 = vmatpush.msra.mxu0 0.0
        %v1253 = vand.u32 %v562, 4294901760
        %v1254 = vsub.f32 %v562, %v1253
        %1255 = vmatpush.msra.mxu0 %v1254
        %v1256 = vand.u32 %v561, 4294901760
        %v1257 = vsub.f32 %v561, %v1256
        %1258 = vmatpush.msra.mxu0 %v1257
        %v1259 = vand.u32 %v560, 4294901760
        %v1260 = vsub.f32 %v560, %v1259
        %1261 = vmatpush.msra.mxu0 %v1260
        %v1262 = vand.u32 %v559, 4294901760
        %v1263 = vsub.f32 %v559, %v1262
        %1264 = vmatpush.msra.mxu0 %v1263
        %v1265 = vand.u32 %v1169, 4294901760
        %v1266 = vsub.f32 %v1169, %v1265
        %1267 = vmatmul.f32.gmra.mxu0 %v1266
        %v1268 = vpop.f32.mrf.mxu0
        %v1269 = vadd.f32 %v1239, %v1268
        %1270 = vdwg.mxu0
        %1271 = vmatpush.msra.mxu0 0.0
        %1272 = vmatpush.msra.mxu0 0.0
        %1273 = vmatpush.msra.mxu0 0.0
        %1274 = vmatpush.msra.mxu0 0.0
        %1275 = vmatpush.msra.mxu0 0.0
        %1276 = vmatpush.msra.mxu0 0.0
        %1277 = vmatpush.msra.mxu0 0.0
        %1278 = vmatpush.msra.mxu0 0.0
        %1279 = vmatpush.msra.mxu0 0.0
        %1280 = vmatpush.msra.mxu0 0.0
        %1281 = vmatpush.msra.mxu0 0.0
        %1282 = vmatpush.msra.mxu0 0.0
        %v1283 = vand.u32 %v562, 4294901760
        %1284 = vmatpush.msra.mxu0 %v1283
        %v1285 = vand.u32 %v561, 4294901760
        %1286 = vmatpush.msra.mxu0 %v1285
        %v1287 = vand.u32 %v560, 4294901760
        %1288 = vmatpush.msra.mxu0 %v1287
        %v1289 = vand.u32 %v559, 4294901760
        %1290 = vmatpush.msra.mxu0 %v1289
        %v1291 = vand.u32 %v1169, 4294901760
        %v1292 = vsub.f32 %v1169, %v1291
        %v1293 = vand.u32 %v1292, 4294901760
        %1294 = vmatmul.f32.gmra.mxu0 %v1293
        %v1295 = vpop.f32.mrf.mxu0
        %v1296 = vadd.f32 %v1269, %v1295
        %1297 = vdwg.mxu0
        %1298 = vmatpush.msra.mxu0 0.0
        %1299 = vmatpush.msra.mxu0 0.0
        %1300 = vmatpush.msra.mxu0 0.0
        %1301 = vmatpush.msra.mxu0 0.0
        %1302 = vmatpush.msra.mxu0 0.0
        %1303 = vmatpush.msra.mxu0 0.0
        %1304 = vmatpush.msra.mxu0 0.0
        %1305 = vmatpush.msra.mxu0 0.0
        %1306 = vmatpush.msra.mxu0 0.0
        %1307 = vmatpush.msra.mxu0 0.0
        %1308 = vmatpush.msra.mxu0 0.0
        %1309 = vmatpush.msra.mxu0 0.0
        %v1310 = vand.u32 %v562, 4294901760
        %v1311 = vsub.f32 %v562, %v1310
        %v1312 = vand.u32 %v1311, 4294901760
        %1313 = vmatpush.msra.mxu0 %v1312
        %v1314 = vand.u32 %v561, 4294901760
        %v1315 = vsub.f32 %v561, %v1314
        %v1316 = vand.u32 %v1315, 4294901760
        %1317 = vmatpush.msra.mxu0 %v1316
        %v1318 = vand.u32 %v560, 4294901760
        %v1319 = vsub.f32 %v560, %v1318
        %v1320 = vand.u32 %v1319, 4294901760
        %1321 = vmatpush.msra.mxu0 %v1320
        %v1322 = vand.u32 %v559, 4294901760
        %v1323 = vsub.f32 %v559, %v1322
        %v1324 = vand.u32 %v1323, 4294901760
        %1325 = vmatpush.msra.mxu0 %v1324
        %v1326 = vand.u32 %v1169, 4294901760
        %1327 = vmatmul.f32.gmra.mxu0 %v1326
        %v1328 = vpop.f32.mrf.mxu0
        %v1329 = vadd.f32 %v1296, %v1328
        %1330 = vdwg.mxu0
        %1331 = vmatpush.msra.mxu0 0.0
        %1332 = vmatpush.msra.mxu0 0.0
        %1333 = vmatpush.msra.mxu0 0.0
        %1334 = vmatpush.msra.mxu0 0.0
        %1335 = vmatpush.msra.mxu0 0.0
        %1336 = vmatpush.msra.mxu0 0.0
        %1337 = vmatpush.msra.mxu0 0.0
        %1338 = vmatpush.msra.mxu0 0.0
        %1339 = vmatpush.msra.mxu0 0.0
        %1340 = vmatpush.msra.mxu0 0.0
        %1341 = vmatpush.msra.mxu0 0.0
        %1342 = vmatpush.msra.mxu0 0.0
        %v1343 = vand.u32 %v562, 4294901760
        %1344 = vmatpush.msra.mxu0 %v1343
        %v1345 = vand.u32 %v561, 4294901760
        %1346 = vmatpush.msra.mxu0 %v1345
        %v1347 = vand.u32 %v560, 4294901760
        %1348 = vmatpush.msra.mxu0 %v1347
        %v1349 = vand.u32 %v559, 4294901760
        %1350 = vmatpush.msra.mxu0 %v1349
        %v1351 = vand.u32 %v1169, 4294901760
        %1352 = vmatmul.f32.gmra.mxu0 %v1351
        %v1353 = vpop.f32.mrf.mxu0
        %v1354 = vadd.f32 %v1329, %v1353
        %1355 = vdwg.mxu0
        %v1357 = vsel %vm997, %v981, 0
        %1359 = vmatpush.msra.mxu0 0.0
        %1360 = vmatpush.msra.mxu0 0.0
        %1361 = vmatpush.msra.mxu0 0.0
        %1362 = vmatpush.msra.mxu0 0.0
        %1363 = vmatpush.msra.mxu0 0.0
        %1364 = vmatpush.msra.mxu0 0.0
        %1365 = vmatpush.msra.mxu0 0.0
        %1366 = vmatpush.msra.mxu0 0.0
        %1367 = vmatpush.msra.mxu0 0.0
        %1368 = vmatpush.msra.mxu0 0.0
        %1369 = vmatpush.msra.mxu0 0.0
        %1370 = vmatpush.msra.mxu0 0.0
        %1371 = vmatpush.msra.mxu0 0.0
        %1372 = vmatpush.msra.mxu0 0.0
        %1373 = vmatpush.msra.mxu0 0.0
        %v1374 = vand.u32 %v1003, 4294901760
        %1375 = vmatpush.msra.mxu0 %v1374
        %v1376 = vand.u32 %v1357, 4294901760
        %v1377 = vsub.f32 %v1357, %v1376
        %v1378 = vand.u32 %v1377, 4294901760
        %v1379 = vsub.f32 %v1377, %v1378
        %v1380 = vand.u32 %v1379, 4294901760
        %1381 = vmatmul.f32.gmra.mxu0 %v1380
        %v1382 = vpop.f32.mrf.mxu0
        %v1383 = vadd.f32 0.0, %v1382
        %1384 = vdwg.mxu0
        %1385 = vmatpush.msra.mxu0 0.0
        %1386 = vmatpush.msra.mxu0 0.0
        %1387 = vmatpush.msra.mxu0 0.0
        %1388 = vmatpush.msra.mxu0 0.0
        %1389 = vmatpush.msra.mxu0 0.0
        %1390 = vmatpush.msra.mxu0 0.0
        %1391 = vmatpush.msra.mxu0 0.0
        %1392 = vmatpush.msra.mxu0 0.0
        %1393 = vmatpush.msra.mxu0 0.0
        %1394 = vmatpush.msra.mxu0 0.0
        %1395 = vmatpush.msra.mxu0 0.0
        %1396 = vmatpush.msra.mxu0 0.0
        %1397 = vmatpush.msra.mxu0 0.0
        %1398 = vmatpush.msra.mxu0 0.0
        %1399 = vmatpush.msra.mxu0 0.0
        %v1400 = vand.u32 %v1003, 4294901760
        %v1401 = vsub.f32 %v1003, %v1400
        %v1402 = vand.u32 %v1401, 4294901760
        %v1403 = vsub.f32 %v1401, %v1402
        %v1404 = vand.u32 %v1403, 4294901760
        %1405 = vmatpush.msra.mxu0 %v1404
        %v1406 = vand.u32 %v1357, 4294901760
        %1407 = vmatmul.f32.gmra.mxu0 %v1406
        %v1408 = vpop.f32.mrf.mxu0
        %v1409 = vadd.f32 %v1383, %v1408
        %1410 = vdwg.mxu0
        %1411 = vmatpush.msra.mxu0 0.0
        %1412 = vmatpush.msra.mxu0 0.0
        %1413 = vmatpush.msra.mxu0 0.0
        %1414 = vmatpush.msra.mxu0 0.0
        %1415 = vmatpush.msra.mxu0 0.0
        %1416 = vmatpush.msra.mxu0 0.0
        %1417 = vmatpush.msra.mxu0 0.0
        %1418 = vmatpush.msra.mxu0 0.0
        %1419 = vmatpush.msra.mxu0 0.0
        %1420 = vmatpush.msra.mxu0 0.0
        %1421 = vmatpush.msra.mxu0 0.0
        %1422 = vmatpush.msra.mxu0 0.0
        %1423 = vmatpush.msra.mxu0 0.0
        %1424 = vmatpush.msra.mxu0 0.0
        %1425 = vmatpush.msra.mxu0 0.0
        %v1426 = vand.u32 %v1003, 4294901760
        %v1427 = vsub.f32 %v1003, %v1426
        %1428 = vmatpush.msra.mxu0 %v1427
        %v1429 = vand.u32 %v1357, 4294901760
        %v1430 = vsub.f32 %v1357, %v1429
        %1431 = vmatmul.f32.gmra.mxu0 %v1430
        %v1432 = vpop.f32.mrf.mxu0
        %v1433 = vadd.f32 %v1409, %v1432
        %1434 = vdwg.mxu0
        %1435 = vmatpush.msra.mxu0 0.0
        %1436 = vmatpush.msra.mxu0 0.0
        %1437 = vmatpush.msra.mxu0 0.0
        %1438 = vmatpush.msra.mxu0 0.0
        %1439 = vmatpush.msra.mxu0 0.0
        %1440 = vmatpush.msra.mxu0 0.0
        %1441 = vmatpush.msra.mxu0 0.0
        %1442 = vmatpush.msra.mxu0 0.0
        %1443 = vmatpush.msra.mxu0 0.0
        %1444 = vmatpush.msra.mxu0 0.0
        %1445 = vmatpush.msra.mxu0 0.0
        %1446 = vmatpush.msra.mxu0 0.0
        %1447 = vmatpush.msra.mxu0 0.0
        %1448 = vmatpush.msra.mxu0 0.0
        %1449 = vmatpush.msra.mxu0 0.0
        %v1450 = vand.u32 %v1003, 4294901760
        %1451 = vmatpush.msra.mxu0 %v1450
        %v1452 = vand.u32 %v1357, 4294901760
        %v1453 = vsub.f32 %v1357, %v1452
        %v1454 = vand.u32 %v1453, 4294901760
        %1455 = vmatmul.f32.gmra.mxu0 %v1454
        %v1456 = vpop.f32.mrf.mxu0
        %v1457 = vadd.f32 %v1433, %v1456
        %1458 = vdwg.mxu0
        %1459 = vmatpush.msra.mxu0 0.0
        %1460 = vmatpush.msra.mxu0 0.0
        %1461 = vmatpush.msra.mxu0 0.0
        %1462 = vmatpush.msra.mxu0 0.0
        %1463 = vmatpush.msra.mxu0 0.0
        %1464 = vmatpush.msra.mxu0 0.0
        %1465 = vmatpush.msra.mxu0 0.0
        %1466 = vmatpush.msra.mxu0 0.0
        %1467 = vmatpush.msra.mxu0 0.0
        %1468 = vmatpush.msra.mxu0 0.0
        %1469 = vmatpush.msra.mxu0 0.0
        %1470 = vmatpush.msra.mxu0 0.0
        %1471 = vmatpush.msra.mxu0 0.0
        %1472 = vmatpush.msra.mxu0 0.0
        %1473 = vmatpush.msra.mxu0 0.0
        %v1474 = vand.u32 %v1003, 4294901760
        %v1475 = vsub.f32 %v1003, %v1474
        %v1476 = vand.u32 %v1475, 4294901760
        %1477 = vmatpush.msra.mxu0 %v1476
        %v1478 = vand.u32 %v1357, 4294901760
        %1479 = vmatmul.f32.gmra.mxu0 %v1478
        %v1480 = vpop.f32.mrf.mxu0
        %v1481 = vadd.f32 %v1457, %v1480
        %1482 = vdwg.mxu0
        %1483 = vmatpush.msra.mxu0 0.0
        %1484 = vmatpush.msra.mxu0 0.0
        %1485 = vmatpush.msra.mxu0 0.0
        %1486 = vmatpush.msra.mxu0 0.0
        %1487 = vmatpush.msra.mxu0 0.0
        %1488 = vmatpush.msra.mxu0 0.0
        %1489 = vmatpush.msra.mxu0 0.0
        %1490 = vmatpush.msra.mxu0 0.0
        %1491 = vmatpush.msra.mxu0 0.0
        %1492 = vmatpush.msra.mxu0 0.0
        %1493 = vmatpush.msra.mxu0 0.0
        %1494 = vmatpush.msra.mxu0 0.0
        %1495 = vmatpush.msra.mxu0 0.0
        %1496 = vmatpush.msra.mxu0 0.0
        %1497 = vmatpush.msra.mxu0 0.0
        %v1498 = vand.u32 %v1003, 4294901760
        %1499 = vmatpush.msra.mxu0 %v1498
        %v1500 = vand.u32 %v1357, 4294901760
        %1501 = vmatmul.f32.gmra.mxu0 %v1500
        %v1502 = vpop.f32.mrf.mxu0
        %v1503 = vadd.f32 %v1481, %v1502
        %1504 = vdwg.mxu0
        %v1505 = vmul.f32 %v558, %v1503
        %v1506 = vsel %vm351, %v1505, 0.0
        %v1507 = vrot.slane %v1506, 4
        %v1508 = vadd.f32 %v1506, %v1507
        %v1509 = vrot.slane %v1508, 2
        %v1510 = vadd.f32 %v1508, %v1509
        %v1511 = vrot.slane %v1510, 1
        %v1512 = vadd.f32 %v1510, %v1511
        %1514 = vrot.lane.b32.xlu0 %v1512, 32
        %v1515 = vpop.permute.xlu0 %1514
        %v1517 = vmul.f32 %v558, %v1515
        %1519 = vrot.lane.b32.xlu0 %v1517, 96
        %v1520 = vpop.permute.xlu0 %1519
        %v1521 = vsel %vm351, %v1520, 0
        %1523 = vmatpush.msra.mxu0 0.0
        %1524 = vmatpush.msra.mxu0 0.0
        %1525 = vmatpush.msra.mxu0 0.0
        %1526 = vmatpush.msra.mxu0 0.0
        %1527 = vmatpush.msra.mxu0 0.0
        %1528 = vmatpush.msra.mxu0 0.0
        %1529 = vmatpush.msra.mxu0 0.0
        %1530 = vmatpush.msra.mxu0 0.0
        %1531 = vmatpush.msra.mxu0 0.0
        %1532 = vmatpush.msra.mxu0 0.0
        %1533 = vmatpush.msra.mxu0 0.0
        %1534 = vmatpush.msra.mxu0 0.0
        %v1535 = vand.u32 %v562, 4294901760
        %1536 = vmatpush.msra.mxu0 %v1535
        %v1537 = vand.u32 %v561, 4294901760
        %1538 = vmatpush.msra.mxu0 %v1537
        %v1539 = vand.u32 %v560, 4294901760
        %1540 = vmatpush.msra.mxu0 %v1539
        %v1541 = vand.u32 %v559, 4294901760
        %1542 = vmatpush.msra.mxu0 %v1541
        %v1543 = vand.u32 %v1521, 4294901760
        %v1544 = vsub.f32 %v1521, %v1543
        %v1545 = vand.u32 %v1544, 4294901760
        %v1546 = vsub.f32 %v1544, %v1545
        %v1547 = vand.u32 %v1546, 4294901760
        %1548 = vmatmul.f32.gmra.mxu0 %v1547
        %v1549 = vpop.f32.mrf.mxu0
        %v1550 = vadd.f32 0.0, %v1549
        %1551 = vdwg.mxu0
        %1552 = vmatpush.msra.mxu0 0.0
        %1553 = vmatpush.msra.mxu0 0.0
        %1554 = vmatpush.msra.mxu0 0.0
        %1555 = vmatpush.msra.mxu0 0.0
        %1556 = vmatpush.msra.mxu0 0.0
        %1557 = vmatpush.msra.mxu0 0.0
        %1558 = vmatpush.msra.mxu0 0.0
        %1559 = vmatpush.msra.mxu0 0.0
        %1560 = vmatpush.msra.mxu0 0.0
        %1561 = vmatpush.msra.mxu0 0.0
        %1562 = vmatpush.msra.mxu0 0.0
        %1563 = vmatpush.msra.mxu0 0.0
        %v1564 = vand.u32 %v562, 4294901760
        %v1565 = vsub.f32 %v562, %v1564
        %v1566 = vand.u32 %v1565, 4294901760
        %v1567 = vsub.f32 %v1565, %v1566
        %v1568 = vand.u32 %v1567, 4294901760
        %1569 = vmatpush.msra.mxu0 %v1568
        %v1570 = vand.u32 %v561, 4294901760
        %v1571 = vsub.f32 %v561, %v1570
        %v1572 = vand.u32 %v1571, 4294901760
        %v1573 = vsub.f32 %v1571, %v1572
        %v1574 = vand.u32 %v1573, 4294901760
        %1575 = vmatpush.msra.mxu0 %v1574
        %v1576 = vand.u32 %v560, 4294901760
        %v1577 = vsub.f32 %v560, %v1576
        %v1578 = vand.u32 %v1577, 4294901760
        %v1579 = vsub.f32 %v1577, %v1578
        %v1580 = vand.u32 %v1579, 4294901760
        %1581 = vmatpush.msra.mxu0 %v1580
        %v1582 = vand.u32 %v559, 4294901760
        %v1583 = vsub.f32 %v559, %v1582
        %v1584 = vand.u32 %v1583, 4294901760
        %v1585 = vsub.f32 %v1583, %v1584
        %v1586 = vand.u32 %v1585, 4294901760
        %1587 = vmatpush.msra.mxu0 %v1586
        %v1588 = vand.u32 %v1521, 4294901760
        %1589 = vmatmul.f32.gmra.mxu0 %v1588
        %v1590 = vpop.f32.mrf.mxu0
        %v1591 = vadd.f32 %v1550, %v1590
        %1592 = vdwg.mxu0
        %1593 = vmatpush.msra.mxu0 0.0
        %1594 = vmatpush.msra.mxu0 0.0
        %1595 = vmatpush.msra.mxu0 0.0
        %1596 = vmatpush.msra.mxu0 0.0
        %1597 = vmatpush.msra.mxu0 0.0
        %1598 = vmatpush.msra.mxu0 0.0
        %1599 = vmatpush.msra.mxu0 0.0
        %1600 = vmatpush.msra.mxu0 0.0
        %1601 = vmatpush.msra.mxu0 0.0
        %1602 = vmatpush.msra.mxu0 0.0
        %1603 = vmatpush.msra.mxu0 0.0
        %1604 = vmatpush.msra.mxu0 0.0
        %v1605 = vand.u32 %v562, 4294901760
        %v1606 = vsub.f32 %v562, %v1605
        %1607 = vmatpush.msra.mxu0 %v1606
        %v1608 = vand.u32 %v561, 4294901760
        %v1609 = vsub.f32 %v561, %v1608
        %1610 = vmatpush.msra.mxu0 %v1609
        %v1611 = vand.u32 %v560, 4294901760
        %v1612 = vsub.f32 %v560, %v1611
        %1613 = vmatpush.msra.mxu0 %v1612
        %v1614 = vand.u32 %v559, 4294901760
        %v1615 = vsub.f32 %v559, %v1614
        %1616 = vmatpush.msra.mxu0 %v1615
        %v1617 = vand.u32 %v1521, 4294901760
        %v1618 = vsub.f32 %v1521, %v1617
        %1619 = vmatmul.f32.gmra.mxu0 %v1618
        %v1620 = vpop.f32.mrf.mxu0
        %v1621 = vadd.f32 %v1591, %v1620
        %1622 = vdwg.mxu0
        %1623 = vmatpush.msra.mxu0 0.0
        %1624 = vmatpush.msra.mxu0 0.0
        %1625 = vmatpush.msra.mxu0 0.0
        %1626 = vmatpush.msra.mxu0 0.0
        %1627 = vmatpush.msra.mxu0 0.0
        %1628 = vmatpush.msra.mxu0 0.0
        %1629 = vmatpush.msra.mxu0 0.0
        %1630 = vmatpush.msra.mxu0 0.0
        %1631 = vmatpush.msra.mxu0 0.0
        %1632 = vmatpush.msra.mxu0 0.0
        %1633 = vmatpush.msra.mxu0 0.0
        %1634 = vmatpush.msra.mxu0 0.0
        %v1635 = vand.u32 %v562, 4294901760
        %1636 = vmatpush.msra.mxu0 %v1635
        %v1637 = vand.u32 %v561, 4294901760
        %1638 = vmatpush.msra.mxu0 %v1637
        %v1639 = vand.u32 %v560, 4294901760
        %1640 = vmatpush.msra.mxu0 %v1639
        %v1641 = vand.u32 %v559, 4294901760
        %1642 = vmatpush.msra.mxu0 %v1641
        %v1643 = vand.u32 %v1521, 4294901760
        %v1644 = vsub.f32 %v1521, %v1643
        %v1645 = vand.u32 %v1644, 4294901760
        %1646 = vmatmul.f32.gmra.mxu0 %v1645
        %v1647 = vpop.f32.mrf.mxu0
        %v1648 = vadd.f32 %v1621, %v1647
        %1649 = vdwg.mxu0
        %1650 = vmatpush.msra.mxu0 0.0
        %1651 = vmatpush.msra.mxu0 0.0
        %1652 = vmatpush.msra.mxu0 0.0
        %1653 = vmatpush.msra.mxu0 0.0
        %1654 = vmatpush.msra.mxu0 0.0
        %1655 = vmatpush.msra.mxu0 0.0
        %1656 = vmatpush.msra.mxu0 0.0
        %1657 = vmatpush.msra.mxu0 0.0
        %1658 = vmatpush.msra.mxu0 0.0
        %1659 = vmatpush.msra.mxu0 0.0
        %1660 = vmatpush.msra.mxu0 0.0
        %1661 = vmatpush.msra.mxu0 0.0
        %v1662 = vand.u32 %v562, 4294901760
        %v1663 = vsub.f32 %v562, %v1662
        %v1664 = vand.u32 %v1663, 4294901760
        %1665 = vmatpush.msra.mxu0 %v1664
        %v1666 = vand.u32 %v561, 4294901760
        %v1667 = vsub.f32 %v561, %v1666
        %v1668 = vand.u32 %v1667, 4294901760
        %1669 = vmatpush.msra.mxu0 %v1668
        %v1670 = vand.u32 %v560, 4294901760
        %v1671 = vsub.f32 %v560, %v1670
        %v1672 = vand.u32 %v1671, 4294901760
        %1673 = vmatpush.msra.mxu0 %v1672
        %v1674 = vand.u32 %v559, 4294901760
        %v1675 = vsub.f32 %v559, %v1674
        %v1676 = vand.u32 %v1675, 4294901760
        %1677 = vmatpush.msra.mxu0 %v1676
        %v1678 = vand.u32 %v1521, 4294901760
        %1679 = vmatmul.f32.gmra.mxu0 %v1678
        %v1680 = vpop.f32.mrf.mxu0
        %v1681 = vadd.f32 %v1648, %v1680
        %1682 = vdwg.mxu0
        %1683 = vmatpush.msra.mxu0 0.0
        %1684 = vmatpush.msra.mxu0 0.0
        %1685 = vmatpush.msra.mxu0 0.0
        %1686 = vmatpush.msra.mxu0 0.0
        %1687 = vmatpush.msra.mxu0 0.0
        %1688 = vmatpush.msra.mxu0 0.0
        %1689 = vmatpush.msra.mxu0 0.0
        %1690 = vmatpush.msra.mxu0 0.0
        %1691 = vmatpush.msra.mxu0 0.0
        %1692 = vmatpush.msra.mxu0 0.0
        %1693 = vmatpush.msra.mxu0 0.0
        %1694 = vmatpush.msra.mxu0 0.0
        %v1695 = vand.u32 %v562, 4294901760
        %1696 = vmatpush.msra.mxu0 %v1695
        %v1697 = vand.u32 %v561, 4294901760
        %1698 = vmatpush.msra.mxu0 %v1697
        %v1699 = vand.u32 %v560, 4294901760
        %1700 = vmatpush.msra.mxu0 %v1699
        %v1701 = vand.u32 %v559, 4294901760
        %1702 = vmatpush.msra.mxu0 %v1701
        %v1703 = vand.u32 %v1521, 4294901760
        %1704 = vmatmul.f32.gmra.mxu0 %v1703
        %v1705 = vpop.f32.mrf.mxu0
        %v1706 = vadd.f32 %v1681, %v1705
        %1707 = vdwg.mxu0
        %v1708 = vsel %vm997, %v1706, -inf
        %v1709 = vrot.slane %v1708, 4
        %v1710 = vmax.f32 %v1708, %v1709
        %v1711 = vrot.slane %v1710, 2
        %v1712 = vmax.f32 %v1710, %v1711
        %v1713 = vrot.slane %v1712, 1
        %v1714 = vmax.f32 %v1712, %v1713
        %v1715 = vsub.f32 %v1706, %v1714
        %v1716 = vmul.f32 %v1715, 1.442695
        %v1717 = vpow.pop %v1716
        %v1718 = vsel %vm997, %v1717, 0.0
        %v1719 = vrot.slane %v1718, 4
        %v1720 = vadd.f32 %v1718, %v1719
        %v1721 = vrot.slane %v1720, 2
        %v1722 = vadd.f32 %v1720, %v1721
        %v1723 = vrot.slane %v1722, 1
        %v1724 = vadd.f32 %v1722, %v1723
        %v1725 = vrcp.pop %v1724
        %v1726 = vmul.f32 %v1724, %v1725
        %v1727 = vsub.f32 1.0, %v1726
        %v1728 = vmul.f32 %v1725, %v1727
        %v1729 = vadd.f32 %v1725, %v1728
        %vm1730 = vweird.f32 %v1724
        %vm1731 = vweird.f32 %v1725
        %vm1732 = vmor %vm1730, %vm1731
        %v1733 = vsel %vm1732, %v1725, %v1729
        %v1734 = vand.u32 2147483647, %v1724
        %vm1735 = vcmp.eq.f32.partialorder %v1734, 8.507059e+37
        %v1736 = vand.u32 %v1724, 2147483648
        %v1737 = vor.u32 1.1754944e-38, %v1736
        %v1738 = vsel %vm1735, %v1737, %v1733
        %v1739 = vmul.f32 1.0, %v1738
        %v1740 = vmul.f32 %v1717, %v1739
        %v1742 = vsel %vm997, %v1740, 0
        %1744 = vmatpush.msra.mxu0 0.0
        %1745 = vmatpush.msra.mxu0 0.0
        %1746 = vmatpush.msra.mxu0 0.0
        %1747 = vmatpush.msra.mxu0 0.0
        %1748 = vmatpush.msra.mxu0 0.0
        %1749 = vmatpush.msra.mxu0 0.0
        %1750 = vmatpush.msra.mxu0 0.0
        %1751 = vmatpush.msra.mxu0 0.0
        %1752 = vmatpush.msra.mxu0 0.0
        %1753 = vmatpush.msra.mxu0 0.0
        %1754 = vmatpush.msra.mxu0 0.0
        %1755 = vmatpush.msra.mxu0 0.0
        %1756 = vmatpush.msra.mxu0 0.0
        %1757 = vmatpush.msra.mxu0 0.0
        %1758 = vmatpush.msra.mxu0 0.0
        %v1759 = vand.u32 %v1003, 4294901760
        %1760 = vmatpush.msra.mxu0 %v1759
        %v1761 = vand.u32 %v1742, 4294901760
        %v1762 = vsub.f32 %v1742, %v1761
        %v1763 = vand.u32 %v1762, 4294901760
        %v1764 = vsub.f32 %v1762, %v1763
        %v1765 = vand.u32 %v1764, 4294901760
        %1766 = vmatmul.f32.gmra.mxu0 %v1765
        %v1767 = vpop.f32.mrf.mxu0
        %v1768 = vadd.f32 0.0, %v1767
        %1769 = vdwg.mxu0
        %1770 = vmatpush.msra.mxu0 0.0
        %1771 = vmatpush.msra.mxu0 0.0
        %1772 = vmatpush.msra.mxu0 0.0
        %1773 = vmatpush.msra.mxu0 0.0
        %1774 = vmatpush.msra.mxu0 0.0
        %1775 = vmatpush.msra.mxu0 0.0
        %1776 = vmatpush.msra.mxu0 0.0
        %1777 = vmatpush.msra.mxu0 0.0
        %1778 = vmatpush.msra.mxu0 0.0
        %1779 = vmatpush.msra.mxu0 0.0
        %1780 = vmatpush.msra.mxu0 0.0
        %1781 = vmatpush.msra.mxu0 0.0
        %1782 = vmatpush.msra.mxu0 0.0
        %1783 = vmatpush.msra.mxu0 0.0
        %1784 = vmatpush.msra.mxu0 0.0
        %v1785 = vand.u32 %v1003, 4294901760
        %v1786 = vsub.f32 %v1003, %v1785
        %v1787 = vand.u32 %v1786, 4294901760
        %v1788 = vsub.f32 %v1786, %v1787
        %v1789 = vand.u32 %v1788, 4294901760
        %1790 = vmatpush.msra.mxu0 %v1789
        %v1791 = vand.u32 %v1742, 4294901760
        %1792 = vmatmul.f32.gmra.mxu0 %v1791
        %v1793 = vpop.f32.mrf.mxu0
        %v1794 = vadd.f32 %v1768, %v1793
        %1795 = vdwg.mxu0
        %1796 = vmatpush.msra.mxu0 0.0
        %1797 = vmatpush.msra.mxu0 0.0
        %1798 = vmatpush.msra.mxu0 0.0
        %1799 = vmatpush.msra.mxu0 0.0
        %1800 = vmatpush.msra.mxu0 0.0
        %1801 = vmatpush.msra.mxu0 0.0
        %1802 = vmatpush.msra.mxu0 0.0
        %1803 = vmatpush.msra.mxu0 0.0
        %1804 = vmatpush.msra.mxu0 0.0
        %1805 = vmatpush.msra.mxu0 0.0
        %1806 = vmatpush.msra.mxu0 0.0
        %1807 = vmatpush.msra.mxu0 0.0
        %1808 = vmatpush.msra.mxu0 0.0
        %1809 = vmatpush.msra.mxu0 0.0
        %1810 = vmatpush.msra.mxu0 0.0
        %v1811 = vand.u32 %v1003, 4294901760
        %v1812 = vsub.f32 %v1003, %v1811
        %1813 = vmatpush.msra.mxu0 %v1812
        %v1814 = vand.u32 %v1742, 4294901760
        %v1815 = vsub.f32 %v1742, %v1814
        %1816 = vmatmul.f32.gmra.mxu0 %v1815
        %v1817 = vpop.f32.mrf.mxu0
        %v1818 = vadd.f32 %v1794, %v1817
        %1819 = vdwg.mxu0
        %1820 = vmatpush.msra.mxu0 0.0
        %1821 = vmatpush.msra.mxu0 0.0
        %1822 = vmatpush.msra.mxu0 0.0
        %1823 = vmatpush.msra.mxu0 0.0
        %1824 = vmatpush.msra.mxu0 0.0
        %1825 = vmatpush.msra.mxu0 0.0
        %1826 = vmatpush.msra.mxu0 0.0
        %1827 = vmatpush.msra.mxu0 0.0
        %1828 = vmatpush.msra.mxu0 0.0
        %1829 = vmatpush.msra.mxu0 0.0
        %1830 = vmatpush.msra.mxu0 0.0
        %1831 = vmatpush.msra.mxu0 0.0
        %1832 = vmatpush.msra.mxu0 0.0
        %1833 = vmatpush.msra.mxu0 0.0
        %1834 = vmatpush.msra.mxu0 0.0
        %v1835 = vand.u32 %v1003, 4294901760
        %1836 = vmatpush.msra.mxu0 %v1835
        %v1837 = vand.u32 %v1742, 4294901760
        %v1838 = vsub.f32 %v1742, %v1837
        %v1839 = vand.u32 %v1838, 4294901760
        %1840 = vmatmul.f32.gmra.mxu0 %v1839
        %v1841 = vpop.f32.mrf.mxu0
        %v1842 = vadd.f32 %v1818, %v1841
        %1843 = vdwg.mxu0
        %1844 = vmatpush.msra.mxu0 0.0
        %1845 = vmatpush.msra.mxu0 0.0
        %1846 = vmatpush.msra.mxu0 0.0
        %1847 = vmatpush.msra.mxu0 0.0
        %1848 = vmatpush.msra.mxu0 0.0
        %1849 = vmatpush.msra.mxu0 0.0
        %1850 = vmatpush.msra.mxu0 0.0
        %1851 = vmatpush.msra.mxu0 0.0
        %1852 = vmatpush.msra.mxu0 0.0
        %1853 = vmatpush.msra.mxu0 0.0
        %1854 = vmatpush.msra.mxu0 0.0
        %1855 = vmatpush.msra.mxu0 0.0
        %1856 = vmatpush.msra.mxu0 0.0
        %1857 = vmatpush.msra.mxu0 0.0
        %1858 = vmatpush.msra.mxu0 0.0
        %v1859 = vand.u32 %v1003, 4294901760
        %v1860 = vsub.f32 %v1003, %v1859
        %v1861 = vand.u32 %v1860, 4294901760
        %1862 = vmatpush.msra.mxu0 %v1861
        %v1863 = vand.u32 %v1742, 4294901760
        %1864 = vmatmul.f32.gmra.mxu0 %v1863
        %v1865 = vpop.f32.mrf.mxu0
        %v1866 = vadd.f32 %v1842, %v1865
        %1867 = vdwg.mxu0
        %1868 = vmatpush.msra.mxu0 0.0
        %1869 = vmatpush.msra.mxu0 0.0
        %1870 = vmatpush.msra.mxu0 0.0
        %1871 = vmatpush.msra.mxu0 0.0
        %1872 = vmatpush.msra.mxu0 0.0
        %1873 = vmatpush.msra.mxu0 0.0
        %1874 = vmatpush.msra.mxu0 0.0
        %1875 = vmatpush.msra.mxu0 0.0
        %1876 = vmatpush.msra.mxu0 0.0
        %1877 = vmatpush.msra.mxu0 0.0
        %1878 = vmatpush.msra.mxu0 0.0
        %1879 = vmatpush.msra.mxu0 0.0
        %1880 = vmatpush.msra.mxu0 0.0
        %1881 = vmatpush.msra.mxu0 0.0
        %1882 = vmatpush.msra.mxu0 0.0
        %v1883 = vand.u32 %v1003, 4294901760
        %1884 = vmatpush.msra.mxu0 %v1883
        %v1885 = vand.u32 %v1742, 4294901760
        %1886 = vmatmul.f32.gmra.mxu0 %v1885
        %v1887 = vpop.f32.mrf.mxu0
        %v1888 = vadd.f32 %v1866, %v1887
        %1889 = vdwg.mxu0
        %1891 = vrot.lane.b32.xlu0 %v1888, 64
        %v1892 = vpop.permute.xlu0 %1891
        %v1894 = vmul.f32 %v538, %v1892
        %1896 = vrot.lane.b32.xlu0 %v558, 96
        %v1897 = vpop.permute.xlu0 %1896
        %v1899 = vmul.f32 %v1505, %v1897
        %v1901 = vsel %vm351, %v1899, 0
        %1903 = vmatpush.msra.mxu0 0.0
        %1904 = vmatpush.msra.mxu0 0.0
        %1905 = vmatpush.msra.mxu0 0.0
        %1906 = vmatpush.msra.mxu0 0.0
        %1907 = vmatpush.msra.mxu0 0.0
        %1908 = vmatpush.msra.mxu0 0.0
        %1909 = vmatpush.msra.mxu0 0.0
        %1910 = vmatpush.msra.mxu0 0.0
        %1911 = vmatpush.msra.mxu0 0.0
        %1912 = vmatpush.msra.mxu0 0.0
        %1913 = vmatpush.msra.mxu0 0.0
        %1914 = vmatpush.msra.mxu0 0.0
        %v1915 = vand.u32 %v562, 4294901760
        %1916 = vmatpush.msra.mxu0 %v1915
        %v1917 = vand.u32 %v561, 4294901760
        %1918 = vmatpush.msra.mxu0 %v1917
        %v1919 = vand.u32 %v560, 4294901760
        %1920 = vmatpush.msra.mxu0 %v1919
        %v1921 = vand.u32 %v559, 4294901760
        %1922 = vmatpush.msra.mxu0 %v1921
        %v1923 = vand.u32 %v1901, 4294901760
        %v1924 = vsub.f32 %v1901, %v1923
        %v1925 = vand.u32 %v1924, 4294901760
        %v1926 = vsub.f32 %v1924, %v1925
        %v1927 = vand.u32 %v1926, 4294901760
        %1928 = vmatmul.f32.gmra.mxu0 %v1927
        %v1929 = vpop.f32.mrf.mxu0
        %v1930 = vadd.f32 0.0, %v1929
        %1931 = vdwg.mxu0
        %1932 = vmatpush.msra.mxu0 0.0
        %1933 = vmatpush.msra.mxu0 0.0
        %1934 = vmatpush.msra.mxu0 0.0
        %1935 = vmatpush.msra.mxu0 0.0
        %1936 = vmatpush.msra.mxu0 0.0
        %1937 = vmatpush.msra.mxu0 0.0
        %1938 = vmatpush.msra.mxu0 0.0
        %1939 = vmatpush.msra.mxu0 0.0
        %1940 = vmatpush.msra.mxu0 0.0
        %1941 = vmatpush.msra.mxu0 0.0
        %1942 = vmatpush.msra.mxu0 0.0
        %1943 = vmatpush.msra.mxu0 0.0
        %v1944 = vand.u32 %v562, 4294901760
        %v1945 = vsub.f32 %v562, %v1944
        %v1946 = vand.u32 %v1945, 4294901760
        %v1947 = vsub.f32 %v1945, %v1946
        %v1948 = vand.u32 %v1947, 4294901760
        %1949 = vmatpush.msra.mxu0 %v1948
        %v1950 = vand.u32 %v561, 4294901760
        %v1951 = vsub.f32 %v561, %v1950
        %v1952 = vand.u32 %v1951, 4294901760
        %v1953 = vsub.f32 %v1951, %v1952
        %v1954 = vand.u32 %v1953, 4294901760
        %1955 = vmatpush.msra.mxu0 %v1954
        %v1956 = vand.u32 %v560, 4294901760
        %v1957 = vsub.f32 %v560, %v1956
        %v1958 = vand.u32 %v1957, 4294901760
        %v1959 = vsub.f32 %v1957, %v1958
        %v1960 = vand.u32 %v1959, 4294901760
        %1961 = vmatpush.msra.mxu0 %v1960
        %v1962 = vand.u32 %v559, 4294901760
        %v1963 = vsub.f32 %v559, %v1962
        %v1964 = vand.u32 %v1963, 4294901760
        %v1965 = vsub.f32 %v1963, %v1964
        %v1966 = vand.u32 %v1965, 4294901760
        %1967 = vmatpush.msra.mxu0 %v1966
        %v1968 = vand.u32 %v1901, 4294901760
        %1969 = vmatmul.f32.gmra.mxu0 %v1968
        %v1970 = vpop.f32.mrf.mxu0
        %v1971 = vadd.f32 %v1930, %v1970
        %1972 = vdwg.mxu0
        %1973 = vmatpush.msra.mxu0 0.0
        %1974 = vmatpush.msra.mxu0 0.0
        %1975 = vmatpush.msra.mxu0 0.0
        %1976 = vmatpush.msra.mxu0 0.0
        %1977 = vmatpush.msra.mxu0 0.0
        %1978 = vmatpush.msra.mxu0 0.0
        %1979 = vmatpush.msra.mxu0 0.0
        %1980 = vmatpush.msra.mxu0 0.0
        %1981 = vmatpush.msra.mxu0 0.0
        %1982 = vmatpush.msra.mxu0 0.0
        %1983 = vmatpush.msra.mxu0 0.0
        %1984 = vmatpush.msra.mxu0 0.0
        %v1985 = vand.u32 %v562, 4294901760
        %v1986 = vsub.f32 %v562, %v1985
        %1987 = vmatpush.msra.mxu0 %v1986
        %v1988 = vand.u32 %v561, 4294901760
        %v1989 = vsub.f32 %v561, %v1988
        %1990 = vmatpush.msra.mxu0 %v1989
        %v1991 = vand.u32 %v560, 4294901760
        %v1992 = vsub.f32 %v560, %v1991
        %1993 = vmatpush.msra.mxu0 %v1992
        %v1994 = vand.u32 %v559, 4294901760
        %v1995 = vsub.f32 %v559, %v1994
        %1996 = vmatpush.msra.mxu0 %v1995
        %v1997 = vand.u32 %v1901, 4294901760
        %v1998 = vsub.f32 %v1901, %v1997
        %1999 = vmatmul.f32.gmra.mxu0 %v1998
        %v2000 = vpop.f32.mrf.mxu0
        %v2001 = vadd.f32 %v1971, %v2000
        %2002 = vdwg.mxu0
        %2003 = vmatpush.msra.mxu0 0.0
        %2004 = vmatpush.msra.mxu0 0.0
        %2005 = vmatpush.msra.mxu0 0.0
        %2006 = vmatpush.msra.mxu0 0.0
        %2007 = vmatpush.msra.mxu0 0.0
        %2008 = vmatpush.msra.mxu0 0.0
        %2009 = vmatpush.msra.mxu0 0.0
        %2010 = vmatpush.msra.mxu0 0.0
        %2011 = vmatpush.msra.mxu0 0.0
        %2012 = vmatpush.msra.mxu0 0.0
        %2013 = vmatpush.msra.mxu0 0.0
        %2014 = vmatpush.msra.mxu0 0.0
        %v2015 = vand.u32 %v562, 4294901760
        %2016 = vmatpush.msra.mxu0 %v2015
        %v2017 = vand.u32 %v561, 4294901760
        %2018 = vmatpush.msra.mxu0 %v2017
        %v2019 = vand.u32 %v560, 4294901760
        %2020 = vmatpush.msra.mxu0 %v2019
        %v2021 = vand.u32 %v559, 4294901760
        %2022 = vmatpush.msra.mxu0 %v2021
        %v2023 = vand.u32 %v1901, 4294901760
        %v2024 = vsub.f32 %v1901, %v2023
        %v2025 = vand.u32 %v2024, 4294901760
        %2026 = vmatmul.f32.gmra.mxu0 %v2025
        %v2027 = vpop.f32.mrf.mxu0
        %v2028 = vadd.f32 %v2001, %v2027
        %2029 = vdwg.mxu0
        %2030 = vmatpush.msra.mxu0 0.0
        %2031 = vmatpush.msra.mxu0 0.0
        %2032 = vmatpush.msra.mxu0 0.0
        %2033 = vmatpush.msra.mxu0 0.0
        %2034 = vmatpush.msra.mxu0 0.0
        %2035 = vmatpush.msra.mxu0 0.0
        %2036 = vmatpush.msra.mxu0 0.0
        %2037 = vmatpush.msra.mxu0 0.0
        %2038 = vmatpush.msra.mxu0 0.0
        %2039 = vmatpush.msra.mxu0 0.0
        %2040 = vmatpush.msra.mxu0 0.0
        %2041 = vmatpush.msra.mxu0 0.0
        %v2042 = vand.u32 %v562, 4294901760
        %v2043 = vsub.f32 %v562, %v2042
        %v2044 = vand.u32 %v2043, 4294901760
        %2045 = vmatpush.msra.mxu0 %v2044
        %v2046 = vand.u32 %v561, 4294901760
        %v2047 = vsub.f32 %v561, %v2046
        %v2048 = vand.u32 %v2047, 4294901760
        %2049 = vmatpush.msra.mxu0 %v2048
        %v2050 = vand.u32 %v560, 4294901760
        %v2051 = vsub.f32 %v560, %v2050
        %v2052 = vand.u32 %v2051, 4294901760
        %2053 = vmatpush.msra.mxu0 %v2052
        %v2054 = vand.u32 %v559, 4294901760
        %v2055 = vsub.f32 %v559, %v2054
        %v2056 = vand.u32 %v2055, 4294901760
        %2057 = vmatpush.msra.mxu0 %v2056
        %v2058 = vand.u32 %v1901, 4294901760
        %2059 = vmatmul.f32.gmra.mxu0 %v2058
        %v2060 = vpop.f32.mrf.mxu0
        %v2061 = vadd.f32 %v2028, %v2060
        %2062 = vdwg.mxu0
        %2063 = vmatpush.msra.mxu0 0.0
        %2064 = vmatpush.msra.mxu0 0.0
        %2065 = vmatpush.msra.mxu0 0.0
        %2066 = vmatpush.msra.mxu0 0.0
        %2067 = vmatpush.msra.mxu0 0.0
        %2068 = vmatpush.msra.mxu0 0.0
        %2069 = vmatpush.msra.mxu0 0.0
        %2070 = vmatpush.msra.mxu0 0.0
        %2071 = vmatpush.msra.mxu0 0.0
        %2072 = vmatpush.msra.mxu0 0.0
        %2073 = vmatpush.msra.mxu0 0.0
        %2074 = vmatpush.msra.mxu0 0.0
        %v2075 = vand.u32 %v562, 4294901760
        %2076 = vmatpush.msra.mxu0 %v2075
        %v2077 = vand.u32 %v561, 4294901760
        %2078 = vmatpush.msra.mxu0 %v2077
        %v2079 = vand.u32 %v560, 4294901760
        %2080 = vmatpush.msra.mxu0 %v2079
        %v2081 = vand.u32 %v559, 4294901760
        %2082 = vmatpush.msra.mxu0 %v2081
        %v2083 = vand.u32 %v1901, 4294901760
        %2084 = vmatmul.f32.gmra.mxu0 %v2083
        %v2085 = vpop.f32.mrf.mxu0
        %v2086 = vadd.f32 %v2061, %v2085
        %2087 = vdwg.mxu0
        %v2089 = vsel %vm997, %v2086, 0
        %2091 = vmatpush.msra.mxu0 0.0
        %2092 = vmatpush.msra.mxu0 0.0
        %2093 = vmatpush.msra.mxu0 0.0
        %2094 = vmatpush.msra.mxu0 0.0
        %2095 = vmatpush.msra.mxu0 0.0
        %2096 = vmatpush.msra.mxu0 0.0
        %2097 = vmatpush.msra.mxu0 0.0
        %2098 = vmatpush.msra.mxu0 0.0
        %2099 = vmatpush.msra.mxu0 0.0
        %2100 = vmatpush.msra.mxu0 0.0
        %2101 = vmatpush.msra.mxu0 0.0
        %2102 = vmatpush.msra.mxu0 0.0
        %2103 = vmatpush.msra.mxu0 0.0
        %2104 = vmatpush.msra.mxu0 0.0
        %2105 = vmatpush.msra.mxu0 0.0
        %v2106 = vand.u32 %v1003, 4294901760
        %2107 = vmatpush.msra.mxu0 %v2106
        %v2108 = vand.u32 %v2089, 4294901760
        %v2109 = vsub.f32 %v2089, %v2108
        %v2110 = vand.u32 %v2109, 4294901760
        %v2111 = vsub.f32 %v2109, %v2110
        %v2112 = vand.u32 %v2111, 4294901760
        %2113 = vmatmul.f32.gmra.mxu0 %v2112
        %v2114 = vpop.f32.mrf.mxu0
        %v2115 = vadd.f32 0.0, %v2114
        %2116 = vdwg.mxu0
        %2117 = vmatpush.msra.mxu0 0.0
        %2118 = vmatpush.msra.mxu0 0.0
        %2119 = vmatpush.msra.mxu0 0.0
        %2120 = vmatpush.msra.mxu0 0.0
        %2121 = vmatpush.msra.mxu0 0.0
        %2122 = vmatpush.msra.mxu0 0.0
        %2123 = vmatpush.msra.mxu0 0.0
        %2124 = vmatpush.msra.mxu0 0.0
        %2125 = vmatpush.msra.mxu0 0.0
        %2126 = vmatpush.msra.mxu0 0.0
        %2127 = vmatpush.msra.mxu0 0.0
        %2128 = vmatpush.msra.mxu0 0.0
        %2129 = vmatpush.msra.mxu0 0.0
        %2130 = vmatpush.msra.mxu0 0.0
        %2131 = vmatpush.msra.mxu0 0.0
        %v2132 = vand.u32 %v1003, 4294901760
        %v2133 = vsub.f32 %v1003, %v2132
        %v2134 = vand.u32 %v2133, 4294901760
        %v2135 = vsub.f32 %v2133, %v2134
        %v2136 = vand.u32 %v2135, 4294901760
        %2137 = vmatpush.msra.mxu0 %v2136
        %v2138 = vand.u32 %v2089, 4294901760
        %2139 = vmatmul.f32.gmra.mxu0 %v2138
        %v2140 = vpop.f32.mrf.mxu0
        %v2141 = vadd.f32 %v2115, %v2140
        %2142 = vdwg.mxu0
        %2143 = vmatpush.msra.mxu0 0.0
        %2144 = vmatpush.msra.mxu0 0.0
        %2145 = vmatpush.msra.mxu0 0.0
        %2146 = vmatpush.msra.mxu0 0.0
        %2147 = vmatpush.msra.mxu0 0.0
        %2148 = vmatpush.msra.mxu0 0.0
        %2149 = vmatpush.msra.mxu0 0.0
        %2150 = vmatpush.msra.mxu0 0.0
        %2151 = vmatpush.msra.mxu0 0.0
        %2152 = vmatpush.msra.mxu0 0.0
        %2153 = vmatpush.msra.mxu0 0.0
        %2154 = vmatpush.msra.mxu0 0.0
        %2155 = vmatpush.msra.mxu0 0.0
        %2156 = vmatpush.msra.mxu0 0.0
        %2157 = vmatpush.msra.mxu0 0.0
        %v2158 = vand.u32 %v1003, 4294901760
        %v2159 = vsub.f32 %v1003, %v2158
        %2160 = vmatpush.msra.mxu0 %v2159
        %v2161 = vand.u32 %v2089, 4294901760
        %v2162 = vsub.f32 %v2089, %v2161
        %2163 = vmatmul.f32.gmra.mxu0 %v2162
        %v2164 = vpop.f32.mrf.mxu0
        %v2165 = vadd.f32 %v2141, %v2164
        %2166 = vdwg.mxu0
        %2167 = vmatpush.msra.mxu0 0.0
        %2168 = vmatpush.msra.mxu0 0.0
        %2169 = vmatpush.msra.mxu0 0.0
        %2170 = vmatpush.msra.mxu0 0.0
        %2171 = vmatpush.msra.mxu0 0.0
        %2172 = vmatpush.msra.mxu0 0.0
        %2173 = vmatpush.msra.mxu0 0.0
        %2174 = vmatpush.msra.mxu0 0.0
        %2175 = vmatpush.msra.mxu0 0.0
        %2176 = vmatpush.msra.mxu0 0.0
        %2177 = vmatpush.msra.mxu0 0.0
        %2178 = vmatpush.msra.mxu0 0.0
        %2179 = vmatpush.msra.mxu0 0.0
        %2180 = vmatpush.msra.mxu0 0.0
        %2181 = vmatpush.msra.mxu0 0.0
        %v2182 = vand.u32 %v1003, 4294901760
        %2183 = vmatpush.msra.mxu0 %v2182
        %v2184 = vand.u32 %v2089, 4294901760
        %v2185 = vsub.f32 %v2089, %v2184
        %v2186 = vand.u32 %v2185, 4294901760
        %2187 = vmatmul.f32.gmra.mxu0 %v2186
        %v2188 = vpop.f32.mrf.mxu0
        %v2189 = vadd.f32 %v2165, %v2188
        %2190 = vdwg.mxu0
        %2191 = vmatpush.msra.mxu0 0.0
        %2192 = vmatpush.msra.mxu0 0.0
        %2193 = vmatpush.msra.mxu0 0.0
        %2194 = vmatpush.msra.mxu0 0.0
        %2195 = vmatpush.msra.mxu0 0.0
        %2196 = vmatpush.msra.mxu0 0.0
        %2197 = vmatpush.msra.mxu0 0.0
        %2198 = vmatpush.msra.mxu0 0.0
        %2199 = vmatpush.msra.mxu0 0.0
        %2200 = vmatpush.msra.mxu0 0.0
        %2201 = vmatpush.msra.mxu0 0.0
        %2202 = vmatpush.msra.mxu0 0.0
        %2203 = vmatpush.msra.mxu0 0.0
        %2204 = vmatpush.msra.mxu0 0.0
        %2205 = vmatpush.msra.mxu0 0.0
        %v2206 = vand.u32 %v1003, 4294901760
        %v2207 = vsub.f32 %v1003, %v2206
        %v2208 = vand.u32 %v2207, 4294901760
        %2209 = vmatpush.msra.mxu0 %v2208
        %v2210 = vand.u32 %v2089, 4294901760
        %2211 = vmatmul.f32.gmra.mxu0 %v2210
        %v2212 = vpop.f32.mrf.mxu0
        %v2213 = vadd.f32 %v2189, %v2212
        %2214 = vdwg.mxu0
        %2215 = vmatpush.msra.mxu0 0.0
        %2216 = vmatpush.msra.mxu0 0.0
        %2217 = vmatpush.msra.mxu0 0.0
        %2218 = vmatpush.msra.mxu0 0.0
        %2219 = vmatpush.msra.mxu0 0.0
        %2220 = vmatpush.msra.mxu0 0.0
        %2221 = vmatpush.msra.mxu0 0.0
        %2222 = vmatpush.msra.mxu0 0.0
        %2223 = vmatpush.msra.mxu0 0.0
        %2224 = vmatpush.msra.mxu0 0.0
        %2225 = vmatpush.msra.mxu0 0.0
        %2226 = vmatpush.msra.mxu0 0.0
        %2227 = vmatpush.msra.mxu0 0.0
        %2228 = vmatpush.msra.mxu0 0.0
        %2229 = vmatpush.msra.mxu0 0.0
        %v2230 = vand.u32 %v1003, 4294901760
        %2231 = vmatpush.msra.mxu0 %v2230
        %v2232 = vand.u32 %v2089, 4294901760
        %2233 = vmatmul.f32.gmra.mxu0 %v2232
        %v2234 = vpop.f32.mrf.mxu0
        %v2235 = vadd.f32 %v2213, %v2234
        %2236 = vdwg.mxu0
        %2238 = vrot.lane.b32.xlu0 %v1894, 64
        %v2239 = vpop.permute.xlu0 %2238
        %v2241 = vmul.f32 %v2235, %v2239
        %2242 = vrot.lane.b32.xlu0 %v558, 88
        %v2243 = vpop.permute.xlu0 %2242
        %2245 = vrot.lane.b32.xlu0 %v558, 120
        %v2246 = vpop.permute.xlu0 %2245
        %vm2248 = vcmask 195584
        %v2249 = vsel %vm2248, %v2243, %v2246
        %2250 = vrot.lane.b32.xlu0 %v1894, 56
        %v2251 = vpop.permute.xlu0 %2250
        %2253 = vrot.lane.b32.xlu0 %v1894, 88
        %v2254 = vpop.permute.xlu0 %2253
        %v2256 = vsel %vm2248, %v2251, %v2254
        %v2257 = vmul.f32 %v1505, %v2249
        %v2259 = vsel %vm351, %v2257, 0
        %2261 = vmatpush.msra.mxu0 0.0
        %2262 = vmatpush.msra.mxu0 0.0
        %2263 = vmatpush.msra.mxu0 0.0
        %2264 = vmatpush.msra.mxu0 0.0
        %2265 = vmatpush.msra.mxu0 0.0
        %2266 = vmatpush.msra.mxu0 0.0
        %2267 = vmatpush.msra.mxu0 0.0
        %2268 = vmatpush.msra.mxu0 0.0
        %2269 = vmatpush.msra.mxu0 0.0
        %2270 = vmatpush.msra.mxu0 0.0
        %2271 = vmatpush.msra.mxu0 0.0
        %2272 = vmatpush.msra.mxu0 0.0
        %v2273 = vand.u32 %v562, 4294901760
        %2274 = vmatpush.msra.mxu0 %v2273
        %v2275 = vand.u32 %v561, 4294901760
        %2276 = vmatpush.msra.mxu0 %v2275
        %v2277 = vand.u32 %v560, 4294901760
        %2278 = vmatpush.msra.mxu0 %v2277
        %v2279 = vand.u32 %v559, 4294901760
        %2280 = vmatpush.msra.mxu0 %v2279
        %v2281 = vand.u32 %v2259, 4294901760
        %v2282 = vsub.f32 %v2259, %v2281
        %v2283 = vand.u32 %v2282, 4294901760
        %v2284 = vsub.f32 %v2282, %v2283
        %v2285 = vand.u32 %v2284, 4294901760
        %2286 = vmatmul.f32.gmra.mxu0 %v2285
        %v2287 = vpop.f32.mrf.mxu0
        %v2288 = vadd.f32 0.0, %v2287
        %2289 = vdwg.mxu0
        %2290 = vmatpush.msra.mxu0 0.0
        %2291 = vmatpush.msra.mxu0 0.0
        %2292 = vmatpush.msra.mxu0 0.0
        %2293 = vmatpush.msra.mxu0 0.0
        %2294 = vmatpush.msra.mxu0 0.0
        %2295 = vmatpush.msra.mxu0 0.0
        %2296 = vmatpush.msra.mxu0 0.0
        %2297 = vmatpush.msra.mxu0 0.0
        %2298 = vmatpush.msra.mxu0 0.0
        %2299 = vmatpush.msra.mxu0 0.0
        %2300 = vmatpush.msra.mxu0 0.0
        %2301 = vmatpush.msra.mxu0 0.0
        %v2302 = vand.u32 %v562, 4294901760
        %v2303 = vsub.f32 %v562, %v2302
        %v2304 = vand.u32 %v2303, 4294901760
        %v2305 = vsub.f32 %v2303, %v2304
        %v2306 = vand.u32 %v2305, 4294901760
        %2307 = vmatpush.msra.mxu0 %v2306
        %v2308 = vand.u32 %v561, 4294901760
        %v2309 = vsub.f32 %v561, %v2308
        %v2310 = vand.u32 %v2309, 4294901760
        %v2311 = vsub.f32 %v2309, %v2310
        %v2312 = vand.u32 %v2311, 4294901760
        %2313 = vmatpush.msra.mxu0 %v2312
        %v2314 = vand.u32 %v560, 4294901760
        %v2315 = vsub.f32 %v560, %v2314
        %v2316 = vand.u32 %v2315, 4294901760
        %v2317 = vsub.f32 %v2315, %v2316
        %v2318 = vand.u32 %v2317, 4294901760
        %2319 = vmatpush.msra.mxu0 %v2318
        %v2320 = vand.u32 %v559, 4294901760
        %v2321 = vsub.f32 %v559, %v2320
        %v2322 = vand.u32 %v2321, 4294901760
        %v2323 = vsub.f32 %v2321, %v2322
        %v2324 = vand.u32 %v2323, 4294901760
        %2325 = vmatpush.msra.mxu0 %v2324
        %v2326 = vand.u32 %v2259, 4294901760
        %2327 = vmatmul.f32.gmra.mxu0 %v2326
        %v2328 = vpop.f32.mrf.mxu0
        %v2329 = vadd.f32 %v2288, %v2328
        %2330 = vdwg.mxu0
        %2331 = vmatpush.msra.mxu0 0.0
        %2332 = vmatpush.msra.mxu0 0.0
        %2333 = vmatpush.msra.mxu0 0.0
        %2334 = vmatpush.msra.mxu0 0.0
        %2335 = vmatpush.msra.mxu0 0.0
        %2336 = vmatpush.msra.mxu0 0.0
        %2337 = vmatpush.msra.mxu0 0.0
        %2338 = vmatpush.msra.mxu0 0.0
        %2339 = vmatpush.msra.mxu0 0.0
        %2340 = vmatpush.msra.mxu0 0.0
        %2341 = vmatpush.msra.mxu0 0.0
        %2342 = vmatpush.msra.mxu0 0.0
        %v2343 = vand.u32 %v562, 4294901760
        %v2344 = vsub.f32 %v562, %v2343
        %2345 = vmatpush.msra.mxu0 %v2344
        %v2346 = vand.u32 %v561, 4294901760
        %v2347 = vsub.f32 %v561, %v2346
        %2348 = vmatpush.msra.mxu0 %v2347
        %v2349 = vand.u32 %v560, 4294901760
        %v2350 = vsub.f32 %v560, %v2349
        %2351 = vmatpush.msra.mxu0 %v2350
        %v2352 = vand.u32 %v559, 4294901760
        %v2353 = vsub.f32 %v559, %v2352
        %2354 = vmatpush.msra.mxu0 %v2353
        %v2355 = vand.u32 %v2259, 4294901760
        %v2356 = vsub.f32 %v2259, %v2355
        %2357 = vmatmul.f32.gmra.mxu0 %v2356
        %v2358 = vpop.f32.mrf.mxu0
        %v2359 = vadd.f32 %v2329, %v2358
        %2360 = vdwg.mxu0
        %2361 = vmatpush.msra.mxu0 0.0
        %2362 = vmatpush.msra.mxu0 0.0
        %2363 = vmatpush.msra.mxu0 0.0
        %2364 = vmatpush.msra.mxu0 0.0
        %2365 = vmatpush.msra.mxu0 0.0
        %2366 = vmatpush.msra.mxu0 0.0
        %2367 = vmatpush.msra.mxu0 0.0
        %2368 = vmatpush.msra.mxu0 0.0
        %2369 = vmatpush.msra.mxu0 0.0
        %2370 = vmatpush.msra.mxu0 0.0
        %2371 = vmatpush.msra.mxu0 0.0
        %2372 = vmatpush.msra.mxu0 0.0
        %v2373 = vand.u32 %v562, 4294901760
        %2374 = vmatpush.msra.mxu0 %v2373
        %v2375 = vand.u32 %v561, 4294901760
        %2376 = vmatpush.msra.mxu0 %v2375
        %v2377 = vand.u32 %v560, 4294901760
        %2378 = vmatpush.msra.mxu0 %v2377
        %v2379 = vand.u32 %v559, 4294901760
        %2380 = vmatpush.msra.mxu0 %v2379
        %v2381 = vand.u32 %v2259, 4294901760
        %v2382 = vsub.f32 %v2259, %v2381
        %v2383 = vand.u32 %v2382, 4294901760
        %2384 = vmatmul.f32.gmra.mxu0 %v2383
        %v2385 = vpop.f32.mrf.mxu0
        %v2386 = vadd.f32 %v2359, %v2385
        %2387 = vdwg.mxu0
        %2388 = vmatpush.msra.mxu0 0.0
        %2389 = vmatpush.msra.mxu0 0.0
        %2390 = vmatpush.msra.mxu0 0.0
        %2391 = vmatpush.msra.mxu0 0.0
        %2392 = vmatpush.msra.mxu0 0.0
        %2393 = vmatpush.msra.mxu0 0.0
        %2394 = vmatpush.msra.mxu0 0.0
        %2395 = vmatpush.msra.mxu0 0.0
        %2396 = vmatpush.msra.mxu0 0.0
        %2397 = vmatpush.msra.mxu0 0.0
        %2398 = vmatpush.msra.mxu0 0.0
        %2399 = vmatpush.msra.mxu0 0.0
        %v2400 = vand.u32 %v562, 4294901760
        %v2401 = vsub.f32 %v562, %v2400
        %v2402 = vand.u32 %v2401, 4294901760
        %2403 = vmatpush.msra.mxu0 %v2402
        %v2404 = vand.u32 %v561, 4294901760
        %v2405 = vsub.f32 %v561, %v2404
        %v2406 = vand.u32 %v2405, 4294901760
        %2407 = vmatpush.msra.mxu0 %v2406
        %v2408 = vand.u32 %v560, 4294901760
        %v2409 = vsub.f32 %v560, %v2408
        %v2410 = vand.u32 %v2409, 4294901760
        %2411 = vmatpush.msra.mxu0 %v2410
        %v2412 = vand.u32 %v559, 4294901760
        %v2413 = vsub.f32 %v559, %v2412
        %v2414 = vand.u32 %v2413, 4294901760
        %2415 = vmatpush.msra.mxu0 %v2414
        %v2416 = vand.u32 %v2259, 4294901760
        %2417 = vmatmul.f32.gmra.mxu0 %v2416
        %v2418 = vpop.f32.mrf.mxu0
        %v2419 = vadd.f32 %v2386, %v2418
        %2420 = vdwg.mxu0
        %2421 = vmatpush.msra.mxu0 0.0
        %2422 = vmatpush.msra.mxu0 0.0
        %2423 = vmatpush.msra.mxu0 0.0
        %2424 = vmatpush.msra.mxu0 0.0
        %2425 = vmatpush.msra.mxu0 0.0
        %2426 = vmatpush.msra.mxu0 0.0
        %2427 = vmatpush.msra.mxu0 0.0
        %2428 = vmatpush.msra.mxu0 0.0
        %2429 = vmatpush.msra.mxu0 0.0
        %2430 = vmatpush.msra.mxu0 0.0
        %2431 = vmatpush.msra.mxu0 0.0
        %2432 = vmatpush.msra.mxu0 0.0
        %v2433 = vand.u32 %v562, 4294901760
        %2434 = vmatpush.msra.mxu0 %v2433
        %v2435 = vand.u32 %v561, 4294901760
        %2436 = vmatpush.msra.mxu0 %v2435
        %v2437 = vand.u32 %v560, 4294901760
        %2438 = vmatpush.msra.mxu0 %v2437
        %v2439 = vand.u32 %v559, 4294901760
        %2440 = vmatpush.msra.mxu0 %v2439
        %v2441 = vand.u32 %v2259, 4294901760
        %2442 = vmatmul.f32.gmra.mxu0 %v2441
        %v2443 = vpop.f32.mrf.mxu0
        %v2444 = vadd.f32 %v2419, %v2443
        %2445 = vdwg.mxu0
        %v2447 = vsel %vm997, %v2444, 0
        %2449 = vmatpush.msra.mxu0 0.0
        %2450 = vmatpush.msra.mxu0 0.0
        %2451 = vmatpush.msra.mxu0 0.0
        %2452 = vmatpush.msra.mxu0 0.0
        %2453 = vmatpush.msra.mxu0 0.0
        %2454 = vmatpush.msra.mxu0 0.0
        %2455 = vmatpush.msra.mxu0 0.0
        %2456 = vmatpush.msra.mxu0 0.0
        %2457 = vmatpush.msra.mxu0 0.0
        %2458 = vmatpush.msra.mxu0 0.0
        %2459 = vmatpush.msra.mxu0 0.0
        %2460 = vmatpush.msra.mxu0 0.0
        %2461 = vmatpush.msra.mxu0 0.0
        %2462 = vmatpush.msra.mxu0 0.0
        %2463 = vmatpush.msra.mxu0 0.0
        %v2464 = vand.u32 %v1003, 4294901760
        %2465 = vmatpush.msra.mxu0 %v2464
        %v2466 = vand.u32 %v2447, 4294901760
        %v2467 = vsub.f32 %v2447, %v2466
        %v2468 = vand.u32 %v2467, 4294901760
        %v2469 = vsub.f32 %v2467, %v2468
        %v2470 = vand.u32 %v2469, 4294901760
        %2471 = vmatmul.f32.gmra.mxu0 %v2470
        %v2472 = vpop.f32.mrf.mxu0
        %v2473 = vadd.f32 0.0, %v2472
        %2474 = vdwg.mxu0
        %2475 = vmatpush.msra.mxu0 0.0
        %2476 = vmatpush.msra.mxu0 0.0
        %2477 = vmatpush.msra.mxu0 0.0
        %2478 = vmatpush.msra.mxu0 0.0
        %2479 = vmatpush.msra.mxu0 0.0
        %2480 = vmatpush.msra.mxu0 0.0
        %2481 = vmatpush.msra.mxu0 0.0
        %2482 = vmatpush.msra.mxu0 0.0
        %2483 = vmatpush.msra.mxu0 0.0
        %2484 = vmatpush.msra.mxu0 0.0
        %2485 = vmatpush.msra.mxu0 0.0
        %2486 = vmatpush.msra.mxu0 0.0
        %2487 = vmatpush.msra.mxu0 0.0
        %2488 = vmatpush.msra.mxu0 0.0
        %2489 = vmatpush.msra.mxu0 0.0
        %v2490 = vand.u32 %v1003, 4294901760
        %v2491 = vsub.f32 %v1003, %v2490
        %v2492 = vand.u32 %v2491, 4294901760
        %v2493 = vsub.f32 %v2491, %v2492
        %v2494 = vand.u32 %v2493, 4294901760
        %2495 = vmatpush.msra.mxu0 %v2494
        %v2496 = vand.u32 %v2447, 4294901760
        %2497 = vmatmul.f32.gmra.mxu0 %v2496
        %v2498 = vpop.f32.mrf.mxu0
        %v2499 = vadd.f32 %v2473, %v2498
        %2500 = vdwg.mxu0
        %2501 = vmatpush.msra.mxu0 0.0
        %2502 = vmatpush.msra.mxu0 0.0
        %2503 = vmatpush.msra.mxu0 0.0
        %2504 = vmatpush.msra.mxu0 0.0
        %2505 = vmatpush.msra.mxu0 0.0
        %2506 = vmatpush.msra.mxu0 0.0
        %2507 = vmatpush.msra.mxu0 0.0
        %2508 = vmatpush.msra.mxu0 0.0
        %2509 = vmatpush.msra.mxu0 0.0
        %2510 = vmatpush.msra.mxu0 0.0
        %2511 = vmatpush.msra.mxu0 0.0
        %2512 = vmatpush.msra.mxu0 0.0
        %2513 = vmatpush.msra.mxu0 0.0
        %2514 = vmatpush.msra.mxu0 0.0
        %2515 = vmatpush.msra.mxu0 0.0
        %v2516 = vand.u32 %v1003, 4294901760
        %v2517 = vsub.f32 %v1003, %v2516
        %2518 = vmatpush.msra.mxu0 %v2517
        %v2519 = vand.u32 %v2447, 4294901760
        %v2520 = vsub.f32 %v2447, %v2519
        %2521 = vmatmul.f32.gmra.mxu0 %v2520
        %v2522 = vpop.f32.mrf.mxu0
        %v2523 = vadd.f32 %v2499, %v2522
        %2524 = vdwg.mxu0
        %2525 = vmatpush.msra.mxu0 0.0
        %2526 = vmatpush.msra.mxu0 0.0
        %2527 = vmatpush.msra.mxu0 0.0
        %2528 = vmatpush.msra.mxu0 0.0
        %2529 = vmatpush.msra.mxu0 0.0
        %2530 = vmatpush.msra.mxu0 0.0
        %2531 = vmatpush.msra.mxu0 0.0
        %2532 = vmatpush.msra.mxu0 0.0
        %2533 = vmatpush.msra.mxu0 0.0
        %2534 = vmatpush.msra.mxu0 0.0
        %2535 = vmatpush.msra.mxu0 0.0
        %2536 = vmatpush.msra.mxu0 0.0
        %2537 = vmatpush.msra.mxu0 0.0
        %2538 = vmatpush.msra.mxu0 0.0
        %2539 = vmatpush.msra.mxu0 0.0
        %v2540 = vand.u32 %v1003, 4294901760
        %2541 = vmatpush.msra.mxu0 %v2540
        %v2542 = vand.u32 %v2447, 4294901760
        %v2543 = vsub.f32 %v2447, %v2542
        %v2544 = vand.u32 %v2543, 4294901760
        %2545 = vmatmul.f32.gmra.mxu0 %v2544
        %v2546 = vpop.f32.mrf.mxu0
        %v2547 = vadd.f32 %v2523, %v2546
        %2548 = vdwg.mxu0
        %2549 = vmatpush.msra.mxu0 0.0
        %2550 = vmatpush.msra.mxu0 0.0
        %2551 = vmatpush.msra.mxu0 0.0
        %2552 = vmatpush.msra.mxu0 0.0
        %2553 = vmatpush.msra.mxu0 0.0
        %2554 = vmatpush.msra.mxu0 0.0
        %2555 = vmatpush.msra.mxu0 0.0
        %2556 = vmatpush.msra.mxu0 0.0
        %2557 = vmatpush.msra.mxu0 0.0
        %2558 = vmatpush.msra.mxu0 0.0
        %2559 = vmatpush.msra.mxu0 0.0
        %2560 = vmatpush.msra.mxu0 0.0
        %2561 = vmatpush.msra.mxu0 0.0
        %2562 = vmatpush.msra.mxu0 0.0
        %2563 = vmatpush.msra.mxu0 0.0
        %v2564 = vand.u32 %v1003, 4294901760
        %v2565 = vsub.f32 %v1003, %v2564
        %v2566 = vand.u32 %v2565, 4294901760
        %2567 = vmatpush.msra.mxu0 %v2566
        %v2568 = vand.u32 %v2447, 4294901760
        %2569 = vmatmul.f32.gmra.mxu0 %v2568
        %v2570 = vpop.f32.mrf.mxu0
        %v2571 = vadd.f32 %v2547, %v2570
        %2572 = vdwg.mxu0
        %2573 = vmatpush.msra.mxu0 0.0
        %2574 = vmatpush.msra.mxu0 0.0
        %2575 = vmatpush.msra.mxu0 0.0
        %2576 = vmatpush.msra.mxu0 0.0
        %2577 = vmatpush.msra.mxu0 0.0
        %2578 = vmatpush.msra.mxu0 0.0
        %2579 = vmatpush.msra.mxu0 0.0
        %2580 = vmatpush.msra.mxu0 0.0
        %2581 = vmatpush.msra.mxu0 0.0
        %2582 = vmatpush.msra.mxu0 0.0
        %2583 = vmatpush.msra.mxu0 0.0
        %2584 = vmatpush.msra.mxu0 0.0
        %2585 = vmatpush.msra.mxu0 0.0
        %2586 = vmatpush.msra.mxu0 0.0
        %2587 = vmatpush.msra.mxu0 0.0
        %v2588 = vand.u32 %v1003, 4294901760
        %2589 = vmatpush.msra.mxu0 %v2588
        %v2590 = vand.u32 %v2447, 4294901760
        %2591 = vmatmul.f32.gmra.mxu0 %v2590
        %v2592 = vpop.f32.mrf.mxu0
        %v2593 = vadd.f32 %v2571, %v2592
        %2594 = vdwg.mxu0
        %v2595 = vmul.f32 %v2593, %v2256
        %v2596 = vadd.f32 %v2241, %v2595
        %2598 = vrot.lane.b32.xlu0 %v2249, 120
        %v2599 = vpop.permute.xlu0 %2598
        %2601 = vrot.lane.b32.xlu0 %v2249, 24
        %v2602 = vpop.permute.xlu0 %2601
        %v2604 = vsel %vm2248, %v2599, %v2602
        %2606 = vrot.lane.b32.xlu0 %v2256, 120
        %v2607 = vpop.permute.xlu0 %2606
        %2609 = vrot.lane.b32.xlu0 %v2256, 24
        %v2610 = vpop.permute.xlu0 %2609
        %v2612 = vsel %vm2248, %v2607, %v2610
        %v2613 = vmul.f32 %v1505, %v2604
        %v2615 = vsel %vm351, %v2613, 0
        %2617 = vmatpush.msra.mxu0 0.0
        %2618 = vmatpush.msra.mxu0 0.0
        %2619 = vmatpush.msra.mxu0 0.0
        %2620 = vmatpush.msra.mxu0 0.0
        %2621 = vmatpush.msra.mxu0 0.0
        %2622 = vmatpush.msra.mxu0 0.0
        %2623 = vmatpush.msra.mxu0 0.0
        %2624 = vmatpush.msra.mxu0 0.0
        %2625 = vmatpush.msra.mxu0 0.0
        %2626 = vmatpush.msra.mxu0 0.0
        %2627 = vmatpush.msra.mxu0 0.0
        %2628 = vmatpush.msra.mxu0 0.0
        %v2629 = vand.u32 %v562, 4294901760
        %2630 = vmatpush.msra.mxu0 %v2629
        %v2631 = vand.u32 %v561, 4294901760
        %2632 = vmatpush.msra.mxu0 %v2631
        %v2633 = vand.u32 %v560, 4294901760
        %2634 = vmatpush.msra.mxu0 %v2633
        %v2635 = vand.u32 %v559, 4294901760
        %2636 = vmatpush.msra.mxu0 %v2635
        %v2637 = vand.u32 %v2615, 4294901760
        %v2638 = vsub.f32 %v2615, %v2637
        %v2639 = vand.u32 %v2638, 4294901760
        %v2640 = vsub.f32 %v2638, %v2639
        %v2641 = vand.u32 %v2640, 4294901760
        %2642 = vmatmul.f32.gmra.mxu0 %v2641
        %v2643 = vpop.f32.mrf.mxu0
        %v2644 = vadd.f32 0.0, %v2643
        %2645 = vdwg.mxu0
        %2646 = vmatpush.msra.mxu0 0.0
        %2647 = vmatpush.msra.mxu0 0.0
        %2648 = vmatpush.msra.mxu0 0.0
        %2649 = vmatpush.msra.mxu0 0.0
        %2650 = vmatpush.msra.mxu0 0.0
        %2651 = vmatpush.msra.mxu0 0.0
        %2652 = vmatpush.msra.mxu0 0.0
        %2653 = vmatpush.msra.mxu0 0.0
        %2654 = vmatpush.msra.mxu0 0.0
        %2655 = vmatpush.msra.mxu0 0.0
        %2656 = vmatpush.msra.mxu0 0.0
        %2657 = vmatpush.msra.mxu0 0.0
        %v2658 = vand.u32 %v562, 4294901760
        %v2659 = vsub.f32 %v562, %v2658
        %v2660 = vand.u32 %v2659, 4294901760
        %v2661 = vsub.f32 %v2659, %v2660
        %v2662 = vand.u32 %v2661, 4294901760
        %2663 = vmatpush.msra.mxu0 %v2662
        %v2664 = vand.u32 %v561, 4294901760
        %v2665 = vsub.f32 %v561, %v2664
        %v2666 = vand.u32 %v2665, 4294901760
        %v2667 = vsub.f32 %v2665, %v2666
        %v2668 = vand.u32 %v2667, 4294901760
        %2669 = vmatpush.msra.mxu0 %v2668
        %v2670 = vand.u32 %v560, 4294901760
        %v2671 = vsub.f32 %v560, %v2670
        %v2672 = vand.u32 %v2671, 4294901760
        %v2673 = vsub.f32 %v2671, %v2672
        %v2674 = vand.u32 %v2673, 4294901760
        %2675 = vmatpush.msra.mxu0 %v2674
        %v2676 = vand.u32 %v559, 4294901760
        %v2677 = vsub.f32 %v559, %v2676
        %v2678 = vand.u32 %v2677, 4294901760
        %v2679 = vsub.f32 %v2677, %v2678
        %v2680 = vand.u32 %v2679, 4294901760
        %2681 = vmatpush.msra.mxu0 %v2680
        %v2682 = vand.u32 %v2615, 4294901760
        %2683 = vmatmul.f32.gmra.mxu0 %v2682
        %v2684 = vpop.f32.mrf.mxu0
        %v2685 = vadd.f32 %v2644, %v2684
        %2686 = vdwg.mxu0
        %2687 = vmatpush.msra.mxu0 0.0
        %2688 = vmatpush.msra.mxu0 0.0
        %2689 = vmatpush.msra.mxu0 0.0
        %2690 = vmatpush.msra.mxu0 0.0
        %2691 = vmatpush.msra.mxu0 0.0
        %2692 = vmatpush.msra.mxu0 0.0
        %2693 = vmatpush.msra.mxu0 0.0
        %2694 = vmatpush.msra.mxu0 0.0
        %2695 = vmatpush.msra.mxu0 0.0
        %2696 = vmatpush.msra.mxu0 0.0
        %2697 = vmatpush.msra.mxu0 0.0
        %2698 = vmatpush.msra.mxu0 0.0
        %v2699 = vand.u32 %v562, 4294901760
        %v2700 = vsub.f32 %v562, %v2699
        %2701 = vmatpush.msra.mxu0 %v2700
        %v2702 = vand.u32 %v561, 4294901760
        %v2703 = vsub.f32 %v561, %v2702
        %2704 = vmatpush.msra.mxu0 %v2703
        %v2705 = vand.u32 %v560, 4294901760
        %v2706 = vsub.f32 %v560, %v2705
        %2707 = vmatpush.msra.mxu0 %v2706
        %v2708 = vand.u32 %v559, 4294901760
        %v2709 = vsub.f32 %v559, %v2708
        %2710 = vmatpush.msra.mxu0 %v2709
        %v2711 = vand.u32 %v2615, 4294901760
        %v2712 = vsub.f32 %v2615, %v2711
        %2713 = vmatmul.f32.gmra.mxu0 %v2712
        %v2714 = vpop.f32.mrf.mxu0
        %v2715 = vadd.f32 %v2685, %v2714
        %2716 = vdwg.mxu0
        %2717 = vmatpush.msra.mxu0 0.0
        %2718 = vmatpush.msra.mxu0 0.0
        %2719 = vmatpush.msra.mxu0 0.0
        %2720 = vmatpush.msra.mxu0 0.0
        %2721 = vmatpush.msra.mxu0 0.0
        %2722 = vmatpush.msra.mxu0 0.0
        %2723 = vmatpush.msra.mxu0 0.0
        %2724 = vmatpush.msra.mxu0 0.0
        %2725 = vmatpush.msra.mxu0 0.0
        %2726 = vmatpush.msra.mxu0 0.0
        %2727 = vmatpush.msra.mxu0 0.0
        %2728 = vmatpush.msra.mxu0 0.0
        %v2729 = vand.u32 %v562, 4294901760
        %2730 = vmatpush.msra.mxu0 %v2729
        %v2731 = vand.u32 %v561, 4294901760
        %2732 = vmatpush.msra.mxu0 %v2731
        %v2733 = vand.u32 %v560, 4294901760
        %2734 = vmatpush.msra.mxu0 %v2733
        %v2735 = vand.u32 %v559, 4294901760
        %2736 = vmatpush.msra.mxu0 %v2735
        %v2737 = vand.u32 %v2615, 4294901760
        %v2738 = vsub.f32 %v2615, %v2737
        %v2739 = vand.u32 %v2738, 4294901760
        %2740 = vmatmul.f32.gmra.mxu0 %v2739
        %v2741 = vpop.f32.mrf.mxu0
        %v2742 = vadd.f32 %v2715, %v2741
        %2743 = vdwg.mxu0
        %2744 = vmatpush.msra.mxu0 0.0
        %2745 = vmatpush.msra.mxu0 0.0
        %2746 = vmatpush.msra.mxu0 0.0
        %2747 = vmatpush.msra.mxu0 0.0
        %2748 = vmatpush.msra.mxu0 0.0
        %2749 = vmatpush.msra.mxu0 0.0
        %2750 = vmatpush.msra.mxu0 0.0
        %2751 = vmatpush.msra.mxu0 0.0
        %2752 = vmatpush.msra.mxu0 0.0
        %2753 = vmatpush.msra.mxu0 0.0
        %2754 = vmatpush.msra.mxu0 0.0
        %2755 = vmatpush.msra.mxu0 0.0
        %v2756 = vand.u32 %v562, 4294901760
        %v2757 = vsub.f32 %v562, %v2756
        %v2758 = vand.u32 %v2757, 4294901760
        %2759 = vmatpush.msra.mxu0 %v2758
        %v2760 = vand.u32 %v561, 4294901760
        %v2761 = vsub.f32 %v561, %v2760
        %v2762 = vand.u32 %v2761, 4294901760
        %2763 = vmatpush.msra.mxu0 %v2762
        %v2764 = vand.u32 %v560, 4294901760
        %v2765 = vsub.f32 %v560, %v2764
        %v2766 = vand.u32 %v2765, 4294901760
        %2767 = vmatpush.msra.mxu0 %v2766
        %v2768 = vand.u32 %v559, 4294901760
        %v2769 = vsub.f32 %v559, %v2768
        %v2770 = vand.u32 %v2769, 4294901760
        %2771 = vmatpush.msra.mxu0 %v2770
        %v2772 = vand.u32 %v2615, 4294901760
        %2773 = vmatmul.f32.gmra.mxu0 %v2772
        %v2774 = vpop.f32.mrf.mxu0
        %v2775 = vadd.f32 %v2742, %v2774
        %2776 = vdwg.mxu0
        %2777 = vmatpush.msra.mxu0 0.0
        %2778 = vmatpush.msra.mxu0 0.0
        %2779 = vmatpush.msra.mxu0 0.0
        %2780 = vmatpush.msra.mxu0 0.0
        %2781 = vmatpush.msra.mxu0 0.0
        %2782 = vmatpush.msra.mxu0 0.0
        %2783 = vmatpush.msra.mxu0 0.0
        %2784 = vmatpush.msra.mxu0 0.0
        %2785 = vmatpush.msra.mxu0 0.0
        %2786 = vmatpush.msra.mxu0 0.0
        %2787 = vmatpush.msra.mxu0 0.0
        %2788 = vmatpush.msra.mxu0 0.0
        %v2789 = vand.u32 %v562, 4294901760
        %2790 = vmatpush.msra.mxu0 %v2789
        %v2791 = vand.u32 %v561, 4294901760
        %2792 = vmatpush.msra.mxu0 %v2791
        %v2793 = vand.u32 %v560, 4294901760
        %2794 = vmatpush.msra.mxu0 %v2793
        %v2795 = vand.u32 %v559, 4294901760
        %2796 = vmatpush.msra.mxu0 %v2795
        %v2797 = vand.u32 %v2615, 4294901760
        %2798 = vmatmul.f32.gmra.mxu0 %v2797
        %v2799 = vpop.f32.mrf.mxu0
        %v2800 = vadd.f32 %v2775, %v2799
        %2801 = vdwg.mxu0
        %v2803 = vsel %vm997, %v2800, 0
        %2805 = vmatpush.msra.mxu0 0.0
        %2806 = vmatpush.msra.mxu0 0.0
        %2807 = vmatpush.msra.mxu0 0.0
        %2808 = vmatpush.msra.mxu0 0.0
        %2809 = vmatpush.msra.mxu0 0.0
        %2810 = vmatpush.msra.mxu0 0.0
        %2811 = vmatpush.msra.mxu0 0.0
        %2812 = vmatpush.msra.mxu0 0.0
        %2813 = vmatpush.msra.mxu0 0.0
        %2814 = vmatpush.msra.mxu0 0.0
        %2815 = vmatpush.msra.mxu0 0.0
        %2816 = vmatpush.msra.mxu0 0.0
        %2817 = vmatpush.msra.mxu0 0.0
        %2818 = vmatpush.msra.mxu0 0.0
        %2819 = vmatpush.msra.mxu0 0.0
        %v2820 = vand.u32 %v1003, 4294901760
        %2821 = vmatpush.msra.mxu0 %v2820
        %v2822 = vand.u32 %v2803, 4294901760
        %v2823 = vsub.f32 %v2803, %v2822
        %v2824 = vand.u32 %v2823, 4294901760
        %v2825 = vsub.f32 %v2823, %v2824
        %v2826 = vand.u32 %v2825, 4294901760
        %2827 = vmatmul.f32.gmra.mxu0 %v2826
        %v2828 = vpop.f32.mrf.mxu0
        %v2829 = vadd.f32 0.0, %v2828
        %2830 = vdwg.mxu0
        %2831 = vmatpush.msra.mxu0 0.0
        %2832 = vmatpush.msra.mxu0 0.0
        %2833 = vmatpush.msra.mxu0 0.0
        %2834 = vmatpush.msra.mxu0 0.0
        %2835 = vmatpush.msra.mxu0 0.0
        %2836 = vmatpush.msra.mxu0 0.0
        %2837 = vmatpush.msra.mxu0 0.0
        %2838 = vmatpush.msra.mxu0 0.0
        %2839 = vmatpush.msra.mxu0 0.0
        %2840 = vmatpush.msra.mxu0 0.0
        %2841 = vmatpush.msra.mxu0 0.0
        %2842 = vmatpush.msra.mxu0 0.0
        %2843 = vmatpush.msra.mxu0 0.0
        %2844 = vmatpush.msra.mxu0 0.0
        %2845 = vmatpush.msra.mxu0 0.0
        %v2846 = vand.u32 %v1003, 4294901760
        %v2847 = vsub.f32 %v1003, %v2846
        %v2848 = vand.u32 %v2847, 4294901760
        %v2849 = vsub.f32 %v2847, %v2848
        %v2850 = vand.u32 %v2849, 4294901760
        %2851 = vmatpush.msra.mxu0 %v2850
        %v2852 = vand.u32 %v2803, 4294901760
        %2853 = vmatmul.f32.gmra.mxu0 %v2852
        %v2854 = vpop.f32.mrf.mxu0
        %v2855 = vadd.f32 %v2829, %v2854
        %2856 = vdwg.mxu0
        %2857 = vmatpush.msra.mxu0 0.0
        %2858 = vmatpush.msra.mxu0 0.0
        %2859 = vmatpush.msra.mxu0 0.0
        %2860 = vmatpush.msra.mxu0 0.0
        %2861 = vmatpush.msra.mxu0 0.0
        %2862 = vmatpush.msra.mxu0 0.0
        %2863 = vmatpush.msra.mxu0 0.0
        %2864 = vmatpush.msra.mxu0 0.0
        %2865 = vmatpush.msra.mxu0 0.0
        %2866 = vmatpush.msra.mxu0 0.0
        %2867 = vmatpush.msra.mxu0 0.0
        %2868 = vmatpush.msra.mxu0 0.0
        %2869 = vmatpush.msra.mxu0 0.0
        %2870 = vmatpush.msra.mxu0 0.0
        %2871 = vmatpush.msra.mxu0 0.0
        %v2872 = vand.u32 %v1003, 4294901760
        %v2873 = vsub.f32 %v1003, %v2872
        %2874 = vmatpush.msra.mxu0 %v2873
        %v2875 = vand.u32 %v2803, 4294901760
        %v2876 = vsub.f32 %v2803, %v2875
        %2877 = vmatmul.f32.gmra.mxu0 %v2876
        %v2878 = vpop.f32.mrf.mxu0
        %v2879 = vadd.f32 %v2855, %v2878
        %2880 = vdwg.mxu0
        %2881 = vmatpush.msra.mxu0 0.0
        %2882 = vmatpush.msra.mxu0 0.0
        %2883 = vmatpush.msra.mxu0 0.0
        %2884 = vmatpush.msra.mxu0 0.0
        %2885 = vmatpush.msra.mxu0 0.0
        %2886 = vmatpush.msra.mxu0 0.0
        %2887 = vmatpush.msra.mxu0 0.0
        %2888 = vmatpush.msra.mxu0 0.0
        %2889 = vmatpush.msra.mxu0 0.0
        %2890 = vmatpush.msra.mxu0 0.0
        %2891 = vmatpush.msra.mxu0 0.0
        %2892 = vmatpush.msra.mxu0 0.0
        %2893 = vmatpush.msra.mxu0 0.0
        %2894 = vmatpush.msra.mxu0 0.0
        %2895 = vmatpush.msra.mxu0 0.0
        %v2896 = vand.u32 %v1003, 4294901760
        %2897 = vmatpush.msra.mxu0 %v2896
        %v2898 = vand.u32 %v2803, 4294901760
        %v2899 = vsub.f32 %v2803, %v2898
        %v2900 = vand.u32 %v2899, 4294901760
        %2901 = vmatmul.f32.gmra.mxu0 %v2900
        %v2902 = vpop.f32.mrf.mxu0
        %v2903 = vadd.f32 %v2879, %v2902
        %2904 = vdwg.mxu0
        %2905 = vmatpush.msra.mxu0 0.0
        %2906 = vmatpush.msra.mxu0 0.0
        %2907 = vmatpush.msra.mxu0 0.0
        %2908 = vmatpush.msra.mxu0 0.0
        %2909 = vmatpush.msra.mxu0 0.0
        %2910 = vmatpush.msra.mxu0 0.0
        %2911 = vmatpush.msra.mxu0 0.0
        %2912 = vmatpush.msra.mxu0 0.0
        %2913 = vmatpush.msra.mxu0 0.0
        %2914 = vmatpush.msra.mxu0 0.0
        %2915 = vmatpush.msra.mxu0 0.0
        %2916 = vmatpush.msra.mxu0 0.0
        %2917 = vmatpush.msra.mxu0 0.0
        %2918 = vmatpush.msra.mxu0 0.0
        %2919 = vmatpush.msra.mxu0 0.0
        %v2920 = vand.u32 %v1003, 4294901760
        %v2921 = vsub.f32 %v1003, %v2920
        %v2922 = vand.u32 %v2921, 4294901760
        %2923 = vmatpush.msra.mxu0 %v2922
        %v2924 = vand.u32 %v2803, 4294901760
        %2925 = vmatmul.f32.gmra.mxu0 %v2924
        %v2926 = vpop.f32.mrf.mxu0
        %v2927 = vadd.f32 %v2903, %v2926
        %2928 = vdwg.mxu0
        %2929 = vmatpush.msra.mxu0 0.0
        %2930 = vmatpush.msra.mxu0 0.0
        %2931 = vmatpush.msra.mxu0 0.0
        %2932 = vmatpush.msra.mxu0 0.0
        %2933 = vmatpush.msra.mxu0 0.0
        %2934 = vmatpush.msra.mxu0 0.0
        %2935 = vmatpush.msra.mxu0 0.0
        %2936 = vmatpush.msra.mxu0 0.0
        %2937 = vmatpush.msra.mxu0 0.0
        %2938 = vmatpush.msra.mxu0 0.0
        %2939 = vmatpush.msra.mxu0 0.0
        %2940 = vmatpush.msra.mxu0 0.0
        %2941 = vmatpush.msra.mxu0 0.0
        %2942 = vmatpush.msra.mxu0 0.0
        %2943 = vmatpush.msra.mxu0 0.0
        %v2944 = vand.u32 %v1003, 4294901760
        %2945 = vmatpush.msra.mxu0 %v2944
        %v2946 = vand.u32 %v2803, 4294901760
        %2947 = vmatmul.f32.gmra.mxu0 %v2946
        %v2948 = vpop.f32.mrf.mxu0
        %v2949 = vadd.f32 %v2927, %v2948
        %2950 = vdwg.mxu0
        %v2951 = vmul.f32 %v2949, %v2612
        %v2952 = vadd.f32 %v2596, %v2951
        %2954 = vrot.lane.b32.xlu0 %v2604, 120
        %v2955 = vpop.permute.xlu0 %2954
        %2957 = vrot.lane.b32.xlu0 %v2604, 24
        %v2958 = vpop.permute.xlu0 %2957
        %v2960 = vsel %vm2248, %v2955, %v2958
        %2962 = vrot.lane.b32.xlu0 %v2612, 120
        %v2963 = vpop.permute.xlu0 %2962
        %2965 = vrot.lane.b32.xlu0 %v2612, 24
        %v2966 = vpop.permute.xlu0 %2965
        %v2968 = vsel %vm2248, %v2963, %v2966
        %v2969 = vmul.f32 %v1505, %v2960
        %v2971 = vsel %vm351, %v2969, 0
        %2973 = vmatpush.msra.mxu0 0.0
        %2974 = vmatpush.msra.mxu0 0.0
        %2975 = vmatpush.msra.mxu0 0.0
        %2976 = vmatpush.msra.mxu0 0.0
        %2977 = vmatpush.msra.mxu0 0.0
        %2978 = vmatpush.msra.mxu0 0.0
        %2979 = vmatpush.msra.mxu0 0.0
        %2980 = vmatpush.msra.mxu0 0.0
        %2981 = vmatpush.msra.mxu0 0.0
        %2982 = vmatpush.msra.mxu0 0.0
        %2983 = vmatpush.msra.mxu0 0.0
        %2984 = vmatpush.msra.mxu0 0.0
        %v2985 = vand.u32 %v562, 4294901760
        %2986 = vmatpush.msra.mxu0 %v2985
        %v2987 = vand.u32 %v561, 4294901760
        %2988 = vmatpush.msra.mxu0 %v2987
        %v2989 = vand.u32 %v560, 4294901760
        %2990 = vmatpush.msra.mxu0 %v2989
        %v2991 = vand.u32 %v559, 4294901760
        %2992 = vmatpush.msra.mxu0 %v2991
        %v2993 = vand.u32 %v2971, 4294901760
        %v2994 = vsub.f32 %v2971, %v2993
        %v2995 = vand.u32 %v2994, 4294901760
        %v2996 = vsub.f32 %v2994, %v2995
        %v2997 = vand.u32 %v2996, 4294901760
        %2998 = vmatmul.f32.gmra.mxu0 %v2997
        %v2999 = vpop.f32.mrf.mxu0
        %v3000 = vadd.f32 0.0, %v2999
        %3001 = vdwg.mxu0
        %3002 = vmatpush.msra.mxu0 0.0
        %3003 = vmatpush.msra.mxu0 0.0
        %3004 = vmatpush.msra.mxu0 0.0
        %3005 = vmatpush.msra.mxu0 0.0
        %3006 = vmatpush.msra.mxu0 0.0
        %3007 = vmatpush.msra.mxu0 0.0
        %3008 = vmatpush.msra.mxu0 0.0
        %3009 = vmatpush.msra.mxu0 0.0
        %3010 = vmatpush.msra.mxu0 0.0
        %3011 = vmatpush.msra.mxu0 0.0
        %3012 = vmatpush.msra.mxu0 0.0
        %3013 = vmatpush.msra.mxu0 0.0
        %v3014 = vand.u32 %v562, 4294901760
        %v3015 = vsub.f32 %v562, %v3014
        %v3016 = vand.u32 %v3015, 4294901760
        %v3017 = vsub.f32 %v3015, %v3016
        %v3018 = vand.u32 %v3017, 4294901760
        %3019 = vmatpush.msra.mxu0 %v3018
        %v3020 = vand.u32 %v561, 4294901760
        %v3021 = vsub.f32 %v561, %v3020
        %v3022 = vand.u32 %v3021, 4294901760
        %v3023 = vsub.f32 %v3021, %v3022
        %v3024 = vand.u32 %v3023, 4294901760
        %3025 = vmatpush.msra.mxu0 %v3024
        %v3026 = vand.u32 %v560, 4294901760
        %v3027 = vsub.f32 %v560, %v3026
        %v3028 = vand.u32 %v3027, 4294901760
        %v3029 = vsub.f32 %v3027, %v3028
        %v3030 = vand.u32 %v3029, 4294901760
        %3031 = vmatpush.msra.mxu0 %v3030
        %v3032 = vand.u32 %v559, 4294901760
        %v3033 = vsub.f32 %v559, %v3032
        %v3034 = vand.u32 %v3033, 4294901760
        %v3035 = vsub.f32 %v3033, %v3034
        %v3036 = vand.u32 %v3035, 4294901760
        %3037 = vmatpush.msra.mxu0 %v3036
        %v3038 = vand.u32 %v2971, 4294901760
        %3039 = vmatmul.f32.gmra.mxu0 %v3038
        %v3040 = vpop.f32.mrf.mxu0
        %v3041 = vadd.f32 %v3000, %v3040
        %3042 = vdwg.mxu0
        %3043 = vmatpush.msra.mxu0 0.0
        %3044 = vmatpush.msra.mxu0 0.0
        %3045 = vmatpush.msra.mxu0 0.0
        %3046 = vmatpush.msra.mxu0 0.0
        %3047 = vmatpush.msra.mxu0 0.0
        %3048 = vmatpush.msra.mxu0 0.0
        %3049 = vmatpush.msra.mxu0 0.0
        %3050 = vmatpush.msra.mxu0 0.0
        %3051 = vmatpush.msra.mxu0 0.0
        %3052 = vmatpush.msra.mxu0 0.0
        %3053 = vmatpush.msra.mxu0 0.0
        %3054 = vmatpush.msra.mxu0 0.0
        %v3055 = vand.u32 %v562, 4294901760
        %v3056 = vsub.f32 %v562, %v3055
        %3057 = vmatpush.msra.mxu0 %v3056
        %v3058 = vand.u32 %v561, 4294901760
        %v3059 = vsub.f32 %v561, %v3058
        %3060 = vmatpush.msra.mxu0 %v3059
        %v3061 = vand.u32 %v560, 4294901760
        %v3062 = vsub.f32 %v560, %v3061
        %3063 = vmatpush.msra.mxu0 %v3062
        %v3064 = vand.u32 %v559, 4294901760
        %v3065 = vsub.f32 %v559, %v3064
        %3066 = vmatpush.msra.mxu0 %v3065
        %v3067 = vand.u32 %v2971, 4294901760
        %v3068 = vsub.f32 %v2971, %v3067
        %3069 = vmatmul.f32.gmra.mxu0 %v3068
        %v3070 = vpop.f32.mrf.mxu0
        %v3071 = vadd.f32 %v3041, %v3070
        %3072 = vdwg.mxu0
        %3073 = vmatpush.msra.mxu0 0.0
        %3074 = vmatpush.msra.mxu0 0.0
        %3075 = vmatpush.msra.mxu0 0.0
        %3076 = vmatpush.msra.mxu0 0.0
        %3077 = vmatpush.msra.mxu0 0.0
        %3078 = vmatpush.msra.mxu0 0.0
        %3079 = vmatpush.msra.mxu0 0.0
        %3080 = vmatpush.msra.mxu0 0.0
        %3081 = vmatpush.msra.mxu0 0.0
        %3082 = vmatpush.msra.mxu0 0.0
        %3083 = vmatpush.msra.mxu0 0.0
        %3084 = vmatpush.msra.mxu0 0.0
        %v3085 = vand.u32 %v562, 4294901760
        %3086 = vmatpush.msra.mxu0 %v3085
        %v3087 = vand.u32 %v561, 4294901760
        %3088 = vmatpush.msra.mxu0 %v3087
        %v3089 = vand.u32 %v560, 4294901760
        %3090 = vmatpush.msra.mxu0 %v3089
        %v3091 = vand.u32 %v559, 4294901760
        %3092 = vmatpush.msra.mxu0 %v3091
        %v3093 = vand.u32 %v2971, 4294901760
        %v3094 = vsub.f32 %v2971, %v3093
        %v3095 = vand.u32 %v3094, 4294901760
        %3096 = vmatmul.f32.gmra.mxu0 %v3095
        %v3097 = vpop.f32.mrf.mxu0
        %v3098 = vadd.f32 %v3071, %v3097
        %3099 = vdwg.mxu0
        %3100 = vmatpush.msra.mxu0 0.0
        %3101 = vmatpush.msra.mxu0 0.0
        %3102 = vmatpush.msra.mxu0 0.0
        %3103 = vmatpush.msra.mxu0 0.0
        %3104 = vmatpush.msra.mxu0 0.0
        %3105 = vmatpush.msra.mxu0 0.0
        %3106 = vmatpush.msra.mxu0 0.0
        %3107 = vmatpush.msra.mxu0 0.0
        %3108 = vmatpush.msra.mxu0 0.0
        %3109 = vmatpush.msra.mxu0 0.0
        %3110 = vmatpush.msra.mxu0 0.0
        %3111 = vmatpush.msra.mxu0 0.0
        %v3112 = vand.u32 %v562, 4294901760
        %v3113 = vsub.f32 %v562, %v3112
        %v3114 = vand.u32 %v3113, 4294901760
        %3115 = vmatpush.msra.mxu0 %v3114
        %v3116 = vand.u32 %v561, 4294901760
        %v3117 = vsub.f32 %v561, %v3116
        %v3118 = vand.u32 %v3117, 4294901760
        %3119 = vmatpush.msra.mxu0 %v3118
        %v3120 = vand.u32 %v560, 4294901760
        %v3121 = vsub.f32 %v560, %v3120
        %v3122 = vand.u32 %v3121, 4294901760
        %3123 = vmatpush.msra.mxu0 %v3122
        %v3124 = vand.u32 %v559, 4294901760
        %v3125 = vsub.f32 %v559, %v3124
        %v3126 = vand.u32 %v3125, 4294901760
        %3127 = vmatpush.msra.mxu0 %v3126
        %v3128 = vand.u32 %v2971, 4294901760
        %3129 = vmatmul.f32.gmra.mxu0 %v3128
        %v3130 = vpop.f32.mrf.mxu0
        %v3131 = vadd.f32 %v3098, %v3130
        %3132 = vdwg.mxu0
        %3133 = vmatpush.msra.mxu0 0.0
        %3134 = vmatpush.msra.mxu0 0.0
        %3135 = vmatpush.msra.mxu0 0.0
        %3136 = vmatpush.msra.mxu0 0.0
        %3137 = vmatpush.msra.mxu0 0.0
        %3138 = vmatpush.msra.mxu0 0.0
        %3139 = vmatpush.msra.mxu0 0.0
        %3140 = vmatpush.msra.mxu0 0.0
        %3141 = vmatpush.msra.mxu0 0.0
        %3142 = vmatpush.msra.mxu0 0.0
        %3143 = vmatpush.msra.mxu0 0.0
        %3144 = vmatpush.msra.mxu0 0.0
        %v3145 = vand.u32 %v562, 4294901760
        %3146 = vmatpush.msra.mxu0 %v3145
        %v3147 = vand.u32 %v561, 4294901760
        %3148 = vmatpush.msra.mxu0 %v3147
        %v3149 = vand.u32 %v560, 4294901760
        %3150 = vmatpush.msra.mxu0 %v3149
        %v3151 = vand.u32 %v559, 4294901760
        %3152 = vmatpush.msra.mxu0 %v3151
        %v3153 = vand.u32 %v2971, 4294901760
        %3154 = vmatmul.f32.gmra.mxu0 %v3153
        %v3155 = vpop.f32.mrf.mxu0
        %v3156 = vadd.f32 %v3131, %v3155
        %3157 = vdwg.mxu0
        %v3159 = vsel %vm997, %v3156, 0
        %3161 = vmatpush.msra.mxu0 0.0
        %3162 = vmatpush.msra.mxu0 0.0
        %3163 = vmatpush.msra.mxu0 0.0
        %3164 = vmatpush.msra.mxu0 0.0
        %3165 = vmatpush.msra.mxu0 0.0
        %3166 = vmatpush.msra.mxu0 0.0
        %3167 = vmatpush.msra.mxu0 0.0
        %3168 = vmatpush.msra.mxu0 0.0
        %3169 = vmatpush.msra.mxu0 0.0
        %3170 = vmatpush.msra.mxu0 0.0
        %3171 = vmatpush.msra.mxu0 0.0
        %3172 = vmatpush.msra.mxu0 0.0
        %3173 = vmatpush.msra.mxu0 0.0
        %3174 = vmatpush.msra.mxu0 0.0
        %3175 = vmatpush.msra.mxu0 0.0
        %v3176 = vand.u32 %v1003, 4294901760
        %3177 = vmatpush.msra.mxu0 %v3176
        %v3178 = vand.u32 %v3159, 4294901760
        %v3179 = vsub.f32 %v3159, %v3178
        %v3180 = vand.u32 %v3179, 4294901760
        %v3181 = vsub.f32 %v3179, %v3180
        %v3182 = vand.u32 %v3181, 4294901760
        %3183 = vmatmul.f32.gmra.mxu0 %v3182
        %v3184 = vpop.f32.mrf.mxu0
        %v3185 = vadd.f32 0.0, %v3184
        %3186 = vdwg.mxu0
        %3187 = vmatpush.msra.mxu0 0.0
        %3188 = vmatpush.msra.mxu0 0.0
        %3189 = vmatpush.msra.mxu0 0.0
        %3190 = vmatpush.msra.mxu0 0.0
        %3191 = vmatpush.msra.mxu0 0.0
        %3192 = vmatpush.msra.mxu0 0.0
        %3193 = vmatpush.msra.mxu0 0.0
        %3194 = vmatpush.msra.mxu0 0.0
        %3195 = vmatpush.msra.mxu0 0.0
        %3196 = vmatpush.msra.mxu0 0.0
        %3197 = vmatpush.msra.mxu0 0.0
        %3198 = vmatpush.msra.mxu0 0.0
        %3199 = vmatpush.msra.mxu0 0.0
        %3200 = vmatpush.msra.mxu0 0.0
        %3201 = vmatpush.msra.mxu0 0.0
        %v3202 = vand.u32 %v1003, 4294901760
        %v3203 = vsub.f32 %v1003, %v3202
        %v3204 = vand.u32 %v3203, 4294901760
        %v3205 = vsub.f32 %v3203, %v3204
        %v3206 = vand.u32 %v3205, 4294901760
        %3207 = vmatpush.msra.mxu0 %v3206
        %v3208 = vand.u32 %v3159, 4294901760
        %3209 = vmatmul.f32.gmra.mxu0 %v3208
        %v3210 = vpop.f32.mrf.mxu0
        %v3211 = vadd.f32 %v3185, %v3210
        %3212 = vdwg.mxu0
        %3213 = vmatpush.msra.mxu0 0.0
        %3214 = vmatpush.msra.mxu0 0.0
        %3215 = vmatpush.msra.mxu0 0.0
        %3216 = vmatpush.msra.mxu0 0.0
        %3217 = vmatpush.msra.mxu0 0.0
        %3218 = vmatpush.msra.mxu0 0.0
        %3219 = vmatpush.msra.mxu0 0.0
        %3220 = vmatpush.msra.mxu0 0.0
        %3221 = vmatpush.msra.mxu0 0.0
        %3222 = vmatpush.msra.mxu0 0.0
        %3223 = vmatpush.msra.mxu0 0.0
        %3224 = vmatpush.msra.mxu0 0.0
        %3225 = vmatpush.msra.mxu0 0.0
        %3226 = vmatpush.msra.mxu0 0.0
        %3227 = vmatpush.msra.mxu0 0.0
        %v3228 = vand.u32 %v1003, 4294901760
        %v3229 = vsub.f32 %v1003, %v3228
        %3230 = vmatpush.msra.mxu0 %v3229
        %v3231 = vand.u32 %v3159, 4294901760
        %v3232 = vsub.f32 %v3159, %v3231
        %3233 = vmatmul.f32.gmra.mxu0 %v3232
        %v3234 = vpop.f32.mrf.mxu0
        %v3235 = vadd.f32 %v3211, %v3234
        %3236 = vdwg.mxu0
        %3237 = vmatpush.msra.mxu0 0.0
        %3238 = vmatpush.msra.mxu0 0.0
        %3239 = vmatpush.msra.mxu0 0.0
        %3240 = vmatpush.msra.mxu0 0.0
        %3241 = vmatpush.msra.mxu0 0.0
        %3242 = vmatpush.msra.mxu0 0.0
        %3243 = vmatpush.msra.mxu0 0.0
        %3244 = vmatpush.msra.mxu0 0.0
        %3245 = vmatpush.msra.mxu0 0.0
        %3246 = vmatpush.msra.mxu0 0.0
        %3247 = vmatpush.msra.mxu0 0.0
        %3248 = vmatpush.msra.mxu0 0.0
        %3249 = vmatpush.msra.mxu0 0.0
        %3250 = vmatpush.msra.mxu0 0.0
        %3251 = vmatpush.msra.mxu0 0.0
        %v3252 = vand.u32 %v1003, 4294901760
        %3253 = vmatpush.msra.mxu0 %v3252
        %v3254 = vand.u32 %v3159, 4294901760
        %v3255 = vsub.f32 %v3159, %v3254
        %v3256 = vand.u32 %v3255, 4294901760
        %3257 = vmatmul.f32.gmra.mxu0 %v3256
        %v3258 = vpop.f32.mrf.mxu0
        %v3259 = vadd.f32 %v3235, %v3258
        %3260 = vdwg.mxu0
        %3261 = vmatpush.msra.mxu0 0.0
        %3262 = vmatpush.msra.mxu0 0.0
        %3263 = vmatpush.msra.mxu0 0.0
        %3264 = vmatpush.msra.mxu0 0.0
        %3265 = vmatpush.msra.mxu0 0.0
        %3266 = vmatpush.msra.mxu0 0.0
        %3267 = vmatpush.msra.mxu0 0.0
        %3268 = vmatpush.msra.mxu0 0.0
        %3269 = vmatpush.msra.mxu0 0.0
        %3270 = vmatpush.msra.mxu0 0.0
        %3271 = vmatpush.msra.mxu0 0.0
        %3272 = vmatpush.msra.mxu0 0.0
        %3273 = vmatpush.msra.mxu0 0.0
        %3274 = vmatpush.msra.mxu0 0.0
        %3275 = vmatpush.msra.mxu0 0.0
        %v3276 = vand.u32 %v1003, 4294901760
        %v3277 = vsub.f32 %v1003, %v3276
        %v3278 = vand.u32 %v3277, 4294901760
        %3279 = vmatpush.msra.mxu0 %v3278
        %v3280 = vand.u32 %v3159, 4294901760
        %3281 = vmatmul.f32.gmra.mxu0 %v3280
        %v3282 = vpop.f32.mrf.mxu0
        %v3283 = vadd.f32 %v3259, %v3282
        %3284 = vdwg.mxu0
        %3285 = vmatpush.msra.mxu0 0.0
        %3286 = vmatpush.msra.mxu0 0.0
        %3287 = vmatpush.msra.mxu0 0.0
        %3288 = vmatpush.msra.mxu0 0.0
        %3289 = vmatpush.msra.mxu0 0.0
        %3290 = vmatpush.msra.mxu0 0.0
        %3291 = vmatpush.msra.mxu0 0.0
        %3292 = vmatpush.msra.mxu0 0.0
        %3293 = vmatpush.msra.mxu0 0.0
        %3294 = vmatpush.msra.mxu0 0.0
        %3295 = vmatpush.msra.mxu0 0.0
        %3296 = vmatpush.msra.mxu0 0.0
        %3297 = vmatpush.msra.mxu0 0.0
        %3298 = vmatpush.msra.mxu0 0.0
        %3299 = vmatpush.msra.mxu0 0.0
        %v3300 = vand.u32 %v1003, 4294901760
        %3301 = vmatpush.msra.mxu0 %v3300
        %v3302 = vand.u32 %v3159, 4294901760
        %3303 = vmatmul.f32.gmra.mxu0 %v3302
        %v3304 = vpop.f32.mrf.mxu0
        %v3305 = vadd.f32 %v3283, %v3304
        %3306 = vdwg.mxu0
        %v3307 = vmul.f32 %v3305, %v2968
        %v3308 = vadd.f32 %v2952, %v3307
        %v3309 = vxor.u32 %v1354, 2147483648
        %v3310 = vmul.f32 %v3309, 1.442695
        %v3311 = vpow.pop %v3310
        %v3312 = vadd.f32 %v3311, 1.0
        %v3313 = vrcp.pop %v3312
        %v3314 = vmul.f32 %v3312, %v3313
        %v3315 = vsub.f32 1.0, %v3314
        %v3316 = vmul.f32 %v3313, %v3315
        %v3317 = vadd.f32 %v3313, %v3316
        %vm3318 = vweird.f32 %v3312
        %vm3319 = vweird.f32 %v3313
        %vm3320 = vmor %vm3318, %vm3319
        %v3321 = vsel %vm3320, %v3313, %v3317
        %v3322 = vand.u32 2147483647, %v3312
        %vm3323 = vcmp.eq.f32.partialorder %v3322, 8.507059e+37
        %v3324 = vand.u32 %v3312, 2147483648
        %v3325 = vor.u32 1.1754944e-38, %v3324
        %v3326 = vsel %vm3323, %v3325, %v3321
        %v3327 = vmul.f32 1.0, %v3326
        %v3329 = vsel %vm997, %v3327, 0
        %3331 = vmatpush.msra.mxu0 0.0
        %3332 = vmatpush.msra.mxu0 0.0
        %3333 = vmatpush.msra.mxu0 0.0
        %3334 = vmatpush.msra.mxu0 0.0
        %3335 = vmatpush.msra.mxu0 0.0
        %3336 = vmatpush.msra.mxu0 0.0
        %3337 = vmatpush.msra.mxu0 0.0
        %3338 = vmatpush.msra.mxu0 0.0
        %3339 = vmatpush.msra.mxu0 0.0
        %3340 = vmatpush.msra.mxu0 0.0
        %3341 = vmatpush.msra.mxu0 0.0
        %3342 = vmatpush.msra.mxu0 0.0
        %3343 = vmatpush.msra.mxu0 0.0
        %3344 = vmatpush.msra.mxu0 0.0
        %3345 = vmatpush.msra.mxu0 0.0
        %v3346 = vand.u32 %v1003, 4294901760
        %3347 = vmatpush.msra.mxu0 %v3346
        %v3348 = vand.u32 %v3329, 4294901760
        %v3349 = vsub.f32 %v3329, %v3348
        %v3350 = vand.u32 %v3349, 4294901760
        %v3351 = vsub.f32 %v3349, %v3350
        %v3352 = vand.u32 %v3351, 4294901760
        %3353 = vmatmul.f32.gmra.mxu0 %v3352
        %v3354 = vpop.f32.mrf.mxu0
        %v3355 = vadd.f32 0.0, %v3354
        %3356 = vdwg.mxu0
        %3357 = vmatpush.msra.mxu0 0.0
        %3358 = vmatpush.msra.mxu0 0.0
        %3359 = vmatpush.msra.mxu0 0.0
        %3360 = vmatpush.msra.mxu0 0.0
        %3361 = vmatpush.msra.mxu0 0.0
        %3362 = vmatpush.msra.mxu0 0.0
        %3363 = vmatpush.msra.mxu0 0.0
        %3364 = vmatpush.msra.mxu0 0.0
        %3365 = vmatpush.msra.mxu0 0.0
        %3366 = vmatpush.msra.mxu0 0.0
        %3367 = vmatpush.msra.mxu0 0.0
        %3368 = vmatpush.msra.mxu0 0.0
        %3369 = vmatpush.msra.mxu0 0.0
        %3370 = vmatpush.msra.mxu0 0.0
        %3371 = vmatpush.msra.mxu0 0.0
        %v3372 = vand.u32 %v1003, 4294901760
        %v3373 = vsub.f32 %v1003, %v3372
        %v3374 = vand.u32 %v3373, 4294901760
        %v3375 = vsub.f32 %v3373, %v3374
        %v3376 = vand.u32 %v3375, 4294901760
        %3377 = vmatpush.msra.mxu0 %v3376
        %v3378 = vand.u32 %v3329, 4294901760
        %3379 = vmatmul.f32.gmra.mxu0 %v3378
        %v3380 = vpop.f32.mrf.mxu0
        %v3381 = vadd.f32 %v3355, %v3380
        %3382 = vdwg.mxu0
        %3383 = vmatpush.msra.mxu0 0.0
        %3384 = vmatpush.msra.mxu0 0.0
        %3385 = vmatpush.msra.mxu0 0.0
        %3386 = vmatpush.msra.mxu0 0.0
        %3387 = vmatpush.msra.mxu0 0.0
        %3388 = vmatpush.msra.mxu0 0.0
        %3389 = vmatpush.msra.mxu0 0.0
        %3390 = vmatpush.msra.mxu0 0.0
        %3391 = vmatpush.msra.mxu0 0.0
        %3392 = vmatpush.msra.mxu0 0.0
        %3393 = vmatpush.msra.mxu0 0.0
        %3394 = vmatpush.msra.mxu0 0.0
        %3395 = vmatpush.msra.mxu0 0.0
        %3396 = vmatpush.msra.mxu0 0.0
        %3397 = vmatpush.msra.mxu0 0.0
        %v3398 = vand.u32 %v1003, 4294901760
        %v3399 = vsub.f32 %v1003, %v3398
        %3400 = vmatpush.msra.mxu0 %v3399
        %v3401 = vand.u32 %v3329, 4294901760
        %v3402 = vsub.f32 %v3329, %v3401
        %3403 = vmatmul.f32.gmra.mxu0 %v3402
        %v3404 = vpop.f32.mrf.mxu0
        %v3405 = vadd.f32 %v3381, %v3404
        %3406 = vdwg.mxu0
        %3407 = vmatpush.msra.mxu0 0.0
        %3408 = vmatpush.msra.mxu0 0.0
        %3409 = vmatpush.msra.mxu0 0.0
        %3410 = vmatpush.msra.mxu0 0.0
        %3411 = vmatpush.msra.mxu0 0.0
        %3412 = vmatpush.msra.mxu0 0.0
        %3413 = vmatpush.msra.mxu0 0.0
        %3414 = vmatpush.msra.mxu0 0.0
        %3415 = vmatpush.msra.mxu0 0.0
        %3416 = vmatpush.msra.mxu0 0.0
        %3417 = vmatpush.msra.mxu0 0.0
        %3418 = vmatpush.msra.mxu0 0.0
        %3419 = vmatpush.msra.mxu0 0.0
        %3420 = vmatpush.msra.mxu0 0.0
        %3421 = vmatpush.msra.mxu0 0.0
        %v3422 = vand.u32 %v1003, 4294901760
        %3423 = vmatpush.msra.mxu0 %v3422
        %v3424 = vand.u32 %v3329, 4294901760
        %v3425 = vsub.f32 %v3329, %v3424
        %v3426 = vand.u32 %v3425, 4294901760
        %3427 = vmatmul.f32.gmra.mxu0 %v3426
        %v3428 = vpop.f32.mrf.mxu0
        %v3429 = vadd.f32 %v3405, %v3428
        %3430 = vdwg.mxu0
        %3431 = vmatpush.msra.mxu0 0.0
        %3432 = vmatpush.msra.mxu0 0.0
        %3433 = vmatpush.msra.mxu0 0.0
        %3434 = vmatpush.msra.mxu0 0.0
        %3435 = vmatpush.msra.mxu0 0.0
        %3436 = vmatpush.msra.mxu0 0.0
        %3437 = vmatpush.msra.mxu0 0.0
        %3438 = vmatpush.msra.mxu0 0.0
        %3439 = vmatpush.msra.mxu0 0.0
        %3440 = vmatpush.msra.mxu0 0.0
        %3441 = vmatpush.msra.mxu0 0.0
        %3442 = vmatpush.msra.mxu0 0.0
        %3443 = vmatpush.msra.mxu0 0.0
        %3444 = vmatpush.msra.mxu0 0.0
        %3445 = vmatpush.msra.mxu0 0.0
        %v3446 = vand.u32 %v1003, 4294901760
        %v3447 = vsub.f32 %v1003, %v3446
        %v3448 = vand.u32 %v3447, 4294901760
        %3449 = vmatpush.msra.mxu0 %v3448
        %v3450 = vand.u32 %v3329, 4294901760
        %3451 = vmatmul.f32.gmra.mxu0 %v3450
        %v3452 = vpop.f32.mrf.mxu0
        %v3453 = vadd.f32 %v3429, %v3452
        %3454 = vdwg.mxu0
        %3455 = vmatpush.msra.mxu0 0.0
        %3456 = vmatpush.msra.mxu0 0.0
        %3457 = vmatpush.msra.mxu0 0.0
        %3458 = vmatpush.msra.mxu0 0.0
        %3459 = vmatpush.msra.mxu0 0.0
        %3460 = vmatpush.msra.mxu0 0.0
        %3461 = vmatpush.msra.mxu0 0.0
        %3462 = vmatpush.msra.mxu0 0.0
        %3463 = vmatpush.msra.mxu0 0.0
        %3464 = vmatpush.msra.mxu0 0.0
        %3465 = vmatpush.msra.mxu0 0.0
        %3466 = vmatpush.msra.mxu0 0.0
        %3467 = vmatpush.msra.mxu0 0.0
        %3468 = vmatpush.msra.mxu0 0.0
        %3469 = vmatpush.msra.mxu0 0.0
        %v3470 = vand.u32 %v1003, 4294901760
        %3471 = vmatpush.msra.mxu0 %v3470
        %v3472 = vand.u32 %v3329, 4294901760
        %3473 = vmatmul.f32.gmra.mxu0 %v3472
        %v3474 = vpop.f32.mrf.mxu0
        %v3475 = vadd.f32 %v3453, %v3474
        %3476 = vdwg.mxu0
        %v3477 = vmul.f32 %v3308, %v3475
        %v3478 = vld [vmem:[#allocation7] sm:$0xff]
        %v3479 = vld [vmem:[#allocation7 + $0x8] sm:$0xff]
        %v3480 = vld [vmem:[#allocation7 + $0x10] sm:$0xff]
        %v3481 = vld [vmem:[#allocation7 + $0x18] sm:$0xff]
        %v3482 = vld [vmem:[#allocation8] sm:$0x1]
        %v3484 = vperm.slane %v3482, 0
        %v3487 = vsel %vm351, %v3477, 0
        %3489 = vmatpush.msra.mxu0 0.0
        %3490 = vmatpush.msra.mxu0 0.0
        %3491 = vmatpush.msra.mxu0 0.0
        %3492 = vmatpush.msra.mxu0 0.0
        %3493 = vmatpush.msra.mxu0 0.0
        %3494 = vmatpush.msra.mxu0 0.0
        %3495 = vmatpush.msra.mxu0 0.0
        %3496 = vmatpush.msra.mxu0 0.0
        %3497 = vmatpush.msra.mxu0 0.0
        %3498 = vmatpush.msra.mxu0 0.0
        %3499 = vmatpush.msra.mxu0 0.0
        %3500 = vmatpush.msra.mxu0 0.0
        %v3501 = vand.u32 %v3481, 4294901760
        %3502 = vmatpush.msra.mxu0 %v3501
        %v3503 = vand.u32 %v3480, 4294901760
        %3504 = vmatpush.msra.mxu0 %v3503
        %v3505 = vand.u32 %v3479, 4294901760
        %3506 = vmatpush.msra.mxu0 %v3505
        %v3507 = vand.u32 %v3478, 4294901760
        %3508 = vmatpush.msra.mxu0 %v3507
        %v3509 = vand.u32 %v3487, 4294901760
        %v3510 = vsub.f32 %v3487, %v3509
        %v3511 = vand.u32 %v3510, 4294901760
        %v3512 = vsub.f32 %v3510, %v3511
        %v3513 = vand.u32 %v3512, 4294901760
        %3514 = vmatmul.f32.gmra.mxu0 %v3513
        %v3515 = vpop.f32.mrf.mxu0
        %v3516 = vadd.f32 %v3484, %v3515
        %3517 = vdwg.mxu0
        %3518 = vmatpush.msra.mxu0 0.0
        %3519 = vmatpush.msra.mxu0 0.0
        %3520 = vmatpush.msra.mxu0 0.0
        %3521 = vmatpush.msra.mxu0 0.0
        %3522 = vmatpush.msra.mxu0 0.0
        %3523 = vmatpush.msra.mxu0 0.0
        %3524 = vmatpush.msra.mxu0 0.0
        %3525 = vmatpush.msra.mxu0 0.0
        %3526 = vmatpush.msra.mxu0 0.0
        %3527 = vmatpush.msra.mxu0 0.0
        %3528 = vmatpush.msra.mxu0 0.0
        %3529 = vmatpush.msra.mxu0 0.0
        %v3530 = vand.u32 %v3481, 4294901760
        %v3531 = vsub.f32 %v3481, %v3530
        %v3532 = vand.u32 %v3531, 4294901760
        %v3533 = vsub.f32 %v3531, %v3532
        %v3534 = vand.u32 %v3533, 4294901760
        %3535 = vmatpush.msra.mxu0 %v3534
        %v3536 = vand.u32 %v3480, 4294901760
        %v3537 = vsub.f32 %v3480, %v3536
        %v3538 = vand.u32 %v3537, 4294901760
        %v3539 = vsub.f32 %v3537, %v3538
        %v3540 = vand.u32 %v3539, 4294901760
        %3541 = vmatpush.msra.mxu0 %v3540
        %v3542 = vand.u32 %v3479, 4294901760
        %v3543 = vsub.f32 %v3479, %v3542
        %v3544 = vand.u32 %v3543, 4294901760
        %v3545 = vsub.f32 %v3543, %v3544
        %v3546 = vand.u32 %v3545, 4294901760
        %3547 = vmatpush.msra.mxu0 %v3546
        %v3548 = vand.u32 %v3478, 4294901760
        %v3549 = vsub.f32 %v3478, %v3548
        %v3550 = vand.u32 %v3549, 4294901760
        %v3551 = vsub.f32 %v3549, %v3550
        %v3552 = vand.u32 %v3551, 4294901760
        %3553 = vmatpush.msra.mxu0 %v3552
        %v3554 = vand.u32 %v3487, 4294901760
        %3555 = vmatmul.f32.gmra.mxu0 %v3554
        %v3556 = vpop.f32.mrf.mxu0
        %v3557 = vadd.f32 %v3516, %v3556
        %3558 = vdwg.mxu0
        %3559 = vmatpush.msra.mxu0 0.0
        %3560 = vmatpush.msra.mxu0 0.0
        %3561 = vmatpush.msra.mxu0 0.0
        %3562 = vmatpush.msra.mxu0 0.0
        %3563 = vmatpush.msra.mxu0 0.0
        %3564 = vmatpush.msra.mxu0 0.0
        %3565 = vmatpush.msra.mxu0 0.0
        %3566 = vmatpush.msra.mxu0 0.0
        %3567 = vmatpush.msra.mxu0 0.0
        %3568 = vmatpush.msra.mxu0 0.0
        %3569 = vmatpush.msra.mxu0 0.0
        %3570 = vmatpush.msra.mxu0 0.0
        %v3571 = vand.u32 %v3481, 4294901760
        %v3572 = vsub.f32 %v3481, %v3571
        %3573 = vmatpush.msra.mxu0 %v3572
        %v3574 = vand.u32 %v3480, 4294901760
        %v3575 = vsub.f32 %v3480, %v3574
        %3576 = vmatpush.msra.mxu0 %v3575
        %v3577 = vand.u32 %v3479, 4294901760
        %v3578 = vsub.f32 %v3479, %v3577
        %3579 = vmatpush.msra.mxu0 %v3578
        %v3580 = vand.u32 %v3478, 4294901760
        %v3581 = vsub.f32 %v3478, %v3580
        %3582 = vmatpush.msra.mxu0 %v3581
        %v3583 = vand.u32 %v3487, 4294901760
        %v3584 = vsub.f32 %v3487, %v3583
        %3585 = vmatmul.f32.gmra.mxu0 %v3584
        %v3586 = vpop.f32.mrf.mxu0
        %v3587 = vadd.f32 %v3557, %v3586
        %3588 = vdwg.mxu0
        %3589 = vmatpush.msra.mxu0 0.0
        %3590 = vmatpush.msra.mxu0 0.0
        %3591 = vmatpush.msra.mxu0 0.0
        %3592 = vmatpush.msra.mxu0 0.0
        %3593 = vmatpush.msra.mxu0 0.0
        %3594 = vmatpush.msra.mxu0 0.0
        %3595 = vmatpush.msra.mxu0 0.0
        %3596 = vmatpush.msra.mxu0 0.0
        %3597 = vmatpush.msra.mxu0 0.0
        %3598 = vmatpush.msra.mxu0 0.0
        %3599 = vmatpush.msra.mxu0 0.0
        %3600 = vmatpush.msra.mxu0 0.0
        %v3601 = vand.u32 %v3481, 4294901760
        %3602 = vmatpush.msra.mxu0 %v3601
        %v3603 = vand.u32 %v3480, 4294901760
        %3604 = vmatpush.msra.mxu0 %v3603
        %v3605 = vand.u32 %v3479, 4294901760
        %3606 = vmatpush.msra.mxu0 %v3605
        %v3607 = vand.u32 %v3478, 4294901760
        %3608 = vmatpush.msra.mxu0 %v3607
        %v3609 = vand.u32 %v3487, 4294901760
        %v3610 = vsub.f32 %v3487, %v3609
        %v3611 = vand.u32 %v3610, 4294901760
        %3612 = vmatmul.f32.gmra.mxu0 %v3611
        %v3613 = vpop.f32.mrf.mxu0
        %v3614 = vadd.f32 %v3587, %v3613
        %3615 = vdwg.mxu0
        %3616 = vmatpush.msra.mxu0 0.0
        %3617 = vmatpush.msra.mxu0 0.0
        %3618 = vmatpush.msra.mxu0 0.0
        %3619 = vmatpush.msra.mxu0 0.0
        %3620 = vmatpush.msra.mxu0 0.0
        %3621 = vmatpush.msra.mxu0 0.0
        %3622 = vmatpush.msra.mxu0 0.0
        %3623 = vmatpush.msra.mxu0 0.0
        %3624 = vmatpush.msra.mxu0 0.0
        %3625 = vmatpush.msra.mxu0 0.0
        %3626 = vmatpush.msra.mxu0 0.0
        %3627 = vmatpush.msra.mxu0 0.0
        %v3628 = vand.u32 %v3481, 4294901760
        %v3629 = vsub.f32 %v3481, %v3628
        %v3630 = vand.u32 %v3629, 4294901760
        %3631 = vmatpush.msra.mxu0 %v3630
        %v3632 = vand.u32 %v3480, 4294901760
        %v3633 = vsub.f32 %v3480, %v3632
        %v3634 = vand.u32 %v3633, 4294901760
        %3635 = vmatpush.msra.mxu0 %v3634
        %v3636 = vand.u32 %v3479, 4294901760
        %v3637 = vsub.f32 %v3479, %v3636
        %v3638 = vand.u32 %v3637, 4294901760
        %3639 = vmatpush.msra.mxu0 %v3638
        %v3640 = vand.u32 %v3478, 4294901760
        %v3641 = vsub.f32 %v3478, %v3640
        %v3642 = vand.u32 %v3641, 4294901760
        %3643 = vmatpush.msra.mxu0 %v3642
        %v3644 = vand.u32 %v3487, 4294901760
        %3645 = vmatmul.f32.gmra.mxu0 %v3644
        %v3646 = vpop.f32.mrf.mxu0
        %v3647 = vadd.f32 %v3614, %v3646
        %3648 = vdwg.mxu0
        %3649 = vmatpush.msra.mxu0 0.0
        %3650 = vmatpush.msra.mxu0 0.0
        %3651 = vmatpush.msra.mxu0 0.0
        %3652 = vmatpush.msra.mxu0 0.0
        %3653 = vmatpush.msra.mxu0 0.0
        %3654 = vmatpush.msra.mxu0 0.0
        %3655 = vmatpush.msra.mxu0 0.0
        %3656 = vmatpush.msra.mxu0 0.0
        %3657 = vmatpush.msra.mxu0 0.0
        %3658 = vmatpush.msra.mxu0 0.0
        %3659 = vmatpush.msra.mxu0 0.0
        %3660 = vmatpush.msra.mxu0 0.0
        %v3661 = vand.u32 %v3481, 4294901760
        %3662 = vmatpush.msra.mxu0 %v3661
        %v3663 = vand.u32 %v3480, 4294901760
        %3664 = vmatpush.msra.mxu0 %v3663
        %v3665 = vand.u32 %v3479, 4294901760
        %3666 = vmatpush.msra.mxu0 %v3665
        %v3667 = vand.u32 %v3478, 4294901760
        %3668 = vmatpush.msra.mxu0 %v3667
        %v3669 = vand.u32 %v3487, 4294901760
        %3670 = vmatmul.f32.gmra.mxu0 %v3669
        %v3671 = vpop.f32.mrf.mxu0
        %v3672 = vadd.f32 %v3647, %v3671
        %3673 = vdwg.mxu0
        %3674 = vst.msk [vmem:[%s341] sm:$0xff] %vm351, %v3672
        %s3675 = sand.u32 %s186, 1
        %s3676 = scalar_lea.sflag [#allocation4], %s3675
        %s3677 = sand.u32 %s186, 1
        %s3678 = smul.addr %s3677, 8
        %s3679 = scalar_lea.vmem [#allocation10], %s3678
        // Predicated region
        $region65: #{tpu_custom_call.1} parent=47 // pred_check
          %p3680 = pneg %p196
        $region66: #{tpu_custom_call.1} parent=47 // pred_check_branch
          %3682 = sbr.rel (%p3680) target = $region68
        $region67: #{tpu_custom_call.1} parent=47 // pred_region
          %3684 = vsyncadd %s3676, 0
          %s3685 = smul.addr %s26, 8
          %s3686 = scalar_lea.hbm %s7, %s3685
          %s3688 = sshll.u32 %s3679, 4
          %s3689 = int_to_ptr.vmem [resolvable:$true] %s3688
          %s3690 = sshll.u32 %s3686, 4
          %s3691 = int_to_ptr.hbm [resolvable:$true] %s3690
          %3693 = dma.vmem_to_hbm [thread:$0]  %s3689, 128, %s3691, %s3676
        $region68: #{tpu_custom_call.1} parent=47 // pred_fallthru
          _
      $region48: #{tpu_custom_call.1} parent=5 // pred_fallthru
        _
      %p3694 = scmp.le.s32.totalorder 2, %s21
      // Predicated region
      $region69: #{tpu_custom_call.1} parent=5 // pred_check
        %p3695 = pneg %p3694
      $region70: #{tpu_custom_call.1} parent=5 // pred_check_branch
        %3697 = sbr.rel (%p3695) target = $region72
      $region71: #{tpu_custom_call.1} parent=5 // pred_region
        %s3698 = ssub.s32 %s21, 2
        // Predicated region
        $region73: #{tpu_custom_call.1} parent=71 // pred_check
          %p3699 = pneg %p202
        $region74: #{tpu_custom_call.1} parent=71 // pred_check_branch
          %3701 = sbr.rel (%p3699) target = $region76
        $region75: #{tpu_custom_call.1} parent=71 // pred_region
          %s3702 = sand.u32 %s187, 1
          %s3703 = scalar_lea.sflag [#allocation4], %s3702
          %s3704 = sand.u32 %s187, 1
          %s3705 = smul.addr %s3704, 8
          %s3706 = scalar_lea.vmem [#allocation10], %s3705
          %3708 = dma.done %s3703, 128
        $region76: #{tpu_custom_call.1} parent=71 // pred_fallthru
          _
      $region72: #{tpu_custom_call.1} parent=5 // pred_fallthru
        _
    $region6: #{tpu_custom_call.1} parent=1 // loop_footer
      %s25 = sadd.s32 1, %s21
    $region7: #{tpu_custom_call.1} parent=1 // loop_footer_branch
      %20 = sbr.rel target = $region3
    $region8: #{tpu_custom_call.1} parent=1 // loop_exit
      _
    %3709 = vsyncpa [#allocation3], 1
    %s3710 = scalar_lea.sflag [#allocation3], 1
    %3711 = vsyncpa %s3710, 1
    %3712 = vsyncpa [#allocation6], 1
    %3713 = vsyncpa [#allocation9], 1
    %3714 = vsyncpa [#allocation4], 1
    %s3715 = scalar_lea.sflag [#allocation4], 1
    %3716 = vsyncpa %s3715, 1

// kernel: tpu_custom_call.1
$region0: #{tpu_custom_call.1}
  #allocation0 [shape = 'u32[]', space=smem, size = 0x4, offset = 0x4, fixed_abs, tag = 'smem constant byte address 0x4 - core index']
  #allocation1 [shape = 'u32[72,128]{1,0:T(1,128)}', space=vmem, size = 0x9000, scoped, tag = 'internal scratch']
  %s0 = inlined_call_operand.hbm [shape: f32[2,8,32], index: 0, kind: input, shape index: {}]
  %s1 = inlined_call_operand.vmem [shape: f32[32,96], index: 1, kind: input, shape index: {}]
  %s2 = inlined_call_operand.hbm [shape: f32[1,96], index: 2, kind: input, shape index: {}]
  %s3 = inlined_call_operand.hbm [shape: f32[32,32], index: 3, kind: input, shape index: {}]
  %s4 = inlined_call_operand.hbm [shape: f32[1,32], index: 4, kind: input, shape index: {}]
  %s5 = inlined_call_operand.vmem [shape: f32[32,4], index: 5, kind: input, shape index: {}]
  %s6 = inlined_call_operand.vmem [shape: f32[4,32], index: 6, kind: input, shape index: {}]
  %s7 = inlined_call_operand.hbm [shape: f32[2,8,32], index: 7, kind: output, shape index: {}]
  %s8 = sld [smem:[#allocation0]]
  $region77: #{tpu_custom_call.1} parent=0
    _
  %s10 = ssub.s32 1, %s8
  %s11 = scalar_select 0, %s10, %s8
  $region1: #{tpu_custom_call.1} parent=0
    #allocation2 [shape = 'u8[8192]{0}', space=vmem, size = 0x2000, scoped, tag = 'input window, operand 0']
    #allocation3 [shape = 's32[2]{0}', space=sflag, size = 0x8, scoped, tag = 'scoped memory for tpu_custom_call.1']
    #allocation4 [shape = 's32[2]{0}', space=sflag, size = 0x8, scoped, tag = 'scoped memory for tpu_custom_call.1']
    #allocation5 [shape = 'u8[512]{0}', space=vmem, size = 0x400, scoped, tag = 'input window, operand 2, single buffered']
    #allocation6 [shape = 's32[1]{0}', space=sflag, size = 0x4, scoped, tag = 'scoped memory for tpu_custom_call.1']
    #allocation7 [shape = 'u8[16384]{0}', space=vmem, size = 0x4000, scoped, tag = 'input window, operand 3, single buffered']
    #allocation8 [shape = 'u8[512]{0}', space=vmem, size = 0x400, scoped, tag = 'input window, operand 4, single buffered']
    #allocation9 [shape = 's32[1]{0}', space=sflag, size = 0x4, scoped, tag = 'scoped memory for tpu_custom_call.1']
    #allocation10 [shape = 'u8[8192]{0}', space=vmem, size = 0x2000, scoped, tag = 'output window, operand 0']
    %12 = vsyncpa [#allocation3], 0
    %s13 = scalar_lea.sflag [#allocation3], 1
    %14 = vsyncpa %s13, 0
    %15 = vsyncpa [#allocation6], 0
    %16 = vsyncpa [#allocation9], 0
    %17 = vsyncpa [#allocation4], 0
    %s18 = scalar_lea.sflag [#allocation4], 1
    %19 = vsyncpa %s18, 0
    loop: start=0, step=1, limit=4
    $region2: #{tpu_custom_call.1} parent=1 // loop_pre_header
      _
    $region3: #{tpu_custom_call.1} parent=1 // loop_header
      %s21 = sphi 0, %s25
      %p22 = scmp.ge.s32.totalorder %s21, 4
      %s31 = sphi 0, %s33
      %s34 = sphi 0, %s31
      %s35 = sphi 0, %s34
      %s51 = sphi 0, %s35
      %s55 = sphi 0, %s55
      %s57 = sphi 0, %s55
      %s58 = sphi 0, %s57
      %s72 = sphi 0, %s58
      %s76 = sphi 0, %s76
      %s78 = sphi 0, %s76
      %s79 = sphi 0, %s78
      %s93 = sphi 0, %s79
      %s97 = sphi 0, %s97
      %s99 = sphi 0, %s97
      %s100 = sphi 0, %s99
      %s114 = sphi 0, %s100
      %s118 = sphi 0, %s118
      %s120 = sphi 0, %s118
      %s121 = sphi 0, %s120
      %s135 = sphi 0, %s121
      %s139 = sphi 0, %s139
      %s141 = sphi 0, %s139
      %s142 = sphi 0, %s141
      %s156 = sphi 0, %s142
      %s160 = sphi 0, %s160
      %s162 = sphi 0, %s160
      %s163 = sphi 0, %s162
      %s177 = sphi 0, %s163
      %s183 = sphi 0, %s185
      %s186 = sphi 0, %s183
      %s187 = sphi 0, %s186
      %s203 = sphi 0, %s187
    $region4: #{tpu_custom_call.1} parent=1 // loop_header_branch
      %24 = sbr.rel (%p22) target = $region8
    $region5: #{tpu_custom_call.1} parent=1 // loop_body
      %s26 = ssub.s32 %s21, 1
      %s27 = ssub.s32 %s21, 2
      %s28 = sadd.s32 %s21, 1
      %s29 = ssub.s32 %s21, %s28
      %p30 = scmp.eq.s32.totalorder %s29, 0
      %s32 = sadd.s32 %s31, 1
      %s33 = scalar_select %p30, %s31, %s32
      %p36 = pneg %p30
      %p37 = scmp.eq.s32.totalorder %s21, 1
      %p38 = por %p36, %p37
      %p39 = scmp.ne.s32.totalorder %s31, %s34
      %p40 = scmp.eq.s32.totalorder %s21, 0
      %p41 = por %p39, %p40
      %p42 = scmp.ne.s32.totalorder %s31, %s34
      %p43 = scmp.eq.s32.totalorder %s26, 1
      %p44 = por %p42, %p43
      %p45 = scmp.ne.s32.totalorder %s34, %s35
      %p46 = scmp.eq.s32.totalorder %s26, 0
      %p47 = por %p45, %p46
      %p48 = scmp.ne.s32.totalorder %s34, %s35
      %p49 = scmp.eq.s32.totalorder %s27, 1
      %p50 = por %p48, %p49
      %p52 = scmp.ne.s32.totalorder %s35, %s51
      %p53 = scmp.eq.s32.totalorder %s27, 0
      %p54 = por %p52, %p53
      %s56 = sadd.s32 %s55, 1
      %p59 = scmp.eq.s32.totalorder %s21, 1
      %p60 = scmp.ne.s32.totalorder %s55, %s57
      %p61 = scmp.eq.s32.totalorder %s21, 0
      %p62 = por %p60, %p61
      %p63 = scmp.ne.s32.totalorder %s55, %s57
      %p64 = scmp.eq.s32.totalorder %s26, 1
      %p65 = por %p63, %p64
      %p66 = scmp.ne.s32.totalorder %s57, %s58
      %p67 = scmp.eq.s32.totalorder %s26, 0
      %p68 = por %p66, %p67
      %p69 = scmp.ne.s32.totalorder %s57, %s58
      %p70 = scmp.eq.s32.totalorder %s27, 1
      %p71 = por %p69, %p70
      %p73 = scmp.ne.s32.totalorder %s58, %s72
      %p74 = scmp.eq.s32.totalorder %s27, 0
      %p75 = por %p73, %p74
      %s77 = sadd.s32 %s76, 1
      %p80 = scmp.eq.s32.totalorder %s21, 1
      %p81 = scmp.ne.s32.totalorder %s76, %s78
      %p82 = scmp.eq.s32.totalorder %s21, 0
      %p83 = por %p81, %p82
      %p84 = scmp.ne.s32.totalorder %s76, %s78
      %p85 = scmp.eq.s32.totalorder %s26, 1
      %p86 = por %p84, %p85
      %p87 = scmp.ne.s32.totalorder %s78, %s79
      %p88 = scmp.eq.s32.totalorder %s26, 0
      %p89 = por %p87, %p88
      %p90 = scmp.ne.s32.totalorder %s78, %s79
      %p91 = scmp.eq.s32.totalorder %s27, 1
      %p92 = por %p90, %p91
      %p94 = scmp.ne.s32.totalorder %s79, %s93
      %p95 = scmp.eq.s32.totalorder %s27, 0
      %p96 = por %p94, %p95
      %s98 = sadd.s32 %s97, 1
      %p101 = scmp.eq.s32.totalorder %s21, 1
      %p102 = scmp.ne.s32.totalorder %s97, %s99
      %p103 = scmp.eq.s32.totalorder %s21, 0
      %p104 = por %p102, %p103
      %p105 = scmp.ne.s32.totalorder %s97, %s99
      %p106 = scmp.eq.s32.totalorder %s26, 1
      %p107 = por %p105, %p106
      %p108 = scmp.ne.s32.totalorder %s99, %s100
      %p109 = scmp.eq.s32.totalorder %s26, 0
      %p110 = por %p108, %p109
      %p111 = scmp.ne.s32.totalorder %s99, %s100
      %p112 = scmp.eq.s32.totalorder %s27, 1
      %p113 = por %p111, %p112
      %p115 = scmp.ne.s32.totalorder %s100, %s114
      %p116 = scmp.eq.s32.totalorder %s27, 0
      %p117 = por %p115, %p116
      %s119 = sadd.s32 %s118, 1
      %p122 = scmp.eq.s32.totalorder %s21, 1
      %p123 = scmp.ne.s32.totalorder %s118, %s120
      %p124 = scmp.eq.s32.totalorder %s21, 0
      %p125 = por %p123, %p124
      %p126 = scmp.ne.s32.totalorder %s118, %s120
      %p127 = scmp.eq.s32.totalorder %s26, 1
      %p128 = por %p126, %p127
      %p129 = scmp.ne.s32.totalorder %s120, %s121
      %p130 = scmp.eq.s32.totalorder %s26, 0
      %p131 = por %p129, %p130
      %p132 = scmp.ne.s32.totalorder %s120, %s121
      %p133 = scmp.eq.s32.totalorder %s27, 1
      %p134 = por %p132, %p133
      %p136 = scmp.ne.s32.totalorder %s121, %s135
      %p137 = scmp.eq.s32.totalorder %s27, 0
      %p138 = por %p136, %p137
      %s140 = sadd.s32 %s139, 1
      %p143 = scmp.eq.s32.totalorder %s21, 1
      %p144 = scmp.ne.s32.totalorder %s139, %s141
      %p145 = scmp.eq.s32.totalorder %s21, 0
      %p146 = por %p144, %p145
      %p147 = scmp.ne.s32.totalorder %s139, %s141
      %p148 = scmp.eq.s32.totalorder %s26, 1
      %p149 = por %p147, %p148
      %p150 = scmp.ne.s32.totalorder %s141, %s142
      %p151 = scmp.eq.s32.totalorder %s26, 0
      %p152 = por %p150, %p151
      %p153 = scmp.ne.s32.totalorder %s141, %s142
      %p154 = scmp.eq.s32.totalorder %s27, 1
      %p155 = por %p153, %p154
      %p157 = scmp.ne.s32.totalorder %s142, %s156
      %p158 = scmp.eq.s32.totalorder %s27, 0
      %p159 = por %p157, %p158
      %s161 = sadd.s32 %s160, 1
      %p164 = scmp.eq.s32.totalorder %s21, 1
      %p165 = scmp.ne.s32.totalorder %s160, %s162
      %p166 = scmp.eq.s32.totalorder %s21, 0
      %p167 = por %p165, %p166
      %p168 = scmp.ne.s32.totalorder %s160, %s162
      %p169 = scmp.eq.s32.totalorder %s26, 1
      %p170 = por %p168, %p169
      %p171 = scmp.ne.s32.totalorder %s162, %s163
      %p172 = scmp.eq.s32.totalorder %s26, 0
      %p173 = por %p171, %p172
      %p174 = scmp.ne.s32.totalorder %s162, %s163
      %p175 = scmp.eq.s32.totalorder %s27, 1
      %p176 = por %p174, %p175
      %p178 = scmp.ne.s32.totalorder %s163, %s177
      %p179 = scmp.eq.s32.totalorder %s27, 0
      %p180 = por %p178, %p179
      %s181 = ssub.s32 %s21, %s28
      %p182 = scmp.eq.s32.totalorder %s181, 0
      %s184 = sadd.s32 %s183, 1
      %s185 = scalar_select %p182, %s183, %s184
      %p188 = pneg %p182
      %p189 = scmp.eq.s32.totalorder %s21, 1
      %p190 = por %p188, %p189
      %p191 = scmp.ne.s32.totalorder %s183, %s186
      %p192 = scmp.eq.s32.totalorder %s21, 0
      %p193 = por %p191, %p192
      %p194 = scmp.ne.s32.totalorder %s183, %s186
      %p195 = scmp.eq.s32.totalorder %s26, 1
      %p196 = por %p194, %p195
      %p197 = scmp.ne.s32.totalorder %s186, %s187
      %p198 = scmp.eq.s32.totalorder %s26, 0
      %p199 = por %p197, %p198
      %p200 = scmp.ne.s32.totalorder %s186, %s187
      %p201 = scmp.eq.s32.totalorder %s27, 1
      %p202 = por %p200, %p201
      %p204 = scmp.ne.s32.totalorder %s187, %s203
      %p205 = scmp.eq.s32.totalorder %s27, 0
      %p206 = por %p204, %p205
      %p207 = scmp.le.s32.totalorder 1, %s21
      %p208 = scmp.lt.s32.totalorder %s21, 3
      %p209 = pnand %p207, %p208
      %p210 = pneg %p209
      // Predicated region
      $region9: #{tpu_custom_call.1} parent=5 // pred_check
        _
      $region10: #{tpu_custom_call.1} parent=5 // pred_check_branch
        %212 = sbr.rel (%p209) target = $region12
      $region11: #{tpu_custom_call.1} parent=5 // pred_region
        %s213 = ssub.s32 %s21, 1
        // Predicated region
        $region13: #{tpu_custom_call.1} parent=11 // pred_check
          %p214 = pneg %p68
        $region14: #{tpu_custom_call.1} parent=11 // pred_check_branch
          %216 = sbr.rel (%p214) target = $region16
        $region15: #{tpu_custom_call.1} parent=11 // pred_region
          _
        $region16: #{tpu_custom_call.1} parent=11 // pred_fallthru
          _
        // Predicated region
        $region17: #{tpu_custom_call.1} parent=11 // pred_check
          %p217 = pneg %p89
        $region18: #{tpu_custom_call.1} parent=11 // pred_check_branch
          %219 = sbr.rel (%p217) target = $region20
        $region19: #{tpu_custom_call.1} parent=11 // pred_region
          %221 = vsyncadd [#allocation6], 0
          %s223 = sshll.u32 %s2, 4
          %s224 = int_to_ptr.hbm [resolvable:$true] %s223
          %s225 = sshll.u32 [#allocation5], 4
          %s226 = int_to_ptr.vmem [resolvable:$true] %s225
          %228 = dma.hbm_to_vmem [thread:$0]  %s224, 16, %s226, [#allocation6]
        $region20: #{tpu_custom_call.1} parent=11 // pred_fallthru
          _
        // Predicated region
        $region21: #{tpu_custom_call.1} parent=11 // pred_check
          %p229 = pneg %p110
        $region22: #{tpu_custom_call.1} parent=11 // pred_check_branch
          %231 = sbr.rel (%p229) target = $region24
        $region23: #{tpu_custom_call.1} parent=11 // pred_region
          %233 = vsyncadd [#allocation6], 0
          %s234 = sshll.u32 %s3, 4
          %s235 = int_to_ptr.hbm [resolvable:$true] %s234
          %s236 = sshll.u32 [#allocation7], 4
          %s237 = int_to_ptr.vmem [resolvable:$true] %s236
          %242 = dma.hbm_to_vmem [thread:$0]  %s235, 512, %s237, [#allocation6], 128, 128, 8
        $region24: #{tpu_custom_call.1} parent=11 // pred_fallthru
          _
        // Predicated region
        $region25: #{tpu_custom_call.1} parent=11 // pred_check
          %p243 = pneg %p131
        $region26: #{tpu_custom_call.1} parent=11 // pred_check_branch
          %245 = sbr.rel (%p243) target = $region28
        $region27: #{tpu_custom_call.1} parent=11 // pred_region
          %247 = vsyncadd [#allocation9], 0
          %s249 = sshll.u32 %s4, 4
          %s250 = int_to_ptr.hbm [resolvable:$true] %s249
          %s251 = sshll.u32 [#allocation8], 4
          %s252 = int_to_ptr.vmem [resolvable:$true] %s251
          %254 = dma.hbm_to_vmem [thread:$0]  %s250, 16, %s252, [#allocation9]
        $region28: #{tpu_custom_call.1} parent=11 // pred_fallthru
          _
        // Predicated region
        $region29: #{tpu_custom_call.1} parent=11 // pred_check
          %p255 = pneg %p152
        $region30: #{tpu_custom_call.1} parent=11 // pred_check_branch
          %257 = sbr.rel (%p255) target = $region32
        $region31: #{tpu_custom_call.1} parent=11 // pred_region
          _
        $region32: #{tpu_custom_call.1} parent=11 // pred_fallthru
          _
        // Predicated region
        $region33: #{tpu_custom_call.1} parent=11 // pred_check
          %p258 = pneg %p173
        $region34: #{tpu_custom_call.1} parent=11 // pred_check_branch
          %260 = sbr.rel (%p258) target = $region36
        $region35: #{tpu_custom_call.1} parent=11 // pred_region
          _
        $region36: #{tpu_custom_call.1} parent=11 // pred_fallthru
          _
      $region12: #{tpu_custom_call.1} parent=5 // pred_fallthru
        _
      %p261 = scmp.lt.s32.totalorder %s21, 2
      // Predicated region
      $region37: #{tpu_custom_call.1} parent=5 // pred_check
        %p262 = pneg %p261
      $region38: #{tpu_custom_call.1} parent=5 // pred_check_branch
        %264 = sbr.rel (%p262) target = $region40
      $region39: #{tpu_custom_call.1} parent=5 // pred_region
        // Predicated region
        $region41: #{tpu_custom_call.1} parent=39 // pred_check
          %p265 = pneg %p41
        $region42: #{tpu_custom_call.1} parent=39 // pred_check_branch
          %267 = sbr.rel (%p265) target = $region44
        $region43: #{tpu_custom_call.1} parent=39 // pred_region
          %s268 = sand.u32 %s31, 1
          %s269 = scalar_lea.sflag [#allocation3], %s268
          %s270 = sand.u32 %s31, 1
          %s271 = smul.addr %s270, 8
          %s272 = scalar_lea.vmem [#allocation2], %s271
          %274 = vsyncadd %s269, 0
          %s275 = smul.addr %s21, 8
          %s276 = scalar_lea.hbm %s0, %s275
          %s278 = sshll.u32 %s276, 4
          %s279 = int_to_ptr.hbm [resolvable:$true] %s278
          %s280 = sshll.u32 %s272, 4
          %s281 = int_to_ptr.vmem [resolvable:$true] %s280
          %283 = dma.hbm_to_vmem [thread:$0]  %s279, 128, %s281, %s269
        $region44: #{tpu_custom_call.1} parent=39 // pred_fallthru
          _
      $region40: #{tpu_custom_call.1} parent=5 // pred_fallthru
        _
      %p284 = scmp.le.s32.totalorder 1, %s21
      %p285 = scmp.lt.s32.totalorder %s21, 3
      %p286 = pnand %p284, %p285
      %p287 = pneg %p286
      // Predicated region
      $region45: #{tpu_custom_call.1} parent=5 // pred_check
        _
      $region46: #{tpu_custom_call.1} parent=5 // pred_check_branch
        %289 = sbr.rel (%p286) target = $region48
      $region47: #{tpu_custom_call.1} parent=5 // pred_region
        %s290 = ssub.s32 %s21, 1
        %s291 = sand.u32 %s34, 1
        %s292 = scalar_lea.sflag [#allocation3], %s291
        %s293 = sand.u32 %s34, 1
        %s294 = smul.addr %s293, 8
        %s295 = scalar_lea.vmem [#allocation2], %s294
        // Predicated region
        $region49: #{tpu_custom_call.1} parent=47 // pred_check
          %p296 = pneg %p47
        $region50: #{tpu_custom_call.1} parent=47 // pred_check_branch
          %298 = sbr.rel (%p296) target = $region52
        $region51: #{tpu_custom_call.1} parent=47 // pred_region
          %300 = dma.done %s292, 128
        $region52: #{tpu_custom_call.1} parent=47 // pred_fallthru
          _
        // Predicated region
        $region53: #{tpu_custom_call.1} parent=47 // pred_check
          %p301 = pneg %p89
        $region54: #{tpu_custom_call.1} parent=47 // pred_check_branch
          %303 = sbr.rel (%p301) target = $region56
        $region55: #{tpu_custom_call.1} parent=47 // pred_region
          %305 = dma.done [#allocation6], 16
        $region56: #{tpu_custom_call.1} parent=47 // pred_fallthru
          _
        // Predicated region
        $region57: #{tpu_custom_call.1} parent=47 // pred_check
          %p306 = pneg %p110
        $region58: #{tpu_custom_call.1} parent=47 // pred_check_branch
          %308 = sbr.rel (%p306) target = $region60
        $region59: #{tpu_custom_call.1} parent=47 // pred_region
          %310 = dma.done [#allocation6], 512
        $region60: #{tpu_custom_call.1} parent=47 // pred_fallthru
          _
        // Predicated region
        $region61: #{tpu_custom_call.1} parent=47 // pred_check
          %p311 = pneg %p131
        $region62: #{tpu_custom_call.1} parent=47 // pred_check_branch
          %313 = sbr.rel (%p311) target = $region64
        $region63: #{tpu_custom_call.1} parent=47 // pred_region
          %315 = dma.done [#allocation9], 16
        $region64: #{tpu_custom_call.1} parent=47 // pred_fallthru
          _
        %s316 = sand.u32 %s34, 1
        %s317 = scalar_lea.sflag [#allocation3], %s316
        %s318 = sand.u32 %s34, 1
        %s319 = smul.addr %s318, 8
        %s320 = scalar_lea.vmem [#allocation2], %s319
        %p321 = pneg %p47
        %p322 = pneg %p44
        %p323 = pneg %p68
        %p324 = pneg %p65
        %p325 = pneg %p89
        %p326 = pneg %p86
        %p327 = pneg %p110
        %p328 = pneg %p107
        %p329 = pneg %p131
        %p330 = pneg %p128
        %p331 = pneg %p152
        %p332 = pneg %p149
        %p333 = pneg %p173
        %p334 = pneg %p170
        %p335 = pneg %p199
        %p336 = pneg %p196
        %s337 = sand.u32 %s186, 1
        %s338 = scalar_lea.sflag [#allocation4], %s337
        %s339 = sand.u32 %s186, 1
        %s340 = smul.addr %s339, 8
        %s341 = scalar_lea.vmem [#allocation10], %s340
        %v342 = vld [vmem:[%s295] sm:$0xff]
        %v343 = vld [vmem:[%s1] sm:$0xff]
        %v344 = vld [vmem:[%s1 + $0x8] sm:$0xff]
        %v345 = vld [vmem:[%s1 + $0x10] sm:$0xff]
        %v346 = vld [vmem:[%s1 + $0x18] sm:$0xff]
        %v347 = vld [vmem:[#allocation5] sm:$0x1]
        %v349 = vperm.slane %v347, 0
        %vm351 = vcmask 261120
        %v353 = vsel %vm351, %v342, 0
        %355 = vmatpush.msra.mxu0 0.0
        %356 = vmatpush.msra.mxu0 0.0
        %357 = vmatpush.msra.mxu0 0.0
        %358 = vmatpush.msra.mxu0 0.0
        %359 = vmatpush.msra.mxu0 0.0
        %360 = vmatpush.msra.mxu0 0.0
        %361 = vmatpush.msra.mxu0 0.0
        %362 = vmatpush.msra.mxu0 0.0
        %363 = vmatpush.msra.mxu0 0.0
        %364 = vmatpush.msra.mxu0 0.0
        %365 = vmatpush.msra.mxu0 0.0
        %366 = vmatpush.msra.mxu0 0.0
        %v367 = vand.u32 %v346, 4294901760
        %368 = vmatpush.msra.mxu0 %v367
        %v369 = vand.u32 %v345, 4294901760
        %370 = vmatpush.msra.mxu0 %v369
        %v371 = vand.u32 %v344, 4294901760
        %372 = vmatpush.msra.mxu0 %v371
        %v373 = vand.u32 %v343, 4294901760
        %374 = vmatpush.msra.mxu0 %v373
        %v375 = vand.u32 %v353, 4294901760
        %v376 = vsub.f32 %v353, %v375
        %v377 = vand.u32 %v376, 4294901760
        %v378 = vsub.f32 %v376, %v377
        %v379 = vand.u32 %v378, 4294901760
        %380 = vmatmul.f32.gmra.mxu0 %v379
        %v381 = vpop.f32.mrf.mxu0
        %v382 = vadd.f32 %v349, %v381
        %383 = vdwg.mxu0
        %384 = vmatpush.msra.mxu0 0.0
        %385 = vmatpush.msra.mxu0 0.0
        %386 = vmatpush.msra.mxu0 0.0
        %387 = vmatpush.msra.mxu0 0.0
        %388 = vmatpush.msra.mxu0 0.0
        %389 = vmatpush.msra.mxu0 0.0
        %390 = vmatpush.msra.mxu0 0.0
        %391 = vmatpush.msra.mxu0 0.0
        %392 = vmatpush.msra.mxu0 0.0
        %393 = vmatpush.msra.mxu0 0.0
        %394 = vmatpush.msra.mxu0 0.0
        %395 = vmatpush.msra.mxu0 0.0
        %v396 = vand.u32 %v346, 4294901760
        %v397 = vsub.f32 %v346, %v396
        %v398 = vand.u32 %v397, 4294901760
        %v399 = vsub.f32 %v397, %v398
        %v400 = vand.u32 %v399, 4294901760
        %401 = vmatpush.msra.mxu0 %v400
        %v402 = vand.u32 %v345, 4294901760
        %v403 = vsub.f32 %v345, %v402
        %v404 = vand.u32 %v403, 4294901760
        %v405 = vsub.f32 %v403, %v404
        %v406 = vand.u32 %v405, 4294901760
        %407 = vmatpush.msra.mxu0 %v406
        %v408 = vand.u32 %v344, 4294901760
        %v409 = vsub.f32 %v344, %v408
        %v410 = vand.u32 %v409, 4294901760
        %v411 = vsub.f32 %v409, %v410
        %v412 = vand.u32 %v411, 4294901760
        %413 = vmatpush.msra.mxu0 %v412
        %v414 = vand.u32 %v343, 4294901760
        %v415 = vsub.f32 %v343, %v414
        %v416 = vand.u32 %v415, 4294901760
        %v417 = vsub.f32 %v415, %v416
        %v418 = vand.u32 %v417, 4294901760
        %419 = vmatpush.msra.mxu0 %v418
        %v420 = vand.u32 %v353, 4294901760
        %421 = vmatmul.f32.gmra.mxu0 %v420
        %v422 = vpop.f32.mrf.mxu0
        %v423 = vadd.f32 %v382, %v422
        %424 = vdwg.mxu0
        %425 = vmatpush.msra.mxu0 0.0
        %426 = vmatpush.msra.mxu0 0.0
        %427 = vmatpush.msra.mxu0 0.0
        %428 = vmatpush.msra.mxu0 0.0
        %429 = vmatpush.msra.mxu0 0.0
        %430 = vmatpush.msra.mxu0 0.0
        %431 = vmatpush.msra.mxu0 0.0
        %432 = vmatpush.msra.mxu0 0.0
        %433 = vmatpush.msra.mxu0 0.0
        %434 = vmatpush.msra.mxu0 0.0
        %435 = vmatpush.msra.mxu0 0.0
        %436 = vmatpush.msra.mxu0 0.0
        %v437 = vand.u32 %v346, 4294901760
        %v438 = vsub.f32 %v346, %v437
        %439 = vmatpush.msra.mxu0 %v438
        %v440 = vand.u32 %v345, 4294901760
        %v441 = vsub.f32 %v345, %v440
        %442 = vmatpush.msra.mxu0 %v441
        %v443 = vand.u32 %v344, 4294901760
        %v444 = vsub.f32 %v344, %v443
        %445 = vmatpush.msra.mxu0 %v444
        %v446 = vand.u32 %v343, 4294901760
        %v447 = vsub.f32 %v343, %v446
        %448 = vmatpush.msra.mxu0 %v447
        %v449 = vand.u32 %v353, 4294901760
        %v450 = vsub.f32 %v353, %v449
        %451 = vmatmul.f32.gmra.mxu0 %v450
        %v452 = vpop.f32.mrf.mxu0
        %v453 = vadd.f32 %v423, %v452
        %454 = vdwg.mxu0
        %455 = vmatpush.msra.mxu0 0.0
        %456 = vmatpush.msra.mxu0 0.0
        %457 = vmatpush.msra.mxu0 0.0
        %458 = vmatpush.msra.mxu0 0.0
        %459 = vmatpush.msra.mxu0 0.0
        %460 = vmatpush.msra.mxu0 0.0
        %461 = vmatpush.msra.mxu0 0.0
        %462 = vmatpush.msra.mxu0 0.0
        %463 = vmatpush.msra.mxu0 0.0
        %464 = vmatpush.msra.mxu0 0.0
        %465 = vmatpush.msra.mxu0 0.0
        %466 = vmatpush.msra.mxu0 0.0
        %v467 = vand.u32 %v346, 4294901760
        %468 = vmatpush.msra.mxu0 %v467
        %v469 = vand.u32 %v345, 4294901760
        %470 = vmatpush.msra.mxu0 %v469
        %v471 = vand.u32 %v344, 4294901760
        %472 = vmatpush.msra.mxu0 %v471
        %v473 = vand.u32 %v343, 4294901760
        %474 = vmatpush.msra.mxu0 %v473
        %v475 = vand.u32 %v353, 4294901760
        %v476 = vsub.f32 %v353, %v475
        %v477 = vand.u32 %v476, 4294901760
        %478 = vmatmul.f32.gmra.mxu0 %v477
        %v479 = vpop.f32.mrf.mxu0
        %v480 = vadd.f32 %v453, %v479
        %481 = vdwg.mxu0
        %482 = vmatpush.msra.mxu0 0.0
        %483 = vmatpush.msra.mxu0 0.0
        %484 = vmatpush.msra.mxu0 0.0
        %485 = vmatpush.msra.mxu0 0.0
        %486 = vmatpush.msra.mxu0 0.0
        %487 = vmatpush.msra.mxu0 0.0
        %488 = vmatpush.msra.mxu0 0.0
        %489 = vmatpush.msra.mxu0 0.0
        %490 = vmatpush.msra.mxu0 0.0
        %491 = vmatpush.msra.mxu0 0.0
        %492 = vmatpush.msra.mxu0 0.0
        %493 = vmatpush.msra.mxu0 0.0
        %v494 = vand.u32 %v346, 4294901760
        %v495 = vsub.f32 %v346, %v494
        %v496 = vand.u32 %v495, 4294901760
        %497 = vmatpush.msra.mxu0 %v496
        %v498 = vand.u32 %v345, 4294901760
        %v499 = vsub.f32 %v345, %v498
        %v500 = vand.u32 %v499, 4294901760
        %501 = vmatpush.msra.mxu0 %v500
        %v502 = vand.u32 %v344, 4294901760
        %v503 = vsub.f32 %v344, %v502
        %v504 = vand.u32 %v503, 4294901760
        %505 = vmatpush.msra.mxu0 %v504
        %v506 = vand.u32 %v343, 4294901760
        %v507 = vsub.f32 %v343, %v506
        %v508 = vand.u32 %v507, 4294901760
        %509 = vmatpush.msra.mxu0 %v508
        %v510 = vand.u32 %v353, 4294901760
        %511 = vmatmul.f32.gmra.mxu0 %v510
        %v512 = vpop.f32.mrf.mxu0
        %v513 = vadd.f32 %v480, %v512
        %514 = vdwg.mxu0
        %515 = vmatpush.msra.mxu0 0.0
        %516 = vmatpush.msra.mxu0 0.0
        %517 = vmatpush.msra.mxu0 0.0
        %518 = vmatpush.msra.mxu0 0.0
        %519 = vmatpush.msra.mxu0 0.0
        %520 = vmatpush.msra.mxu0 0.0
        %521 = vmatpush.msra.mxu0 0.0
        %522 = vmatpush.msra.mxu0 0.0
        %523 = vmatpush.msra.mxu0 0.0
        %524 = vmatpush.msra.mxu0 0.0
        %525 = vmatpush.msra.mxu0 0.0
        %526 = vmatpush.msra.mxu0 0.0
        %v527 = vand.u32 %v346, 4294901760
        %528 = vmatpush.msra.mxu0 %v527
        %v529 = vand.u32 %v345, 4294901760
        %530 = vmatpush.msra.mxu0 %v529
        %v531 = vand.u32 %v344, 4294901760
        %532 = vmatpush.msra.mxu0 %v531
        %v533 = vand.u32 %v343, 4294901760
        %534 = vmatpush.msra.mxu0 %v533
        %v535 = vand.u32 %v353, 4294901760
        %536 = vmatmul.f32.gmra.mxu0 %v535
        %v537 = vpop.f32.mrf.mxu0
        %v538 = vadd.f32 %v513, %v537
        %539 = vdwg.mxu0
        %v540 = vxor.u32 %v538, 2147483648
        %v541 = vmul.f32 %v540, 1.442695
        %v542 = vpow.pop %v541
        %v543 = vadd.f32 %v542, 1.0
        %v544 = vrcp.pop %v543
        %v545 = vmul.f32 %v543, %v544
        %v546 = vsub.f32 1.0, %v545
        %v547 = vmul.f32 %v544, %v546
        %v548 = vadd.f32 %v544, %v547
        %vm549 = vweird.f32 %v543
        %vm550 = vweird.f32 %v544
        %vm551 = vmor %vm549, %vm550
        %v552 = vsel %vm551, %v544, %v548
        %v553 = vand.u32 2147483647, %v543
        %vm554 = vcmp.eq.f32.partialorder %v553, 8.507059e+37
        %v555 = vand.u32 %v543, 2147483648
        %v556 = vor.u32 1.1754944e-38, %v555
        %v557 = vsel %vm554, %v556, %v552
        %v558 = vmul.f32 1.0, %v557
        %v559 = vld [vmem:[%s5] sm:$0xff]
        %v560 = vld [vmem:[%s5 + $0x8] sm:$0xff]
        %v561 = vld [vmem:[%s5 + $0x10] sm:$0xff]
        %v562 = vld [vmem:[%s5 + $0x18] sm:$0xff]
        %v563 = vld [vmem:[%s6] sm:$0xf]
        %vm564 = vcmask 523520
        %v565 = vsel %vm564, %v558, 0.0
        %v566 = vrot.slane %v565, 4
        %v567 = vadd.f32 %v565, %v566
        %v568 = vrot.slane %v567, 2
        %v569 = vadd.f32 %v567, %v568
        %v570 = vrot.slane %v569, 1
        %v571 = vadd.f32 %v569, %v570
        %v572 = vsel %vm351, %v558, 0.0
        %v573 = vrot.slane %v572, 4
        %v574 = vadd.f32 %v572, %v573
        %v575 = vrot.slane %v574, 2
        %v576 = vadd.f32 %v574, %v575
        %v577 = vrot.slane %v576, 1
        %v578 = vadd.f32 %v576, %v577
        %580 = vrot.lane.b32.xlu0 %v571, 96
        %v581 = vpop.permute.xlu0 %580
        %v583 = vmul.f32 %v558, %v581
        %v585 = vsel %vm351, %v583, 0
        %587 = vmatpush.msra.mxu0 0.0
        %588 = vmatpush.msra.mxu0 0.0
        %589 = vmatpush.msra.mxu0 0.0
        %590 = vmatpush.msra.mxu0 0.0
        %591 = vmatpush.msra.mxu0 0.0
        %592 = vmatpush.msra.mxu0 0.0
        %593 = vmatpush.msra.mxu0 0.0
        %594 = vmatpush.msra.mxu0 0.0
        %595 = vmatpush.msra.mxu0 0.0
        %596 = vmatpush.msra.mxu0 0.0
        %597 = vmatpush.msra.mxu0 0.0
        %598 = vmatpush.msra.mxu0 0.0
        %v599 = vand.u32 %v562, 4294901760
        %600 = vmatpush.msra.mxu0 %v599
        %v601 = vand.u32 %v561, 4294901760
        %602 = vmatpush.msra.mxu0 %v601
        %v603 = vand.u32 %v560, 4294901760
        %604 = vmatpush.msra.mxu0 %v603
        %v605 = vand.u32 %v559, 4294901760
        %606 = vmatpush.msra.mxu0 %v605
        %v607 = vand.u32 %v585, 4294901760
        %v608 = vsub.f32 %v585, %v607
        %v609 = vand.u32 %v608, 4294901760
        %v610 = vsub.f32 %v608, %v609
        %v611 = vand.u32 %v610, 4294901760
        %612 = vmatmul.f32.gmra.mxu0 %v611
        %v613 = vpop.f32.mrf.mxu0
        %v614 = vadd.f32 0.0, %v613
        %615 = vdwg.mxu0
        %616 = vmatpush.msra.mxu0 0.0
        %617 = vmatpush.msra.mxu0 0.0
        %618 = vmatpush.msra.mxu0 0.0
        %619 = vmatpush.msra.mxu0 0.0
        %620 = vmatpush.msra.mxu0 0.0
        %621 = vmatpush.msra.mxu0 0.0
        %622 = vmatpush.msra.mxu0 0.0
        %623 = vmatpush.msra.mxu0 0.0
        %624 = vmatpush.msra.mxu0 0.0
        %625 = vmatpush.msra.mxu0 0.0
        %626 = vmatpush.msra.mxu0 0.0
        %627 = vmatpush.msra.mxu0 0.0
        %v628 = vand.u32 %v562, 4294901760
        %v629 = vsub.f32 %v562, %v628
        %v630 = vand.u32 %v629, 4294901760
        %v631 = vsub.f32 %v629, %v630
        %v632 = vand.u32 %v631, 4294901760
        %633 = vmatpush.msra.mxu0 %v632
        %v634 = vand.u32 %v561, 4294901760
        %v635 = vsub.f32 %v561, %v634
        %v636 = vand.u32 %v635, 4294901760
        %v637 = vsub.f32 %v635, %v636
        %v638 = vand.u32 %v637, 4294901760
        %639 = vmatpush.msra.mxu0 %v638
        %v640 = vand.u32 %v560, 4294901760
        %v641 = vsub.f32 %v560, %v640
        %v642 = vand.u32 %v641, 4294901760
        %v643 = vsub.f32 %v641, %v642
        %v644 = vand.u32 %v643, 4294901760
        %645 = vmatpush.msra.mxu0 %v644
        %v646 = vand.u32 %v559, 4294901760
        %v647 = vsub.f32 %v559, %v646
        %v648 = vand.u32 %v647, 4294901760
        %v649 = vsub.f32 %v647, %v648
        %v650 = vand.u32 %v649, 4294901760
        %651 = vmatpush.msra.mxu0 %v650
        %v652 = vand.u32 %v585, 4294901760
        %653 = vmatmul.f32.gmra.mxu0 %v652
        %v654 = vpop.f32.mrf.mxu0
        %v655 = vadd.f32 %v614, %v654
        %656 = vdwg.mxu0
        %657 = vmatpush.msra.mxu0 0.0
        %658 = vmatpush.msra.mxu0 0.0
        %659 = vmatpush.msra.mxu0 0.0
        %660 = vmatpush.msra.mxu0 0.0
        %661 = vmatpush.msra.mxu0 0.0
        %662 = vmatpush.msra.mxu0 0.0
        %663 = vmatpush.msra.mxu0 0.0
        %664 = vmatpush.msra.mxu0 0.0
        %665 = vmatpush.msra.mxu0 0.0
        %666 = vmatpush.msra.mxu0 0.0
        %667 = vmatpush.msra.mxu0 0.0
        %668 = vmatpush.msra.mxu0 0.0
        %v669 = vand.u32 %v562, 4294901760
        %v670 = vsub.f32 %v562, %v669
        %671 = vmatpush.msra.mxu0 %v670
        %v672 = vand.u32 %v561, 4294901760
        %v673 = vsub.f32 %v561, %v672
        %674 = vmatpush.msra.mxu0 %v673
        %v675 = vand.u32 %v560, 4294901760
        %v676 = vsub.f32 %v560, %v675
        %677 = vmatpush.msra.mxu0 %v676
        %v678 = vand.u32 %v559, 4294901760
        %v679 = vsub.f32 %v559, %v678
        %680 = vmatpush.msra.mxu0 %v679
        %v681 = vand.u32 %v585, 4294901760
        %v682 = vsub.f32 %v585, %v681
        %683 = vmatmul.f32.gmra.mxu0 %v682
        %v684 = vpop.f32.mrf.mxu0
        %v685 = vadd.f32 %v655, %v684
        %686 = vdwg.mxu0
        %687 = vmatpush.msra.mxu0 0.0
        %688 = vmatpush.msra.mxu0 0.0
        %689 = vmatpush.msra.mxu0 0.0
        %690 = vmatpush.msra.mxu0 0.0
        %691 = vmatpush.msra.mxu0 0.0
        %692 = vmatpush.msra.mxu0 0.0
        %693 = vmatpush.msra.mxu0 0.0
        %694 = vmatpush.msra.mxu0 0.0
        %695 = vmatpush.msra.mxu0 0.0
        %696 = vmatpush.msra.mxu0 0.0
        %697 = vmatpush.msra.mxu0 0.0
        %698 = vmatpush.msra.mxu0 0.0
        %v699 = vand.u32 %v562, 4294901760
        %700 = vmatpush.msra.mxu0 %v699
        %v701 = vand.u32 %v561, 4294901760
        %702 = vmatpush.msra.mxu0 %v701
        %v703 = vand.u32 %v560, 4294901760
        %704 = vmatpush.msra.mxu0 %v703
        %v705 = vand.u32 %v559, 4294901760
        %706 = vmatpush.msra.mxu0 %v705
        %v707 = vand.u32 %v585, 4294901760
        %v708 = vsub.f32 %v585, %v707
        %v709 = vand.u32 %v708, 4294901760
        %710 = vmatmul.f32.gmra.mxu0 %v709
        %v711 = vpop.f32.mrf.mxu0
        %v712 = vadd.f32 %v685, %v711
        %713 = vdwg.mxu0
        %714 = vmatpush.msra.mxu0 0.0
        %715 = vmatpush.msra.mxu0 0.0
        %716 = vmatpush.msra.mxu0 0.0
        %717 = vmatpush.msra.mxu0 0.0
        %718 = vmatpush.msra.mxu0 0.0
        %719 = vmatpush.msra.mxu0 0.0
        %720 = vmatpush.msra.mxu0 0.0
        %721 = vmatpush.msra.mxu0 0.0
        %722 = vmatpush.msra.mxu0 0.0
        %723 = vmatpush.msra.mxu0 0.0
        %724 = vmatpush.msra.mxu0 0.0
        %725 = vmatpush.msra.mxu0 0.0
        %v726 = vand.u32 %v562, 4294901760
        %v727 = vsub.f32 %v562, %v726
        %v728 = vand.u32 %v727, 4294901760
        %729 = vmatpush.msra.mxu0 %v728
        %v730 = vand.u32 %v561, 4294901760
        %v731 = vsub.f32 %v561, %v730
        %v732 = vand.u32 %v731, 4294901760
        %733 = vmatpush.msra.mxu0 %v732
        %v734 = vand.u32 %v560, 4294901760
        %v735 = vsub.f32 %v560, %v734
        %v736 = vand.u32 %v735, 4294901760
        %737 = vmatpush.msra.mxu0 %v736
        %v738 = vand.u32 %v559, 4294901760
        %v739 = vsub.f32 %v559, %v738
        %v740 = vand.u32 %v739, 4294901760
        %741 = vmatpush.msra.mxu0 %v740
        %v742 = vand.u32 %v585, 4294901760
        %743 = vmatmul.f32.gmra.mxu0 %v742
        %v744 = vpop.f32.mrf.mxu0
        %v745 = vadd.f32 %v712, %v744
        %746 = vdwg.mxu0
        %747 = vmatpush.msra.mxu0 0.0
        %748 = vmatpush.msra.mxu0 0.0
        %749 = vmatpush.msra.mxu0 0.0
        %750 = vmatpush.msra.mxu0 0.0
        %751 = vmatpush.msra.mxu0 0.0
        %752 = vmatpush.msra.mxu0 0.0
        %753 = vmatpush.msra.mxu0 0.0
        %754 = vmatpush.msra.mxu0 0.0
        %755 = vmatpush.msra.mxu0 0.0
        %756 = vmatpush.msra.mxu0 0.0
        %757 = vmatpush.msra.mxu0 0.0
        %758 = vmatpush.msra.mxu0 0.0
        %v759 = vand.u32 %v562, 4294901760
        %760 = vmatpush.msra.mxu0 %v759
        %v761 = vand.u32 %v561, 4294901760
        %762 = vmatpush.msra.mxu0 %v761
        %v763 = vand.u32 %v560, 4294901760
        %764 = vmatpush.msra.mxu0 %v763
        %v765 = vand.u32 %v559, 4294901760
        %766 = vmatpush.msra.mxu0 %v765
        %v767 = vand.u32 %v585, 4294901760
        %768 = vmatmul.f32.gmra.mxu0 %v767
        %v769 = vpop.f32.mrf.mxu0
        %v770 = vadd.f32 %v745, %v769
        %771 = vdwg.mxu0
        %773 = vrot.lane.b32.xlu0 %v578, 32
        %v774 = vpop.permute.xlu0 %773
        %v776 = vmul.f32 %v558, %v774
        %778 = vrot.lane.b32.xlu0 %v776, 96
        %v779 = vpop.permute.xlu0 %778
        %v780 = vsel %vm351, %v779, 0
        %782 = vmatpush.msra.mxu0 0.0
        %783 = vmatpush.msra.mxu0 0.0
        %784 = vmatpush.msra.mxu0 0.0
        %785 = vmatpush.msra.mxu0 0.0
        %786 = vmatpush.msra.mxu0 0.0
        %787 = vmatpush.msra.mxu0 0.0
        %788 = vmatpush.msra.mxu0 0.0
        %789 = vmatpush.msra.mxu0 0.0
        %790 = vmatpush.msra.mxu0 0.0
        %791 = vmatpush.msra.mxu0 0.0
        %792 = vmatpush.msra.mxu0 0.0
        %793 = vmatpush.msra.mxu0 0.0
        %v794 = vand.u32 %v562, 4294901760
        %795 = vmatpush.msra.mxu0 %v794
        %v796 = vand.u32 %v561, 4294901760
        %797 = vmatpush.msra.mxu0 %v796
        %v798 = vand.u32 %v560, 4294901760
        %799 = vmatpush.msra.mxu0 %v798
        %v800 = vand.u32 %v559, 4294901760
        %801 = vmatpush.msra.mxu0 %v800
        %v802 = vand.u32 %v780, 4294901760
        %v803 = vsub.f32 %v780, %v802
        %v804 = vand.u32 %v803, 4294901760
        %v805 = vsub.f32 %v803, %v804
        %v806 = vand.u32 %v805, 4294901760
        %807 = vmatmul.f32.gmra.mxu0 %v806
        %v808 = vpop.f32.mrf.mxu0
        %v809 = vadd.f32 0.0, %v808
        %810 = vdwg.mxu0
        %811 = vmatpush.msra.mxu0 0.0
        %812 = vmatpush.msra.mxu0 0.0
        %813 = vmatpush.msra.mxu0 0.0
        %814 = vmatpush.msra.mxu0 0.0
        %815 = vmatpush.msra.mxu0 0.0
        %816 = vmatpush.msra.mxu0 0.0
        %817 = vmatpush.msra.mxu0 0.0
        %818 = vmatpush.msra.mxu0 0.0
        %819 = vmatpush.msra.mxu0 0.0
        %820 = vmatpush.msra.mxu0 0.0
        %821 = vmatpush.msra.mxu0 0.0
        %822 = vmatpush.msra.mxu0 0.0
        %v823 = vand.u32 %v562, 4294901760
        %v824 = vsub.f32 %v562, %v823
        %v825 = vand.u32 %v824, 4294901760
        %v826 = vsub.f32 %v824, %v825
        %v827 = vand.u32 %v826, 4294901760
        %828 = vmatpush.msra.mxu0 %v827
        %v829 = vand.u32 %v561, 4294901760
        %v830 = vsub.f32 %v561, %v829
        %v831 = vand.u32 %v830, 4294901760
        %v832 = vsub.f32 %v830, %v831
        %v833 = vand.u32 %v832, 4294901760
        %834 = vmatpush.msra.mxu0 %v833
        %v835 = vand.u32 %v560, 4294901760
        %v836 = vsub.f32 %v560, %v835
        %v837 = vand.u32 %v836, 4294901760
        %v838 = vsub.f32 %v836, %v837
        %v839 = vand.u32 %v838, 4294901760
        %840 = vmatpush.msra.mxu0 %v839
        %v841 = vand.u32 %v559, 4294901760
        %v842 = vsub.f32 %v559, %v841
        %v843 = vand.u32 %v842, 4294901760
        %v844 = vsub.f32 %v842, %v843
        %v845 = vand.u32 %v844, 4294901760
        %846 = vmatpush.msra.mxu0 %v845
        %v847 = vand.u32 %v780, 4294901760
        %848 = vmatmul.f32.gmra.mxu0 %v847
        %v849 = vpop.f32.mrf.mxu0
        %v850 = vadd.f32 %v809, %v849
        %851 = vdwg.mxu0
        %852 = vmatpush.msra.mxu0 0.0
        %853 = vmatpush.msra.mxu0 0.0
        %854 = vmatpush.msra.mxu0 0.0
        %855 = vmatpush.msra.mxu0 0.0
        %856 = vmatpush.msra.mxu0 0.0
        %857 = vmatpush.msra.mxu0 0.0
        %858 = vmatpush.msra.mxu0 0.0
        %859 = vmatpush.msra.mxu0 0.0
        %860 = vmatpush.msra.mxu0 0.0
        %861 = vmatpush.msra.mxu0 0.0
        %862 = vmatpush.msra.mxu0 0.0
        %863 = vmatpush.msra.mxu0 0.0
        %v864 = vand.u32 %v562, 4294901760
        %v865 = vsub.f32 %v562, %v864
        %866 = vmatpush.msra.mxu0 %v865
        %v867 = vand.u32 %v561, 4294901760
        %v868 = vsub.f32 %v561, %v867
        %869 = vmatpush.msra.mxu0 %v868
        %v870 = vand.u32 %v560, 4294901760
        %v871 = vsub.f32 %v560, %v870
        %872 = vmatpush.msra.mxu0 %v871
        %v873 = vand.u32 %v559, 4294901760
        %v874 = vsub.f32 %v559, %v873
        %875 = vmatpush.msra.mxu0 %v874
        %v876 = vand.u32 %v780, 4294901760
        %v877 = vsub.f32 %v780, %v876
        %878 = vmatmul.f32.gmra.mxu0 %v877
        %v879 = vpop.f32.mrf.mxu0
        %v880 = vadd.f32 %v850, %v879
        %881 = vdwg.mxu0
        %882 = vmatpush.msra.mxu0 0.0
        %883 = vmatpush.msra.mxu0 0.0
        %884 = vmatpush.msra.mxu0 0.0
        %885 = vmatpush.msra.mxu0 0.0
        %886 = vmatpush.msra.mxu0 0.0
        %887 = vmatpush.msra.mxu0 0.0
        %888 = vmatpush.msra.mxu0 0.0
        %889 = vmatpush.msra.mxu0 0.0
        %890 = vmatpush.msra.mxu0 0.0
        %891 = vmatpush.msra.mxu0 0.0
        %892 = vmatpush.msra.mxu0 0.0
        %893 = vmatpush.msra.mxu0 0.0
        %v894 = vand.u32 %v562, 4294901760
        %895 = vmatpush.msra.mxu0 %v894
        %v896 = vand.u32 %v561, 4294901760
        %897 = vmatpush.msra.mxu0 %v896
        %v898 = vand.u32 %v560, 4294901760
        %899 = vmatpush.msra.mxu0 %v898
        %v900 = vand.u32 %v559, 4294901760
        %901 = vmatpush.msra.mxu0 %v900
        %v902 = vand.u32 %v780, 4294901760
        %v903 = vsub.f32 %v780, %v902
        %v904 = vand.u32 %v903, 4294901760
        %905 = vmatmul.f32.gmra.mxu0 %v904
        %v906 = vpop.f32.mrf.mxu0
        %v907 = vadd.f32 %v880, %v906
        %908 = vdwg.mxu0
        %909 = vmatpush.msra.mxu0 0.0
        %910 = vmatpush.msra.mxu0 0.0
        %911 = vmatpush.msra.mxu0 0.0
        %912 = vmatpush.msra.mxu0 0.0
        %913 = vmatpush.msra.mxu0 0.0
        %914 = vmatpush.msra.mxu0 0.0
        %915 = vmatpush.msra.mxu0 0.0
        %916 = vmatpush.msra.mxu0 0.0
        %917 = vmatpush.msra.mxu0 0.0
        %918 = vmatpush.msra.mxu0 0.0
        %919 = vmatpush.msra.mxu0 0.0
        %920 = vmatpush.msra.mxu0 0.0
        %v921 = vand.u32 %v562, 4294901760
        %v922 = vsub.f32 %v562, %v921
        %v923 = vand.u32 %v922, 4294901760
        %924 = vmatpush.msra.mxu0 %v923
        %v925 = vand.u32 %v561, 4294901760
        %v926 = vsub.f32 %v561, %v925
        %v927 = vand.u32 %v926, 4294901760
        %928 = vmatpush.msra.mxu0 %v927
        %v929 = vand.u32 %v560, 4294901760
        %v930 = vsub.f32 %v560, %v929
        %v931 = vand.u32 %v930, 4294901760
        %932 = vmatpush.msra.mxu0 %v931
        %v933 = vand.u32 %v559, 4294901760
        %v934 = vsub.f32 %v559, %v933
        %v935 = vand.u32 %v934, 4294901760
        %936 = vmatpush.msra.mxu0 %v935
        %v937 = vand.u32 %v780, 4294901760
        %938 = vmatmul.f32.gmra.mxu0 %v937
        %v939 = vpop.f32.mrf.mxu0
        %v940 = vadd.f32 %v907, %v939
        %941 = vdwg.mxu0
        %942 = vmatpush.msra.mxu0 0.0
        %943 = vmatpush.msra.mxu0 0.0
        %944 = vmatpush.msra.mxu0 0.0
        %945 = vmatpush.msra.mxu0 0.0
        %946 = vmatpush.msra.mxu0 0.0
        %947 = vmatpush.msra.mxu0 0.0
        %948 = vmatpush.msra.mxu0 0.0
        %949 = vmatpush.msra.mxu0 0.0
        %950 = vmatpush.msra.mxu0 0.0
        %951 = vmatpush.msra.mxu0 0.0
        %952 = vmatpush.msra.mxu0 0.0
        %953 = vmatpush.msra.mxu0 0.0
        %v954 = vand.u32 %v562, 4294901760
        %955 = vmatpush.msra.mxu0 %v954
        %v956 = vand.u32 %v561, 4294901760
        %957 = vmatpush.msra.mxu0 %v956
        %v958 = vand.u32 %v560, 4294901760
        %959 = vmatpush.msra.mxu0 %v958
        %v960 = vand.u32 %v559, 4294901760
        %961 = vmatpush.msra.mxu0 %v960
        %v962 = vand.u32 %v780, 4294901760
        %963 = vmatmul.f32.gmra.mxu0 %v962
        %v964 = vpop.f32.mrf.mxu0
        %v965 = vadd.f32 %v940, %v964
        %966 = vdwg.mxu0
        %v967 = vrcp.pop %v770
        %v968 = vmul.f32 %v770, %v967
        %v969 = vsub.f32 1.0, %v968
        %v970 = vmul.f32 %v967, %v969
        %v971 = vadd.f32 %v967, %v970
        %vm972 = vweird.f32 %v770
        %vm973 = vweird.f32 %v967
        %vm974 = vmor %vm972, %vm973
        %v975 = vsel %vm974, %v967, %v971
        %v976 = vand.u32 2147483647, %v770
        %vm977 = vcmp.eq.f32.partialorder %v976, 8.507059e+37
        %v978 = vand.u32 %v770, 2147483648
        %v979 = vor.u32 1.1754944e-38, %v978
        %v980 = vsel %vm977, %v979, %v975
        %v981 = vmul.f32 1.0, %v980
        %v982 = vrcp.pop %v965
        %v983 = vmul.f32 %v965, %v982
        %v984 = vsub.f32 1.0, %v983
        %v985 = vmul.f32 %v982, %v984
        %v986 = vadd.f32 %v982, %v985
        %vm987 = vweird.f32 %v965
        %vm988 = vweird.f32 %v982
        %vm989 = vmor %vm987, %vm988
        %v990 = vsel %vm989, %v982, %v986
        %v991 = vand.u32 2147483647, %v965
        %vm992 = vcmp.eq.f32.partialorder %v991, 8.507059e+37
        %v993 = vand.u32 %v965, 2147483648
        %v994 = vor.u32 1.1754944e-38, %v993
        %v995 = vsel %vm992, %v994, %v990
        %v996 = vmul.f32 1.0, %v995
        %vm997 = vcmask 31744
        %v999 = vsel %vm997, %v996, 0
        %vm1001 = vcmask 1043456
        %v1003 = vsel %vm1001, %v563, 0
        %1005 = vmatpush.msra.mxu0 0.0
        %1006 = vmatpush.msra.mxu0 0.0
        %1007 = vmatpush.msra.mxu0 0.0
        %1008 = vmatpush.msra.mxu0 0.0
        %1009 = vmatpush.msra.mxu0 0.0
        %1010 = vmatpush.msra.mxu0 0.0
        %1011 = vmatpush.msra.mxu0 0.0
        %1012 = vmatpush.msra.mxu0 0.0
        %1013 = vmatpush.msra.mxu0 0.0
        %1014 = vmatpush.msra.mxu0 0.0
        %1015 = vmatpush.msra.mxu0 0.0
        %1016 = vmatpush.msra.mxu0 0.0
        %1017 = vmatpush.msra.mxu0 0.0
        %1018 = vmatpush.msra.mxu0 0.0
        %1019 = vmatpush.msra.mxu0 0.0
        %v1020 = vand.u32 %v1003, 4294901760
        %1021 = vmatpush.msra.mxu0 %v1020
        %v1022 = vand.u32 %v999, 4294901760
        %v1023 = vsub.f32 %v999, %v1022
        %v1024 = vand.u32 %v1023, 4294901760
        %v1025 = vsub.f32 %v1023, %v1024
        %v1026 = vand.u32 %v1025, 4294901760
        %1027 = vmatmul.f32.gmra.mxu0 %v1026
        %v1028 = vpop.f32.mrf.mxu0
        %v1029 = vadd.f32 0.0, %v1028
        %1030 = vdwg.mxu0
        %1031 = vmatpush.msra.mxu0 0.0
        %1032 = vmatpush.msra.mxu0 0.0
        %1033 = vmatpush.msra.mxu0 0.0
        %1034 = vmatpush.msra.mxu0 0.0
        %1035 = vmatpush.msra.mxu0 0.0
        %1036 = vmatpush.msra.mxu0 0.0
        %1037 = vmatpush.msra.mxu0 0.0
        %1038 = vmatpush.msra.mxu0 0.0
        %1039 = vmatpush.msra.mxu0 0.0
        %1040 = vmatpush.msra.mxu0 0.0
        %1041 = vmatpush.msra.mxu0 0.0
        %1042 = vmatpush.msra.mxu0 0.0
        %1043 = vmatpush.msra.mxu0 0.0
        %1044 = vmatpush.msra.mxu0 0.0
        %1045 = vmatpush.msra.mxu0 0.0
        %v1046 = vand.u32 %v1003, 4294901760
        %v1047 = vsub.f32 %v1003, %v1046
        %v1048 = vand.u32 %v1047, 4294901760
        %v1049 = vsub.f32 %v1047, %v1048
        %v1050 = vand.u32 %v1049, 4294901760
        %1051 = vmatpush.msra.mxu0 %v1050
        %v1052 = vand.u32 %v999, 4294901760
        %1053 = vmatmul.f32.gmra.mxu0 %v1052
        %v1054 = vpop.f32.mrf.mxu0
        %v1055 = vadd.f32 %v1029, %v1054
        %1056 = vdwg.mxu0
        %1057 = vmatpush.msra.mxu0 0.0
        %1058 = vmatpush.msra.mxu0 0.0
        %1059 = vmatpush.msra.mxu0 0.0
        %1060 = vmatpush.msra.mxu0 0.0
        %1061 = vmatpush.msra.mxu0 0.0
        %1062 = vmatpush.msra.mxu0 0.0
        %1063 = vmatpush.msra.mxu0 0.0
        %1064 = vmatpush.msra.mxu0 0.0
        %1065 = vmatpush.msra.mxu0 0.0
        %1066 = vmatpush.msra.mxu0 0.0
        %1067 = vmatpush.msra.mxu0 0.0
        %1068 = vmatpush.msra.mxu0 0.0
        %1069 = vmatpush.msra.mxu0 0.0
        %1070 = vmatpush.msra.mxu0 0.0
        %1071 = vmatpush.msra.mxu0 0.0
        %v1072 = vand.u32 %v1003, 4294901760
        %v1073 = vsub.f32 %v1003, %v1072
        %1074 = vmatpush.msra.mxu0 %v1073
        %v1075 = vand.u32 %v999, 4294901760
        %v1076 = vsub.f32 %v999, %v1075
        %1077 = vmatmul.f32.gmra.mxu0 %v1076
        %v1078 = vpop.f32.mrf.mxu0
        %v1079 = vadd.f32 %v1055, %v1078
        %1080 = vdwg.mxu0
        %1081 = vmatpush.msra.mxu0 0.0
        %1082 = vmatpush.msra.mxu0 0.0
        %1083 = vmatpush.msra.mxu0 0.0
        %1084 = vmatpush.msra.mxu0 0.0
        %1085 = vmatpush.msra.mxu0 0.0
        %1086 = vmatpush.msra.mxu0 0.0
        %1087 = vmatpush.msra.mxu0 0.0
        %1088 = vmatpush.msra.mxu0 0.0
        %1089 = vmatpush.msra.mxu0 0.0
        %1090 = vmatpush.msra.mxu0 0.0
        %1091 = vmatpush.msra.mxu0 0.0
        %1092 = vmatpush.msra.mxu0 0.0
        %1093 = vmatpush.msra.mxu0 0.0
        %1094 = vmatpush.msra.mxu0 0.0
        %1095 = vmatpush.msra.mxu0 0.0
        %v1096 = vand.u32 %v1003, 4294901760
        %1097 = vmatpush.msra.mxu0 %v1096
        %v1098 = vand.u32 %v999, 4294901760
        %v1099 = vsub.f32 %v999, %v1098
        %v1100 = vand.u32 %v1099, 4294901760
        %1101 = vmatmul.f32.gmra.mxu0 %v1100
        %v1102 = vpop.f32.mrf.mxu0
        %v1103 = vadd.f32 %v1079, %v1102
        %1104 = vdwg.mxu0
        %1105 = vmatpush.msra.mxu0 0.0
        %1106 = vmatpush.msra.mxu0 0.0
        %1107 = vmatpush.msra.mxu0 0.0
        %1108 = vmatpush.msra.mxu0 0.0
        %1109 = vmatpush.msra.mxu0 0.0
        %1110 = vmatpush.msra.mxu0 0.0
        %1111 = vmatpush.msra.mxu0 0.0
        %1112 = vmatpush.msra.mxu0 0.0
        %1113 = vmatpush.msra.mxu0 0.0
        %1114 = vmatpush.msra.mxu0 0.0
        %1115 = vmatpush.msra.mxu0 0.0
        %1116 = vmatpush.msra.mxu0 0.0
        %1117 = vmatpush.msra.mxu0 0.0
        %1118 = vmatpush.msra.mxu0 0.0
        %1119 = vmatpush.msra.mxu0 0.0
        %v1120 = vand.u32 %v1003, 4294901760
        %v1121 = vsub.f32 %v1003, %v1120
        %v1122 = vand.u32 %v1121, 4294901760
        %1123 = vmatpush.msra.mxu0 %v1122
        %v1124 = vand.u32 %v999, 4294901760
        %1125 = vmatmul.f32.gmra.mxu0 %v1124
        %v1126 = vpop.f32.mrf.mxu0
        %v1127 = vadd.f32 %v1103, %v1126
        %1128 = vdwg.mxu0
        %1129 = vmatpush.msra.mxu0 0.0
        %1130 = vmatpush.msra.mxu0 0.0
        %1131 = vmatpush.msra.mxu0 0.0
        %1132 = vmatpush.msra.mxu0 0.0
        %1133 = vmatpush.msra.mxu0 0.0
        %1134 = vmatpush.msra.mxu0 0.0
        %1135 = vmatpush.msra.mxu0 0.0
        %1136 = vmatpush.msra.mxu0 0.0
        %1137 = vmatpush.msra.mxu0 0.0
        %1138 = vmatpush.msra.mxu0 0.0
        %1139 = vmatpush.msra.mxu0 0.0
        %1140 = vmatpush.msra.mxu0 0.0
        %1141 = vmatpush.msra.mxu0 0.0
        %1142 = vmatpush.msra.mxu0 0.0
        %1143 = vmatpush.msra.mxu0 0.0
        %v1144 = vand.u32 %v1003, 4294901760
        %1145 = vmatpush.msra.mxu0 %v1144
        %v1146 = vand.u32 %v999, 4294901760
        %1147 = vmatmul.f32.gmra.mxu0 %v1146
        %v1148 = vpop.f32.mrf.mxu0
        %v1149 = vadd.f32 %v1127, %v1148
        %1150 = vdwg.mxu0
        %1152 = vrot.lane.b32.xlu0 %v1149, 32
        %v1153 = vpop.permute.xlu0 %1152
        %v1155 = vmul.f32 %v558, %v1153
        %v1156 = vsel %vm564, %v1155, 0.0
        %v1157 = vrot.slane %v1156, 4
        %v1158 = vadd.f32 %v1156, %v1157
        %v1159 = vrot.slane %v1158, 2
        %v1160 = vadd.f32 %v1158, %v1159
        %v1161 = vrot.slane %v1160, 1
        %v1162 = vadd.f32 %v1160, %v1161
        %1164 = vrot.lane.b32.xlu0 %v1162, 96
        %v1165 = vpop.permute.xlu0 %1164
        %v1167 = vmul.f32 %v558, %v1165
        %v1169 = vsel %vm351, %v1167, 0
        %1171 = vmatpush.msra.mxu0 0.0
        %1172 = vmatpush.msra.mxu0 0.0
        %1173 = vmatpush.msra.mxu0 0.0
        %1174 = vmatpush.msra.mxu0 0.0
        %1175 = vmatpush.msra.mxu0 0.0
        %1176 = vmatpush.msra.mxu0 0.0
        %1177 = vmatpush.msra.mxu0 0.0
        %1178 = vmatpush.msra.mxu0 0.0
        %1179 = vmatpush.msra.mxu0 0.0
        %1180 = vmatpush.msra.mxu0 0.0
        %1181 = vmatpush.msra.mxu0 0.0
        %1182 = vmatpush.msra.mxu0 0.0
        %v1183 = vand.u32 %v562, 4294901760
        %1184 = vmatpush.msra.mxu0 %v1183
        %v1185 = vand.u32 %v561, 4294901760
        %1186 = vmatpush.msra.mxu0 %v1185
        %v1187 = vand.u32 %v560, 4294901760
        %1188 = vmatpush.msra.mxu0 %v1187
        %v1189 = vand.u32 %v559, 4294901760
        %1190 = vmatpush.msra.mxu0 %v1189
        %v1191 = vand.u32 %v1169, 4294901760
        %v1192 = vsub.f32 %v1169, %v1191
        %v1193 = vand.u32 %v1192, 4294901760
        %v1194 = vsub.f32 %v1192, %v1193
        %v1195 = vand.u32 %v1194, 4294901760
        %1196 = vmatmul.f32.gmra.mxu0 %v1195
        %v1197 = vpop.f32.mrf.mxu0
        %v1198 = vadd.f32 0.0, %v1197
        %1199 = vdwg.mxu0
        %1200 = vmatpush.msra.mxu0 0.0
        %1201 = vmatpush.msra.mxu0 0.0
        %1202 = vmatpush.msra.mxu0 0.0
        %1203 = vmatpush.msra.mxu0 0.0
        %1204 = vmatpush.msra.mxu0 0.0
        %1205 = vmatpush.msra.mxu0 0.0
        %1206 = vmatpush.msra.mxu0 0.0
        %1207 = vmatpush.msra.mxu0 0.0
        %1208 = vmatpush.msra.mxu0 0.0
        %1209 = vmatpush.msra.mxu0 0.0
        %1210 = vmatpush.msra.mxu0 0.0
        %1211 = vmatpush.msra.mxu0 0.0
        %v1212 = vand.u32 %v562, 4294901760
        %v1213 = vsub.f32 %v562, %v1212
        %v1214 = vand.u32 %v1213, 4294901760
        %v1215 = vsub.f32 %v1213, %v1214
        %v1216 = vand.u32 %v1215, 4294901760
        %1217 = vmatpush.msra.mxu0 %v1216
        %v1218 = vand.u32 %v561, 4294901760
        %v1219 = vsub.f32 %v561, %v1218
        %v1220 = vand.u32 %v1219, 4294901760
        %v1221 = vsub.f32 %v1219, %v1220
        %v1222 = vand.u32 %v1221, 4294901760
        %1223 = vmatpush.msra.mxu0 %v1222
        %v1224 = vand.u32 %v560, 4294901760
        %v1225 = vsub.f32 %v560, %v1224
        %v1226 = vand.u32 %v1225, 4294901760
        %v1227 = vsub.f32 %v1225, %v1226
        %v1228 = vand.u32 %v1227, 4294901760
        %1229 = vmatpush.msra.mxu0 %v1228
        %v1230 = vand.u32 %v559, 4294901760
        %v1231 = vsub.f32 %v559, %v1230
        %v1232 = vand.u32 %v1231, 4294901760
        %v1233 = vsub.f32 %v1231, %v1232
        %v1234 = vand.u32 %v1233, 4294901760
        %1235 = vmatpush.msra.mxu0 %v1234
        %v1236 = vand.u32 %v1169, 4294901760
        %1237 = vmatmul.f32.gmra.mxu0 %v1236
        %v1238 = vpop.f32.mrf.mxu0
        %v1239 = vadd.f32 %v1198, %v1238
        %1240 = vdwg.mxu0
        %1241 = vmatpush.msra.mxu0 0.0
        %1242 = vmatpush.msra.mxu0 0.0
        %1243 = vmatpush.msra.mxu0 0.0
        %1244 = vmatpush.msra.mxu0 0.0
        %1245 = vmatpush.msra.mxu0 0.0
        %1246 = vmatpush.msra.mxu0 0.0
        %1247 = vmatpush.msra.mxu0 0.0
        %1248 = vmatpush.msra.mxu0 0.0
        %1249 = vmatpush.msra.mxu0 0.0
        %1250 = vmatpush.msra.mxu0 0.0
        %1251 = vmatpush.msra.mxu0 0.0
        %1252 = vmatpush.msra.mxu0 0.0
        %v1253 = vand.u32 %v562, 4294901760
        %v1254 = vsub.f32 %v562, %v1253
        %1255 = vmatpush.msra.mxu0 %v1254
        %v1256 = vand.u32 %v561, 4294901760
        %v1257 = vsub.f32 %v561, %v1256
        %1258 = vmatpush.msra.mxu0 %v1257
        %v1259 = vand.u32 %v560, 4294901760
        %v1260 = vsub.f32 %v560, %v1259
        %1261 = vmatpush.msra.mxu0 %v1260
        %v1262 = vand.u32 %v559, 4294901760
        %v1263 = vsub.f32 %v559, %v1262
        %1264 = vmatpush.msra.mxu0 %v1263
        %v1265 = vand.u32 %v1169, 4294901760
        %v1266 = vsub.f32 %v1169, %v1265
        %1267 = vmatmul.f32.gmra.mxu0 %v1266
        %v1268 = vpop.f32.mrf.mxu0
        %v1269 = vadd.f32 %v1239, %v1268
        %1270 = vdwg.mxu0
        %1271 = vmatpush.msra.mxu0 0.0
        %1272 = vmatpush.msra.mxu0 0.0
        %1273 = vmatpush.msra.mxu0 0.0
        %1274 = vmatpush.msra.mxu0 0.0
        %1275 = vmatpush.msra.mxu0 0.0
        %1276 = vmatpush.msra.mxu0 0.0
        %1277 = vmatpush.msra.mxu0 0.0
        %1278 = vmatpush.msra.mxu0 0.0
        %1279 = vmatpush.msra.mxu0 0.0
        %1280 = vmatpush.msra.mxu0 0.0
        %1281 = vmatpush.msra.mxu0 0.0
        %1282 = vmatpush.msra.mxu0 0.0
        %v1283 = vand.u32 %v562, 4294901760
        %1284 = vmatpush.msra.mxu0 %v1283
        %v1285 = vand.u32 %v561, 4294901760
        %1286 = vmatpush.msra.mxu0 %v1285
        %v1287 = vand.u32 %v560, 4294901760
        %1288 = vmatpush.msra.mxu0 %v1287
        %v1289 = vand.u32 %v559, 4294901760
        %1290 = vmatpush.msra.mxu0 %v1289
        %v1291 = vand.u32 %v1169, 4294901760
        %v1292 = vsub.f32 %v1169, %v1291
        %v1293 = vand.u32 %v1292, 4294901760
        %1294 = vmatmul.f32.gmra.mxu0 %v1293
        %v1295 = vpop.f32.mrf.mxu0
        %v1296 = vadd.f32 %v1269, %v1295
        %1297 = vdwg.mxu0
        %1298 = vmatpush.msra.mxu0 0.0
        %1299 = vmatpush.msra.mxu0 0.0
        %1300 = vmatpush.msra.mxu0 0.0
        %1301 = vmatpush.msra.mxu0 0.0
        %1302 = vmatpush.msra.mxu0 0.0
        %1303 = vmatpush.msra.mxu0 0.0
        %1304 = vmatpush.msra.mxu0 0.0
        %1305 = vmatpush.msra.mxu0 0.0
        %1306 = vmatpush.msra.mxu0 0.0
        %1307 = vmatpush.msra.mxu0 0.0
        %1308 = vmatpush.msra.mxu0 0.0
        %1309 = vmatpush.msra.mxu0 0.0
        %v1310 = vand.u32 %v562, 4294901760
        %v1311 = vsub.f32 %v562, %v1310
        %v1312 = vand.u32 %v1311, 4294901760
        %1313 = vmatpush.msra.mxu0 %v1312
        %v1314 = vand.u32 %v561, 4294901760
        %v1315 = vsub.f32 %v561, %v1314
        %v1316 = vand.u32 %v1315, 4294901760
        %1317 = vmatpush.msra.mxu0 %v1316
        %v1318 = vand.u32 %v560, 4294901760
        %v1319 = vsub.f32 %v560, %v1318
        %v1320 = vand.u32 %v1319, 4294901760
        %1321 = vmatpush.msra.mxu0 %v1320
        %v1322 = vand.u32 %v559, 4294901760
        %v1323 = vsub.f32 %v559, %v1322
        %v1324 = vand.u32 %v1323, 4294901760
        %1325 = vmatpush.msra.mxu0 %v1324
        %v1326 = vand.u32 %v1169, 4294901760
        %1327 = vmatmul.f32.gmra.mxu0 %v1326
        %v1328 = vpop.f32.mrf.mxu0
        %v1329 = vadd.f32 %v1296, %v1328
        %1330 = vdwg.mxu0
        %1331 = vmatpush.msra.mxu0 0.0
        %1332 = vmatpush.msra.mxu0 0.0
        %1333 = vmatpush.msra.mxu0 0.0
        %1334 = vmatpush.msra.mxu0 0.0
        %1335 = vmatpush.msra.mxu0 0.0
        %1336 = vmatpush.msra.mxu0 0.0
        %1337 = vmatpush.msra.mxu0 0.0
        %1338 = vmatpush.msra.mxu0 0.0
        %1339 = vmatpush.msra.mxu0 0.0
        %1340 = vmatpush.msra.mxu0 0.0
        %1341 = vmatpush.msra.mxu0 0.0
        %1342 = vmatpush.msra.mxu0 0.0
        %v1343 = vand.u32 %v562, 4294901760
        %1344 = vmatpush.msra.mxu0 %v1343
        %v1345 = vand.u32 %v561, 4294901760
        %1346 = vmatpush.msra.mxu0 %v1345
        %v1347 = vand.u32 %v560, 4294901760
        %1348 = vmatpush.msra.mxu0 %v1347
        %v1349 = vand.u32 %v559, 4294901760
        %1350 = vmatpush.msra.mxu0 %v1349
        %v1351 = vand.u32 %v1169, 4294901760
        %1352 = vmatmul.f32.gmra.mxu0 %v1351
        %v1353 = vpop.f32.mrf.mxu0
        %v1354 = vadd.f32 %v1329, %v1353
        %1355 = vdwg.mxu0
        %v1357 = vsel %vm997, %v981, 0
        %1359 = vmatpush.msra.mxu0 0.0
        %1360 = vmatpush.msra.mxu0 0.0
        %1361 = vmatpush.msra.mxu0 0.0
        %1362 = vmatpush.msra.mxu0 0.0
        %1363 = vmatpush.msra.mxu0 0.0
        %1364 = vmatpush.msra.mxu0 0.0
        %1365 = vmatpush.msra.mxu0 0.0
        %1366 = vmatpush.msra.mxu0 0.0
        %1367 = vmatpush.msra.mxu0 0.0
        %1368 = vmatpush.msra.mxu0 0.0
        %1369 = vmatpush.msra.mxu0 0.0
        %1370 = vmatpush.msra.mxu0 0.0
        %1371 = vmatpush.msra.mxu0 0.0
        %1372 = vmatpush.msra.mxu0 0.0
        %1373 = vmatpush.msra.mxu0 0.0
        %v1374 = vand.u32 %v1003, 4294901760
        %1375 = vmatpush.msra.mxu0 %v1374
        %v1376 = vand.u32 %v1357, 4294901760
        %v1377 = vsub.f32 %v1357, %v1376
        %v1378 = vand.u32 %v1377, 4294901760
        %v1379 = vsub.f32 %v1377, %v1378
        %v1380 = vand.u32 %v1379, 4294901760
        %1381 = vmatmul.f32.gmra.mxu0 %v1380
        %v1382 = vpop.f32.mrf.mxu0
        %v1383 = vadd.f32 0.0, %v1382
        %1384 = vdwg.mxu0
        %1385 = vmatpush.msra.mxu0 0.0
        %1386 = vmatpush.msra.mxu0 0.0
        %1387 = vmatpush.msra.mxu0 0.0
        %1388 = vmatpush.msra.mxu0 0.0
        %1389 = vmatpush.msra.mxu0 0.0
        %1390 = vmatpush.msra.mxu0 0.0
        %1391 = vmatpush.msra.mxu0 0.0
        %1392 = vmatpush.msra.mxu0 0.0
        %1393 = vmatpush.msra.mxu0 0.0
        %1394 = vmatpush.msra.mxu0 0.0
        %1395 = vmatpush.msra.mxu0 0.0
        %1396 = vmatpush.msra.mxu0 0.0
        %1397 = vmatpush.msra.mxu0 0.0
        %1398 = vmatpush.msra.mxu0 0.0
        %1399 = vmatpush.msra.mxu0 0.0
        %v1400 = vand.u32 %v1003, 4294901760
        %v1401 = vsub.f32 %v1003, %v1400
        %v1402 = vand.u32 %v1401, 4294901760
        %v1403 = vsub.f32 %v1401, %v1402
        %v1404 = vand.u32 %v1403, 4294901760
        %1405 = vmatpush.msra.mxu0 %v1404
        %v1406 = vand.u32 %v1357, 4294901760
        %1407 = vmatmul.f32.gmra.mxu0 %v1406
        %v1408 = vpop.f32.mrf.mxu0
        %v1409 = vadd.f32 %v1383, %v1408
        %1410 = vdwg.mxu0
        %1411 = vmatpush.msra.mxu0 0.0
        %1412 = vmatpush.msra.mxu0 0.0
        %1413 = vmatpush.msra.mxu0 0.0
        %1414 = vmatpush.msra.mxu0 0.0
        %1415 = vmatpush.msra.mxu0 0.0
        %1416 = vmatpush.msra.mxu0 0.0
        %1417 = vmatpush.msra.mxu0 0.0
        %1418 = vmatpush.msra.mxu0 0.0
        %1419 = vmatpush.msra.mxu0 0.0
        %1420 = vmatpush.msra.mxu0 0.0
        %1421 = vmatpush.msra.mxu0 0.0
        %1422 = vmatpush.msra.mxu0 0.0
        %1423 = vmatpush.msra.mxu0 0.0
        %1424 = vmatpush.msra.mxu0 0.0
        %1425 = vmatpush.msra.mxu0 0.0
        %v1426 = vand.u32 %v1003, 4294901760
        %v1427 = vsub.f32 %v1003, %v1426
        %1428 = vmatpush.msra.mxu0 %v1427
        %v1429 = vand.u32 %v1357, 4294901760
        %v1430 = vsub.f32 %v1357, %v1429
        %1431 = vmatmul.f32.gmra.mxu0 %v1430
        %v1432 = vpop.f32.mrf.mxu0
        %v1433 = vadd.f32 %v1409, %v1432
        %1434 = vdwg.mxu0
        %1435 = vmatpush.msra.mxu0 0.0
        %1436 = vmatpush.msra.mxu0 0.0
        %1437 = vmatpush.msra.mxu0 0.0
        %1438 = vmatpush.msra.mxu0 0.0
        %1439 = vmatpush.msra.mxu0 0.0
        %1440 = vmatpush.msra.mxu0 0.0
        %1441 = vmatpush.msra.mxu0 0.0
        %1442 = vmatpush.msra.mxu0 0.0
        %1443 = vmatpush.msra.mxu0 0.0
        %1444 = vmatpush.msra.mxu0 0.0
        %1445 = vmatpush.msra.mxu0 0.0
        %1446 = vmatpush.msra.mxu0 0.0
        %1447 = vmatpush.msra.mxu0 0.0
        %1448 = vmatpush.msra.mxu0 0.0
        %1449 = vmatpush.msra.mxu0 0.0
        %v1450 = vand.u32 %v1003, 4294901760
        %1451 = vmatpush.msra.mxu0 %v1450
        %v1452 = vand.u32 %v1357, 4294901760
        %v1453 = vsub.f32 %v1357, %v1452
        %v1454 = vand.u32 %v1453, 4294901760
        %1455 = vmatmul.f32.gmra.mxu0 %v1454
        %v1456 = vpop.f32.mrf.mxu0
        %v1457 = vadd.f32 %v1433, %v1456
        %1458 = vdwg.mxu0
        %1459 = vmatpush.msra.mxu0 0.0
        %1460 = vmatpush.msra.mxu0 0.0
        %1461 = vmatpush.msra.mxu0 0.0
        %1462 = vmatpush.msra.mxu0 0.0
        %1463 = vmatpush.msra.mxu0 0.0
        %1464 = vmatpush.msra.mxu0 0.0
        %1465 = vmatpush.msra.mxu0 0.0
        %1466 = vmatpush.msra.mxu0 0.0
        %1467 = vmatpush.msra.mxu0 0.0
        %1468 = vmatpush.msra.mxu0 0.0
        %1469 = vmatpush.msra.mxu0 0.0
        %1470 = vmatpush.msra.mxu0 0.0
        %1471 = vmatpush.msra.mxu0 0.0
        %1472 = vmatpush.msra.mxu0 0.0
        %1473 = vmatpush.msra.mxu0 0.0
        %v1474 = vand.u32 %v1003, 4294901760
        %v1475 = vsub.f32 %v1003, %v1474
        %v1476 = vand.u32 %v1475, 4294901760
        %1477 = vmatpush.msra.mxu0 %v1476
        %v1478 = vand.u32 %v1357, 4294901760
        %1479 = vmatmul.f32.gmra.mxu0 %v1478
        %v1480 = vpop.f32.mrf.mxu0
        %v1481 = vadd.f32 %v1457, %v1480
        %1482 = vdwg.mxu0
        %1483 = vmatpush.msra.mxu0 0.0
        %1484 = vmatpush.msra.mxu0 0.0
        %1485 = vmatpush.msra.mxu0 0.0
        %1486 = vmatpush.msra.mxu0 0.0
        %1487 = vmatpush.msra.mxu0 0.0
        %1488 = vmatpush.msra.mxu0 0.0
        %1489 = vmatpush.msra.mxu0 0.0
        %1490 = vmatpush.msra.mxu0 0.0
        %1491 = vmatpush.msra.mxu0 0.0
        %1492 = vmatpush.msra.mxu0 0.0
        %1493 = vmatpush.msra.mxu0 0.0
        %1494 = vmatpush.msra.mxu0 0.0
        %1495 = vmatpush.msra.mxu0 0.0
        %1496 = vmatpush.msra.mxu0 0.0
        %1497 = vmatpush.msra.mxu0 0.0
        %v1498 = vand.u32 %v1003, 4294901760
        %1499 = vmatpush.msra.mxu0 %v1498
        %v1500 = vand.u32 %v1357, 4294901760
        %1501 = vmatmul.f32.gmra.mxu0 %v1500
        %v1502 = vpop.f32.mrf.mxu0
        %v1503 = vadd.f32 %v1481, %v1502
        %1504 = vdwg.mxu0
        %v1505 = vmul.f32 %v558, %v1503
        %v1506 = vsel %vm351, %v1505, 0.0
        %v1507 = vrot.slane %v1506, 4
        %v1508 = vadd.f32 %v1506, %v1507
        %v1509 = vrot.slane %v1508, 2
        %v1510 = vadd.f32 %v1508, %v1509
        %v1511 = vrot.slane %v1510, 1
        %v1512 = vadd.f32 %v1510, %v1511
        %1514 = vrot.lane.b32.xlu0 %v1512, 32
        %v1515 = vpop.permute.xlu0 %1514
        %v1517 = vmul.f32 %v558, %v1515
        %1519 = vrot.lane.b32.xlu0 %v1517, 96
        %v1520 = vpop.permute.xlu0 %1519
        %v1521 = vsel %vm351, %v1520, 0
        %1523 = vmatpush.msra.mxu0 0.0
        %1524 = vmatpush.msra.mxu0 0.0
        %1525 = vmatpush.msra.mxu0 0.0
        %1526 = vmatpush.msra.mxu0 0.0
        %1527 = vmatpush.msra.mxu0 0.0
        %1528 = vmatpush.msra.mxu0 0.0
        %1529 = vmatpush.msra.mxu0 0.0
        %1530 = vmatpush.msra.mxu0 0.0
        %1531 = vmatpush.msra.mxu0 0.0
        %1532 = vmatpush.msra.mxu0 0.0
        %1533 = vmatpush.msra.mxu0 0.0
        %1534 = vmatpush.msra.mxu0 0.0
        %v1535 = vand.u32 %v562, 4294901760
        %1536 = vmatpush.msra.mxu0 %v1535
        %v1537 = vand.u32 %v561, 4294901760
        %1538 = vmatpush.msra.mxu0 %v1537
        %v1539 = vand.u32 %v560, 4294901760
        %1540 = vmatpush.msra.mxu0 %v1539
        %v1541 = vand.u32 %v559, 4294901760
        %1542 = vmatpush.msra.mxu0 %v1541
        %v1543 = vand.u32 %v1521, 4294901760
        %v1544 = vsub.f32 %v1521, %v1543
        %v1545 = vand.u32 %v1544, 4294901760
        %v1546 = vsub.f32 %v1544, %v1545
        %v1547 = vand.u32 %v1546, 4294901760
        %1548 = vmatmul.f32.gmra.mxu0 %v1547
        %v1549 = vpop.f32.mrf.mxu0
        %v1550 = vadd.f32 0.0, %v1549
        %1551 = vdwg.mxu0
        %1552 = vmatpush.msra.mxu0 0.0
        %1553 = vmatpush.msra.mxu0 0.0
        %1554 = vmatpush.msra.mxu0 0.0
        %1555 = vmatpush.msra.mxu0 0.0
        %1556 = vmatpush.msra.mxu0 0.0
        %1557 = vmatpush.msra.mxu0 0.0
        %1558 = vmatpush.msra.mxu0 0.0
        %1559 = vmatpush.msra.mxu0 0.0
        %1560 = vmatpush.msra.mxu0 0.0
        %1561 = vmatpush.msra.mxu0 0.0
        %1562 = vmatpush.msra.mxu0 0.0
        %1563 = vmatpush.msra.mxu0 0.0
        %v1564 = vand.u32 %v562, 4294901760
        %v1565 = vsub.f32 %v562, %v1564
        %v1566 = vand.u32 %v1565, 4294901760
        %v1567 = vsub.f32 %v1565, %v1566
        %v1568 = vand.u32 %v1567, 4294901760
        %1569 = vmatpush.msra.mxu0 %v1568
        %v1570 = vand.u32 %v561, 4294901760
        %v1571 = vsub.f32 %v561, %v1570
        %v1572 = vand.u32 %v1571, 4294901760
        %v1573 = vsub.f32 %v1571, %v1572
        %v1574 = vand.u32 %v1573, 4294901760
        %1575 = vmatpush.msra.mxu0 %v1574
        %v1576 = vand.u32 %v560, 4294901760
        %v1577 = vsub.f32 %v560, %v1576
        %v1578 = vand.u32 %v1577, 4294901760
        %v1579 = vsub.f32 %v1577, %v1578
        %v1580 = vand.u32 %v1579, 4294901760
        %1581 = vmatpush.msra.mxu0 %v1580
        %v1582 = vand.u32 %v559, 4294901760
        %v1583 = vsub.f32 %v559, %v1582
        %v1584 = vand.u32 %v1583, 4294901760
        %v1585 = vsub.f32 %v1583, %v1584
        %v1586 = vand.u32 %v1585, 4294901760
        %1587 = vmatpush.msra.mxu0 %v1586
        %v1588 = vand.u32 %v1521, 4294901760
        %1589 = vmatmul.f32.gmra.mxu0 %v1588
        %v1590 = vpop.f32.mrf.mxu0
        %v1591 = vadd.f32 %v1550, %v1590
        %1592 = vdwg.mxu0
        %1593 = vmatpush.msra.mxu0 0.0
        %1594 = vmatpush.msra.mxu0 0.0
        %1595 = vmatpush.msra.mxu0 0.0
        %1596 = vmatpush.msra.mxu0 0.0
        %1597 = vmatpush.msra.mxu0 0.0
        %1598 = vmatpush.msra.mxu0 0.0
        %1599 = vmatpush.msra.mxu0 0.0
        %1600 = vmatpush.msra.mxu0 0.0
        %1601 = vmatpush.msra.mxu0 0.0
        %1602 = vmatpush.msra.mxu0 0.0
        %1603 = vmatpush.msra.mxu0 0.0
        %1604 = vmatpush.msra.mxu0 0.0
        %v1605 = vand.u32 %v562, 4294901760
        %v1606 = vsub.f32 %v562, %v1605
        %1607 = vmatpush.msra.mxu0 %v1606
        %v1608 = vand.u32 %v561, 4294901760
        %v1609 = vsub.f32 %v561, %v1608
        %1610 = vmatpush.msra.mxu0 %v1609
        %v1611 = vand.u32 %v560, 4294901760
        %v1612 = vsub.f32 %v560, %v1611
        %1613 = vmatpush.msra.mxu0 %v1612
        %v1614 = vand.u32 %v559, 4294901760
        %v1615 = vsub.f32 %v559, %v1614
        %1616 = vmatpush.msra.mxu0 %v1615
        %v1617 = vand.u32 %v1521, 4294901760
        %v1618 = vsub.f32 %v1521, %v1617
        %1619 = vmatmul.f32.gmra.mxu0 %v1618
        %v1620 = vpop.f32.mrf.mxu0
        %v1621 = vadd.f32 %v1591, %v1620
        %1622 = vdwg.mxu0
        %1623 = vmatpush.msra.mxu0 0.0
        %1624 = vmatpush.msra.mxu0 0.0
        %1625 = vmatpush.msra.mxu0 0.0
        %1626 = vmatpush.msra.mxu0 0.0
        %1627 = vmatpush.msra.mxu0 0.0
        %1628 = vmatpush.msra.mxu0 0.0
        %1629 = vmatpush.msra.mxu0 0.0
        %1630 = vmatpush.msra.mxu0 0.0
        %1631 = vmatpush.msra.mxu0 0.0
        %1632 = vmatpush.msra.mxu0 0.0
        %1633 = vmatpush.msra.mxu0 0.0
        %1634 = vmatpush.msra.mxu0 0.0
        %v1635 = vand.u32 %v562, 4294901760
        %1636 = vmatpush.msra.mxu0 %v1635
        %v1637 = vand.u32 %v561, 4294901760
        %1638 = vmatpush.msra.mxu0 %v1637
        %v1639 = vand.u32 %v560, 4294901760
        %1640 = vmatpush.msra.mxu0 %v1639
        %v1641 = vand.u32 %v559, 4294901760
        %1642 = vmatpush.msra.mxu0 %v1641
        %v1643 = vand.u32 %v1521, 4294901760
        %v1644 = vsub.f32 %v1521, %v1643
        %v1645 = vand.u32 %v1644, 4294901760
        %1646 = vmatmul.f32.gmra.mxu0 %v1645
        %v1647 = vpop.f32.mrf.mxu0
        %v1648 = vadd.f32 %v1621, %v1647
        %1649 = vdwg.mxu0
        %1650 = vmatpush.msra.mxu0 0.0
        %1651 = vmatpush.msra.mxu0 0.0
        %1652 = vmatpush.msra.mxu0 0.0
        %1653 = vmatpush.msra.mxu0 0.0
        %1654 = vmatpush.msra.mxu0 0.0
        %1655 = vmatpush.msra.mxu0 0.0
        %1656 = vmatpush.msra.mxu0 0.0
        %1657 = vmatpush.msra.mxu0 0.0
        %1658 = vmatpush.msra.mxu0 0.0
        %1659 = vmatpush.msra.mxu0 0.0
        %1660 = vmatpush.msra.mxu0 0.0
        %1661 = vmatpush.msra.mxu0 0.0
        %v1662 = vand.u32 %v562, 4294901760
        %v1663 = vsub.f32 %v562, %v1662
        %v1664 = vand.u32 %v1663, 4294901760
        %1665 = vmatpush.msra.mxu0 %v1664
        %v1666 = vand.u32 %v561, 4294901760
        %v1667 = vsub.f32 %v561, %v1666
        %v1668 = vand.u32 %v1667, 4294901760
        %1669 = vmatpush.msra.mxu0 %v1668
        %v1670 = vand.u32 %v560, 4294901760
        %v1671 = vsub.f32 %v560, %v1670
        %v1672 = vand.u32 %v1671, 4294901760
        %1673 = vmatpush.msra.mxu0 %v1672
        %v1674 = vand.u32 %v559, 4294901760
        %v1675 = vsub.f32 %v559, %v1674
        %v1676 = vand.u32 %v1675, 4294901760
        %1677 = vmatpush.msra.mxu0 %v1676
        %v1678 = vand.u32 %v1521, 4294901760
        %1679 = vmatmul.f32.gmra.mxu0 %v1678
        %v1680 = vpop.f32.mrf.mxu0
        %v1681 = vadd.f32 %v1648, %v1680
        %1682 = vdwg.mxu0
        %1683 = vmatpush.msra.mxu0 0.0
        %1684 = vmatpush.msra.mxu0 0.0
        %1685 = vmatpush.msra.mxu0 0.0
        %1686 = vmatpush.msra.mxu0 0.0
        %1687 = vmatpush.msra.mxu0 0.0
        %1688 = vmatpush.msra.mxu0 0.0
        %1689 = vmatpush.msra.mxu0 0.0
        %1690 = vmatpush.msra.mxu0 0.0
        %1691 = vmatpush.msra.mxu0 0.0
        %1692 = vmatpush.msra.mxu0 0.0
        %1693 = vmatpush.msra.mxu0 0.0
        %1694 = vmatpush.msra.mxu0 0.0
        %v1695 = vand.u32 %v562, 4294901760
        %1696 = vmatpush.msra.mxu0 %v1695
        %v1697 = vand.u32 %v561, 4294901760
        %1698 = vmatpush.msra.mxu0 %v1697
        %v1699 = vand.u32 %v560, 4294901760
        %1700 = vmatpush.msra.mxu0 %v1699
        %v1701 = vand.u32 %v559, 4294901760
        %1702 = vmatpush.msra.mxu0 %v1701
        %v1703 = vand.u32 %v1521, 4294901760
        %1704 = vmatmul.f32.gmra.mxu0 %v1703
        %v1705 = vpop.f32.mrf.mxu0
        %v1706 = vadd.f32 %v1681, %v1705
        %1707 = vdwg.mxu0
        %v1708 = vsel %vm997, %v1706, -inf
        %v1709 = vrot.slane %v1708, 4
        %v1710 = vmax.f32 %v1708, %v1709
        %v1711 = vrot.slane %v1710, 2
        %v1712 = vmax.f32 %v1710, %v1711
        %v1713 = vrot.slane %v1712, 1
        %v1714 = vmax.f32 %v1712, %v1713
        %v1715 = vsub.f32 %v1706, %v1714
        %v1716 = vmul.f32 %v1715, 1.442695
        %v1717 = vpow.pop %v1716
        %v1718 = vsel %vm997, %v1717, 0.0
        %v1719 = vrot.slane %v1718, 4
        %v1720 = vadd.f32 %v1718, %v1719
        %v1721 = vrot.slane %v1720, 2
        %v1722 = vadd.f32 %v1720, %v1721
        %v1723 = vrot.slane %v1722, 1
        %v1724 = vadd.f32 %v1722, %v1723
        %v1725 = vrcp.pop %v1724
        %v1726 = vmul.f32 %v1724, %v1725
        %v1727 = vsub.f32 1.0, %v1726
        %v1728 = vmul.f32 %v1725, %v1727
        %v1729 = vadd.f32 %v1725, %v1728
        %vm1730 = vweird.f32 %v1724
        %vm1731 = vweird.f32 %v1725
        %vm1732 = vmor %vm1730, %vm1731
        %v1733 = vsel %vm1732, %v1725, %v1729
        %v1734 = vand.u32 2147483647, %v1724
        %vm1735 = vcmp.eq.f32.partialorder %v1734, 8.507059e+37
        %v1736 = vand.u32 %v1724, 2147483648
        %v1737 = vor.u32 1.1754944e-38, %v1736
        %v1738 = vsel %vm1735, %v1737, %v1733
        %v1739 = vmul.f32 1.0, %v1738
        %v1740 = vmul.f32 %v1717, %v1739
        %v1742 = vsel %vm997, %v1740, 0
        %1744 = vmatpush.msra.mxu0 0.0
        %1745 = vmatpush.msra.mxu0 0.0
        %1746 = vmatpush.msra.mxu0 0.0
        %1747 = vmatpush.msra.mxu0 0.0
        %1748 = vmatpush.msra.mxu0 0.0
        %1749 = vmatpush.msra.mxu0 0.0
        %1750 = vmatpush.msra.mxu0 0.0
        %1751 = vmatpush.msra.mxu0 0.0
        %1752 = vmatpush.msra.mxu0 0.0
        %1753 = vmatpush.msra.mxu0 0.0
        %1754 = vmatpush.msra.mxu0 0.0
        %1755 = vmatpush.msra.mxu0 0.0
        %1756 = vmatpush.msra.mxu0 0.0
        %1757 = vmatpush.msra.mxu0 0.0
        %1758 = vmatpush.msra.mxu0 0.0
        %v1759 = vand.u32 %v1003, 4294901760
        %1760 = vmatpush.msra.mxu0 %v1759
        %v1761 = vand.u32 %v1742, 4294901760
        %v1762 = vsub.f32 %v1742, %v1761
        %v1763 = vand.u32 %v1762, 4294901760
        %v1764 = vsub.f32 %v1762, %v1763
        %v1765 = vand.u32 %v1764, 4294901760
        %1766 = vmatmul.f32.gmra.mxu0 %v1765
        %v1767 = vpop.f32.mrf.mxu0
        %v1768 = vadd.f32 0.0, %v1767
        %1769 = vdwg.mxu0
        %1770 = vmatpush.msra.mxu0 0.0
        %1771 = vmatpush.msra.mxu0 0.0
        %1772 = vmatpush.msra.mxu0 0.0
        %1773 = vmatpush.msra.mxu0 0.0
        %1774 = vmatpush.msra.mxu0 0.0
        %1775 = vmatpush.msra.mxu0 0.0
        %1776 = vmatpush.msra.mxu0 0.0
        %1777 = vmatpush.msra.mxu0 0.0
        %1778 = vmatpush.msra.mxu0 0.0
        %1779 = vmatpush.msra.mxu0 0.0
        %1780 = vmatpush.msra.mxu0 0.0
        %1781 = vmatpush.msra.mxu0 0.0
        %1782 = vmatpush.msra.mxu0 0.0
        %1783 = vmatpush.msra.mxu0 0.0
        %1784 = vmatpush.msra.mxu0 0.0
        %v1785 = vand.u32 %v1003, 4294901760
        %v1786 = vsub.f32 %v1003, %v1785
        %v1787 = vand.u32 %v1786, 4294901760
        %v1788 = vsub.f32 %v1786, %v1787
        %v1789 = vand.u32 %v1788, 4294901760
        %1790 = vmatpush.msra.mxu0 %v1789
        %v1791 = vand.u32 %v1742, 4294901760
        %1792 = vmatmul.f32.gmra.mxu0 %v1791
        %v1793 = vpop.f32.mrf.mxu0
        %v1794 = vadd.f32 %v1768, %v1793
        %1795 = vdwg.mxu0
        %1796 = vmatpush.msra.mxu0 0.0
        %1797 = vmatpush.msra.mxu0 0.0
        %1798 = vmatpush.msra.mxu0 0.0
        %1799 = vmatpush.msra.mxu0 0.0
        %1800 = vmatpush.msra.mxu0 0.0
        %1801 = vmatpush.msra.mxu0 0.0
        %1802 = vmatpush.msra.mxu0 0.0
        %1803 = vmatpush.msra.mxu0 0.0
        %1804 = vmatpush.msra.mxu0 0.0
        %1805 = vmatpush.msra.mxu0 0.0
        %1806 = vmatpush.msra.mxu0 0.0
        %1807 = vmatpush.msra.mxu0 0.0
        %1808 = vmatpush.msra.mxu0 0.0
        %1809 = vmatpush.msra.mxu0 0.0
        %1810 = vmatpush.msra.mxu0 0.0
        %v1811 = vand.u32 %v1003, 4294901760
        %v1812 = vsub.f32 %v1003, %v1811
        %1813 = vmatpush.msra.mxu0 %v1812
        %v1814 = vand.u32 %v1742, 4294901760
        %v1815 = vsub.f32 %v1742, %v1814
        %1816 = vmatmul.f32.gmra.mxu0 %v1815
        %v1817 = vpop.f32.mrf.mxu0
        %v1818 = vadd.f32 %v1794, %v1817
        %1819 = vdwg.mxu0
        %1820 = vmatpush.msra.mxu0 0.0
        %1821 = vmatpush.msra.mxu0 0.0
        %1822 = vmatpush.msra.mxu0 0.0
        %1823 = vmatpush.msra.mxu0 0.0
        %1824 = vmatpush.msra.mxu0 0.0
        %1825 = vmatpush.msra.mxu0 0.0
        %1826 = vmatpush.msra.mxu0 0.0
        %1827 = vmatpush.msra.mxu0 0.0
        %1828 = vmatpush.msra.mxu0 0.0
        %1829 = vmatpush.msra.mxu0 0.0
        %1830 = vmatpush.msra.mxu0 0.0
        %1831 = vmatpush.msra.mxu0 0.0
        %1832 = vmatpush.msra.mxu0 0.0
        %1833 = vmatpush.msra.mxu0 0.0
        %1834 = vmatpush.msra.mxu0 0.0
        %v1835 = vand.u32 %v1003, 4294901760
        %1836 = vmatpush.msra.mxu0 %v1835
        %v1837 = vand.u32 %v1742, 4294901760
        %v1838 = vsub.f32 %v1742, %v1837
        %v1839 = vand.u32 %v1838, 4294901760
        %1840 = vmatmul.f32.gmra.mxu0 %v1839
        %v1841 = vpop.f32.mrf.mxu0
        %v1842 = vadd.f32 %v1818, %v1841
        %1843 = vdwg.mxu0
        %1844 = vmatpush.msra.mxu0 0.0
        %1845 = vmatpush.msra.mxu0 0.0
        %1846 = vmatpush.msra.mxu0 0.0
        %1847 = vmatpush.msra.mxu0 0.0
        %1848 = vmatpush.msra.mxu0 0.0
        %1849 = vmatpush.msra.mxu0 0.0
        %1850 = vmatpush.msra.mxu0 0.0
        %1851 = vmatpush.msra.mxu0 0.0
        %1852 = vmatpush.msra.mxu0 0.0
        %1853 = vmatpush.msra.mxu0 0.0
        %1854 = vmatpush.msra.mxu0 0.0
        %1855 = vmatpush.msra.mxu0 0.0
        %1856 = vmatpush.msra.mxu0 0.0
        %1857 = vmatpush.msra.mxu0 0.0
        %1858 = vmatpush.msra.mxu0 0.0
        %v1859 = vand.u32 %v1003, 4294901760
        %v1860 = vsub.f32 %v1003, %v1859
        %v1861 = vand.u32 %v1860, 4294901760
        %1862 = vmatpush.msra.mxu0 %v1861
        %v1863 = vand.u32 %v1742, 4294901760
        %1864 = vmatmul.f32.gmra.mxu0 %v1863
        %v1865 = vpop.f32.mrf.mxu0
        %v1866 = vadd.f32 %v1842, %v1865
        %1867 = vdwg.mxu0
        %1868 = vmatpush.msra.mxu0 0.0
        %1869 = vmatpush.msra.mxu0 0.0
        %1870 = vmatpush.msra.mxu0 0.0
        %1871 = vmatpush.msra.mxu0 0.0
        %1872 = vmatpush.msra.mxu0 0.0
        %1873 = vmatpush.msra.mxu0 0.0
        %1874 = vmatpush.msra.mxu0 0.0
        %1875 = vmatpush.msra.mxu0 0.0
        %1876 = vmatpush.msra.mxu0 0.0
        %1877 = vmatpush.msra.mxu0 0.0
        %1878 = vmatpush.msra.mxu0 0.0
        %1879 = vmatpush.msra.mxu0 0.0
        %1880 = vmatpush.msra.mxu0 0.0
        %1881 = vmatpush.msra.mxu0 0.0
        %1882 = vmatpush.msra.mxu0 0.0
        %v1883 = vand.u32 %v1003, 4294901760
        %1884 = vmatpush.msra.mxu0 %v1883
        %v1885 = vand.u32 %v1742, 4294901760
        %1886 = vmatmul.f32.gmra.mxu0 %v1885
        %v1887 = vpop.f32.mrf.mxu0
        %v1888 = vadd.f32 %v1866, %v1887
        %1889 = vdwg.mxu0
        %1891 = vrot.lane.b32.xlu0 %v1888, 64
        %v1892 = vpop.permute.xlu0 %1891
        %v1894 = vmul.f32 %v538, %v1892
        %1896 = vrot.lane.b32.xlu0 %v558, 96
        %v1897 = vpop.permute.xlu0 %1896
        %v1899 = vmul.f32 %v1505, %v1897
        %v1901 = vsel %vm351, %v1899, 0
        %1903 = vmatpush.msra.mxu0 0.0
        %1904 = vmatpush.msra.mxu0 0.0
        %1905 = vmatpush.msra.mxu0 0.0
        %1906 = vmatpush.msra.mxu0 0.0
        %1907 = vmatpush.msra.mxu0 0.0
        %1908 = vmatpush.msra.mxu0 0.0
        %1909 = vmatpush.msra.mxu0 0.0
        %1910 = vmatpush.msra.mxu0 0.0
        %1911 = vmatpush.msra.mxu0 0.0
        %1912 = vmatpush.msra.mxu0 0.0
        %1913 = vmatpush.msra.mxu0 0.0
        %1914 = vmatpush.msra.mxu0 0.0
        %v1915 = vand.u32 %v562, 4294901760
        %1916 = vmatpush.msra.mxu0 %v1915
        %v1917 = vand.u32 %v561, 4294901760
        %1918 = vmatpush.msra.mxu0 %v1917
        %v1919 = vand.u32 %v560, 4294901760
        %1920 = vmatpush.msra.mxu0 %v1919
        %v1921 = vand.u32 %v559, 4294901760
        %1922 = vmatpush.msra.mxu0 %v1921
        %v1923 = vand.u32 %v1901, 4294901760
        %v1924 = vsub.f32 %v1901, %v1923
        %v1925 = vand.u32 %v1924, 4294901760
        %v1926 = vsub.f32 %v1924, %v1925
        %v1927 = vand.u32 %v1926, 4294901760
        %1928 = vmatmul.f32.gmra.mxu0 %v1927
        %v1929 = vpop.f32.mrf.mxu0
        %v1930 = vadd.f32 0.0, %v1929
        %1931 = vdwg.mxu0
        %1932 = vmatpush.msra.mxu0 0.0
        %1933 = vmatpush.msra.mxu0 0.0
        %1934 = vmatpush.msra.mxu0 0.0
        %1935 = vmatpush.msra.mxu0 0.0
        %1936 = vmatpush.msra.mxu0 0.0
        %1937 = vmatpush.msra.mxu0 0.0
        %1938 = vmatpush.msra.mxu0 0.0
        %1939 = vmatpush.msra.mxu0 0.0
        %1940 = vmatpush.msra.mxu0 0.0
        %1941 = vmatpush.msra.mxu0 0.0
        %1942 = vmatpush.msra.mxu0 0.0
        %1943 = vmatpush.msra.mxu0 0.0
        %v1944 = vand.u32 %v562, 4294901760
        %v1945 = vsub.f32 %v562, %v1944
        %v1946 = vand.u32 %v1945, 4294901760
        %v1947 = vsub.f32 %v1945, %v1946
        %v1948 = vand.u32 %v1947, 4294901760
        %1949 = vmatpush.msra.mxu0 %v1948
        %v1950 = vand.u32 %v561, 4294901760
        %v1951 = vsub.f32 %v561, %v1950
        %v1952 = vand.u32 %v1951, 4294901760
        %v1953 = vsub.f32 %v1951, %v1952
        %v1954 = vand.u32 %v1953, 4294901760
        %1955 = vmatpush.msra.mxu0 %v1954
        %v1956 = vand.u32 %v560, 4294901760
        %v1957 = vsub.f32 %v560, %v1956
        %v1958 = vand.u32 %v1957, 4294901760
        %v1959 = vsub.f32 %v1957, %v1958
        %v1960 = vand.u32 %v1959, 4294901760
        %1961 = vmatpush.msra.mxu0 %v1960
        %v1962 = vand.u32 %v559, 4294901760
        %v1963 = vsub.f32 %v559, %v1962
        %v1964 = vand.u32 %v1963, 4294901760
        %v1965 = vsub.f32 %v1963, %v1964
        %v1966 = vand.u32 %v1965, 4294901760
        %1967 = vmatpush.msra.mxu0 %v1966
        %v1968 = vand.u32 %v1901, 4294901760
        %1969 = vmatmul.f32.gmra.mxu0 %v1968
        %v1970 = vpop.f32.mrf.mxu0
        %v1971 = vadd.f32 %v1930, %v1970
        %1972 = vdwg.mxu0
        %1973 = vmatpush.msra.mxu0 0.0
        %1974 = vmatpush.msra.mxu0 0.0
        %1975 = vmatpush.msra.mxu0 0.0
        %1976 = vmatpush.msra.mxu0 0.0
        %1977 = vmatpush.msra.mxu0 0.0
        %1978 = vmatpush.msra.mxu0 0.0
        %1979 = vmatpush.msra.mxu0 0.0
        %1980 = vmatpush.msra.mxu0 0.0
        %1981 = vmatpush.msra.mxu0 0.0
        %1982 = vmatpush.msra.mxu0 0.0
        %1983 = vmatpush.msra.mxu0 0.0
        %1984 = vmatpush.msra.mxu0 0.0
        %v1985 = vand.u32 %v562, 4294901760
        %v1986 = vsub.f32 %v562, %v1985
        %1987 = vmatpush.msra.mxu0 %v1986
        %v1988 = vand.u32 %v561, 4294901760
        %v1989 = vsub.f32 %v561, %v1988
        %1990 = vmatpush.msra.mxu0 %v1989
        %v1991 = vand.u32 %v560, 4294901760
        %v1992 = vsub.f32 %v560, %v1991
        %1993 = vmatpush.msra.mxu0 %v1992
        %v1994 = vand.u32 %v559, 4294901760
        %v1995 = vsub.f32 %v559, %v1994
        %1996 = vmatpush.msra.mxu0 %v1995
        %v1997 = vand.u32 %v1901, 4294901760
        %v1998 = vsub.f32 %v1901, %v1997
        %1999 = vmatmul.f32.gmra.mxu0 %v1998
        %v2000 = vpop.f32.mrf.mxu0
        %v2001 = vadd.f32 %v1971, %v2000
        %2002 = vdwg.mxu0
        %2003 = vmatpush.msra.mxu0 0.0
        %2004 = vmatpush.msra.mxu0 0.0
        %2005 = vmatpush.msra.mxu0 0.0
        %2006 = vmatpush.msra.mxu0 0.0
        %2007 = vmatpush.msra.mxu0 0.0
        %2008 = vmatpush.msra.mxu0 0.0
        %2009 = vmatpush.msra.mxu0 0.0
        %2010 = vmatpush.msra.mxu0 0.0
        %2011 = vmatpush.msra.mxu0 0.0
        %2012 = vmatpush.msra.mxu0 0.0
        %2013 = vmatpush.msra.mxu0 0.0
        %2014 = vmatpush.msra.mxu0 0.0
        %v2015 = vand.u32 %v562, 4294901760
        %2016 = vmatpush.msra.mxu0 %v2015
        %v2017 = vand.u32 %v561, 4294901760
        %2018 = vmatpush.msra.mxu0 %v2017
        %v2019 = vand.u32 %v560, 4294901760
        %2020 = vmatpush.msra.mxu0 %v2019
        %v2021 = vand.u32 %v559, 4294901760
        %2022 = vmatpush.msra.mxu0 %v2021
        %v2023 = vand.u32 %v1901, 4294901760
        %v2024 = vsub.f32 %v1901, %v2023
        %v2025 = vand.u32 %v2024, 4294901760
        %2026 = vmatmul.f32.gmra.mxu0 %v2025
        %v2027 = vpop.f32.mrf.mxu0
        %v2028 = vadd.f32 %v2001, %v2027
        %2029 = vdwg.mxu0
        %2030 = vmatpush.msra.mxu0 0.0
        %2031 = vmatpush.msra.mxu0 0.0
        %2032 = vmatpush.msra.mxu0 0.0
        %2033 = vmatpush.msra.mxu0 0.0
        %2034 = vmatpush.msra.mxu0 0.0
        %2035 = vmatpush.msra.mxu0 0.0
        %2036 = vmatpush.msra.mxu0 0.0
        %2037 = vmatpush.msra.mxu0 0.0
        %2038 = vmatpush.msra.mxu0 0.0
        %2039 = vmatpush.msra.mxu0 0.0
        %2040 = vmatpush.msra.mxu0 0.0
        %2041 = vmatpush.msra.mxu0 0.0
        %v2042 = vand.u32 %v562, 4294901760
        %v2043 = vsub.f32 %v562, %v2042
        %v2044 = vand.u32 %v2043, 4294901760
        %2045 = vmatpush.msra.mxu0 %v2044
        %v2046 = vand.u32 %v561, 4294901760
        %v2047 = vsub.f32 %v561, %v2046
        %v2048 = vand.u32 %v2047, 4294901760
        %2049 = vmatpush.msra.mxu0 %v2048
        %v2050 = vand.u32 %v560, 4294901760
        %v2051 = vsub.f32 %v560, %v2050
        %v2052 = vand.u32 %v2051, 4294901760
        %2053 = vmatpush.msra.mxu0 %v2052
        %v2054 = vand.u32 %v559, 4294901760
        %v2055 = vsub.f32 %v559, %v2054
        %v2056 = vand.u32 %v2055, 4294901760
        %2057 = vmatpush.msra.mxu0 %v2056
        %v2058 = vand.u32 %v1901, 4294901760
        %2059 = vmatmul.f32.gmra.mxu0 %v2058
        %v2060 = vpop.f32.mrf.mxu0
        %v2061 = vadd.f32 %v2028, %v2060
        %2062 = vdwg.mxu0
        %2063 = vmatpush.msra.mxu0 0.0
        %2064 = vmatpush.msra.mxu0 0.0
        %2065 = vmatpush.msra.mxu0 0.0
        %2066 = vmatpush.msra.mxu0 0.0
        %2067 = vmatpush.msra.mxu0 0.0
        %2068 = vmatpush.msra.mxu0 0.0
        %2069 = vmatpush.msra.mxu0 0.0
        %2070 = vmatpush.msra.mxu0 0.0
        %2071 = vmatpush.msra.mxu0 0.0
        %2072 = vmatpush.msra.mxu0 0.0
        %2073 = vmatpush.msra.mxu0 0.0
        %2074 = vmatpush.msra.mxu0 0.0
        %v2075 = vand.u32 %v562, 4294901760
        %2076 = vmatpush.msra.mxu0 %v2075
        %v2077 = vand.u32 %v561, 4294901760
        %2078 = vmatpush.msra.mxu0 %v2077
        %v2079 = vand.u32 %v560, 4294901760
        %2080 = vmatpush.msra.mxu0 %v2079
        %v2081 = vand.u32 %v559, 4294901760
        %2082 = vmatpush.msra.mxu0 %v2081
        %v2083 = vand.u32 %v1901, 4294901760
        %2084 = vmatmul.f32.gmra.mxu0 %v2083
        %v2085 = vpop.f32.mrf.mxu0
        %v2086 = vadd.f32 %v2061, %v2085
        %2087 = vdwg.mxu0
        %v2089 = vsel %vm997, %v2086, 0
        %2091 = vmatpush.msra.mxu0 0.0
        %2092 = vmatpush.msra.mxu0 0.0
        %2093 = vmatpush.msra.mxu0 0.0
        %2094 = vmatpush.msra.mxu0 0.0
        %2095 = vmatpush.msra.mxu0 0.0
        %2096 = vmatpush.msra.mxu0 0.0
        %2097 = vmatpush.msra.mxu0 0.0
        %2098 = vmatpush.msra.mxu0 0.0
        %2099 = vmatpush.msra.mxu0 0.0
        %2100 = vmatpush.msra.mxu0 0.0
        %2101 = vmatpush.msra.mxu0 0.0
        %2102 = vmatpush.msra.mxu0 0.0
        %2103 = vmatpush.msra.mxu0 0.0
        %2104 = vmatpush.msra.mxu0 0.0
        %2105 = vmatpush.msra.mxu0 0.0
        %v2106 = vand.u32 %v1003, 4294901760
        %2107 = vmatpush.msra.mxu0 %v2106
        %v2108 = vand.u32 %v2089, 4294901760
        %v2109 = vsub.f32 %v2089, %v2108
        %v2110 = vand.u32 %v2109, 4294901760
        %v2111 = vsub.f32 %v2109, %v2110
        %v2112 = vand.u32 %v2111, 4294901760
        %2113 = vmatmul.f32.gmra.mxu0 %v2112
        %v2114 = vpop.f32.mrf.mxu0
        %v2115 = vadd.f32 0.0, %v2114
        %2116 = vdwg.mxu0
        %2117 = vmatpush.msra.mxu0 0.0
        %2118 = vmatpush.msra.mxu0 0.0
        %2119 = vmatpush.msra.mxu0 0.0
        %2120 = vmatpush.msra.mxu0 0.0
        %2121 = vmatpush.msra.mxu0 0.0
        %2122 = vmatpush.msra.mxu0 0.0
        %2123 = vmatpush.msra.mxu0 0.0
        %2124 = vmatpush.msra.mxu0 0.0
        %2125 = vmatpush.msra.mxu0 0.0
        %2126 = vmatpush.msra.mxu0 0.0
        %2127 = vmatpush.msra.mxu0 0.0
        %2128 = vmatpush.msra.mxu0 0.0
        %2129 = vmatpush.msra.mxu0 0.0
        %2130 = vmatpush.msra.mxu0 0.0
        %2131 = vmatpush.msra.mxu0 0.0
        %v2132 = vand.u32 %v1003, 4294901760
        %v2133 = vsub.f32 %v1003, %v2132
        %v2134 = vand.u32 %v2133, 4294901760
        %v2135 = vsub.f32 %v2133, %v2134
        %v2136 = vand.u32 %v2135, 4294901760
        %2137 = vmatpush.msra.mxu0 %v2136
        %v2138 = vand.u32 %v2089, 4294901760
        %2139 = vmatmul.f32.gmra.mxu0 %v2138
        %v2140 = vpop.f32.mrf.mxu0
        %v2141 = vadd.f32 %v2115, %v2140
        %2142 = vdwg.mxu0
        %2143 = vmatpush.msra.mxu0 0.0
        %2144 = vmatpush.msra.mxu0 0.0
        %2145 = vmatpush.msra.mxu0 0.0
        %2146 = vmatpush.msra.mxu0 0.0
        %2147 = vmatpush.msra.mxu0 0.0
        %2148 = vmatpush.msra.mxu0 0.0
        %2149 = vmatpush.msra.mxu0 0.0
        %2150 = vmatpush.msra.mxu0 0.0
        %2151 = vmatpush.msra.mxu0 0.0
        %2152 = vmatpush.msra.mxu0 0.0
        %2153 = vmatpush.msra.mxu0 0.0
        %2154 = vmatpush.msra.mxu0 0.0
        %2155 = vmatpush.msra.mxu0 0.0
        %2156 = vmatpush.msra.mxu0 0.0
        %2157 = vmatpush.msra.mxu0 0.0
        %v2158 = vand.u32 %v1003, 4294901760
        %v2159 = vsub.f32 %v1003, %v2158
        %2160 = vmatpush.msra.mxu0 %v2159
        %v2161 = vand.u32 %v2089, 4294901760
        %v2162 = vsub.f32 %v2089, %v2161
        %2163 = vmatmul.f32.gmra.mxu0 %v2162
        %v2164 = vpop.f32.mrf.mxu0
        %v2165 = vadd.f32 %v2141, %v2164
        %2166 = vdwg.mxu0
        %2167 = vmatpush.msra.mxu0 0.0
        %2168 = vmatpush.msra.mxu0 0.0
        %2169 = vmatpush.msra.mxu0 0.0
        %2170 = vmatpush.msra.mxu0 0.0
        %2171 = vmatpush.msra.mxu0 0.0
        %2172 = vmatpush.msra.mxu0 0.0
        %2173 = vmatpush.msra.mxu0 0.0
        %2174 = vmatpush.msra.mxu0 0.0
        %2175 = vmatpush.msra.mxu0 0.0
        %2176 = vmatpush.msra.mxu0 0.0
        %2177 = vmatpush.msra.mxu0 0.0
        %2178 = vmatpush.msra.mxu0 0.0
        %2179 = vmatpush.msra.mxu0 0.0
        %2180 = vmatpush.msra.mxu0 0.0
        %2181 = vmatpush.msra.mxu0 0.0
        %v2182 = vand.u32 %v1003, 4294901760
        %2183 = vmatpush.msra.mxu0 %v2182
        %v2184 = vand.u32 %v2089, 4294901760
        %v2185 = vsub.f32 %v2089, %v2184
        %v2186 = vand.u32 %v2185, 4294901760
        %2187 = vmatmul.f32.gmra.mxu0 %v2186
        %v2188 = vpop.f32.mrf.mxu0
        %v2189 = vadd.f32 %v2165, %v2188
        %2190 = vdwg.mxu0
        %2191 = vmatpush.msra.mxu0 0.0
        %2192 = vmatpush.msra.mxu0 0.0
        %2193 = vmatpush.msra.mxu0 0.0
        %2194 = vmatpush.msra.mxu0 0.0
        %2195 = vmatpush.msra.mxu0 0.0
        %2196 = vmatpush.msra.mxu0 0.0
        %2197 = vmatpush.msra.mxu0 0.0
        %2198 = vmatpush.msra.mxu0 0.0
        %2199 = vmatpush.msra.mxu0 0.0
        %2200 = vmatpush.msra.mxu0 0.0
        %2201 = vmatpush.msra.mxu0 0.0
        %2202 = vmatpush.msra.mxu0 0.0
        %2203 = vmatpush.msra.mxu0 0.0
        %2204 = vmatpush.msra.mxu0 0.0
        %2205 = vmatpush.msra.mxu0 0.0
        %v2206 = vand.u32 %v1003, 4294901760
        %v2207 = vsub.f32 %v1003, %v2206
        %v2208 = vand.u32 %v2207, 4294901760
        %2209 = vmatpush.msra.mxu0 %v2208
        %v2210 = vand.u32 %v2089, 4294901760
        %2211 = vmatmul.f32.gmra.mxu0 %v2210
        %v2212 = vpop.f32.mrf.mxu0
        %v2213 = vadd.f32 %v2189, %v2212
        %2214 = vdwg.mxu0
        %2215 = vmatpush.msra.mxu0 0.0
        %2216 = vmatpush.msra.mxu0 0.0
        %2217 = vmatpush.msra.mxu0 0.0
        %2218 = vmatpush.msra.mxu0 0.0
        %2219 = vmatpush.msra.mxu0 0.0
        %2220 = vmatpush.msra.mxu0 0.0
        %2221 = vmatpush.msra.mxu0 0.0
        %2222 = vmatpush.msra.mxu0 0.0
        %2223 = vmatpush.msra.mxu0 0.0
        %2224 = vmatpush.msra.mxu0 0.0
        %2225 = vmatpush.msra.mxu0 0.0
        %2226 = vmatpush.msra.mxu0 0.0
        %2227 = vmatpush.msra.mxu0 0.0
        %2228 = vmatpush.msra.mxu0 0.0
        %2229 = vmatpush.msra.mxu0 0.0
        %v2230 = vand.u32 %v1003, 4294901760
        %2231 = vmatpush.msra.mxu0 %v2230
        %v2232 = vand.u32 %v2089, 4294901760
        %2233 = vmatmul.f32.gmra.mxu0 %v2232
        %v2234 = vpop.f32.mrf.mxu0
        %v2235 = vadd.f32 %v2213, %v2234
        %2236 = vdwg.mxu0
        %2238 = vrot.lane.b32.xlu0 %v1894, 64
        %v2239 = vpop.permute.xlu0 %2238
        %v2241 = vmul.f32 %v2235, %v2239
        %2242 = vrot.lane.b32.xlu0 %v558, 88
        %v2243 = vpop.permute.xlu0 %2242
        %2245 = vrot.lane.b32.xlu0 %v558, 120
        %v2246 = vpop.permute.xlu0 %2245
        %vm2248 = vcmask 195584
        %v2249 = vsel %vm2248, %v2243, %v2246
        %2250 = vrot.lane.b32.xlu0 %v1894, 56
        %v2251 = vpop.permute.xlu0 %2250
        %2253 = vrot.lane.b32.xlu0 %v1894, 88
        %v2254 = vpop.permute.xlu0 %2253
        %v2256 = vsel %vm2248, %v2251, %v2254
        %v2257 = vmul.f32 %v1505, %v2249
        %v2259 = vsel %vm351, %v2257, 0
        %2261 = vmatpush.msra.mxu0 0.0
        %2262 = vmatpush.msra.mxu0 0.0
        %2263 = vmatpush.msra.mxu0 0.0
        %2264 = vmatpush.msra.mxu0 0.0
        %2265 = vmatpush.msra.mxu0 0.0
        %2266 = vmatpush.msra.mxu0 0.0
        %2267 = vmatpush.msra.mxu0 0.0
        %2268 = vmatpush.msra.mxu0 0.0
        %2269 = vmatpush.msra.mxu0 0.0
        %2270 = vmatpush.msra.mxu0 0.0
        %2271 = vmatpush.msra.mxu0 0.0
        %2272 = vmatpush.msra.mxu0 0.0
        %v2273 = vand.u32 %v562, 4294901760
        %2274 = vmatpush.msra.mxu0 %v2273
        %v2275 = vand.u32 %v561, 4294901760
        %2276 = vmatpush.msra.mxu0 %v2275
        %v2277 = vand.u32 %v560, 4294901760
        %2278 = vmatpush.msra.mxu0 %v2277
        %v2279 = vand.u32 %v559, 4294901760
        %2280 = vmatpush.msra.mxu0 %v2279
        %v2281 = vand.u32 %v2259, 4294901760
        %v2282 = vsub.f32 %v2259, %v2281
        %v2283 = vand.u32 %v2282, 4294901760
        %v2284 = vsub.f32 %v2282, %v2283
        %v2285 = vand.u32 %v2284, 4294901760
        %2286 = vmatmul.f32.gmra.mxu0 %v2285
        %v2287 = vpop.f32.mrf.mxu0
        %v2288 = vadd.f32 0.0, %v2287
        %2289 = vdwg.mxu0
        %2290 = vmatpush.msra.mxu0 0.0
        %2291 = vmatpush.msra.mxu0 0.0
        %2292 = vmatpush.msra.mxu0 0.0
        %2293 = vmatpush.msra.mxu0 0.0
        %2294 = vmatpush.msra.mxu0 0.0
        %2295 = vmatpush.msra.mxu0 0.0
        %2296 = vmatpush.msra.mxu0 0.0
        %2297 = vmatpush.msra.mxu0 0.0
        %2298 = vmatpush.msra.mxu0 0.0
        %2299 = vmatpush.msra.mxu0 0.0
        %2300 = vmatpush.msra.mxu0 0.0
        %2301 = vmatpush.msra.mxu0 0.0
        %v2302 = vand.u32 %v562, 4294901760
        %v2303 = vsub.f32 %v562, %v2302
        %v2304 = vand.u32 %v2303, 4294901760
        %v2305 = vsub.f32 %v2303, %v2304
        %v2306 = vand.u32 %v2305, 4294901760
        %2307 = vmatpush.msra.mxu0 %v2306
        %v2308 = vand.u32 %v561, 4294901760
        %v2309 = vsub.f32 %v561, %v2308
        %v2310 = vand.u32 %v2309, 4294901760
        %v2311 = vsub.f32 %v2309, %v2310
        %v2312 = vand.u32 %v2311, 4294901760
        %2313 = vmatpush.msra.mxu0 %v2312
        %v2314 = vand.u32 %v560, 4294901760
        %v2315 = vsub.f32 %v560, %v2314
        %v2316 = vand.u32 %v2315, 4294901760
        %v2317 = vsub.f32 %v2315, %v2316
        %v2318 = vand.u32 %v2317, 4294901760
        %2319 = vmatpush.msra.mxu0 %v2318
        %v2320 = vand.u32 %v559, 4294901760
        %v2321 = vsub.f32 %v559, %v2320
        %v2322 = vand.u32 %v2321, 4294901760
        %v2323 = vsub.f32 %v2321, %v2322
        %v2324 = vand.u32 %v2323, 4294901760
        %2325 = vmatpush.msra.mxu0 %v2324
        %v2326 = vand.u32 %v2259, 4294901760
        %2327 = vmatmul.f32.gmra.mxu0 %v2326
        %v2328 = vpop.f32.mrf.mxu0
        %v2329 = vadd.f32 %v2288, %v2328
        %2330 = vdwg.mxu0
        %2331 = vmatpush.msra.mxu0 0.0
        %2332 = vmatpush.msra.mxu0 0.0
        %2333 = vmatpush.msra.mxu0 0.0
        %2334 = vmatpush.msra.mxu0 0.0
        %2335 = vmatpush.msra.mxu0 0.0
        %2336 = vmatpush.msra.mxu0 0.0
        %2337 = vmatpush.msra.mxu0 0.0
        %2338 = vmatpush.msra.mxu0 0.0
        %2339 = vmatpush.msra.mxu0 0.0
        %2340 = vmatpush.msra.mxu0 0.0
        %2341 = vmatpush.msra.mxu0 0.0
        %2342 = vmatpush.msra.mxu0 0.0
        %v2343 = vand.u32 %v562, 4294901760
        %v2344 = vsub.f32 %v562, %v2343
        %2345 = vmatpush.msra.mxu0 %v2344
        %v2346 = vand.u32 %v561, 4294901760
        %v2347 = vsub.f32 %v561, %v2346
        %2348 = vmatpush.msra.mxu0 %v2347
        %v2349 = vand.u32 %v560, 4294901760
        %v2350 = vsub.f32 %v560, %v2349
        %2351 = vmatpush.msra.mxu0 %v2350
        %v2352 = vand.u32 %v559, 4294901760
        %v2353 = vsub.f32 %v559, %v2352
        %2354 = vmatpush.msra.mxu0 %v2353
        %v2355 = vand.u32 %v2259, 4294901760
        %v2356 = vsub.f32 %v2259, %v2355
        %2357 = vmatmul.f32.gmra.mxu0 %v2356
        %v2358 = vpop.f32.mrf.mxu0
        %v2359 = vadd.f32 %v2329, %v2358
        %2360 = vdwg.mxu0
        %2361 = vmatpush.msra.mxu0 0.0
        %2362 = vmatpush.msra.mxu0 0.0
        %2363 = vmatpush.msra.mxu0 0.0
        %2364 = vmatpush.msra.mxu0 0.0
        %2365 = vmatpush.msra.mxu0 0.0
        %2366 = vmatpush.msra.mxu0 0.0
        %2367 = vmatpush.msra.mxu0 0.0
        %2368 = vmatpush.msra.mxu0 0.0
        %2369 = vmatpush.msra.mxu0 0.0
        %2370 = vmatpush.msra.mxu0 0.0
        %2371 = vmatpush.msra.mxu0 0.0
        %2372 = vmatpush.msra.mxu0 0.0
        %v2373 = vand.u32 %v562, 4294901760
        %2374 = vmatpush.msra.mxu0 %v2373
        %v2375 = vand.u32 %v561, 4294901760
        %2376 = vmatpush.msra.mxu0 %v2375
        %v2377 = vand.u32 %v560, 4294901760
        %2378 = vmatpush.msra.mxu0 %v2377
        %v2379 = vand.u32 %v559, 4294901760
        %2380 = vmatpush.msra.mxu0 %v2379
        %v2381 = vand.u32 %v2259, 4294901760
        %v2382 = vsub.f32 %v2259, %v2381
        %v2383 = vand.u32 %v2382, 4294901760
        %2384 = vmatmul.f32.gmra.mxu0 %v2383
        %v2385 = vpop.f32.mrf.mxu0
        %v2386 = vadd.f32 %v2359, %v2385
        %2387 = vdwg.mxu0
        %2388 = vmatpush.msra.mxu0 0.0
        %2389 = vmatpush.msra.mxu0 0.0
        %2390 = vmatpush.msra.mxu0 0.0
        %2391 = vmatpush.msra.mxu0 0.0
        %2392 = vmatpush.msra.mxu0 0.0
        %2393 = vmatpush.msra.mxu0 0.0
        %2394 = vmatpush.msra.mxu0 0.0
        %2395 = vmatpush.msra.mxu0 0.0
        %2396 = vmatpush.msra.mxu0 0.0
        %2397 = vmatpush.msra.mxu0 0.0
        %2398 = vmatpush.msra.mxu0 0.0
        %2399 = vmatpush.msra.mxu0 0.0
        %v2400 = vand.u32 %v562, 4294901760
        %v2401 = vsub.f32 %v562, %v2400
        %v2402 = vand.u32 %v2401, 4294901760
        %2403 = vmatpush.msra.mxu0 %v2402
        %v2404 = vand.u32 %v561, 4294901760
        %v2405 = vsub.f32 %v561, %v2404
        %v2406 = vand.u32 %v2405, 4294901760
        %2407 = vmatpush.msra.mxu0 %v2406
        %v2408 = vand.u32 %v560, 4294901760
        %v2409 = vsub.f32 %v560, %v2408
        %v2410 = vand.u32 %v2409, 4294901760
        %2411 = vmatpush.msra.mxu0 %v2410
        %v2412 = vand.u32 %v559, 4294901760
        %v2413 = vsub.f32 %v559, %v2412
        %v2414 = vand.u32 %v2413, 4294901760
        %2415 = vmatpush.msra.mxu0 %v2414
        %v2416 = vand.u32 %v2259, 4294901760
        %2417 = vmatmul.f32.gmra.mxu0 %v2416
        %v2418 = vpop.f32.mrf.mxu0
        %v2419 = vadd.f32 %v2386, %v2418
        %2420 = vdwg.mxu0
        %2421 = vmatpush.msra.mxu0 0.0
        %2422 = vmatpush.msra.mxu0 0.0
        %2423 = vmatpush.msra.mxu0 0.0
        %2424 = vmatpush.msra.mxu0 0.0
        %2425 = vmatpush.msra.mxu0 0.0
        %2426 = vmatpush.msra.mxu0 0.0
        %2427 = vmatpush.msra.mxu0 0.0
        %2428 = vmatpush.msra.mxu0 0.0
        %2429 = vmatpush.msra.mxu0 0.0
        %2430 = vmatpush.msra.mxu0 0.0
        %2431 = vmatpush.msra.mxu0 0.0
        %2432 = vmatpush.msra.mxu0 0.0
        %v2433 = vand.u32 %v562, 4294901760
        %2434 = vmatpush.msra.mxu0 %v2433
        %v2435 = vand.u32 %v561, 4294901760
        %2436 = vmatpush.msra.mxu0 %v2435
        %v2437 = vand.u32 %v560, 4294901760
        %2438 = vmatpush.msra.mxu0 %v2437
        %v2439 = vand.u32 %v559, 4294901760
        %2440 = vmatpush.msra.mxu0 %v2439
        %v2441 = vand.u32 %v2259, 4294901760
        %2442 = vmatmul.f32.gmra.mxu0 %v2441
        %v2443 = vpop.f32.mrf.mxu0
        %v2444 = vadd.f32 %v2419, %v2443
        %2445 = vdwg.mxu0
        %v2447 = vsel %vm997, %v2444, 0
        %2449 = vmatpush.msra.mxu0 0.0
        %2450 = vmatpush.msra.mxu0 0.0
        %2451 = vmatpush.msra.mxu0 0.0
        %2452 = vmatpush.msra.mxu0 0.0
        %2453 = vmatpush.msra.mxu0 0.0
        %2454 = vmatpush.msra.mxu0 0.0
        %2455 = vmatpush.msra.mxu0 0.0
        %2456 = vmatpush.msra.mxu0 0.0
        %2457 = vmatpush.msra.mxu0 0.0
        %2458 = vmatpush.msra.mxu0 0.0
        %2459 = vmatpush.msra.mxu0 0.0
        %2460 = vmatpush.msra.mxu0 0.0
        %2461 = vmatpush.msra.mxu0 0.0
        %2462 = vmatpush.msra.mxu0 0.0
        %2463 = vmatpush.msra.mxu0 0.0
        %v2464 = vand.u32 %v1003, 4294901760
        %2465 = vmatpush.msra.mxu0 %v2464
        %v2466 = vand.u32 %v2447, 4294901760
        %v2467 = vsub.f32 %v2447, %v2466
        %v2468 = vand.u32 %v2467, 4294901760
        %v2469 = vsub.f32 %v2467, %v2468
        %v2470 = vand.u32 %v2469, 4294901760
        %2471 = vmatmul.f32.gmra.mxu0 %v2470
        %v2472 = vpop.f32.mrf.mxu0
        %v2473 = vadd.f32 0.0, %v2472
        %2474 = vdwg.mxu0
        %2475 = vmatpush.msra.mxu0 0.0
        %2476 = vmatpush.msra.mxu0 0.0
        %2477 = vmatpush.msra.mxu0 0.0
        %2478 = vmatpush.msra.mxu0 0.0
        %2479 = vmatpush.msra.mxu0 0.0
        %2480 = vmatpush.msra.mxu0 0.0
        %2481 = vmatpush.msra.mxu0 0.0
        %2482 = vmatpush.msra.mxu0 0.0
        %2483 = vmatpush.msra.mxu0 0.0
        %2484 = vmatpush.msra.mxu0 0.0
        %2485 = vmatpush.msra.mxu0 0.0
        %2486 = vmatpush.msra.mxu0 0.0
        %2487 = vmatpush.msra.mxu0 0.0
        %2488 = vmatpush.msra.mxu0 0.0
        %2489 = vmatpush.msra.mxu0 0.0
        %v2490 = vand.u32 %v1003, 4294901760
        %v2491 = vsub.f32 %v1003, %v2490
        %v2492 = vand.u32 %v2491, 4294901760
        %v2493 = vsub.f32 %v2491, %v2492
        %v2494 = vand.u32 %v2493, 4294901760
        %2495 = vmatpush.msra.mxu0 %v2494
        %v2496 = vand.u32 %v2447, 4294901760
        %2497 = vmatmul.f32.gmra.mxu0 %v2496
        %v2498 = vpop.f32.mrf.mxu0
        %v2499 = vadd.f32 %v2473, %v2498
        %2500 = vdwg.mxu0
        %2501 = vmatpush.msra.mxu0 0.0
        %2502 = vmatpush.msra.mxu0 0.0
        %2503 = vmatpush.msra.mxu0 0.0
        %2504 = vmatpush.msra.mxu0 0.0
        %2505 = vmatpush.msra.mxu0 0.0
        %2506 = vmatpush.msra.mxu0 0.0
        %2507 = vmatpush.msra.mxu0 0.0
        %2508 = vmatpush.msra.mxu0 0.0
        %2509 = vmatpush.msra.mxu0 0.0
        %2510 = vmatpush.msra.mxu0 0.0
        %2511 = vmatpush.msra.mxu0 0.0
        %2512 = vmatpush.msra.mxu0 0.0
        %2513 = vmatpush.msra.mxu0 0.0
        %2514 = vmatpush.msra.mxu0 0.0
        %2515 = vmatpush.msra.mxu0 0.0
        %v2516 = vand.u32 %v1003, 4294901760
        %v2517 = vsub.f32 %v1003, %v2516
        %2518 = vmatpush.msra.mxu0 %v2517
        %v2519 = vand.u32 %v2447, 4294901760
        %v2520 = vsub.f32 %v2447, %v2519
        %2521 = vmatmul.f32.gmra.mxu0 %v2520
        %v2522 = vpop.f32.mrf.mxu0
        %v2523 = vadd.f32 %v2499, %v2522
        %2524 = vdwg.mxu0
        %2525 = vmatpush.msra.mxu0 0.0
        %2526 = vmatpush.msra.mxu0 0.0
        %2527 = vmatpush.msra.mxu0 0.0
        %2528 = vmatpush.msra.mxu0 0.0
        %2529 = vmatpush.msra.mxu0 0.0
        %2530 = vmatpush.msra.mxu0 0.0
        %2531 = vmatpush.msra.mxu0 0.0
        %2532 = vmatpush.msra.mxu0 0.0
        %2533 = vmatpush.msra.mxu0 0.0
        %2534 = vmatpush.msra.mxu0 0.0
        %2535 = vmatpush.msra.mxu0 0.0
        %2536 = vmatpush.msra.mxu0 0.0
        %2537 = vmatpush.msra.mxu0 0.0
        %2538 = vmatpush.msra.mxu0 0.0
        %2539 = vmatpush.msra.mxu0 0.0
        %v2540 = vand.u32 %v1003, 4294901760
        %2541 = vmatpush.msra.mxu0 %v2540
        %v2542 = vand.u32 %v2447, 4294901760
        %v2543 = vsub.f32 %v2447, %v2542
        %v2544 = vand.u32 %v2543, 4294901760
        %2545 = vmatmul.f32.gmra.mxu0 %v2544
        %v2546 = vpop.f32.mrf.mxu0
        %v2547 = vadd.f32 %v2523, %v2546
        %2548 = vdwg.mxu0
        %2549 = vmatpush.msra.mxu0 0.0
        %2550 = vmatpush.msra.mxu0 0.0
        %2551 = vmatpush.msra.mxu0 0.0
        %2552 = vmatpush.msra.mxu0 0.0
        %2553 = vmatpush.msra.mxu0 0.0
        %2554 = vmatpush.msra.mxu0 0.0
        %2555 = vmatpush.msra.mxu0 0.0
        %2556 = vmatpush.msra.mxu0 0.0
        %2557 = vmatpush.msra.mxu0 0.0
        %2558 = vmatpush.msra.mxu0 0.0
        %2559 = vmatpush.msra.mxu0 0.0
        %2560 = vmatpush.msra.mxu0 0.0
        %2561 = vmatpush.msra.mxu0 0.0
        %2562 = vmatpush.msra.mxu0 0.0
        %2563 = vmatpush.msra.mxu0 0.0
        %v2564 = vand.u32 %v1003, 4294901760
        %v2565 = vsub.f32 %v1003, %v2564
        %v2566 = vand.u32 %v2565, 4294901760
        %2567 = vmatpush.msra.mxu0 %v2566
        %v2568 = vand.u32 %v2447, 4294901760
        %2569 = vmatmul.f32.gmra.mxu0 %v2568
        %v2570 = vpop.f32.mrf.mxu0
        %v2571 = vadd.f32 %v2547, %v2570
        %2572 = vdwg.mxu0
        %2573 = vmatpush.msra.mxu0 0.0
        %2574 = vmatpush.msra.mxu0 0.0
        %2575 = vmatpush.msra.mxu0 0.0
        %2576 = vmatpush.msra.mxu0 0.0
        %2577 = vmatpush.msra.mxu0 0.0
        %2578 = vmatpush.msra.mxu0 0.0
        %2579 = vmatpush.msra.mxu0 0.0
        %2580 = vmatpush.msra.mxu0 0.0
        %2581 = vmatpush.msra.mxu0 0.0
        %2582 = vmatpush.msra.mxu0 0.0
        %2583 = vmatpush.msra.mxu0 0.0
        %2584 = vmatpush.msra.mxu0 0.0
        %2585 = vmatpush.msra.mxu0 0.0
        %2586 = vmatpush.msra.mxu0 0.0
        %2587 = vmatpush.msra.mxu0 0.0
        %v2588 = vand.u32 %v1003, 4294901760
        %2589 = vmatpush.msra.mxu0 %v2588
        %v2590 = vand.u32 %v2447, 4294901760
        %2591 = vmatmul.f32.gmra.mxu0 %v2590
        %v2592 = vpop.f32.mrf.mxu0
        %v2593 = vadd.f32 %v2571, %v2592
        %2594 = vdwg.mxu0
        %v2595 = vmul.f32 %v2593, %v2256
        %v2596 = vadd.f32 %v2241, %v2595
        %2598 = vrot.lane.b32.xlu0 %v2249, 120
        %v2599 = vpop.permute.xlu0 %2598
        %2601 = vrot.lane.b32.xlu0 %v2249, 24
        %v2602 = vpop.permute.xlu0 %2601
        %v2604 = vsel %vm2248, %v2599, %v2602
        %2606 = vrot.lane.b32.xlu0 %v2256, 120
        %v2607 = vpop.permute.xlu0 %2606
        %2609 = vrot.lane.b32.xlu0 %v2256, 24
        %v2610 = vpop.permute.xlu0 %2609
        %v2612 = vsel %vm2248, %v2607, %v2610
        %v2613 = vmul.f32 %v1505, %v2604
        %v2615 = vsel %vm351, %v2613, 0
        %2617 = vmatpush.msra.mxu0 0.0
        %2618 = vmatpush.msra.mxu0 0.0
        %2619 = vmatpush.msra.mxu0 0.0
        %2620 = vmatpush.msra.mxu0 0.0
        %2621 = vmatpush.msra.mxu0 0.0
        %2622 = vmatpush.msra.mxu0 0.0
        %2623 = vmatpush.msra.mxu0 0.0
        %2624 = vmatpush.msra.mxu0 0.0
        %2625 = vmatpush.msra.mxu0 0.0
        %2626 = vmatpush.msra.mxu0 0.0
        %2627 = vmatpush.msra.mxu0 0.0
        %2628 = vmatpush.msra.mxu0 0.0
        %v2629 = vand.u32 %v562, 4294901760
        %2630 = vmatpush.msra.mxu0 %v2629
        %v2631 = vand.u32 %v561, 4294901760
        %2632 = vmatpush.msra.mxu0 %v2631
        %v2633 = vand.u32 %v560, 4294901760
        %2634 = vmatpush.msra.mxu0 %v2633
        %v2635 = vand.u32 %v559, 4294901760
        %2636 = vmatpush.msra.mxu0 %v2635
        %v2637 = vand.u32 %v2615, 4294901760
        %v2638 = vsub.f32 %v2615, %v2637
        %v2639 = vand.u32 %v2638, 4294901760
        %v2640 = vsub.f32 %v2638, %v2639
        %v2641 = vand.u32 %v2640, 4294901760
        %2642 = vmatmul.f32.gmra.mxu0 %v2641
        %v2643 = vpop.f32.mrf.mxu0
        %v2644 = vadd.f32 0.0, %v2643
        %2645 = vdwg.mxu0
        %2646 = vmatpush.msra.mxu0 0.0
        %2647 = vmatpush.msra.mxu0 0.0
        %2648 = vmatpush.msra.mxu0 0.0
        %2649 = vmatpush.msra.mxu0 0.0
        %2650 = vmatpush.msra.mxu0 0.0
        %2651 = vmatpush.msra.mxu0 0.0
        %2652 = vmatpush.msra.mxu0 0.0
        %2653 = vmatpush.msra.mxu0 0.0
        %2654 = vmatpush.msra.mxu0 0.0
        %2655 = vmatpush.msra.mxu0 0.0
        %2656 = vmatpush.msra.mxu0 0.0
        %2657 = vmatpush.msra.mxu0 0.0
        %v2658 = vand.u32 %v562, 4294901760
        %v2659 = vsub.f32 %v562, %v2658
        %v2660 = vand.u32 %v2659, 4294901760
        %v2661 = vsub.f32 %v2659, %v2660
        %v2662 = vand.u32 %v2661, 4294901760
        %2663 = vmatpush.msra.mxu0 %v2662
        %v2664 = vand.u32 %v561, 4294901760
        %v2665 = vsub.f32 %v561, %v2664
        %v2666 = vand.u32 %v2665, 4294901760
        %v2667 = vsub.f32 %v2665, %v2666
        %v2668 = vand.u32 %v2667, 4294901760
        %2669 = vmatpush.msra.mxu0 %v2668
        %v2670 = vand.u32 %v560, 4294901760
        %v2671 = vsub.f32 %v560, %v2670
        %v2672 = vand.u32 %v2671, 4294901760
        %v2673 = vsub.f32 %v2671, %v2672
        %v2674 = vand.u32 %v2673, 4294901760
        %2675 = vmatpush.msra.mxu0 %v2674
        %v2676 = vand.u32 %v559, 4294901760
        %v2677 = vsub.f32 %v559, %v2676
        %v2678 = vand.u32 %v2677, 4294901760
        %v2679 = vsub.f32 %v2677, %v2678
        %v2680 = vand.u32 %v2679, 4294901760
        %2681 = vmatpush.msra.mxu0 %v2680
        %v2682 = vand.u32 %v2615, 4294901760
        %2683 = vmatmul.f32.gmra.mxu0 %v2682
        %v2684 = vpop.f32.mrf.mxu0
        %v2685 = vadd.f32 %v2644, %v2684
        %2686 = vdwg.mxu0
        %2687 = vmatpush.msra.mxu0 0.0
        %2688 = vmatpush.msra.mxu0 0.0
        %2689 = vmatpush.msra.mxu0 0.0
        %2690 = vmatpush.msra.mxu0 0.0
        %2691 = vmatpush.msra.mxu0 0.0
        %2692 = vmatpush.msra.mxu0 0.0
        %2693 = vmatpush.msra.mxu0 0.0
        %2694 = vmatpush.msra.mxu0 0.0
        %2695 = vmatpush.msra.mxu0 0.0
        %2696 = vmatpush.msra.mxu0 0.0
        %2697 = vmatpush.msra.mxu0 0.0
        %2698 = vmatpush.msra.mxu0 0.0
        %v2699 = vand.u32 %v562, 4294901760
        %v2700 = vsub.f32 %v562, %v2699
        %2701 = vmatpush.msra.mxu0 %v2700
        %v2702 = vand.u32 %v561, 4294901760
        %v2703 = vsub.f32 %v561, %v2702
        %2704 = vmatpush.msra.mxu0 %v2703
        %v2705 = vand.u32 %v560, 4294901760
        %v2706 = vsub.f32 %v560, %v2705
        %2707 = vmatpush.msra.mxu0 %v2706
        %v2708 = vand.u32 %v559, 4294901760
        %v2709 = vsub.f32 %v559, %v2708
        %2710 = vmatpush.msra.mxu0 %v2709
        %v2711 = vand.u32 %v2615, 4294901760
        %v2712 = vsub.f32 %v2615, %v2711
        %2713 = vmatmul.f32.gmra.mxu0 %v2712
        %v2714 = vpop.f32.mrf.mxu0
        %v2715 = vadd.f32 %v2685, %v2714
        %2716 = vdwg.mxu0
        %2717 = vmatpush.msra.mxu0 0.0
        %2718 = vmatpush.msra.mxu0 0.0
        %2719 = vmatpush.msra.mxu0 0.0
        %2720 = vmatpush.msra.mxu0 0.0
        %2721 = vmatpush.msra.mxu0 0.0
        %2722 = vmatpush.msra.mxu0 0.0
        %2723 = vmatpush.msra.mxu0 0.0
        %2724 = vmatpush.msra.mxu0 0.0
        %2725 = vmatpush.msra.mxu0 0.0
        %2726 = vmatpush.msra.mxu0 0.0
        %2727 = vmatpush.msra.mxu0 0.0
        %2728 = vmatpush.msra.mxu0 0.0
        %v2729 = vand.u32 %v562, 4294901760
        %2730 = vmatpush.msra.mxu0 %v2729
        %v2731 = vand.u32 %v561, 4294901760
        %2732 = vmatpush.msra.mxu0 %v2731
        %v2733 = vand.u32 %v560, 4294901760
        %2734 = vmatpush.msra.mxu0 %v2733
        %v2735 = vand.u32 %v559, 4294901760
        %2736 = vmatpush.msra.mxu0 %v2735
        %v2737 = vand.u32 %v2615, 4294901760
        %v2738 = vsub.f32 %v2615, %v2737
        %v2739 = vand.u32 %v2738, 4294901760
        %2740 = vmatmul.f32.gmra.mxu0 %v2739
        %v2741 = vpop.f32.mrf.mxu0
        %v2742 = vadd.f32 %v2715, %v2741
        %2743 = vdwg.mxu0
        %2744 = vmatpush.msra.mxu0 0.0
        %2745 = vmatpush.msra.mxu0 0.0
        %2746 = vmatpush.msra.mxu0 0.0
        %2747 = vmatpush.msra.mxu0 0.0
        %2748 = vmatpush.msra.mxu0 0.0
        %2749 = vmatpush.msra.mxu0 0.0
        %2750 = vmatpush.msra.mxu0 0.0
        %2751 = vmatpush.msra.mxu0 0.0
        %2752 = vmatpush.msra.mxu0 0.0
        %2753 = vmatpush.msra.mxu0 0.0
        %2754 = vmatpush.msra.mxu0 0.0
        %2755 = vmatpush.msra.mxu0 0.0
        %v2756 = vand.u32 %v562, 4294901760
        %v2757 = vsub.f32 %v562, %v2756
        %v2758 = vand.u32 %v2757, 4294901760
        %2759 = vmatpush.msra.mxu0 %v2758
        %v2760 = vand.u32 %v561, 4294901760
        %v2761 = vsub.f32 %v561, %v2760
        %v2762 = vand.u32 %v2761, 4294901760
        %2763 = vmatpush.msra.mxu0 %v2762
        %v2764 = vand.u32 %v560, 4294901760
        %v2765 = vsub.f32 %v560, %v2764
        %v2766 = vand.u32 %v2765, 4294901760
        %2767 = vmatpush.msra.mxu0 %v2766
        %v2768 = vand.u32 %v559, 4294901760
        %v2769 = vsub.f32 %v559, %v2768
        %v2770 = vand.u32 %v2769, 4294901760
        %2771 = vmatpush.msra.mxu0 %v2770
        %v2772 = vand.u32 %v2615, 4294901760
        %2773 = vmatmul.f32.gmra.mxu0 %v2772
        %v2774 = vpop.f32.mrf.mxu0
        %v2775 = vadd.f32 %v2742, %v2774
        %2776 = vdwg.mxu0
        %2777 = vmatpush.msra.mxu0 0.0
        %2778 = vmatpush.msra.mxu0 0.0
        %2779 = vmatpush.msra.mxu0 0.0
        %2780 = vmatpush.msra.mxu0 0.0
        %2781 = vmatpush.msra.mxu0 0.0
        %2782 = vmatpush.msra.mxu0 0.0
        %2783 = vmatpush.msra.mxu0 0.0
        %2784 = vmatpush.msra.mxu0 0.0
        %2785 = vmatpush.msra.mxu0 0.0
        %2786 = vmatpush.msra.mxu0 0.0
        %2787 = vmatpush.msra.mxu0 0.0
        %2788 = vmatpush.msra.mxu0 0.0
        %v2789 = vand.u32 %v562, 4294901760
        %2790 = vmatpush.msra.mxu0 %v2789
        %v2791 = vand.u32 %v561, 4294901760
        %2792 = vmatpush.msra.mxu0 %v2791
        %v2793 = vand.u32 %v560, 4294901760
        %2794 = vmatpush.msra.mxu0 %v2793
        %v2795 = vand.u32 %v559, 4294901760
        %2796 = vmatpush.msra.mxu0 %v2795
        %v2797 = vand.u32 %v2615, 4294901760
        %2798 = vmatmul.f32.gmra.mxu0 %v2797
        %v2799 = vpop.f32.mrf.mxu0
        %v2800 = vadd.f32 %v2775, %v2799
        %2801 = vdwg.mxu0
        %v2803 = vsel %vm997, %v2800, 0
        %2805 = vmatpush.msra.mxu0 0.0
        %2806 = vmatpush.msra.mxu0 0.0
        %2807 = vmatpush.msra.mxu0 0.0
        %2808 = vmatpush.msra.mxu0 0.0
        %2809 = vmatpush.msra.mxu0 0.0
        %2810 = vmatpush.msra.mxu0 0.0
        %2811 = vmatpush.msra.mxu0 0.0
        %2812 = vmatpush.msra.mxu0 0.0
        %2813 = vmatpush.msra.mxu0 0.0
        %2814 = vmatpush.msra.mxu0 0.0
        %2815 = vmatpush.msra.mxu0 0.0
        %2816 = vmatpush.msra.mxu0 0.0
        %2817 = vmatpush.msra.mxu0 0.0
        %2818 = vmatpush.msra.mxu0 0.0
        %2819 = vmatpush.msra.mxu0 0.0
        %v2820 = vand.u32 %v1003, 4294901760
        %2821 = vmatpush.msra.mxu0 %v2820
        %v2822 = vand.u32 %v2803, 4294901760
        %v2823 = vsub.f32 %v2803, %v2822
        %v2824 = vand.u32 %v2823, 4294901760
        %v2825 = vsub.f32 %v2823, %v2824
        %v2826 = vand.u32 %v2825, 4294901760
        %2827 = vmatmul.f32.gmra.mxu0 %v2826
        %v2828 = vpop.f32.mrf.mxu0
        %v2829 = vadd.f32 0.0, %v2828
        %2830 = vdwg.mxu0
        %2831 = vmatpush.msra.mxu0 0.0
        %2832 = vmatpush.msra.mxu0 0.0
        %2833 = vmatpush.msra.mxu0 0.0
        %2834 = vmatpush.msra.mxu0 0.0
        %2835 = vmatpush.msra.mxu0 0.0
        %2836 = vmatpush.msra.mxu0 0.0
        %2837 = vmatpush.msra.mxu0 0.0
        %2838 = vmatpush.msra.mxu0 0.0
        %2839 = vmatpush.msra.mxu0 0.0
        %2840 = vmatpush.msra.mxu0 0.0
        %2841 = vmatpush.msra.mxu0 0.0
        %2842 = vmatpush.msra.mxu0 0.0
        %2843 = vmatpush.msra.mxu0 0.0
        %2844 = vmatpush.msra.mxu0 0.0
        %2845 = vmatpush.msra.mxu0 0.0
        %v2846 = vand.u32 %v1003, 4294901760
        %v2847 = vsub.f32 %v1003, %v2846
        %v2848 = vand.u32 %v2847, 4294901760
        %v2849 = vsub.f32 %v2847, %v2848
        %v2850 = vand.u32 %v2849, 4294901760
        %2851 = vmatpush.msra.mxu0 %v2850
        %v2852 = vand.u32 %v2803, 4294901760
        %2853 = vmatmul.f32.gmra.mxu0 %v2852
        %v2854 = vpop.f32.mrf.mxu0
        %v2855 = vadd.f32 %v2829, %v2854
        %2856 = vdwg.mxu0
        %2857 = vmatpush.msra.mxu0 0.0
        %2858 = vmatpush.msra.mxu0 0.0
        %2859 = vmatpush.msra.mxu0 0.0
        %2860 = vmatpush.msra.mxu0 0.0
        %2861 = vmatpush.msra.mxu0 0.0
        %2862 = vmatpush.msra.mxu0 0.0
        %2863 = vmatpush.msra.mxu0 0.0
        %2864 = vmatpush.msra.mxu0 0.0
        %2865 = vmatpush.msra.mxu0 0.0
        %2866 = vmatpush.msra.mxu0 0.0
        %2867 = vmatpush.msra.mxu0 0.0
        %2868 = vmatpush.msra.mxu0 0.0
        %2869 = vmatpush.msra.mxu0 0.0
        %2870 = vmatpush.msra.mxu0 0.0
        %2871 = vmatpush.msra.mxu0 0.0
        %v2872 = vand.u32 %v1003, 4294901760
        %v2873 = vsub.f32 %v1003, %v2872
        %2874 = vmatpush.msra.mxu0 %v2873
        %v2875 = vand.u32 %v2803, 4294901760
        %v2876 = vsub.f32 %v2803, %v2875
        %2877 = vmatmul.f32.gmra.mxu0 %v2876
        %v2878 = vpop.f32.mrf.mxu0
        %v2879 = vadd.f32 %v2855, %v2878
        %2880 = vdwg.mxu0
        %2881 = vmatpush.msra.mxu0 0.0
        %2882 = vmatpush.msra.mxu0 0.0
        %2883 = vmatpush.msra.mxu0 0.0
        %2884 = vmatpush.msra.mxu0 0.0
        %2885 = vmatpush.msra.mxu0 0.0
        %2886 = vmatpush.msra.mxu0 0.0
        %2887 = vmatpush.msra.mxu0 0.0
        %2888 = vmatpush.msra.mxu0 0.0
        %2889 = vmatpush.msra.mxu0 0.0
        %2890 = vmatpush.msra.mxu0 0.0
        %2891 = vmatpush.msra.mxu0 0.0
        %2892 = vmatpush.msra.mxu0 0.0
        %2893 = vmatpush.msra.mxu0 0.0
        %2894 = vmatpush.msra.mxu0 0.0
        %2895 = vmatpush.msra.mxu0 0.0
        %v2896 = vand.u32 %v1003, 4294901760
        %2897 = vmatpush.msra.mxu0 %v2896
        %v2898 = vand.u32 %v2803, 4294901760
        %v2899 = vsub.f32 %v2803, %v2898
        %v2900 = vand.u32 %v2899, 4294901760
        %2901 = vmatmul.f32.gmra.mxu0 %v2900
        %v2902 = vpop.f32.mrf.mxu0
        %v2903 = vadd.f32 %v2879, %v2902
        %2904 = vdwg.mxu0
        %2905 = vmatpush.msra.mxu0 0.0
        %2906 = vmatpush.msra.mxu0 0.0
        %2907 = vmatpush.msra.mxu0 0.0
        %2908 = vmatpush.msra.mxu0 0.0
        %2909 = vmatpush.msra.mxu0 0.0
        %2910 = vmatpush.msra.mxu0 0.0
        %2911 = vmatpush.msra.mxu0 0.0
        %2912 = vmatpush.msra.mxu0 0.0
        %2913 = vmatpush.msra.mxu0 0.0
        %2914 = vmatpush.msra.mxu0 0.0
        %2915 = vmatpush.msra.mxu0 0.0
        %2916 = vmatpush.msra.mxu0 0.0
        %2917 = vmatpush.msra.mxu0 0.0
        %2918 = vmatpush.msra.mxu0 0.0
        %2919 = vmatpush.msra.mxu0 0.0
        %v2920 = vand.u32 %v1003, 4294901760
        %v2921 = vsub.f32 %v1003, %v2920
        %v2922 = vand.u32 %v2921, 4294901760
        %2923 = vmatpush.msra.mxu0 %v2922
        %v2924 = vand.u32 %v2803, 4294901760
        %2925 = vmatmul.f32.gmra.mxu0 %v2924
        %v2926 = vpop.f32.mrf.mxu0
        %v2927 = vadd.f32 %v2903, %v2926
        %2928 = vdwg.mxu0
        %2929 = vmatpush.msra.mxu0 0.0
        %2930 = vmatpush.msra.mxu0 0.0
        %2931 = vmatpush.msra.mxu0 0.0
        %2932 = vmatpush.msra.mxu0 0.0
        %2933 = vmatpush.msra.mxu0 0.0
        %2934 = vmatpush.msra.mxu0 0.0
        %2935 = vmatpush.msra.mxu0 0.0
        %2936 = vmatpush.msra.mxu0 0.0
        %2937 = vmatpush.msra.mxu0 0.0
        %2938 = vmatpush.msra.mxu0 0.0
        %2939 = vmatpush.msra.mxu0 0.0
        %2940 = vmatpush.msra.mxu0 0.0
        %2941 = vmatpush.msra.mxu0 0.0
        %2942 = vmatpush.msra.mxu0 0.0
        %2943 = vmatpush.msra.mxu0 0.0
        %v2944 = vand.u32 %v1003, 4294901760
        %2945 = vmatpush.msra.mxu0 %v2944
        %v2946 = vand.u32 %v2803, 4294901760
        %2947 = vmatmul.f32.gmra.mxu0 %v2946
        %v2948 = vpop.f32.mrf.mxu0
        %v2949 = vadd.f32 %v2927, %v2948
        %2950 = vdwg.mxu0
        %v2951 = vmul.f32 %v2949, %v2612
        %v2952 = vadd.f32 %v2596, %v2951
        %2954 = vrot.lane.b32.xlu0 %v2604, 120
        %v2955 = vpop.permute.xlu0 %2954
        %2957 = vrot.lane.b32.xlu0 %v2604, 24
        %v2958 = vpop.permute.xlu0 %2957
        %v2960 = vsel %vm2248, %v2955, %v2958
        %2962 = vrot.lane.b32.xlu0 %v2612, 120
        %v2963 = vpop.permute.xlu0 %2962
        %2965 = vrot.lane.b32.xlu0 %v2612, 24
        %v2966 = vpop.permute.xlu0 %2965
        %v2968 = vsel %vm2248, %v2963, %v2966
        %v2969 = vmul.f32 %v1505, %v2960
        %v2971 = vsel %vm351, %v2969, 0
        %2973 = vmatpush.msra.mxu0 0.0
        %2974 = vmatpush.msra.mxu0 0.0
        %2975 = vmatpush.msra.mxu0 0.0
        %2976 = vmatpush.msra.mxu0 0.0
        %2977 = vmatpush.msra.mxu0 0.0
        %2978 = vmatpush.msra.mxu0 0.0
        %2979 = vmatpush.msra.mxu0 0.0
        %2980 = vmatpush.msra.mxu0 0.0
        %2981 = vmatpush.msra.mxu0 0.0
        %2982 = vmatpush.msra.mxu0 0.0
        %2983 = vmatpush.msra.mxu0 0.0
        %2984 = vmatpush.msra.mxu0 0.0
        %v2985 = vand.u32 %v562, 4294901760
        %2986 = vmatpush.msra.mxu0 %v2985
        %v2987 = vand.u32 %v561, 4294901760
        %2988 = vmatpush.msra.mxu0 %v2987
        %v2989 = vand.u32 %v560, 4294901760
        %2990 = vmatpush.msra.mxu0 %v2989
        %v2991 = vand.u32 %v559, 4294901760
        %2992 = vmatpush.msra.mxu0 %v2991
        %v2993 = vand.u32 %v2971, 4294901760
        %v2994 = vsub.f32 %v2971, %v2993
        %v2995 = vand.u32 %v2994, 4294901760
        %v2996 = vsub.f32 %v2994, %v2995
        %v2997 = vand.u32 %v2996, 4294901760
        %2998 = vmatmul.f32.gmra.mxu0 %v2997
        %v2999 = vpop.f32.mrf.mxu0
        %v3000 = vadd.f32 0.0, %v2999
        %3001 = vdwg.mxu0
        %3002 = vmatpush.msra.mxu0 0.0
        %3003 = vmatpush.msra.mxu0 0.0
        %3004 = vmatpush.msra.mxu0 0.0
        %3005 = vmatpush.msra.mxu0 0.0
        %3006 = vmatpush.msra.mxu0 0.0
        %3007 = vmatpush.msra.mxu0 0.0
        %3008 = vmatpush.msra.mxu0 0.0
        %3009 = vmatpush.msra.mxu0 0.0
        %3010 = vmatpush.msra.mxu0 0.0
        %3011 = vmatpush.msra.mxu0 0.0
        %3012 = vmatpush.msra.mxu0 0.0
        %3013 = vmatpush.msra.mxu0 0.0
        %v3014 = vand.u32 %v562, 4294901760
        %v3015 = vsub.f32 %v562, %v3014
        %v3016 = vand.u32 %v3015, 4294901760
        %v3017 = vsub.f32 %v3015, %v3016
        %v3018 = vand.u32 %v3017, 4294901760
        %3019 = vmatpush.msra.mxu0 %v3018
        %v3020 = vand.u32 %v561, 4294901760
        %v3021 = vsub.f32 %v561, %v3020
        %v3022 = vand.u32 %v3021, 4294901760
        %v3023 = vsub.f32 %v3021, %v3022
        %v3024 = vand.u32 %v3023, 4294901760
        %3025 = vmatpush.msra.mxu0 %v3024
        %v3026 = vand.u32 %v560, 4294901760
        %v3027 = vsub.f32 %v560, %v3026
        %v3028 = vand.u32 %v3027, 4294901760
        %v3029 = vsub.f32 %v3027, %v3028
        %v3030 = vand.u32 %v3029, 4294901760
        %3031 = vmatpush.msra.mxu0 %v3030
        %v3032 = vand.u32 %v559, 4294901760
        %v3033 = vsub.f32 %v559, %v3032
        %v3034 = vand.u32 %v3033, 4294901760
        %v3035 = vsub.f32 %v3033, %v3034
        %v3036 = vand.u32 %v3035, 4294901760
        %3037 = vmatpush.msra.mxu0 %v3036
        %v3038 = vand.u32 %v2971, 4294901760
        %3039 = vmatmul.f32.gmra.mxu0 %v3038
        %v3040 = vpop.f32.mrf.mxu0
        %v3041 = vadd.f32 %v3000, %v3040
        %3042 = vdwg.mxu0
        %3043 = vmatpush.msra.mxu0 0.0
        %3044 = vmatpush.msra.mxu0 0.0
        %3045 = vmatpush.msra.mxu0 0.0
        %3046 = vmatpush.msra.mxu0 0.0
        %3047 = vmatpush.msra.mxu0 0.0
        %3048 = vmatpush.msra.mxu0 0.0
        %3049 = vmatpush.msra.mxu0 0.0
        %3050 = vmatpush.msra.mxu0 0.0
        %3051 = vmatpush.msra.mxu0 0.0
        %3052 = vmatpush.msra.mxu0 0.0
        %3053 = vmatpush.msra.mxu0 0.0
        %3054 = vmatpush.msra.mxu0 0.0
        %v3055 = vand.u32 %v562, 4294901760
        %v3056 = vsub.f32 %v562, %v3055
        %3057 = vmatpush.msra.mxu0 %v3056
        %v3058 = vand.u32 %v561, 4294901760
        %v3059 = vsub.f32 %v561, %v3058
        %3060 = vmatpush.msra.mxu0 %v3059
        %v3061 = vand.u32 %v560, 4294901760
        %v3062 = vsub.f32 %v560, %v3061
        %3063 = vmatpush.msra.mxu0 %v3062
        %v3064 = vand.u32 %v559, 4294901760
        %v3065 = vsub.f32 %v559, %v3064
        %3066 = vmatpush.msra.mxu0 %v3065
        %v3067 = vand.u32 %v2971, 4294901760
        %v3068 = vsub.f32 %v2971, %v3067
        %3069 = vmatmul.f32.gmra.mxu0 %v3068
        %v3070 = vpop.f32.mrf.mxu0
        %v3071 = vadd.f32 %v3041, %v3070
        %3072 = vdwg.mxu0
        %3073 = vmatpush.msra.mxu0 0.0
        %3074 = vmatpush.msra.mxu0 0.0
        %3075 = vmatpush.msra.mxu0 0.0
        %3076 = vmatpush.msra.mxu0 0.0
        %3077 = vmatpush.msra.mxu0 0.0
        %3078 = vmatpush.msra.mxu0 0.0
        %3079 = vmatpush.msra.mxu0 0.0
        %3080 = vmatpush.msra.mxu0 0.0
        %3081 = vmatpush.msra.mxu0 0.0
        %3082 = vmatpush.msra.mxu0 0.0
        %3083 = vmatpush.msra.mxu0 0.0
        %3084 = vmatpush.msra.mxu0 0.0
        %v3085 = vand.u32 %v562, 4294901760
        %3086 = vmatpush.msra.mxu0 %v3085
        %v3087 = vand.u32 %v561, 4294901760
        %3088 = vmatpush.msra.mxu0 %v3087
        %v3089 = vand.u32 %v560, 4294901760
        %3090 = vmatpush.msra.mxu0 %v3089
        %v3091 = vand.u32 %v559, 4294901760
        %3092 = vmatpush.msra.mxu0 %v3091
        %v3093 = vand.u32 %v2971, 4294901760
        %v3094 = vsub.f32 %v2971, %v3093
        %v3095 = vand.u32 %v3094, 4294901760
        %3096 = vmatmul.f32.gmra.mxu0 %v3095
        %v3097 = vpop.f32.mrf.mxu0
        %v3098 = vadd.f32 %v3071, %v3097
        %3099 = vdwg.mxu0
        %3100 = vmatpush.msra.mxu0 0.0
        %3101 = vmatpush.msra.mxu0 0.0
        %3102 = vmatpush.msra.mxu0 0.0
        %3103 = vmatpush.msra.mxu0 0.0
        %3104 = vmatpush.msra.mxu0 0.0
        %3105 = vmatpush.msra.mxu0 0.0
        %3106 = vmatpush.msra.mxu0 0.0
        %3107 = vmatpush.msra.mxu0 0.0
        %3108 = vmatpush.msra.mxu0 0.0
        %3109 = vmatpush.msra.mxu0 0.0
        %3110 = vmatpush.msra.mxu0 0.0
        %3111 = vmatpush.msra.mxu0 0.0
        %v3112 = vand.u32 %v562, 4294901760
        %v3113 = vsub.f32 %v562, %v3112
        %v3114 = vand.u32 %v3113, 4294901760
        %3115 = vmatpush.msra.mxu0 %v3114
        %v3116 = vand.u32 %v561, 4294901760
        %v3117 = vsub.f32 %v561, %v3116
        %v3118 = vand.u32 %v3117, 4294901760
        %3119 = vmatpush.msra.mxu0 %v3118
        %v3120 = vand.u32 %v560, 4294901760
        %v3121 = vsub.f32 %v560, %v3120
        %v3122 = vand.u32 %v3121, 4294901760
        %3123 = vmatpush.msra.mxu0 %v3122
        %v3124 = vand.u32 %v559, 4294901760
        %v3125 = vsub.f32 %v559, %v3124
        %v3126 = vand.u32 %v3125, 4294901760
        %3127 = vmatpush.msra.mxu0 %v3126
        %v3128 = vand.u32 %v2971, 4294901760
        %3129 = vmatmul.f32.gmra.mxu0 %v3128
        %v3130 = vpop.f32.mrf.mxu0
        %v3131 = vadd.f32 %v3098, %v3130
        %3132 = vdwg.mxu0
        %3133 = vmatpush.msra.mxu0 0.0
        %3134 = vmatpush.msra.mxu0 0.0
        %3135 = vmatpush.msra.mxu0 0.0
        %3136 = vmatpush.msra.mxu0 0.0
        %3137 = vmatpush.msra.mxu0 0.0
        %3138 = vmatpush.msra.mxu0 0.0
        %3139 = vmatpush.msra.mxu0 0.0
        %3140 = vmatpush.msra.mxu0 0.0
        %3141 = vmatpush.msra.mxu0 0.0
        %3142 = vmatpush.msra.mxu0 0.0
        %3143 = vmatpush.msra.mxu0 0.0
        %3144 = vmatpush.msra.mxu0 0.0
        %v3145 = vand.u32 %v562, 4294901760
        %3146 = vmatpush.msra.mxu0 %v3145
        %v3147 = vand.u32 %v561, 4294901760
        %3148 = vmatpush.msra.mxu0 %v3147
        %v3149 = vand.u32 %v560, 4294901760
        %3150 = vmatpush.msra.mxu0 %v3149
        %v3151 = vand.u32 %v559, 4294901760
        %3152 = vmatpush.msra.mxu0 %v3151
        %v3153 = vand.u32 %v2971, 4294901760
        %3154 = vmatmul.f32.gmra.mxu0 %v3153
        %v3155 = vpop.f32.mrf.mxu0
        %v3156 = vadd.f32 %v3131, %v3155
        %3157 = vdwg.mxu0
        %v3159 = vsel %vm997, %v3156, 0
        %3161 = vmatpush.msra.mxu0 0.0
        %3162 = vmatpush.msra.mxu0 0.0
        %3163 = vmatpush.msra.mxu0 0.0
        %3164 = vmatpush.msra.mxu0 0.0
        %3165 = vmatpush.msra.mxu0 0.0
        %3166 = vmatpush.msra.mxu0 0.0
        %3167 = vmatpush.msra.mxu0 0.0
        %3168 = vmatpush.msra.mxu0 0.0
        %3169 = vmatpush.msra.mxu0 0.0
        %3170 = vmatpush.msra.mxu0 0.0
        %3171 = vmatpush.msra.mxu0 0.0
        %3172 = vmatpush.msra.mxu0 0.0
        %3173 = vmatpush.msra.mxu0 0.0
        %3174 = vmatpush.msra.mxu0 0.0
        %3175 = vmatpush.msra.mxu0 0.0
        %v3176 = vand.u32 %v1003, 4294901760
        %3177 = vmatpush.msra.mxu0 %v3176
        %v3178 = vand.u32 %v3159, 4294901760
        %v3179 = vsub.f32 %v3159, %v3178
        %v3180 = vand.u32 %v3179, 4294901760
        %v3181 = vsub.f32 %v3179, %v3180
        %v3182 = vand.u32 %v3181, 4294901760
        %3183 = vmatmul.f32.gmra.mxu0 %v3182
        %v3184 = vpop.f32.mrf.mxu0
        %v3185 = vadd.f32 0.0, %v3184
        %3186 = vdwg.mxu0
        %3187 = vmatpush.msra.mxu0 0.0
        %3188 = vmatpush.msra.mxu0 0.0
        %3189 = vmatpush.msra.mxu0 0.0
        %3190 = vmatpush.msra.mxu0 0.0
        %3191 = vmatpush.msra.mxu0 0.0
        %3192 = vmatpush.msra.mxu0 0.0
        %3193 = vmatpush.msra.mxu0 0.0
        %3194 = vmatpush.msra.mxu0 0.0
        %3195 = vmatpush.msra.mxu0 0.0
        %3196 = vmatpush.msra.mxu0 0.0
        %3197 = vmatpush.msra.mxu0 0.0
        %3198 = vmatpush.msra.mxu0 0.0
        %3199 = vmatpush.msra.mxu0 0.0
        %3200 = vmatpush.msra.mxu0 0.0
        %3201 = vmatpush.msra.mxu0 0.0
        %v3202 = vand.u32 %v1003, 4294901760
        %v3203 = vsub.f32 %v1003, %v3202
        %v3204 = vand.u32 %v3203, 4294901760
        %v3205 = vsub.f32 %v3203, %v3204
        %v3206 = vand.u32 %v3205, 4294901760
        %3207 = vmatpush.msra.mxu0 %v3206
        %v3208 = vand.u32 %v3159, 4294901760
        %3209 = vmatmul.f32.gmra.mxu0 %v3208
        %v3210 = vpop.f32.mrf.mxu0
        %v3211 = vadd.f32 %v3185, %v3210
        %3212 = vdwg.mxu0
        %3213 = vmatpush.msra.mxu0 0.0
        %3214 = vmatpush.msra.mxu0 0.0
        %3215 = vmatpush.msra.mxu0 0.0
        %3216 = vmatpush.msra.mxu0 0.0
        %3217 = vmatpush.msra.mxu0 0.0
        %3218 = vmatpush.msra.mxu0 0.0
        %3219 = vmatpush.msra.mxu0 0.0
        %3220 = vmatpush.msra.mxu0 0.0
        %3221 = vmatpush.msra.mxu0 0.0
        %3222 = vmatpush.msra.mxu0 0.0
        %3223 = vmatpush.msra.mxu0 0.0
        %3224 = vmatpush.msra.mxu0 0.0
        %3225 = vmatpush.msra.mxu0 0.0
        %3226 = vmatpush.msra.mxu0 0.0
        %3227 = vmatpush.msra.mxu0 0.0
        %v3228 = vand.u32 %v1003, 4294901760
        %v3229 = vsub.f32 %v1003, %v3228
        %3230 = vmatpush.msra.mxu0 %v3229
        %v3231 = vand.u32 %v3159, 4294901760
        %v3232 = vsub.f32 %v3159, %v3231
        %3233 = vmatmul.f32.gmra.mxu0 %v3232
        %v3234 = vpop.f32.mrf.mxu0
        %v3235 = vadd.f32 %v3211, %v3234
        %3236 = vdwg.mxu0
        %3237 = vmatpush.msra.mxu0 0.0
        %3238 = vmatpush.msra.mxu0 0.0
        %3239 = vmatpush.msra.mxu0 0.0
        %3240 = vmatpush.msra.mxu0 0.0
        %3241 = vmatpush.msra.mxu0 0.0
        %3242 = vmatpush.msra.mxu0 0.0
        %3243 = vmatpush.msra.mxu0 0.0
        %3244 = vmatpush.msra.mxu0 0.0
        %3245 = vmatpush.msra.mxu0 0.0
        %3246 = vmatpush.msra.mxu0 0.0
        %3247 = vmatpush.msra.mxu0 0.0
        %3248 = vmatpush.msra.mxu0 0.0
        %3249 = vmatpush.msra.mxu0 0.0
        %3250 = vmatpush.msra.mxu0 0.0
        %3251 = vmatpush.msra.mxu0 0.0
        %v3252 = vand.u32 %v1003, 4294901760
        %3253 = vmatpush.msra.mxu0 %v3252
        %v3254 = vand.u32 %v3159, 4294901760
        %v3255 = vsub.f32 %v3159, %v3254
        %v3256 = vand.u32 %v3255, 4294901760
        %3257 = vmatmul.f32.gmra.mxu0 %v3256
        %v3258 = vpop.f32.mrf.mxu0
        %v3259 = vadd.f32 %v3235, %v3258
        %3260 = vdwg.mxu0
        %3261 = vmatpush.msra.mxu0 0.0
        %3262 = vmatpush.msra.mxu0 0.0
        %3263 = vmatpush.msra.mxu0 0.0
        %3264 = vmatpush.msra.mxu0 0.0
        %3265 = vmatpush.msra.mxu0 0.0
        %3266 = vmatpush.msra.mxu0 0.0
        %3267 = vmatpush.msra.mxu0 0.0
        %3268 = vmatpush.msra.mxu0 0.0
        %3269 = vmatpush.msra.mxu0 0.0
        %3270 = vmatpush.msra.mxu0 0.0
        %3271 = vmatpush.msra.mxu0 0.0
        %3272 = vmatpush.msra.mxu0 0.0
        %3273 = vmatpush.msra.mxu0 0.0
        %3274 = vmatpush.msra.mxu0 0.0
        %3275 = vmatpush.msra.mxu0 0.0
        %v3276 = vand.u32 %v1003, 4294901760
        %v3277 = vsub.f32 %v1003, %v3276
        %v3278 = vand.u32 %v3277, 4294901760
        %3279 = vmatpush.msra.mxu0 %v3278
        %v3280 = vand.u32 %v3159, 4294901760
        %3281 = vmatmul.f32.gmra.mxu0 %v3280
        %v3282 = vpop.f32.mrf.mxu0
        %v3283 = vadd.f32 %v3259, %v3282
        %3284 = vdwg.mxu0
        %3285 = vmatpush.msra.mxu0 0.0
        %3286 = vmatpush.msra.mxu0 0.0
        %3287 = vmatpush.msra.mxu0 0.0
        %3288 = vmatpush.msra.mxu0 0.0
        %3289 = vmatpush.msra.mxu0 0.0
        %3290 = vmatpush.msra.mxu0 0.0
        %3291 = vmatpush.msra.mxu0 0.0
        %3292 = vmatpush.msra.mxu0 0.0
        %3293 = vmatpush.msra.mxu0 0.0
        %3294 = vmatpush.msra.mxu0 0.0
        %3295 = vmatpush.msra.mxu0 0.0
        %3296 = vmatpush.msra.mxu0 0.0
        %3297 = vmatpush.msra.mxu0 0.0
        %3298 = vmatpush.msra.mxu0 0.0
        %3299 = vmatpush.msra.mxu0 0.0
        %v3300 = vand.u32 %v1003, 4294901760
        %3301 = vmatpush.msra.mxu0 %v3300
        %v3302 = vand.u32 %v3159, 4294901760
        %3303 = vmatmul.f32.gmra.mxu0 %v3302
        %v3304 = vpop.f32.mrf.mxu0
        %v3305 = vadd.f32 %v3283, %v3304
        %3306 = vdwg.mxu0
        %v3307 = vmul.f32 %v3305, %v2968
        %v3308 = vadd.f32 %v2952, %v3307
        %v3309 = vxor.u32 %v1354, 2147483648
        %v3310 = vmul.f32 %v3309, 1.442695
        %v3311 = vpow.pop %v3310
        %v3312 = vadd.f32 %v3311, 1.0
        %v3313 = vrcp.pop %v3312
        %v3314 = vmul.f32 %v3312, %v3313
        %v3315 = vsub.f32 1.0, %v3314
        %v3316 = vmul.f32 %v3313, %v3315
        %v3317 = vadd.f32 %v3313, %v3316
        %vm3318 = vweird.f32 %v3312
        %vm3319 = vweird.f32 %v3313
        %vm3320 = vmor %vm3318, %vm3319
        %v3321 = vsel %vm3320, %v3313, %v3317
        %v3322 = vand.u32 2147483647, %v3312
        %vm3323 = vcmp.eq.f32.partialorder %v3322, 8.507059e+37
        %v3324 = vand.u32 %v3312, 2147483648
        %v3325 = vor.u32 1.1754944e-38, %v3324
        %v3326 = vsel %vm3323, %v3325, %v3321
        %v3327 = vmul.f32 1.0, %v3326
        %v3329 = vsel %vm997, %v3327, 0
        %3331 = vmatpush.msra.mxu0 0.0
        %3332 = vmatpush.msra.mxu0 0.0
        %3333 = vmatpush.msra.mxu0 0.0
        %3334 = vmatpush.msra.mxu0 0.0
        %3335 = vmatpush.msra.mxu0 0.0
        %3336 = vmatpush.msra.mxu0 0.0
        %3337 = vmatpush.msra.mxu0 0.0
        %3338 = vmatpush.msra.mxu0 0.0
        %3339 = vmatpush.msra.mxu0 0.0
        %3340 = vmatpush.msra.mxu0 0.0
        %3341 = vmatpush.msra.mxu0 0.0
        %3342 = vmatpush.msra.mxu0 0.0
        %3343 = vmatpush.msra.mxu0 0.0
        %3344 = vmatpush.msra.mxu0 0.0
        %3345 = vmatpush.msra.mxu0 0.0
        %v3346 = vand.u32 %v1003, 4294901760
        %3347 = vmatpush.msra.mxu0 %v3346
        %v3348 = vand.u32 %v3329, 4294901760
        %v3349 = vsub.f32 %v3329, %v3348
        %v3350 = vand.u32 %v3349, 4294901760
        %v3351 = vsub.f32 %v3349, %v3350
        %v3352 = vand.u32 %v3351, 4294901760
        %3353 = vmatmul.f32.gmra.mxu0 %v3352
        %v3354 = vpop.f32.mrf.mxu0
        %v3355 = vadd.f32 0.0, %v3354
        %3356 = vdwg.mxu0
        %3357 = vmatpush.msra.mxu0 0.0
        %3358 = vmatpush.msra.mxu0 0.0
        %3359 = vmatpush.msra.mxu0 0.0
        %3360 = vmatpush.msra.mxu0 0.0
        %3361 = vmatpush.msra.mxu0 0.0
        %3362 = vmatpush.msra.mxu0 0.0
        %3363 = vmatpush.msra.mxu0 0.0
        %3364 = vmatpush.msra.mxu0 0.0
        %3365 = vmatpush.msra.mxu0 0.0
        %3366 = vmatpush.msra.mxu0 0.0
        %3367 = vmatpush.msra.mxu0 0.0
        %3368 = vmatpush.msra.mxu0 0.0
        %3369 = vmatpush.msra.mxu0 0.0
        %3370 = vmatpush.msra.mxu0 0.0
        %3371 = vmatpush.msra.mxu0 0.0
        %v3372 = vand.u32 %v1003, 4294901760
        %v3373 = vsub.f32 %v1003, %v3372
        %v3374 = vand.u32 %v3373, 4294901760
        %v3375 = vsub.f32 %v3373, %v3374
        %v3376 = vand.u32 %v3375, 4294901760
        %3377 = vmatpush.msra.mxu0 %v3376
        %v3378 = vand.u32 %v3329, 4294901760
        %3379 = vmatmul.f32.gmra.mxu0 %v3378
        %v3380 = vpop.f32.mrf.mxu0
        %v3381 = vadd.f32 %v3355, %v3380
        %3382 = vdwg.mxu0
        %3383 = vmatpush.msra.mxu0 0.0
        %3384 = vmatpush.msra.mxu0 0.0
        %3385 = vmatpush.msra.mxu0 0.0
        %3386 = vmatpush.msra.mxu0 0.0
        %3387 = vmatpush.msra.mxu0 0.0
        %3388 = vmatpush.msra.mxu0 0.0
        %3389 = vmatpush.msra.mxu0 0.0
        %3390 = vmatpush.msra.mxu0 0.0
        %3391 = vmatpush.msra.mxu0 0.0
        %3392 = vmatpush.msra.mxu0 0.0
        %3393 = vmatpush.msra.mxu0 0.0
        %3394 = vmatpush.msra.mxu0 0.0
        %3395 = vmatpush.msra.mxu0 0.0
        %3396 = vmatpush.msra.mxu0 0.0
        %3397 = vmatpush.msra.mxu0 0.0
        %v3398 = vand.u32 %v1003, 4294901760
        %v3399 = vsub.f32 %v1003, %v3398
        %3400 = vmatpush.msra.mxu0 %v3399
        %v3401 = vand.u32 %v3329, 4294901760
        %v3402 = vsub.f32 %v3329, %v3401
        %3403 = vmatmul.f32.gmra.mxu0 %v3402
        %v3404 = vpop.f32.mrf.mxu0
        %v3405 = vadd.f32 %v3381, %v3404
        %3406 = vdwg.mxu0
        %3407 = vmatpush.msra.mxu0 0.0
        %3408 = vmatpush.msra.mxu0 0.0
        %3409 = vmatpush.msra.mxu0 0.0
        %3410 = vmatpush.msra.mxu0 0.0
        %3411 = vmatpush.msra.mxu0 0.0
        %3412 = vmatpush.msra.mxu0 0.0
        %3413 = vmatpush.msra.mxu0 0.0
        %3414 = vmatpush.msra.mxu0 0.0
        %3415 = vmatpush.msra.mxu0 0.0
        %3416 = vmatpush.msra.mxu0 0.0
        %3417 = vmatpush.msra.mxu0 0.0
        %3418 = vmatpush.msra.mxu0 0.0
        %3419 = vmatpush.msra.mxu0 0.0
        %3420 = vmatpush.msra.mxu0 0.0
        %3421 = vmatpush.msra.mxu0 0.0
        %v3422 = vand.u32 %v1003, 4294901760
        %3423 = vmatpush.msra.mxu0 %v3422
        %v3424 = vand.u32 %v3329, 4294901760
        %v3425 = vsub.f32 %v3329, %v3424
        %v3426 = vand.u32 %v3425, 4294901760
        %3427 = vmatmul.f32.gmra.mxu0 %v3426
        %v3428 = vpop.f32.mrf.mxu0
        %v3429 = vadd.f32 %v3405, %v3428
        %3430 = vdwg.mxu0
        %3431 = vmatpush.msra.mxu0 0.0
        %3432 = vmatpush.msra.mxu0 0.0
        %3433 = vmatpush.msra.mxu0 0.0
        %3434 = vmatpush.msra.mxu0 0.0
        %3435 = vmatpush.msra.mxu0 0.0
        %3436 = vmatpush.msra.mxu0 0.0
        %3437 = vmatpush.msra.mxu0 0.0
        %3438 = vmatpush.msra.mxu0 0.0
        %3439 = vmatpush.msra.mxu0 0.0
        %3440 = vmatpush.msra.mxu0 0.0
        %3441 = vmatpush.msra.mxu0 0.0
        %3442 = vmatpush.msra.mxu0 0.0
        %3443 = vmatpush.msra.mxu0 0.0
        %3444 = vmatpush.msra.mxu0 0.0
        %3445 = vmatpush.msra.mxu0 0.0
        %v3446 = vand.u32 %v1003, 4294901760
        %v3447 = vsub.f32 %v1003, %v3446
        %v3448 = vand.u32 %v3447, 4294901760
        %3449 = vmatpush.msra.mxu0 %v3448
        %v3450 = vand.u32 %v3329, 4294901760
        %3451 = vmatmul.f32.gmra.mxu0 %v3450
        %v3452 = vpop.f32.mrf.mxu0
        %v3453 = vadd.f32 %v3429, %v3452
        %3454 = vdwg.mxu0
        %3455 = vmatpush.msra.mxu0 0.0
        %3456 = vmatpush.msra.mxu0 0.0
        %3457 = vmatpush.msra.mxu0 0.0
        %3458 = vmatpush.msra.mxu0 0.0
        %3459 = vmatpush.msra.mxu0 0.0
        %3460 = vmatpush.msra.mxu0 0.0
        %3461 = vmatpush.msra.mxu0 0.0
        %3462 = vmatpush.msra.mxu0 0.0
        %3463 = vmatpush.msra.mxu0 0.0
        %3464 = vmatpush.msra.mxu0 0.0
        %3465 = vmatpush.msra.mxu0 0.0
        %3466 = vmatpush.msra.mxu0 0.0
        %3467 = vmatpush.msra.mxu0 0.0
        %3468 = vmatpush.msra.mxu0 0.0
        %3469 = vmatpush.msra.mxu0 0.0
        %v3470 = vand.u32 %v1003, 4294901760
        %3471 = vmatpush.msra.mxu0 %v3470
        %v3472 = vand.u32 %v3329, 4294901760
        %3473 = vmatmul.f32.gmra.mxu0 %v3472
        %v3474 = vpop.f32.mrf.mxu0
        %v3475 = vadd.f32 %v3453, %v3474
        %3476 = vdwg.mxu0
        %v3477 = vmul.f32 %v3308, %v3475
        %v3478 = vld [vmem:[#allocation7] sm:$0xff]
        %v3479 = vld [vmem:[#allocation7 + $0x8] sm:$0xff]
        %v3480 = vld [vmem:[#allocation7 + $0x10] sm:$0xff]
        %v3481 = vld [vmem:[#allocation7 + $0x18] sm:$0xff]
        %v3482 = vld [vmem:[#allocation8] sm:$0x1]
        %v3484 = vperm.slane %v3482, 0
        %v3487 = vsel %vm351, %v3477, 0
        %3489 = vmatpush.msra.mxu0 0.0
        %3490 = vmatpush.msra.mxu0 0.0
        %3491 = vmatpush.msra.mxu0 0.0
        %3492 = vmatpush.msra.mxu0 0.0
        %3493 = vmatpush.msra.mxu0 0.0
        %3494 = vmatpush.msra.mxu0 0.0
        %3495 = vmatpush.msra.mxu0 0.0
        %3496 = vmatpush.msra.mxu0 0.0
        %3497 = vmatpush.msra.mxu0 0.0
        %3498 = vmatpush.msra.mxu0 0.0
        %3499 = vmatpush.msra.mxu0 0.0
        %3500 = vmatpush.msra.mxu0 0.0
        %v3501 = vand.u32 %v3481, 4294901760
        %3502 = vmatpush.msra.mxu0 %v3501
        %v3503 = vand.u32 %v3480, 4294901760
        %3504 = vmatpush.msra.mxu0 %v3503
        %v3505 = vand.u32 %v3479, 4294901760
        %3506 = vmatpush.msra.mxu0 %v3505
        %v3507 = vand.u32 %v3478, 4294901760
        %3508 = vmatpush.msra.mxu0 %v3507
        %v3509 = vand.u32 %v3487, 4294901760
        %v3510 = vsub.f32 %v3487, %v3509
        %v3511 = vand.u32 %v3510, 4294901760
        %v3512 = vsub.f32 %v3510, %v3511
        %v3513 = vand.u32 %v3512, 4294901760
        %3514 = vmatmul.f32.gmra.mxu0 %v3513
        %v3515 = vpop.f32.mrf.mxu0
        %v3516 = vadd.f32 %v3484, %v3515
        %3517 = vdwg.mxu0
        %3518 = vmatpush.msra.mxu0 0.0
        %3519 = vmatpush.msra.mxu0 0.0
        %3520 = vmatpush.msra.mxu0 0.0
        %3521 = vmatpush.msra.mxu0 0.0
        %3522 = vmatpush.msra.mxu0 0.0
        %3523 = vmatpush.msra.mxu0 0.0
        %3524 = vmatpush.msra.mxu0 0.0
        %3525 = vmatpush.msra.mxu0 0.0
        %3526 = vmatpush.msra.mxu0 0.0
        %3527 = vmatpush.msra.mxu0 0.0
        %3528 = vmatpush.msra.mxu0 0.0
        %3529 = vmatpush.msra.mxu0 0.0
        %v3530 = vand.u32 %v3481, 4294901760
        %v3531 = vsub.f32 %v3481, %v3530
        %v3532 = vand.u32 %v3531, 4294901760
        %v3533 = vsub.f32 %v3531, %v3532
        %v3534 = vand.u32 %v3533, 4294901760
        %3535 = vmatpush.msra.mxu0 %v3534
        %v3536 = vand.u32 %v3480, 4294901760
        %v3537 = vsub.f32 %v3480, %v3536
        %v3538 = vand.u32 %v3537, 4294901760
        %v3539 = vsub.f32 %v3537, %v3538
        %v3540 = vand.u32 %v3539, 4294901760
        %3541 = vmatpush.msra.mxu0 %v3540
        %v3542 = vand.u32 %v3479, 4294901760
        %v3543 = vsub.f32 %v3479, %v3542
        %v3544 = vand.u32 %v3543, 4294901760
        %v3545 = vsub.f32 %v3543, %v3544
        %v3546 = vand.u32 %v3545, 4294901760
        %3547 = vmatpush.msra.mxu0 %v3546
        %v3548 = vand.u32 %v3478, 4294901760
        %v3549 = vsub.f32 %v3478, %v3548
        %v3550 = vand.u32 %v3549, 4294901760
        %v3551 = vsub.f32 %v3549, %v3550
        %v3552 = vand.u32 %v3551, 4294901760
        %3553 = vmatpush.msra.mxu0 %v3552
        %v3554 = vand.u32 %v3487, 4294901760
        %3555 = vmatmul.f32.gmra.mxu0 %v3554
        %v3556 = vpop.f32.mrf.mxu0
        %v3557 = vadd.f32 %v3516, %v3556
        %3558 = vdwg.mxu0
        %3559 = vmatpush.msra.mxu0 0.0
        %3560 = vmatpush.msra.mxu0 0.0
        %3561 = vmatpush.msra.mxu0 0.0
        %3562 = vmatpush.msra.mxu0 0.0
        %3563 = vmatpush.msra.mxu0 0.0
        %3564 = vmatpush.msra.mxu0 0.0
        %3565 = vmatpush.msra.mxu0 0.0
        %3566 = vmatpush.msra.mxu0 0.0
        %3567 = vmatpush.msra.mxu0 0.0
        %3568 = vmatpush.msra.mxu0 0.0
        %3569 = vmatpush.msra.mxu0 0.0
        %3570 = vmatpush.msra.mxu0 0.0
        %v3571 = vand.u32 %v3481, 4294901760
        %v3572 = vsub.f32 %v3481, %v3571
        %3573 = vmatpush.msra.mxu0 %v3572
        %v3574 = vand.u32 %v3480, 4294901760
        %v3575 = vsub.f32 %v3480, %v3574
        %3576 = vmatpush.msra.mxu0 %v3575
        %v3577 = vand.u32 %v3479, 4294901760
        %v3578 = vsub.f32 %v3479, %v3577
        %3579 = vmatpush.msra.mxu0 %v3578
        %v3580 = vand.u32 %v3478, 4294901760
        %v3581 = vsub.f32 %v3478, %v3580
        %3582 = vmatpush.msra.mxu0 %v3581
        %v3583 = vand.u32 %v3487, 4294901760
        %v3584 = vsub.f32 %v3487, %v3583
        %3585 = vmatmul.f32.gmra.mxu0 %v3584
        %v3586 = vpop.f32.mrf.mxu0
        %v3587 = vadd.f32 %v3557, %v3586
        %3588 = vdwg.mxu0
        %3589 = vmatpush.msra.mxu0 0.0
        %3590 = vmatpush.msra.mxu0 0.0
        %3591 = vmatpush.msra.mxu0 0.0
        %3592 = vmatpush.msra.mxu0 0.0
        %3593 = vmatpush.msra.mxu0 0.0
        %3594 = vmatpush.msra.mxu0 0.0
        %3595 = vmatpush.msra.mxu0 0.0
        %3596 = vmatpush.msra.mxu0 0.0
        %3597 = vmatpush.msra.mxu0 0.0
        %3598 = vmatpush.msra.mxu0 0.0
        %3599 = vmatpush.msra.mxu0 0.0
        %3600 = vmatpush.msra.mxu0 0.0
        %v3601 = vand.u32 %v3481, 4294901760
        %3602 = vmatpush.msra.mxu0 %v3601
        %v3603 = vand.u32 %v3480, 4294901760
        %3604 = vmatpush.msra.mxu0 %v3603
        %v3605 = vand.u32 %v3479, 4294901760
        %3606 = vmatpush.msra.mxu0 %v3605
        %v3607 = vand.u32 %v3478, 4294901760
        %3608 = vmatpush.msra.mxu0 %v3607
        %v3609 = vand.u32 %v3487, 4294901760
        %v3610 = vsub.f32 %v3487, %v3609
        %v3611 = vand.u32 %v3610, 4294901760
        %3612 = vmatmul.f32.gmra.mxu0 %v3611
        %v3613 = vpop.f32.mrf.mxu0
        %v3614 = vadd.f32 %v3587, %v3613
        %3615 = vdwg.mxu0
        %3616 = vmatpush.msra.mxu0 0.0
        %3617 = vmatpush.msra.mxu0 0.0
        %3618 = vmatpush.msra.mxu0 0.0
        %3619 = vmatpush.msra.mxu0 0.0
        %3620 = vmatpush.msra.mxu0 0.0
        %3621 = vmatpush.msra.mxu0 0.0
        %3622 = vmatpush.msra.mxu0 0.0
        %3623 = vmatpush.msra.mxu0 0.0
        %3624 = vmatpush.msra.mxu0 0.0
        %3625 = vmatpush.msra.mxu0 0.0
        %3626 = vmatpush.msra.mxu0 0.0
        %3627 = vmatpush.msra.mxu0 0.0
        %v3628 = vand.u32 %v3481, 4294901760
        %v3629 = vsub.f32 %v3481, %v3628
        %v3630 = vand.u32 %v3629, 4294901760
        %3631 = vmatpush.msra.mxu0 %v3630
        %v3632 = vand.u32 %v3480, 4294901760
        %v3633 = vsub.f32 %v3480, %v3632
        %v3634 = vand.u32 %v3633, 4294901760
        %3635 = vmatpush.msra.mxu0 %v3634
        %v3636 = vand.u32 %v3479, 4294901760
        %v3637 = vsub.f32 %v3479, %v3636
        %v3638 = vand.u32 %v3637, 4294901760
        %3639 = vmatpush.msra.mxu0 %v3638
        %v3640 = vand.u32 %v3478, 4294901760
        %v3641 = vsub.f32 %v3478, %v3640
        %v3642 = vand.u32 %v3641, 4294901760
        %3643 = vmatpush.msra.mxu0 %v3642
        %v3644 = vand.u32 %v3487, 4294901760
        %3645 = vmatmul.f32.gmra.mxu0 %v3644
        %v3646 = vpop.f32.mrf.mxu0
        %v3647 = vadd.f32 %v3614, %v3646
        %3648 = vdwg.mxu0
        %3649 = vmatpush.msra.mxu0 0.0
        %3650 = vmatpush.msra.mxu0 0.0
        %3651 = vmatpush.msra.mxu0 0.0
        %3652 = vmatpush.msra.mxu0 0.0
        %3653 = vmatpush.msra.mxu0 0.0
        %3654 = vmatpush.msra.mxu0 0.0
        %3655 = vmatpush.msra.mxu0 0.0
        %3656 = vmatpush.msra.mxu0 0.0
        %3657 = vmatpush.msra.mxu0 0.0
        %3658 = vmatpush.msra.mxu0 0.0
        %3659 = vmatpush.msra.mxu0 0.0
        %3660 = vmatpush.msra.mxu0 0.0
        %v3661 = vand.u32 %v3481, 4294901760
        %3662 = vmatpush.msra.mxu0 %v3661
        %v3663 = vand.u32 %v3480, 4294901760
        %3664 = vmatpush.msra.mxu0 %v3663
        %v3665 = vand.u32 %v3479, 4294901760
        %3666 = vmatpush.msra.mxu0 %v3665
        %v3667 = vand.u32 %v3478, 4294901760
        %3668 = vmatpush.msra.mxu0 %v3667
        %v3669 = vand.u32 %v3487, 4294901760
        %3670 = vmatmul.f32.gmra.mxu0 %v3669
        %v3671 = vpop.f32.mrf.mxu0
        %v3672 = vadd.f32 %v3647, %v3671
        %3673 = vdwg.mxu0
        %3674 = vst.msk [vmem:[%s341] sm:$0xff] %vm351, %v3672
        %s3675 = sand.u32 %s186, 1
        %s3676 = scalar_lea.sflag [#allocation4], %s3675
        %s3677 = sand.u32 %s186, 1
        %s3678 = smul.addr %s3677, 8
        %s3679 = scalar_lea.vmem [#allocation10], %s3678
        // Predicated region
        $region65: #{tpu_custom_call.1} parent=47 // pred_check
          %p3680 = pneg %p196
        $region66: #{tpu_custom_call.1} parent=47 // pred_check_branch
          %3682 = sbr.rel (%p3680) target = $region68
        $region67: #{tpu_custom_call.1} parent=47 // pred_region
          %3684 = vsyncadd %s3676, 0
          %s3685 = smul.addr %s26, 8
          %s3686 = scalar_lea.hbm %s7, %s3685
          %s3688 = sshll.u32 %s3679, 4
          %s3689 = int_to_ptr.vmem [resolvable:$true] %s3688
          %s3690 = sshll.u32 %s3686, 4
          %s3691 = int_to_ptr.hbm [resolvable:$true] %s3690
          %3693 = dma.vmem_to_hbm [thread:$0]  %s3689, 128, %s3691, %s3676
        $region68: #{tpu_custom_call.1} parent=47 // pred_fallthru
          _
      $region48: #{tpu_custom_call.1} parent=5 // pred_fallthru
        _
      %p3694 = scmp.le.s32.totalorder 2, %s21
      // Predicated region
      $region69: #{tpu_custom_call.1} parent=5 // pred_check
        %p3695 = pneg %p3694
      $region70: #{tpu_custom_call.1} parent=5 // pred_check_branch
        %3697 = sbr.rel (%p3695) target = $region72
      $region71: #{tpu_custom_call.1} parent=5 // pred_region
        %s3698 = ssub.s32 %s21, 2
        // Predicated region
        $region73: #{tpu_custom_call.1} parent=71 // pred_check
          %p3699 = pneg %p202
        $region74: #{tpu_custom_call.1} parent=71 // pred_check_branch
          %3701 = sbr.rel (%p3699) target = $region76
        $region75: #{tpu_custom_call.1} parent=71 // pred_region
          %s3702 = sand.u32 %s187, 1
          %s3703 = scalar_lea.sflag [#allocation4], %s3702
          %s3704 = sand.u32 %s187, 1
          %s3705 = smul.addr %s3704, 8
          %s3706 = scalar_lea.vmem [#allocation10], %s3705
          %3708 = dma.done %s3703, 128
        $region76: #{tpu_custom_call.1} parent=71 // pred_fallthru
          _
      $region72: #{tpu_custom_call.1} parent=5 // pred_fallthru
        _
    $region6: #{tpu_custom_call.1} parent=1 // loop_footer
      %s25 = sadd.s32 1, %s21
    $region7: #{tpu_custom_call.1} parent=1 // loop_footer_branch
      %20 = sbr.rel target = $region3
    $region8: #{tpu_custom_call.1} parent=1 // loop_exit
      _
    %3709 = vsyncpa [#allocation3], 1
    %s3710 = scalar_lea.sflag [#allocation3], 1
    %3711 = vsyncpa %s3710, 1
    %3712 = vsyncpa [#allocation6], 1
    %3713 = vsyncpa [#allocation9], 1
    %3714 = vsyncpa [#allocation4], 1
    %s3715 = scalar_lea.sflag [#allocation4], 1
    %3716 = vsyncpa %s3715, 1

</llo_original>
